<compile_context>
chip_gen: v7x
topology: tpu7x:2x2x1
jax: 0.10.0
libtpu: 0.0.40
codegen_flags: <defaults>
</compile_context>

<pallas_src>
import jax
import jax.numpy as jnp
import numpy as np
from jax.experimental import pallas as pl
from jax.experimental.pallas import tpu as pltpu

LAST_DIM = 256 * 4 * 4     # 4096, fc1 input size implied by the module
HID = 1024
NUM_CLASSES = 100
PAD_CLASSES = 128          # lane-dense fc3 output (zero-padded columns)
K_TILE = 2048              # fc1 contraction tile (4096 / 2048 = 2 grid steps)


def _mlp_kernel(h_ref, w1_ref, w2_ref, w3_ref,
                y_ref, hm0_ref, hm1_ref, hm2_ref, acc_ref):
    """K-tiled fc1 + fused fc2/fc3 epilogue on the last grid step.

    Grid axis = fc1 contraction (LAST_DIM // K_TILE steps).
      h_ref  : (B, K_TILE)        f32  current input slab
      w1_ref : (K_TILE, HID)      bf16 current fc1 weight slab
      w2_ref : (HID, HID)         bf16 resident, single-buffered
      w3_ref : (HID, PAD_CLASSES) bf16 resident, single-buffered
      acc_ref: (B, HID)           f32  scratch accumulator for fc1
    """
    k = pl.program_id(0)
    nk = pl.num_programs(0)

    h_blk = h_ref[...]                                           # (B, Kt) f32
    # hm0 = mean over batch, streamed per K-tile (exact f32, matches torch).
    hm0_ref[...] = jnp.mean(h_blk, axis=0, keepdims=True)

    @pl.when(k == 0)
    def _():
        acc_ref[...] = jnp.zeros_like(acc_ref)

    # fc1 partial matmul: bf16 operands, f32 accumulation on the MXU.
    acc_ref[...] += jnp.dot(h_blk.astype(jnp.bfloat16), w1_ref[...],
                            preferred_element_type=jnp.float32)

    @pl.when(k == nk - 1)
    def _():
        a1 = jnp.maximum(acc_ref[...], 0.0)                      # relu(fc1)
        hm1_ref[...] = jnp.mean(a1, axis=0, keepdims=True)

        a2 = jnp.dot(a1.astype(jnp.bfloat16), w2_ref[...],
                     preferred_element_type=jnp.float32)
        a2 = jnp.maximum(a2, 0.0)                                # relu(fc2)
        hm2_ref[...] = jnp.mean(a2, axis=0, keepdims=True)

        y_ref[...] = jnp.dot(a2.astype(jnp.bfloat16), w3_ref[...],
                             preferred_element_type=jnp.float32)  # (B, 128)


def prepare_weights(fc1_w, fc2_w, fc3_w):
    """One-time weight prep (do NOT call per forward).

    Takes PyTorch-layout (out, in) f32 weights, returns (in, out) bf16 weights
    with fc3 zero-padded to a lane-dense 128-wide output.
    """
    w1_b = jnp.asarray(fc1_w).T.astype(jnp.bfloat16)             # (4096, 1024)
    w2_b = jnp.asarray(fc2_w).T.astype(jnp.bfloat16)             # (1024, 1024)
    w3_b = jnp.zeros((HID, PAD_CLASSES), jnp.bfloat16)
    w3_b = w3_b.at[:, :NUM_CLASSES].set(jnp.asarray(fc3_w).T.astype(jnp.bfloat16))
    return w1_b, w2_b, w3_b


def net100_forward(h, w1_b, w2_b, w3_b):
    """h: (B, 4096) f32; w*_b: prepared bf16 (in, out) weights (see prepare_weights).

    Returns (y, [hm0, hm1, hm2]) matching Net100.forward semantics.
    """
    B = h.shape[0]
    nk = LAST_DIM // K_TILE

    out_shapes = (
        jax.ShapeDtypeStruct((B, PAD_CLASSES), jnp.float32),     # y (padded)
        jax.ShapeDtypeStruct((1, LAST_DIM), jnp.float32),        # hm0
        jax.ShapeDtypeStruct((1, HID), jnp.float32),             # hm1
        jax.ShapeDtypeStruct((1, HID), jnp.float32),             # hm2
    )

    grid_spec = pltpu.PrefetchScalarGridSpec(
        num_scalar_prefetch=0,
        grid=(nk,),
        in_specs=[
            pl.BlockSpec((B, K_TILE), lambda k: (0, k)),         # h slab
            pl.BlockSpec((K_TILE, HID), lambda k: (k, 0)),       # w1 slab
            pl.BlockSpec((HID, HID), lambda k: (0, 0),           # w2 resident
                         pipeline_mode=pl.Buffered(1)),
            pl.BlockSpec((HID, PAD_CLASSES), lambda k: (0, 0),   # w3 resident
                         pipeline_mode=pl.Buffered(1)),
        ],
        out_specs=(
            pl.BlockSpec((B, PAD_CLASSES), lambda k: (0, 0)),    # y
            pl.BlockSpec((1, K_TILE), lambda k: (0, k)),         # hm0 slab
            pl.BlockSpec((1, HID), lambda k: (0, 0)),            # hm1
            pl.BlockSpec((1, HID), lambda k: (0, 0)),            # hm2
        ),
        scratch_shapes=[pltpu.VMEM((B, HID), jnp.float32)],      # fc1 acc
    )

    y_pad, hm0, hm1, hm2 = pl.pallas_call(
        _mlp_kernel,
        out_shape=out_shapes,
        grid_spec=grid_spec,
        compiler_params=pltpu.CompilerParams(
            dimension_semantics=("arbitrary",),                  # K is a reduction
            vmem_limit_bytes=32 * 1024 * 1024),                  # safe on v5e/v6e/v7x
    )(h, w1_b, w2_b, w3_b)

    # TODO(synk): for large batch (compute-bound, B >= several hundred) add a
    # batch grid axis with partial-sum hm* + final 1/B scale; keep the current
    # single weight stream for small B (batch-parallel would double HBM traffic).
    return y_pad[:, :NUM_CLASSES], [hm0, hm1, hm2]


net100_forward_jit = jax.jit(net100_forward)


def _xavier_normal(key, out_f, in_f):
    # torch.nn.init.xavier_normal_: std = gain * sqrt(2 / (fan_in + fan_out))
    std = np.sqrt(2.0 / (in_f + out_f))
    return jax.random.normal(key, (out_f, in_f), dtype=jnp.float32) * std


if __name__ == "__main__":
    key = jax.random.PRNGKey(0)
    k_h, k1, k2, k3 = jax.random.split(key, 4)

    B = 2
    h = jax.random.normal(k_h, (B, LAST_DIM), dtype=jnp.float32)

    # PyTorch-layout weights (out, in), xavier_normal init, deterministic.
    fc1_w = _xavier_normal(k1, HID, LAST_DIM)
    fc2_w = _xavier_normal(k2, HID, HID)
    fc3_w = _xavier_normal(k3, NUM_CLASSES, HID)

    # One-time weight prep (hoisted out of the hot path).
    w1_b, w2_b, w3_b = prepare_weights(fc1_w, fc2_w, fc3_w)
    w1_b, w2_b, w3_b = jax.block_until_ready((w1_b, w2_b, w3_b))

    y, h_list = net100_forward_jit(h, w1_b, w2_b, w3_b)
    jax.block_until_ready(y)
    jax.block_until_ready(h_list)

    # Reference 1: bf16-weight reference with identical casts (tight check).
    w1r = fc1_w.T.astype(jnp.bfloat16)
    w2r = fc2_w.T.astype(jnp.bfloat16)
    w3r = fc3_w.T.astype(jnp.bfloat16)
    a1 = jnp.maximum(jnp.dot(h.astype(jnp.bfloat16), w1r,
                             preferred_element_type=jnp.float32), 0.0)
    a2 = jnp.maximum(jnp.dot(a1.astype(jnp.bfloat16), w2r,
                             preferred_element_type=jnp.float32), 0.0)
    y_ref = jnp.dot(a2.astype(jnp.bfloat16), w3r,
                    preferred_element_type=jnp.float32)
    refs = [jnp.mean(h, 0, keepdims=True),
            jnp.mean(a1, 0, keepdims=True),
            jnp.mean(a2, 0, keepdims=True)]

    assert y.shape == (B, NUM_CLASSES)
    assert np.allclose(np.asarray(y), np.asarray(y_ref), atol=2e-3, rtol=2e-3)
    for got, want in zip(h_list, refs):
        assert np.allclose(np.asarray(got), np.asarray(want),
                           atol=2e-3, rtol=2e-3)

    # Reference 2: pure f32 reference (loose sanity check vs bf16 rounding).
    a1f = jnp.maximum(h @ fc1_w.T, 0.0)
    a2f = jnp.maximum(a1f @ fc2_w.T, 0.0)
    y_f32 = a2f @ fc3_w.T
    assert np.allclose(np.asarray(y), np.asarray(y_f32), atol=1e-1, rtol=1e-1)

    print("KERNEL_OK")
</pallas_src>

<mosaic_0001>
module attributes {stable_mosaic.version = 11 : i64} {
  func.func @_mlp_kernel(%arg0: i32, %arg1: memref<2x2048xf32, #tpu.memory_space<vmem>>, %arg2: memref<2048x1024xbf16, #tpu.memory_space<vmem>>, %arg3: memref<1024x1024xbf16, #tpu.memory_space<vmem>>, %arg4: memref<1024x128xbf16, #tpu.memory_space<vmem>>, %arg5: memref<2x128xf32, #tpu.memory_space<vmem>>, %arg6: memref<1x2048xf32, #tpu.memory_space<vmem>>, %arg7: memref<1x1024xf32, #tpu.memory_space<vmem>>, %arg8: memref<1x1024xf32, #tpu.memory_space<vmem>>, %arg9: memref<2x1024xf32, #tpu.memory_space<vmem>>) attributes {dimension_semantics = [#tpu.dimension_semantics<arbitrary>], iteration_bounds = array<i64: 2>, scalar_prefetch = 0 : i64, scratch_operands = 1 : i64, tpu.core_type = #tpu.core_type<tc>, window_params = [{transform_indices = @transform_0, window_bounds = array<i64: 2, 2048>}, {transform_indices = @transform_1, window_bounds = array<i64: 2048, 1024>}, {pipeline_mode = #tpu.pipeline_mode<synchronous>, transform_indices = @transform_2, window_bounds = array<i64: 1024, 1024>}, {pipeline_mode = #tpu.pipeline_mode<synchronous>, transform_indices = @transform_3, window_bounds = array<i64: 1024, 128>}, {pipeline_mode = #tpu.pipeline_mode<synchronous>, transform_indices = @transform_4, window_bounds = array<i64: 2, 128>}, {transform_indices = @transform_5, window_bounds = array<i64: 1, 2048>}, {pipeline_mode = #tpu.pipeline_mode<synchronous>, transform_indices = @transform_6, window_bounds = array<i64: 1, 1024>}, {pipeline_mode = #tpu.pipeline_mode<synchronous>, transform_indices = @transform_7, window_bounds = array<i64: 1, 1024>}]} {
    %c0 = arith.constant 0 : index
    %c0_0 = arith.constant 0 : index
    %0 = vector.load %arg1[%c0, %c0_0] : memref<2x2048xf32, #tpu.memory_space<vmem>>, vector<2x2048xf32>
    %cst = arith.constant dense<0.000000e+00> : vector<2048xf32>
    %1 = vector.multi_reduction <add>, %0, %cst [0] : vector<2x2048xf32> to vector<2048xf32>
    %2 = vector.shape_cast %1 : vector<2048xf32> to vector<1x2048xf32>
    %cst_1 = arith.constant 2.000000e+00 : f32
    %3 = vector.broadcast %cst_1 : f32 to vector<1x2048xf32>
    %4 = arith.divf %2, %3 : vector<1x2048xf32>
    %c0_2 = arith.constant 0 : index
    %c0_3 = arith.constant 0 : index
    %5 = vector.load %arg6[%c0_2, %c0_3] : memref<1x2048xf32, #tpu.memory_space<vmem>>, vector<1x2048xf32>
    tpu.vector_store %arg6[%c0_2, %c0_3], %4 {strides = array<i32>} : memref<1x2048xf32, #tpu.memory_space<vmem>>, vector<1x2048xf32>,
    %c0_i32 = arith.constant 0 : i32
    %6 = arith.cmpi eq, %arg0, %c0_i32 : i32
    %7 = arith.extui %6 : i1 to i32
    %c0_i32_4 = arith.constant 0 : i32
    %8 = arith.cmpi ne, %7, %c0_i32_4 : i32
    scf.if %8 {
      %cst_13 = arith.constant 0.000000e+00 : f32
      %18 = vector.broadcast %cst_13 : f32 to vector<2x1024xf32>
      %c0_14 = arith.constant 0 : index
      %c0_15 = arith.constant 0 : index
      %19 = vector.load %arg9[%c0_14, %c0_15] : memref<2x1024xf32, #tpu.memory_space<vmem>>, vector<2x1024xf32>
      tpu.vector_store %arg9[%c0_14, %c0_15], %18 {strides = array<i32>} : memref<2x1024xf32, #tpu.memory_space<vmem>>, vector<2x1024xf32>,
    } else {
    }
    %c0_5 = arith.constant 0 : index
    %c0_6 = arith.constant 0 : index
    %9 = vector.load %arg9[%c0_5, %c0_6] : memref<2x1024xf32, #tpu.memory_space<vmem>>, vector<2x1024xf32>
    %10 = arith.truncf %0 : vector<2x2048xf32> to vector<2x2048xbf16>
    %c0_7 = arith.constant 0 : index
    %c0_8 = arith.constant 0 : index
    %11 = vector.load %arg2[%c0_7, %c0_8] : memref<2048x1024xbf16, #tpu.memory_space<vmem>>, vector<2048x1024xbf16>
    %cst_9 = arith.constant dense<0.000000e+00> : vector<2x1024xf32>
    %12 = tpu.matmul %10, %11, %cst_9 {dimension_numbers = #tpu.dot_dimension_numbers<[1], [0], [0], [1], [0, 0, 1, 1], [], []>} : vector<2x2048xbf16>, vector<2048x1024xbf16>, vector<2x1024xf32> -> vector<2x1024xf32>
    %13 = arith.addf %9, %12 : vector<2x1024xf32>
    %c0_10 = arith.constant 0 : index
    %c0_11 = arith.constant 0 : index
    %14 = vector.load %arg9[%c0_10, %c0_11] : memref<2x1024xf32, #tpu.memory_space<vmem>>, vector<2x1024xf32>
    tpu.vector_store %arg9[%c0_10, %c0_11], %13 {strides = array<i32>} : memref<2x1024xf32, #tpu.memory_space<vmem>>, vector<2x1024xf32>,
    %c1_i32 = arith.constant 1 : i32
    %15 = arith.cmpi eq, %arg0, %c1_i32 : i32
    %16 = arith.extui %15 : i1 to i32
    %c0_i32_12 = arith.constant 0 : i32
    %17 = arith.cmpi ne, %16, %c0_i32_12 : i32
    scf.if %17 {
      %c0_13 = arith.constant 0 : index
      %c0_14 = arith.constant 0 : index
      %18 = vector.load %arg9[%c0_13, %c0_14] : memref<2x1024xf32, #tpu.memory_space<vmem>>, vector<2x1024xf32>
      %cst_15 = arith.constant 0.000000e+00 : f32
      %19 = vector.broadcast %cst_15 : f32 to vector<2x1024xf32>
      %20 = arith.maximumf %18, %19 : vector<2x1024xf32>
      %cst_16 = arith.constant dense<0.000000e+00> : vector<1024xf32>
      %21 = vector.multi_reduction <add>, %20, %cst_16 [0] : vector<2x1024xf32> to vector<1024xf32>
      %22 = vector.shape_cast %21 : vector<1024xf32> to vector<1x1024xf32>
      %cst_17 = arith.constant 2.000000e+00 : f32
      %23 = vector.broadcast %cst_17 : f32 to vector<1x1024xf32>
      %24 = arith.divf %22, %23 : vector<1x1024xf32>
      %c0_18 = arith.constant 0 : index
      %c0_19 = arith.constant 0 : index
      %25 = vector.load %arg7[%c0_18, %c0_19] : memref<1x1024xf32, #tpu.memory_space<vmem>>, vector<1x1024xf32>
      tpu.vector_store %arg7[%c0_18, %c0_19], %24 {strides = array<i32>} : memref<1x1024xf32, #tpu.memory_space<vmem>>, vector<1x1024xf32>,
      %26 = arith.truncf %20 : vector<2x1024xf32> to vector<2x1024xbf16>
      %c0_20 = arith.constant 0 : index
      %c0_21 = arith.constant 0 : index
      %27 = vector.load %arg3[%c0_20, %c0_21] : memref<1024x1024xbf16, #tpu.memory_space<vmem>>, vector<1024x1024xbf16>
      %cst_22 = arith.constant dense<0.000000e+00> : vector<2x1024xf32>
      %28 = tpu.matmul %26, %27, %cst_22 {dimension_numbers = #tpu.dot_dimension_numbers<[1], [0], [0], [1], [0, 0, 1, 1], [], []>} : vector<2x1024xbf16>, vector<1024x1024xbf16>, vector<2x1024xf32> -> vector<2x1024xf32>
      %cst_23 = arith.constant 0.000000e+00 : f32
      %29 = vector.broadcast %cst_23 : f32 to vector<2x1024xf32>
      %30 = arith.maximumf %28, %29 : vector<2x1024xf32>
      %cst_24 = arith.constant dense<0.000000e+00> : vector<1024xf32>
      %31 = vector.multi_reduction <add>, %30, %cst_24 [0] : vector<2x1024xf32> to vector<1024xf32>
      %32 = vector.shape_cast %31 : vector<1024xf32> to vector<1x1024xf32>
      %cst_25 = arith.constant 2.000000e+00 : f32
      %33 = vector.broadcast %cst_25 : f32 to vector<1x1024xf32>
      %34 = arith.divf %32, %33 : vector<1x1024xf32>
      %c0_26 = arith.constant 0 : index
      %c0_27 = arith.constant 0 : index
      %35 = vector.load %arg8[%c0_26, %c0_27] : memref<1x1024xf32, #tpu.memory_space<vmem>>, vector<1x1024xf32>
      tpu.vector_store %arg8[%c0_26, %c0_27], %34 {strides = array<i32>} : memref<1x1024xf32, #tpu.memory_space<vmem>>, vector<1x1024xf32>,
      %36 = arith.truncf %30 : vector<2x1024xf32> to vector<2x1024xbf16>
      %c0_28 = arith.constant 0 : index
      %c0_29 = arith.constant 0 : index
      %37 = vector.load %arg4[%c0_28, %c0_29] : memref<1024x128xbf16, #tpu.memory_space<vmem>>, vector<1024x128xbf16>
      %cst_30 = arith.constant dense<0.000000e+00> : vector<2x128xf32>
      %38 = tpu.matmul %36, %37, %cst_30 {dimension_numbers = #tpu.dot_dimension_numbers<[1], [0], [0], [1], [0, 0, 1, 1], [], []>} : vector<2x1024xbf16>, vector<1024x128xbf16>, vector<2x128xf32> -> vector<2x128xf32>
      %c0_31 = arith.constant 0 : index
      %c0_32 = arith.constant 0 : index
      %39 = vector.load %arg5[%c0_31, %c0_32] : memref<2x128xf32, #tpu.memory_space<vmem>>, vector<2x128xf32>
      tpu.vector_store %arg5[%c0_31, %c0_32], %38 {strides = array<i32>} : memref<2x128xf32, #tpu.memory_space<vmem>>, vector<2x128xf32>,
    } else {
    }
    return
  }
  func.func @transform_0(%arg0: i32) -> (i32, i32) {
    %c0_i32 = arith.constant 0 : i32
    %c0_i32_0 = arith.constant 0 : i32
    return %c0_i32, %arg0 : i32, i32
  }
  func.func @transform_1(%arg0: i32) -> (i32, i32) {
    %c0_i32 = arith.constant 0 : i32
    %c0_i32_0 = arith.constant 0 : i32
    return %arg0, %c0_i32 : i32, i32
  }
  func.func @transform_2(%arg0: i32) -> (i32, i32) {
    %c0_i32 = arith.constant 0 : i32
    %c0_i32_0 = arith.constant 0 : i32
    %c0_i32_1 = arith.constant 0 : i32
    return %c0_i32, %c0_i32_0 : i32, i32
  }
  func.func @transform_3(%arg0: i32) -> (i32, i32) {
    %c0_i32 = arith.constant 0 : i32
    %c0_i32_0 = arith.constant 0 : i32
    %c0_i32_1 = arith.constant 0 : i32
    return %c0_i32, %c0_i32_0 : i32, i32
  }
  func.func @transform_4(%arg0: i32) -> (i32, i32) {
    %c0_i32 = arith.constant 0 : i32
    %c0_i32_0 = arith.constant 0 : i32
    %c0_i32_1 = arith.constant 0 : i32
    return %c0_i32, %c0_i32_0 : i32, i32
  }
  func.func @transform_5(%arg0: i32) -> (i32, i32) {
    %c0_i32 = arith.constant 0 : i32
    %c0_i32_0 = arith.constant 0 : i32
    return %c0_i32, %arg0 : i32, i32
  }
  func.func @transform_6(%arg0: i32) -> (i32, i32) {
    %c0_i32 = arith.constant 0 : i32
    %c0_i32_0 = arith.constant 0 : i32
    %c0_i32_1 = arith.constant 0 : i32
    return %c0_i32, %c0_i32_0 : i32, i32
  }
  func.func @transform_7(%arg0: i32) -> (i32, i32) {
    %c0_i32 = arith.constant 0 : i32
    %c0_i32_0 = arith.constant 0 : i32
    %c0_i32_1 = arith.constant 0 : i32
    return %c0_i32, %c0_i32_0 : i32, i32
  }
}

</mosaic_0001>

<llo_original>
// kernel: net100_forward.1
$region0: #{net100_forward.1}
  #allocation0 [shape = 'u32[]', space=smem, size = 0x4, offset = 0x4, fixed_abs, tag = 'smem constant byte address 0x4 - core index']
  #allocation1 [shape = 'u32[144,128]{1,0:T(1,128)}', space=vmem, size = 0x12000, scoped, tag = 'internal scratch']
  #allocation2 [shape = 'f32[2,1024]{1,0:T(2,128)}', space=vmem, size = 0x2000, scoped, tag = 'scratch operand']
  %s0 = inlined_call_operand.hbm [shape: f32[2,4096], index: 0, kind: input, shape index: {}]
  %s1 = inlined_call_operand.hbm [shape: bf16[4096,1024], index: 1, kind: input, shape index: {}]
  %s2 = inlined_call_operand.hbm [shape: bf16[1024,1024], index: 2, kind: input, shape index: {}]
  %s3 = inlined_call_operand.hbm [shape: bf16[1024,128], index: 3, kind: input, shape index: {}]
  %s4 = inlined_call_operand.hbm [shape: f32[2,128], index: 4, kind: output, shape index: {0}]
  %s5 = inlined_call_operand.hbm [shape: f32[1,4096], index: 5, kind: output, shape index: {1}]
  %s6 = inlined_call_operand.hbm [shape: f32[1,1024], index: 6, kind: output, shape index: {2}]
  %s7 = inlined_call_operand.hbm [shape: f32[1,1024], index: 7, kind: output, shape index: {3}]
  %8 = xla_tuple %s4, %s5, %s6, %s7
  %s9 = sld [smem:[#allocation0]]
  $region97: #{net100_forward.1} parent=0
    _
  %s11 = ssub.s32 1, %s9
  %s12 = scalar_select 0, %s11, %s9
  $region1: #{net100_forward.1} parent=0
    #allocation3 [shape = 'u8[32768]{0}', space=vmem, size = 0x8000, scoped, tag = 'input window, operand 0']
    #allocation4 [shape = 's32[2]{0}', space=sflag, size = 0x8, scoped, tag = 'scoped memory for net100_forward.1']
    #allocation5 [shape = 's32[2]{0}', space=sflag, size = 0x8, scoped, tag = 'scoped memory for net100_forward.1']
    #allocation6 [shape = 'u8[8388608]{0}', space=vmem, size = 0x800000, scoped, tag = 'input window, operand 1']
    #allocation7 [shape = 's32[2]{0}', space=sflag, size = 0x8, scoped, tag = 'scoped memory for net100_forward.1']
    #allocation8 [shape = 'u8[2097152]{0}', space=vmem, size = 0x200000, scoped, tag = 'input window, operand 2, single buffered']
    #allocation9 [shape = 'u8[262144]{0}', space=vmem, size = 0x40000, scoped, tag = 'input window, operand 3, single buffered']
    #allocation10 [shape = 's32[1]{0}', space=sflag, size = 0x4, scoped, tag = 'scoped memory for net100_forward.1']
    #allocation11 [shape = 'u8[1024]{0}', space=vmem, size = 0x400, scoped, tag = 'output window, operand 0, single buffered']
    #allocation12 [shape = 'u8[16384]{0}', space=vmem, size = 0x4000, scoped, tag = 'output window, operand 1']
    #allocation13 [shape = 's32[2]{0}', space=sflag, size = 0x8, scoped, tag = 'scoped memory for net100_forward.1']
    #allocation14 [shape = 'u8[4096]{0}', space=vmem, size = 0x1000, scoped, tag = 'output window, operand 2, single buffered']
    #allocation15 [shape = 'u8[4096]{0}', space=vmem, size = 0x1000, scoped, tag = 'output window, operand 3, single buffered']
    #allocation16 [shape = 's32[1]{0}', space=sflag, size = 0x4, scoped, tag = 'scoped memory for net100_forward.1']
    %13 = vsyncpa [#allocation4], 0
    %s14 = scalar_lea.sflag [#allocation4], 1
    %15 = vsyncpa %s14, 0
    %16 = vsyncpa [#allocation7], 0
    %s17 = scalar_lea.sflag [#allocation7], 1
    %18 = vsyncpa %s17, 0
    %19 = vsyncpa [#allocation10], 0
    %20 = vsyncpa [#allocation5], 0
    %21 = vsyncpa [#allocation13], 0
    %s22 = scalar_lea.sflag [#allocation13], 1
    %23 = vsyncpa %s22, 0
    %24 = vsyncpa [#allocation16], 0
    loop: start=0, step=1, limit=4
    $region2: #{net100_forward.1} parent=1 // loop_pre_header
      _
    $region3: #{net100_forward.1} parent=1 // loop_header
      %s26 = sphi 0, %s30
      %p27 = scmp.ge.s32.totalorder %s26, 4
      %s36 = sphi 0, %s38
      %s39 = sphi 0, %s36
      %s40 = sphi 0, %s39
      %s56 = sphi 0, %s40
      %s62 = sphi 0, %s64
      %s65 = sphi 0, %s62
      %s66 = sphi 0, %s65
      %s82 = sphi 0, %s66
      %s86 = sphi 0, %s86
      %s88 = sphi 0, %s86
      %s89 = sphi 0, %s88
      %s103 = sphi 0, %s89
      %s107 = sphi 0, %s107
      %s109 = sphi 0, %s107
      %s110 = sphi 0, %s109
      %s124 = sphi 0, %s110
      %s128 = sphi 0, %s128
      %s130 = sphi 0, %s128
      %s131 = sphi 0, %s130
      %s145 = sphi 0, %s131
      %s151 = sphi 0, %s153
      %s154 = sphi 0, %s151
      %s155 = sphi 0, %s154
      %s171 = sphi 0, %s155
      %s175 = sphi 0, %s175
      %s177 = sphi 0, %s175
      %s178 = sphi 0, %s177
      %s192 = sphi 0, %s178
      %s196 = sphi 0, %s196
      %s198 = sphi 0, %s196
      %s199 = sphi 0, %s198
      %s213 = sphi 0, %s199
    $region4: #{net100_forward.1} parent=1 // loop_header_branch
      %29 = sbr.rel (%p27) target = $region8
    $region5: #{net100_forward.1} parent=1 // loop_body
      %s31 = ssub.s32 %s26, 1
      %s32 = ssub.s32 %s26, 2
      %s33 = sadd.s32 %s26, 1
      %s34 = ssub.s32 %s26, %s33
      %p35 = scmp.eq.s32.totalorder %s34, 0
      %s37 = sadd.s32 %s36, 1
      %s38 = scalar_select %p35, %s36, %s37
      %p41 = pneg %p35
      %p42 = scmp.eq.s32.totalorder %s26, 1
      %p43 = por %p41, %p42
      %p44 = scmp.ne.s32.totalorder %s36, %s39
      %p45 = scmp.eq.s32.totalorder %s26, 0
      %p46 = por %p44, %p45
      %p47 = scmp.ne.s32.totalorder %s36, %s39
      %p48 = scmp.eq.s32.totalorder %s31, 1
      %p49 = por %p47, %p48
      %p50 = scmp.ne.s32.totalorder %s39, %s40
      %p51 = scmp.eq.s32.totalorder %s31, 0
      %p52 = por %p50, %p51
      %p53 = scmp.ne.s32.totalorder %s39, %s40
      %p54 = scmp.eq.s32.totalorder %s32, 1
      %p55 = por %p53, %p54
      %p57 = scmp.ne.s32.totalorder %s40, %s56
      %p58 = scmp.eq.s32.totalorder %s32, 0
      %p59 = por %p57, %p58
      %s60 = ssub.s32 %s26, %s33
      %p61 = scmp.eq.s32.totalorder %s60, 0
      %s63 = sadd.s32 %s62, 1
      %s64 = scalar_select %p61, %s62, %s63
      %p67 = pneg %p61
      %p68 = scmp.eq.s32.totalorder %s26, 1
      %p69 = por %p67, %p68
      %p70 = scmp.ne.s32.totalorder %s62, %s65
      %p71 = scmp.eq.s32.totalorder %s26, 0
      %p72 = por %p70, %p71
      %p73 = scmp.ne.s32.totalorder %s62, %s65
      %p74 = scmp.eq.s32.totalorder %s31, 1
      %p75 = por %p73, %p74
      %p76 = scmp.ne.s32.totalorder %s65, %s66
      %p77 = scmp.eq.s32.totalorder %s31, 0
      %p78 = por %p76, %p77
      %p79 = scmp.ne.s32.totalorder %s65, %s66
      %p80 = scmp.eq.s32.totalorder %s32, 1
      %p81 = por %p79, %p80
      %p83 = scmp.ne.s32.totalorder %s66, %s82
      %p84 = scmp.eq.s32.totalorder %s32, 0
      %p85 = por %p83, %p84
      %s87 = sadd.s32 %s86, 1
      %p90 = scmp.eq.s32.totalorder %s26, 1
      %p91 = scmp.ne.s32.totalorder %s86, %s88
      %p92 = scmp.eq.s32.totalorder %s26, 0
      %p93 = por %p91, %p92
      %p94 = scmp.ne.s32.totalorder %s86, %s88
      %p95 = scmp.eq.s32.totalorder %s31, 1
      %p96 = por %p94, %p95
      %p97 = scmp.ne.s32.totalorder %s88, %s89
      %p98 = scmp.eq.s32.totalorder %s31, 0
      %p99 = por %p97, %p98
      %p100 = scmp.ne.s32.totalorder %s88, %s89
      %p101 = scmp.eq.s32.totalorder %s32, 1
      %p102 = por %p100, %p101
      %p104 = scmp.ne.s32.totalorder %s89, %s103
      %p105 = scmp.eq.s32.totalorder %s32, 0
      %p106 = por %p104, %p105
      %s108 = sadd.s32 %s107, 1
      %p111 = scmp.eq.s32.totalorder %s26, 1
      %p112 = scmp.ne.s32.totalorder %s107, %s109
      %p113 = scmp.eq.s32.totalorder %s26, 0
      %p114 = por %p112, %p113
      %p115 = scmp.ne.s32.totalorder %s107, %s109
      %p116 = scmp.eq.s32.totalorder %s31, 1
      %p117 = por %p115, %p116
      %p118 = scmp.ne.s32.totalorder %s109, %s110
      %p119 = scmp.eq.s32.totalorder %s31, 0
      %p120 = por %p118, %p119
      %p121 = scmp.ne.s32.totalorder %s109, %s110
      %p122 = scmp.eq.s32.totalorder %s32, 1
      %p123 = por %p121, %p122
      %p125 = scmp.ne.s32.totalorder %s110, %s124
      %p126 = scmp.eq.s32.totalorder %s32, 0
      %p127 = por %p125, %p126
      %s129 = sadd.s32 %s128, 1
      %p132 = scmp.eq.s32.totalorder %s26, 1
      %p133 = scmp.ne.s32.totalorder %s128, %s130
      %p134 = scmp.eq.s32.totalorder %s26, 0
      %p135 = por %p133, %p134
      %p136 = scmp.ne.s32.totalorder %s128, %s130
      %p137 = scmp.eq.s32.totalorder %s31, 1
      %p138 = por %p136, %p137
      %p139 = scmp.ne.s32.totalorder %s130, %s131
      %p140 = scmp.eq.s32.totalorder %s31, 0
      %p141 = por %p139, %p140
      %p142 = scmp.ne.s32.totalorder %s130, %s131
      %p143 = scmp.eq.s32.totalorder %s32, 1
      %p144 = por %p142, %p143
      %p146 = scmp.ne.s32.totalorder %s131, %s145
      %p147 = scmp.eq.s32.totalorder %s32, 0
      %p148 = por %p146, %p147
      %s149 = ssub.s32 %s26, %s33
      %p150 = scmp.eq.s32.totalorder %s149, 0
      %s152 = sadd.s32 %s151, 1
      %s153 = scalar_select %p150, %s151, %s152
      %p156 = pneg %p150
      %p157 = scmp.eq.s32.totalorder %s26, 1
      %p158 = por %p156, %p157
      %p159 = scmp.ne.s32.totalorder %s151, %s154
      %p160 = scmp.eq.s32.totalorder %s26, 0
      %p161 = por %p159, %p160
      %p162 = scmp.ne.s32.totalorder %s151, %s154
      %p163 = scmp.eq.s32.totalorder %s31, 1
      %p164 = por %p162, %p163
      %p165 = scmp.ne.s32.totalorder %s154, %s155
      %p166 = scmp.eq.s32.totalorder %s31, 0
      %p167 = por %p165, %p166
      %p168 = scmp.ne.s32.totalorder %s154, %s155
      %p169 = scmp.eq.s32.totalorder %s32, 1
      %p170 = por %p168, %p169
      %p172 = scmp.ne.s32.totalorder %s155, %s171
      %p173 = scmp.eq.s32.totalorder %s32, 0
      %p174 = por %p172, %p173
      %s176 = sadd.s32 %s175, 1
      %p179 = scmp.eq.s32.totalorder %s26, 1
      %p180 = scmp.ne.s32.totalorder %s175, %s177
      %p181 = scmp.eq.s32.totalorder %s26, 0
      %p182 = por %p180, %p181
      %p183 = scmp.ne.s32.totalorder %s175, %s177
      %p184 = scmp.eq.s32.totalorder %s31, 1
      %p185 = por %p183, %p184
      %p186 = scmp.ne.s32.totalorder %s177, %s178
      %p187 = scmp.eq.s32.totalorder %s31, 0
      %p188 = por %p186, %p187
      %p189 = scmp.ne.s32.totalorder %s177, %s178
      %p190 = scmp.eq.s32.totalorder %s32, 1
      %p191 = por %p189, %p190
      %p193 = scmp.ne.s32.totalorder %s178, %s192
      %p194 = scmp.eq.s32.totalorder %s32, 0
      %p195 = por %p193, %p194
      %s197 = sadd.s32 %s196, 1
      %p200 = scmp.eq.s32.totalorder %s26, 1
      %p201 = scmp.ne.s32.totalorder %s196, %s198
      %p202 = scmp.eq.s32.totalorder %s26, 0
      %p203 = por %p201, %p202
      %p204 = scmp.ne.s32.totalorder %s196, %s198
      %p205 = scmp.eq.s32.totalorder %s31, 1
      %p206 = por %p204, %p205
      %p207 = scmp.ne.s32.totalorder %s198, %s199
      %p208 = scmp.eq.s32.totalorder %s31, 0
      %p209 = por %p207, %p208
      %p210 = scmp.ne.s32.totalorder %s198, %s199
      %p211 = scmp.eq.s32.totalorder %s32, 1
      %p212 = por %p210, %p211
      %p214 = scmp.ne.s32.totalorder %s199, %s213
      %p215 = scmp.eq.s32.totalorder %s32, 0
      %p216 = por %p214, %p215
      %p217 = scmp.le.s32.totalorder 1, %s26
      %p218 = scmp.lt.s32.totalorder %s26, 3
      %p219 = pnand %p217, %p218
      %p220 = pneg %p219
      // Predicated region
      $region9: #{net100_forward.1} parent=5 // pred_check
        _
      $region10: #{net100_forward.1} parent=5 // pred_check_branch
        %222 = sbr.rel (%p219) target = $region12
      $region11: #{net100_forward.1} parent=5 // pred_region
        %s223 = ssub.s32 %s26, 1
        // Predicated region
        $region13: #{net100_forward.1} parent=11 // pred_check
          %p224 = pneg %p99
        $region14: #{net100_forward.1} parent=11 // pred_check_branch
          %226 = sbr.rel (%p224) target = $region16
        $region15: #{net100_forward.1} parent=11 // pred_region
          %s228 = ssub.s32 65536, 65536
          %229 = vsyncadd [#allocation7], %s228
          %s230 = sshll.u32 [#allocation8], 4
          %s231 = int_to_ptr.vmem [resolvable:$true] %s230
          %236 = dma.hbm_to_vmem [thread:$0]  %s2, 65536, %s231, [#allocation7], 512, 512, 32
        $region16: #{net100_forward.1} parent=11 // pred_fallthru
          _
        // Predicated region
        $region17: #{net100_forward.1} parent=11 // pred_check
          %p237 = pneg %p120
        $region18: #{net100_forward.1} parent=11 // pred_check_branch
          %239 = sbr.rel (%p237) target = $region20
        $region19: #{net100_forward.1} parent=11 // pred_region
          %s241 = ssub.s32 8192, 8192
          %242 = vsyncadd [#allocation10], %s241
          %s243 = sshll.u32 [#allocation9], 4
          %s244 = int_to_ptr.vmem [resolvable:$true] %s243
          %249 = dma.hbm_to_vmem [thread:$0]  %s3, 8192, %s244, [#allocation10], 64, 64, 4
        $region20: #{net100_forward.1} parent=11 // pred_fallthru
          _
      $region12: #{net100_forward.1} parent=5 // pred_fallthru
        _
      %p250 = scmp.lt.s32.totalorder %s26, 2
      // Predicated region
      $region21: #{net100_forward.1} parent=5 // pred_check
        %p251 = pneg %p250
      $region22: #{net100_forward.1} parent=5 // pred_check_branch
        %253 = sbr.rel (%p251) target = $region24
      $region23: #{net100_forward.1} parent=5 // pred_region
        // Predicated region
        $region25: #{net100_forward.1} parent=23 // pred_check
          %p254 = pneg %p46
        $region26: #{net100_forward.1} parent=23 // pred_check_branch
          %256 = sbr.rel (%p254) target = $region28
        $region27: #{net100_forward.1} parent=23 // pred_region
          %s257 = sand.u32 %s36, 1
          %s258 = scalar_lea.sflag [#allocation4], %s257
          %s259 = sand.u32 %s36, 1
          %s260 = smul.addr %s259, 32
          %s261 = scalar_lea.vmem [#allocation3], %s260
          %s262 = smul.u32 16, %s26
          %s264 = ssub.s32 512, 512
          %265 = vsyncadd %s258, %s264
          %s266 = smul.addr %s262, 32
          %s267 = scalar_lea.hbm %s0, %s266
          %s269 = sshll.u32 %s261, 4
          %s270 = int_to_ptr.vmem [resolvable:$true] %s269
          %272 = dma.hbm_to_vmem [thread:$0]  %s267, 512, %s270, %s258
        $region28: #{net100_forward.1} parent=23 // pred_fallthru
          _
        // Predicated region
        $region29: #{net100_forward.1} parent=23 // pred_check
          %p273 = pneg %p72
        $region30: #{net100_forward.1} parent=23 // pred_check_branch
          %275 = sbr.rel (%p273) target = $region32
        $region31: #{net100_forward.1} parent=23 // pred_region
          %s276 = sand.u32 %s26, 1
          %s277 = scalar_lea.sflag [#allocation7], %s276
          %s278 = sand.u32 %s62, 1
          %s279 = smul.addr %s278, 8192
          %s280 = scalar_lea.vmem [#allocation6], %s279
          %s281 = smul.u32 256, %s26
          %s283 = ssub.s32 131072, 131072
          %284 = vsyncadd %s277, %s283
          %s285 = smul.addr %s281, 8
          %s286 = smul.addr %s285, 64
          %s287 = scalar_lea.hbm %s1, %s286
          %s288 = sshll.u32 %s280, 4
          %s289 = int_to_ptr.vmem [resolvable:$true] %s288
          %294 = dma.hbm_to_vmem [thread:$0]  %s287, 131072, %s289, %s277, 512, 512, 32
        $region32: #{net100_forward.1} parent=23 // pred_fallthru
          _
      $region24: #{net100_forward.1} parent=5 // pred_fallthru
        _
      %p295 = scmp.le.s32.totalorder 1, %s26
      %p296 = scmp.lt.s32.totalorder %s26, 3
      %p297 = pnand %p295, %p296
      %p298 = pneg %p297
      // Predicated region
      $region33: #{net100_forward.1} parent=5 // pred_check
        _
      $region34: #{net100_forward.1} parent=5 // pred_check_branch
        %300 = sbr.rel (%p297) target = $region36
      $region35: #{net100_forward.1} parent=5 // pred_region
        %s301 = ssub.s32 %s26, 1
        %s302 = sand.u32 %s39, 1
        %s303 = scalar_lea.sflag [#allocation4], %s302
        %s304 = sand.u32 %s39, 1
        %s305 = smul.addr %s304, 32
        %s306 = scalar_lea.vmem [#allocation3], %s305
        // Predicated region
        $region37: #{net100_forward.1} parent=35 // pred_check
          %p307 = pneg %p52
        $region38: #{net100_forward.1} parent=35 // pred_check_branch
          %309 = sbr.rel (%p307) target = $region40
        $region39: #{net100_forward.1} parent=35 // pred_region
          %310 = dma.done %s303, 512
        $region40: #{net100_forward.1} parent=35 // pred_fallthru
          _
        %s311 = sand.u32 %s31, 1
        %s312 = scalar_lea.sflag [#allocation7], %s311
        %s313 = sand.u32 %s65, 1
        %s314 = smul.addr %s313, 8192
        %s315 = scalar_lea.vmem [#allocation6], %s314
        // Predicated region
        $region41: #{net100_forward.1} parent=35 // pred_check
          %p316 = pneg %p78
        $region42: #{net100_forward.1} parent=35 // pred_check_branch
          %318 = sbr.rel (%p316) target = $region44
        $region43: #{net100_forward.1} parent=35 // pred_region
          %319 = dma.done %s312, 131072
        $region44: #{net100_forward.1} parent=35 // pred_fallthru
          _
        // Predicated region
        $region45: #{net100_forward.1} parent=35 // pred_check
          %p320 = pneg %p99
        $region46: #{net100_forward.1} parent=35 // pred_check_branch
          %322 = sbr.rel (%p320) target = $region48
        $region47: #{net100_forward.1} parent=35 // pred_region
          %323 = dma.done [#allocation7], 65536
        $region48: #{net100_forward.1} parent=35 // pred_fallthru
          _
        // Predicated region
        $region49: #{net100_forward.1} parent=35 // pred_check
          %p324 = pneg %p120
        $region50: #{net100_forward.1} parent=35 // pred_check_branch
          %326 = sbr.rel (%p324) target = $region52
        $region51: #{net100_forward.1} parent=35 // pred_region
          %327 = dma.done [#allocation10], 8192
        $region52: #{net100_forward.1} parent=35 // pred_fallthru
          _
        %s328 = sand.u32 %s39, 1
        %s329 = scalar_lea.sflag [#allocation4], %s328
        %s330 = sand.u32 %s39, 1
        %s331 = smul.addr %s330, 32
        %s332 = scalar_lea.vmem [#allocation3], %s331
        %p333 = pneg %p52
        %p334 = pneg %p49
        %s335 = sand.u32 %s31, 1
        %s336 = scalar_lea.sflag [#allocation7], %s335
        %s337 = sand.u32 %s65, 1
        %s338 = smul.addr %s337, 8192
        %s339 = scalar_lea.vmem [#allocation6], %s338
        %p340 = pneg %p78
        %p341 = pneg %p75
        %p342 = pneg %p99
        %p343 = pneg %p96
        %p344 = pneg %p120
        %p345 = pneg %p117
        %p346 = pneg %p141
        %p347 = pneg %p138
        %p348 = pneg %p167
        %p349 = pneg %p164
        %s350 = sand.u32 %s31, 1
        %s351 = scalar_lea.sflag [#allocation13], %s350
        %s352 = sand.u32 %s154, 1
        %s353 = smul.addr %s352, 16
        %s354 = scalar_lea.vmem [#allocation12], %s353
        %p355 = pneg %p188
        %p356 = pneg %p185
        %p357 = pneg %p209
        %p358 = pneg %p206
        %s359 = smul.u32 16, %s31
        %s360 = smul.u32 256, %s31
        %s361 = smul.u32 16, %s31
        %v363 = vld [vmem:[%s306] sm:$0xff]
        %v364 = vld [vmem:[%s306 + $0x8] sm:$0xff]
        %v365 = vld [vmem:[%s306 + $0x10] sm:$0xff]
        %v366 = vld [vmem:[%s306 + $0x18] sm:$0xff]
        %v371 = vcombine.high %v363, %v363
        %v373 = vunpack.c.l.s4 1983009808
        %v374 = vunpack.c.0.s8 %v373
        %v375 = vlaneseq
        %v376 = vshrl.u32 %v375, 7
        %v377 = vsub.s32 %v374, %v376
        %v378 = vrot.slane %v363, %v377
        %v380 = vunpack.c.l.s4 1983009808
        %v381 = vunpack.c.0.s8 %v380
        %v382 = vlaneseq
        %v383 = vshrl.u32 %v382, 7
        %v384 = vsub.s32 %v381, %v383
        %v385 = vrot.slane %v371, %v384
        %v386 = vcombine.high %v378, %v378
        %v387 = vcombine.high %v385, %v385
        %v388 = vcombine.high %v364, %v364
        %v390 = vunpack.c.l.s4 1983009808
        %v391 = vunpack.c.0.s8 %v390
        %v392 = vlaneseq
        %v393 = vshrl.u32 %v392, 7
        %v394 = vsub.s32 %v391, %v393
        %v395 = vrot.slane %v364, %v394
        %v397 = vunpack.c.l.s4 1983009808
        %v398 = vunpack.c.0.s8 %v397
        %v399 = vlaneseq
        %v400 = vshrl.u32 %v399, 7
        %v401 = vsub.s32 %v398, %v400
        %v402 = vrot.slane %v388, %v401
        %v403 = vcombine.high %v395, %v395
        %v404 = vcombine.high %v402, %v402
        %v405 = vcombine.high %v365, %v365
        %v407 = vunpack.c.l.s4 1983009808
        %v408 = vunpack.c.0.s8 %v407
        %v409 = vlaneseq
        %v410 = vshrl.u32 %v409, 7
        %v411 = vsub.s32 %v408, %v410
        %v412 = vrot.slane %v365, %v411
        %v414 = vunpack.c.l.s4 1983009808
        %v415 = vunpack.c.0.s8 %v414
        %v416 = vlaneseq
        %v417 = vshrl.u32 %v416, 7
        %v418 = vsub.s32 %v415, %v417
        %v419 = vrot.slane %v405, %v418
        %v420 = vcombine.high %v412, %v412
        %v421 = vcombine.high %v419, %v419
        %v422 = vcombine.high %v366, %v366
        %v424 = vunpack.c.l.s4 1983009808
        %v425 = vunpack.c.0.s8 %v424
        %v426 = vlaneseq
        %v427 = vshrl.u32 %v426, 7
        %v428 = vsub.s32 %v425, %v427
        %v429 = vrot.slane %v366, %v428
        %v431 = vunpack.c.l.s4 1983009808
        %v432 = vunpack.c.0.s8 %v431
        %v433 = vlaneseq
        %v434 = vshrl.u32 %v433, 7
        %v435 = vsub.s32 %v432, %v434
        %v436 = vrot.slane %v422, %v435
        %v437 = vcombine.high %v429, %v429
        %v438 = vcombine.high %v436, %v436
        %vm455 = vcmask 1041408
        %v456 = vsel %vm455, %v378, 0.0
        %v457 = vrot.slane %v456, 4
        %v458 = vadd.f32 %v456, %v457
        %v459 = vrot.slane %v458, 2
        %v460 = vadd.f32 %v458, %v459
        %v461 = vrot.slane %v460, 1
        %v462 = vadd.f32 %v460, %v461
        %v463 = vsel %vm455, %v386, 0.0
        %v464 = vrot.slane %v463, 4
        %v465 = vadd.f32 %v463, %v464
        %v466 = vrot.slane %v465, 2
        %v467 = vadd.f32 %v465, %v466
        %v468 = vrot.slane %v467, 1
        %v469 = vadd.f32 %v467, %v468
        %v470 = vsel %vm455, %v385, 0.0
        %v471 = vrot.slane %v470, 4
        %v472 = vadd.f32 %v470, %v471
        %v473 = vrot.slane %v472, 2
        %v474 = vadd.f32 %v472, %v473
        %v475 = vrot.slane %v474, 1
        %v476 = vadd.f32 %v474, %v475
        %v477 = vsel %vm455, %v387, 0.0
        %v478 = vrot.slane %v477, 4
        %v479 = vadd.f32 %v477, %v478
        %v480 = vrot.slane %v479, 2
        %v481 = vadd.f32 %v479, %v480
        %v482 = vrot.slane %v481, 1
        %v483 = vadd.f32 %v481, %v482
        %v484 = vsel %vm455, %v395, 0.0
        %v485 = vrot.slane %v484, 4
        %v486 = vadd.f32 %v484, %v485
        %v487 = vrot.slane %v486, 2
        %v488 = vadd.f32 %v486, %v487
        %v489 = vrot.slane %v488, 1
        %v490 = vadd.f32 %v488, %v489
        %v491 = vsel %vm455, %v403, 0.0
        %v492 = vrot.slane %v491, 4
        %v493 = vadd.f32 %v491, %v492
        %v494 = vrot.slane %v493, 2
        %v495 = vadd.f32 %v493, %v494
        %v496 = vrot.slane %v495, 1
        %v497 = vadd.f32 %v495, %v496
        %v498 = vsel %vm455, %v402, 0.0
        %v499 = vrot.slane %v498, 4
        %v500 = vadd.f32 %v498, %v499
        %v501 = vrot.slane %v500, 2
        %v502 = vadd.f32 %v500, %v501
        %v503 = vrot.slane %v502, 1
        %v504 = vadd.f32 %v502, %v503
        %v505 = vsel %vm455, %v404, 0.0
        %v506 = vrot.slane %v505, 4
        %v507 = vadd.f32 %v505, %v506
        %v508 = vrot.slane %v507, 2
        %v509 = vadd.f32 %v507, %v508
        %v510 = vrot.slane %v509, 1
        %v511 = vadd.f32 %v509, %v510
        %v512 = vsel %vm455, %v412, 0.0
        %v513 = vrot.slane %v512, 4
        %v514 = vadd.f32 %v512, %v513
        %v515 = vrot.slane %v514, 2
        %v516 = vadd.f32 %v514, %v515
        %v517 = vrot.slane %v516, 1
        %v518 = vadd.f32 %v516, %v517
        %v519 = vsel %vm455, %v420, 0.0
        %v520 = vrot.slane %v519, 4
        %v521 = vadd.f32 %v519, %v520
        %v522 = vrot.slane %v521, 2
        %v523 = vadd.f32 %v521, %v522
        %v524 = vrot.slane %v523, 1
        %v525 = vadd.f32 %v523, %v524
        %v526 = vsel %vm455, %v419, 0.0
        %v527 = vrot.slane %v526, 4
        %v528 = vadd.f32 %v526, %v527
        %v529 = vrot.slane %v528, 2
        %v530 = vadd.f32 %v528, %v529
        %v531 = vrot.slane %v530, 1
        %v532 = vadd.f32 %v530, %v531
        %v533 = vsel %vm455, %v421, 0.0
        %v534 = vrot.slane %v533, 4
        %v535 = vadd.f32 %v533, %v534
        %v536 = vrot.slane %v535, 2
        %v537 = vadd.f32 %v535, %v536
        %v538 = vrot.slane %v537, 1
        %v539 = vadd.f32 %v537, %v538
        %v540 = vsel %vm455, %v429, 0.0
        %v541 = vrot.slane %v540, 4
        %v542 = vadd.f32 %v540, %v541
        %v543 = vrot.slane %v542, 2
        %v544 = vadd.f32 %v542, %v543
        %v545 = vrot.slane %v544, 1
        %v546 = vadd.f32 %v544, %v545
        %v547 = vsel %vm455, %v437, 0.0
        %v548 = vrot.slane %v547, 4
        %v549 = vadd.f32 %v547, %v548
        %v550 = vrot.slane %v549, 2
        %v551 = vadd.f32 %v549, %v550
        %v552 = vrot.slane %v551, 1
        %v553 = vadd.f32 %v551, %v552
        %v554 = vsel %vm455, %v436, 0.0
        %v555 = vrot.slane %v554, 4
        %v556 = vadd.f32 %v554, %v555
        %v557 = vrot.slane %v556, 2
        %v558 = vadd.f32 %v556, %v557
        %v559 = vrot.slane %v558, 1
        %v560 = vadd.f32 %v558, %v559
        %v561 = vsel %vm455, %v438, 0.0
        %v562 = vrot.slane %v561, 4
        %v563 = vadd.f32 %v561, %v562
        %v564 = vrot.slane %v563, 2
        %v565 = vadd.f32 %v563, %v564
        %v566 = vrot.slane %v565, 1
        %v567 = vadd.f32 %v565, %v566
        %v568 = vrcp.pop 2.0
        %v569 = vmul.f32 %v462, %v568
        %v570 = vmul.f32 %v469, %v568
        %v571 = vmul.f32 %v476, %v568
        %v572 = vmul.f32 %v483, %v568
        %v573 = vmul.f32 %v490, %v568
        %v574 = vmul.f32 %v497, %v568
        %v575 = vmul.f32 %v504, %v568
        %v576 = vmul.f32 %v511, %v568
        %v577 = vmul.f32 %v518, %v568
        %v578 = vmul.f32 %v525, %v568
        %v579 = vmul.f32 %v532, %v568
        %v580 = vmul.f32 %v539, %v568
        %v581 = vmul.f32 %v546, %v568
        %v582 = vmul.f32 %v553, %v568
        %v583 = vmul.f32 %v560, %v568
        %v584 = vmul.f32 %v567, %v568
        %v601 = vcombine.low %v569, %v570
        %v602 = vcombine.low %v571, %v572
        %v603 = vcombine.low %v573, %v574
        %v604 = vcombine.low %v575, %v576
        %v606 = vunpack.c.l.s4 1966171168
        %v607 = vunpack.c.0.s8 %v606
        %v608 = vlaneseq
        %v609 = vshrl.u32 %v608, 7
        %v610 = vsub.s32 %v607, %v609
        %v611 = vrot.slane %v601, %v610
        %v613 = vunpack.c.l.s4 1966171168
        %v614 = vunpack.c.0.s8 %v613
        %v615 = vlaneseq
        %v616 = vshrl.u32 %v615, 7
        %v617 = vsub.s32 %v614, %v616
        %v618 = vrot.slane %v602, %v617
        %v620 = vunpack.c.l.s4 1966171168
        %v621 = vunpack.c.0.s8 %v620
        %v622 = vlaneseq
        %v623 = vshrl.u32 %v622, 7
        %v624 = vsub.s32 %v621, %v623
        %v625 = vrot.slane %v603, %v624
        %v627 = vunpack.c.l.s4 1966171168
        %v628 = vunpack.c.0.s8 %v627
        %v629 = vlaneseq
        %v630 = vshrl.u32 %v629, 7
        %v631 = vsub.s32 %v628, %v630
        %v632 = vrot.slane %v604, %v631
        %v633 = vcombine.low %v611, %v618
        %v634 = vcombine.low %v625, %v632
        %v636 = vunpack.c.l.s4 1966171168
        %v637 = vunpack.c.0.s8 %v636
        %v638 = vlaneseq
        %v639 = vshrl.u32 %v638, 7
        %v640 = vsub.s32 %v637, %v639
        %v641 = vrot.slane %v633, %v640
        %v643 = vunpack.c.l.s4 1966171168
        %v644 = vunpack.c.0.s8 %v643
        %v645 = vlaneseq
        %v646 = vshrl.u32 %v645, 7
        %v647 = vsub.s32 %v644, %v646
        %v648 = vrot.slane %v634, %v647
        %v649 = vcombine.low %v641, %v648
        %v650 = vcombine.low %v577, %v578
        %v651 = vcombine.low %v579, %v580
        %v652 = vcombine.low %v581, %v582
        %v653 = vcombine.low %v583, %v584
        %v655 = vunpack.c.l.s4 1966171168
        %v656 = vunpack.c.0.s8 %v655
        %v657 = vlaneseq
        %v658 = vshrl.u32 %v657, 7
        %v659 = vsub.s32 %v656, %v658
        %v660 = vrot.slane %v650, %v659
        %v662 = vunpack.c.l.s4 1966171168
        %v663 = vunpack.c.0.s8 %v662
        %v664 = vlaneseq
        %v665 = vshrl.u32 %v664, 7
        %v666 = vsub.s32 %v663, %v665
        %v667 = vrot.slane %v651, %v666
        %v669 = vunpack.c.l.s4 1966171168
        %v670 = vunpack.c.0.s8 %v669
        %v671 = vlaneseq
        %v672 = vshrl.u32 %v671, 7
        %v673 = vsub.s32 %v670, %v672
        %v674 = vrot.slane %v652, %v673
        %v676 = vunpack.c.l.s4 1966171168
        %v677 = vunpack.c.0.s8 %v676
        %v678 = vlaneseq
        %v679 = vshrl.u32 %v678, 7
        %v680 = vsub.s32 %v677, %v679
        %v681 = vrot.slane %v653, %v680
        %v682 = vcombine.low %v660, %v667
        %v683 = vcombine.low %v674, %v681
        %v685 = vunpack.c.l.s4 1966171168
        %v686 = vunpack.c.0.s8 %v685
        %v687 = vlaneseq
        %v688 = vshrl.u32 %v687, 7
        %v689 = vsub.s32 %v686, %v688
        %v690 = vrot.slane %v682, %v689
        %v692 = vunpack.c.l.s4 1966171168
        %v693 = vunpack.c.0.s8 %v692
        %v694 = vlaneseq
        %v695 = vshrl.u32 %v694, 7
        %v696 = vsub.s32 %v693, %v695
        %v697 = vrot.slane %v683, %v696
        %v698 = vcombine.low %v690, %v697
        %701 = vst [vmem:[%s354] sm:$0xff] %v649
        %702 = vst [vmem:[%s354 + $0x8] sm:$0xff] %v698
        %p703 = scmp.eq.s32.totalorder %s31, 0
        // Predicated region
        $region53: #{net100_forward.1} parent=35 // pred_check
          %p704 = pneg %p703
        $region54: #{net100_forward.1} parent=35 // pred_check_branch
          %706 = sbr.rel (%p704) target = $region56
        $region55: #{net100_forward.1} parent=35 // pred_region
          %707 = vst [vmem:[#allocation2] sm:$0xff] 0.0
          %708 = vst [vmem:[#allocation2 + $0x8] sm:$0xff] 0.0
        $region56: #{net100_forward.1} parent=35 // pred_fallthru
          _
        %v709 = vld [vmem:[#allocation2] sm:$0xff]
        %v710 = vld [vmem:[#allocation2 + $0x8] sm:$0xff]
        %v711 = vpack.c.bf16 %v378, %v378
        %v712 = vpack.c.bf16 %v386, %v386
        %v713 = vpack.c.bf16 %v385, %v385
        %v714 = vpack.c.bf16 %v387, %v387
        %v715 = vpack.c.bf16 %v395, %v395
        %v716 = vpack.c.bf16 %v403, %v403
        %v717 = vpack.c.bf16 %v402, %v402
        %v718 = vpack.c.bf16 %v404, %v404
        %v719 = vpack.c.bf16 %v412, %v412
        %v720 = vpack.c.bf16 %v420, %v420
        %v721 = vpack.c.bf16 %v419, %v419
        %v722 = vpack.c.bf16 %v421, %v421
        %v723 = vpack.c.bf16 %v429, %v429
        %v724 = vpack.c.bf16 %v437, %v437
        %v725 = vpack.c.bf16 %v436, %v436
        %v726 = vpack.c.bf16 %v438, %v438
        %v727 = vld [vmem:[%s315] sm:$0xff]
        %v728 = vld [vmem:[%s315 + $0x8] sm:$0xff]
        %v729 = vld [vmem:[%s315 + $0x10] sm:$0xff]
        %v730 = vld [vmem:[%s315 + $0x18] sm:$0xff]
        %v731 = vld [vmem:[%s315 + $0x20] sm:$0xff]
        %v732 = vld [vmem:[%s315 + $0x28] sm:$0xff]
        %v733 = vld [vmem:[%s315 + $0x30] sm:$0xff]
        %v734 = vld [vmem:[%s315 + $0x38] sm:$0xff]
        %v735 = vld [vmem:[%s315 + $0x40] sm:$0xff]
        %v736 = vld [vmem:[%s315 + $0x48] sm:$0xff]
        %v737 = vld [vmem:[%s315 + $0x50] sm:$0xff]
        %v738 = vld [vmem:[%s315 + $0x58] sm:$0xff]
        %v739 = vld [vmem:[%s315 + $0x60] sm:$0xff]
        %v740 = vld [vmem:[%s315 + $0x68] sm:$0xff]
        %v741 = vld [vmem:[%s315 + $0x70] sm:$0xff]
        %v742 = vld [vmem:[%s315 + $0x78] sm:$0xff]
        %v743 = vld [vmem:[%s315 + $0x80] sm:$0xff]
        %v744 = vld [vmem:[%s315 + $0x88] sm:$0xff]
        %v745 = vld [vmem:[%s315 + $0x90] sm:$0xff]
        %v746 = vld [vmem:[%s315 + $0x98] sm:$0xff]
        %v747 = vld [vmem:[%s315 + $0xa0] sm:$0xff]
        %v748 = vld [vmem:[%s315 + $0xa8] sm:$0xff]
        %v749 = vld [vmem:[%s315 + $0xb0] sm:$0xff]
        %v750 = vld [vmem:[%s315 + $0xb8] sm:$0xff]
        %v751 = vld [vmem:[%s315 + $0xc0] sm:$0xff]
        %v752 = vld [vmem:[%s315 + $0xc8] sm:$0xff]
        %v753 = vld [vmem:[%s315 + $0xd0] sm:$0xff]
        %v754 = vld [vmem:[%s315 + $0xd8] sm:$0xff]
        %v755 = vld [vmem:[%s315 + $0xe0] sm:$0xff]
        %v756 = vld [vmem:[%s315 + $0xe8] sm:$0xff]
        %v757 = vld [vmem:[%s315 + $0xf0] sm:$0xff]
        %v758 = vld [vmem:[%s315 + $0xf8] sm:$0xff]
        %v759 = vld [vmem:[%s315 + $0x100] sm:$0xff]
        %v760 = vld [vmem:[%s315 + $0x108] sm:$0xff]
        %v761 = vld [vmem:[%s315 + $0x110] sm:$0xff]
        %v762 = vld [vmem:[%s315 + $0x118] sm:$0xff]
        %v763 = vld [vmem:[%s315 + $0x120] sm:$0xff]
        %v764 = vld [vmem:[%s315 + $0x128] sm:$0xff]
        %v765 = vld [vmem:[%s315 + $0x130] sm:$0xff]
        %v766 = vld [vmem:[%s315 + $0x138] sm:$0xff]
        %v767 = vld [vmem:[%s315 + $0x140] sm:$0xff]
        %v768 = vld [vmem:[%s315 + $0x148] sm:$0xff]
        %v769 = vld [vmem:[%s315 + $0x150] sm:$0xff]
        %v770 = vld [vmem:[%s315 + $0x158] sm:$0xff]
        %v771 = vld [vmem:[%s315 + $0x160] sm:$0xff]
        %v772 = vld [vmem:[%s315 + $0x168] sm:$0xff]
        %v773 = vld [vmem:[%s315 + $0x170] sm:$0xff]
        %v774 = vld [vmem:[%s315 + $0x178] sm:$0xff]
        %v775 = vld [vmem:[%s315 + $0x180] sm:$0xff]
        %v776 = vld [vmem:[%s315 + $0x188] sm:$0xff]
        %v777 = vld [vmem:[%s315 + $0x190] sm:$0xff]
        %v778 = vld [vmem:[%s315 + $0x198] sm:$0xff]
        %v779 = vld [vmem:[%s315 + $0x1a0] sm:$0xff]
        %v780 = vld [vmem:[%s315 + $0x1a8] sm:$0xff]
        %v781 = vld [vmem:[%s315 + $0x1b0] sm:$0xff]
        %v782 = vld [vmem:[%s315 + $0x1b8] sm:$0xff]
        %v783 = vld [vmem:[%s315 + $0x1c0] sm:$0xff]
        %v784 = vld [vmem:[%s315 + $0x1c8] sm:$0xff]
        %v785 = vld [vmem:[%s315 + $0x1d0] sm:$0xff]
        %v786 = vld [vmem:[%s315 + $0x1d8] sm:$0xff]
        %v787 = vld [vmem:[%s315 + $0x1e0] sm:$0xff]
        %v788 = vld [vmem:[%s315 + $0x1e8] sm:$0xff]
        %v789 = vld [vmem:[%s315 + $0x1f0] sm:$0xff]
        %v790 = vld [vmem:[%s315 + $0x1f8] sm:$0xff]
        %v791 = vld [vmem:[%s315 + $0x200] sm:$0xff]
        %v792 = vld [vmem:[%s315 + $0x208] sm:$0xff]
        %v793 = vld [vmem:[%s315 + $0x210] sm:$0xff]
        %v794 = vld [vmem:[%s315 + $0x218] sm:$0xff]
        %v795 = vld [vmem:[%s315 + $0x220] sm:$0xff]
        %v796 = vld [vmem:[%s315 + $0x228] sm:$0xff]
        %v797 = vld [vmem:[%s315 + $0x230] sm:$0xff]
        %v798 = vld [vmem:[%s315 + $0x238] sm:$0xff]
        %v799 = vld [vmem:[%s315 + $0x240] sm:$0xff]
        %v800 = vld [vmem:[%s315 + $0x248] sm:$0xff]
        %v801 = vld [vmem:[%s315 + $0x250] sm:$0xff]
        %v802 = vld [vmem:[%s315 + $0x258] sm:$0xff]
        %v803 = vld [vmem:[%s315 + $0x260] sm:$0xff]
        %v804 = vld [vmem:[%s315 + $0x268] sm:$0xff]
        %v805 = vld [vmem:[%s315 + $0x270] sm:$0xff]
        %v806 = vld [vmem:[%s315 + $0x278] sm:$0xff]
        %v807 = vld [vmem:[%s315 + $0x280] sm:$0xff]
        %v808 = vld [vmem:[%s315 + $0x288] sm:$0xff]
        %v809 = vld [vmem:[%s315 + $0x290] sm:$0xff]
        %v810 = vld [vmem:[%s315 + $0x298] sm:$0xff]
        %v811 = vld [vmem:[%s315 + $0x2a0] sm:$0xff]
        %v812 = vld [vmem:[%s315 + $0x2a8] sm:$0xff]
        %v813 = vld [vmem:[%s315 + $0x2b0] sm:$0xff]
        %v814 = vld [vmem:[%s315 + $0x2b8] sm:$0xff]
        %v815 = vld [vmem:[%s315 + $0x2c0] sm:$0xff]
        %v816 = vld [vmem:[%s315 + $0x2c8] sm:$0xff]
        %v817 = vld [vmem:[%s315 + $0x2d0] sm:$0xff]
        %v818 = vld [vmem:[%s315 + $0x2d8] sm:$0xff]
        %v819 = vld [vmem:[%s315 + $0x2e0] sm:$0xff]
        %v820 = vld [vmem:[%s315 + $0x2e8] sm:$0xff]
        %v821 = vld [vmem:[%s315 + $0x2f0] sm:$0xff]
        %v822 = vld [vmem:[%s315 + $0x2f8] sm:$0xff]
        %v823 = vld [vmem:[%s315 + $0x300] sm:$0xff]
        %v824 = vld [vmem:[%s315 + $0x308] sm:$0xff]
        %v825 = vld [vmem:[%s315 + $0x310] sm:$0xff]
        %v826 = vld [vmem:[%s315 + $0x318] sm:$0xff]
        %v827 = vld [vmem:[%s315 + $0x320] sm:$0xff]
        %v828 = vld [vmem:[%s315 + $0x328] sm:$0xff]
        %v829 = vld [vmem:[%s315 + $0x330] sm:$0xff]
        %v830 = vld [vmem:[%s315 + $0x338] sm:$0xff]
        %v831 = vld [vmem:[%s315 + $0x340] sm:$0xff]
        %v832 = vld [vmem:[%s315 + $0x348] sm:$0xff]
        %v833 = vld [vmem:[%s315 + $0x350] sm:$0xff]
        %v834 = vld [vmem:[%s315 + $0x358] sm:$0xff]
        %v835 = vld [vmem:[%s315 + $0x360] sm:$0xff]
        %v836 = vld [vmem:[%s315 + $0x368] sm:$0xff]
        %v837 = vld [vmem:[%s315 + $0x370] sm:$0xff]
        %v838 = vld [vmem:[%s315 + $0x378] sm:$0xff]
        %v839 = vld [vmem:[%s315 + $0x380] sm:$0xff]
        %v840 = vld [vmem:[%s315 + $0x388] sm:$0xff]
        %v841 = vld [vmem:[%s315 + $0x390] sm:$0xff]
        %v842 = vld [vmem:[%s315 + $0x398] sm:$0xff]
        %v843 = vld [vmem:[%s315 + $0x3a0] sm:$0xff]
        %v844 = vld [vmem:[%s315 + $0x3a8] sm:$0xff]
        %v845 = vld [vmem:[%s315 + $0x3b0] sm:$0xff]
        %v846 = vld [vmem:[%s315 + $0x3b8] sm:$0xff]
        %v847 = vld [vmem:[%s315 + $0x3c0] sm:$0xff]
        %v848 = vld [vmem:[%s315 + $0x3c8] sm:$0xff]
        %v849 = vld [vmem:[%s315 + $0x3d0] sm:$0xff]
        %v850 = vld [vmem:[%s315 + $0x3d8] sm:$0xff]
        %v851 = vld [vmem:[%s315 + $0x3e0] sm:$0xff]
        %v852 = vld [vmem:[%s315 + $0x3e8] sm:$0xff]
        %v853 = vld [vmem:[%s315 + $0x3f0] sm:$0xff]
        %v854 = vld [vmem:[%s315 + $0x3f8] sm:$0xff]
        %v855 = vld [vmem:[%s315 + $0x400] sm:$0xff]
        %v856 = vld [vmem:[%s315 + $0x408] sm:$0xff]
        %v857 = vld [vmem:[%s315 + $0x410] sm:$0xff]
        %v858 = vld [vmem:[%s315 + $0x418] sm:$0xff]
        %v859 = vld [vmem:[%s315 + $0x420] sm:$0xff]
        %v860 = vld [vmem:[%s315 + $0x428] sm:$0xff]
        %v861 = vld [vmem:[%s315 + $0x430] sm:$0xff]
        %v862 = vld [vmem:[%s315 + $0x438] sm:$0xff]
        %v863 = vld [vmem:[%s315 + $0x440] sm:$0xff]
        %v864 = vld [vmem:[%s315 + $0x448] sm:$0xff]
        %v865 = vld [vmem:[%s315 + $0x450] sm:$0xff]
        %v866 = vld [vmem:[%s315 + $0x458] sm:$0xff]
        %v867 = vld [vmem:[%s315 + $0x460] sm:$0xff]
        %v868 = vld [vmem:[%s315 + $0x468] sm:$0xff]
        %v869 = vld [vmem:[%s315 + $0x470] sm:$0xff]
        %v870 = vld [vmem:[%s315 + $0x478] sm:$0xff]
        %v871 = vld [vmem:[%s315 + $0x480] sm:$0xff]
        %v872 = vld [vmem:[%s315 + $0x488] sm:$0xff]
        %v873 = vld [vmem:[%s315 + $0x490] sm:$0xff]
        %v874 = vld [vmem:[%s315 + $0x498] sm:$0xff]
        %v875 = vld [vmem:[%s315 + $0x4a0] sm:$0xff]
        %v876 = vld [vmem:[%s315 + $0x4a8] sm:$0xff]
        %v877 = vld [vmem:[%s315 + $0x4b0] sm:$0xff]
        %v878 = vld [vmem:[%s315 + $0x4b8] sm:$0xff]
        %v879 = vld [vmem:[%s315 + $0x4c0] sm:$0xff]
        %v880 = vld [vmem:[%s315 + $0x4c8] sm:$0xff]
        %v881 = vld [vmem:[%s315 + $0x4d0] sm:$0xff]
        %v882 = vld [vmem:[%s315 + $0x4d8] sm:$0xff]
        %v883 = vld [vmem:[%s315 + $0x4e0] sm:$0xff]
        %v884 = vld [vmem:[%s315 + $0x4e8] sm:$0xff]
        %v885 = vld [vmem:[%s315 + $0x4f0] sm:$0xff]
        %v886 = vld [vmem:[%s315 + $0x4f8] sm:$0xff]
        %v887 = vld [vmem:[%s315 + $0x500] sm:$0xff]
        %v888 = vld [vmem:[%s315 + $0x508] sm:$0xff]
        %v889 = vld [vmem:[%s315 + $0x510] sm:$0xff]
        %v890 = vld [vmem:[%s315 + $0x518] sm:$0xff]
        %v891 = vld [vmem:[%s315 + $0x520] sm:$0xff]
        %v892 = vld [vmem:[%s315 + $0x528] sm:$0xff]
        %v893 = vld [vmem:[%s315 + $0x530] sm:$0xff]
        %v894 = vld [vmem:[%s315 + $0x538] sm:$0xff]
        %v895 = vld [vmem:[%s315 + $0x540] sm:$0xff]
        %v896 = vld [vmem:[%s315 + $0x548] sm:$0xff]
        %v897 = vld [vmem:[%s315 + $0x550] sm:$0xff]
        %v898 = vld [vmem:[%s315 + $0x558] sm:$0xff]
        %v899 = vld [vmem:[%s315 + $0x560] sm:$0xff]
        %v900 = vld [vmem:[%s315 + $0x568] sm:$0xff]
        %v901 = vld [vmem:[%s315 + $0x570] sm:$0xff]
        %v902 = vld [vmem:[%s315 + $0x578] sm:$0xff]
        %v903 = vld [vmem:[%s315 + $0x580] sm:$0xff]
        %v904 = vld [vmem:[%s315 + $0x588] sm:$0xff]
        %v905 = vld [vmem:[%s315 + $0x590] sm:$0xff]
        %v906 = vld [vmem:[%s315 + $0x598] sm:$0xff]
        %v907 = vld [vmem:[%s315 + $0x5a0] sm:$0xff]
        %v908 = vld [vmem:[%s315 + $0x5a8] sm:$0xff]
        %v909 = vld [vmem:[%s315 + $0x5b0] sm:$0xff]
        %v910 = vld [vmem:[%s315 + $0x5b8] sm:$0xff]
        %v911 = vld [vmem:[%s315 + $0x5c0] sm:$0xff]
        %v912 = vld [vmem:[%s315 + $0x5c8] sm:$0xff]
        %v913 = vld [vmem:[%s315 + $0x5d0] sm:$0xff]
        %v914 = vld [vmem:[%s315 + $0x5d8] sm:$0xff]
        %v915 = vld [vmem:[%s315 + $0x5e0] sm:$0xff]
        %v916 = vld [vmem:[%s315 + $0x5e8] sm:$0xff]
        %v917 = vld [vmem:[%s315 + $0x5f0] sm:$0xff]
        %v918 = vld [vmem:[%s315 + $0x5f8] sm:$0xff]
        %v919 = vld [vmem:[%s315 + $0x600] sm:$0xff]
        %v920 = vld [vmem:[%s315 + $0x608] sm:$0xff]
        %v921 = vld [vmem:[%s315 + $0x610] sm:$0xff]
        %v922 = vld [vmem:[%s315 + $0x618] sm:$0xff]
        %v923 = vld [vmem:[%s315 + $0x620] sm:$0xff]
        %v924 = vld [vmem:[%s315 + $0x628] sm:$0xff]
        %v925 = vld [vmem:[%s315 + $0x630] sm:$0xff]
        %v926 = vld [vmem:[%s315 + $0x638] sm:$0xff]
        %v927 = vld [vmem:[%s315 + $0x640] sm:$0xff]
        %v928 = vld [vmem:[%s315 + $0x648] sm:$0xff]
        %v929 = vld [vmem:[%s315 + $0x650] sm:$0xff]
        %v930 = vld [vmem:[%s315 + $0x658] sm:$0xff]
        %v931 = vld [vmem:[%s315 + $0x660] sm:$0xff]
        %v932 = vld [vmem:[%s315 + $0x668] sm:$0xff]
        %v933 = vld [vmem:[%s315 + $0x670] sm:$0xff]
        %v934 = vld [vmem:[%s315 + $0x678] sm:$0xff]
        %v935 = vld [vmem:[%s315 + $0x680] sm:$0xff]
        %v936 = vld [vmem:[%s315 + $0x688] sm:$0xff]
        %v937 = vld [vmem:[%s315 + $0x690] sm:$0xff]
        %v938 = vld [vmem:[%s315 + $0x698] sm:$0xff]
        %v939 = vld [vmem:[%s315 + $0x6a0] sm:$0xff]
        %v940 = vld [vmem:[%s315 + $0x6a8] sm:$0xff]
        %v941 = vld [vmem:[%s315 + $0x6b0] sm:$0xff]
        %v942 = vld [vmem:[%s315 + $0x6b8] sm:$0xff]
        %v943 = vld [vmem:[%s315 + $0x6c0] sm:$0xff]
        %v944 = vld [vmem:[%s315 + $0x6c8] sm:$0xff]
        %v945 = vld [vmem:[%s315 + $0x6d0] sm:$0xff]
        %v946 = vld [vmem:[%s315 + $0x6d8] sm:$0xff]
        %v947 = vld [vmem:[%s315 + $0x6e0] sm:$0xff]
        %v948 = vld [vmem:[%s315 + $0x6e8] sm:$0xff]
        %v949 = vld [vmem:[%s315 + $0x6f0] sm:$0xff]
        %v950 = vld [vmem:[%s315 + $0x6f8] sm:$0xff]
        %v951 = vld [vmem:[%s315 + $0x700] sm:$0xff]
        %v952 = vld [vmem:[%s315 + $0x708] sm:$0xff]
        %v953 = vld [vmem:[%s315 + $0x710] sm:$0xff]
        %v954 = vld [vmem:[%s315 + $0x718] sm:$0xff]
        %v955 = vld [vmem:[%s315 + $0x720] sm:$0xff]
        %v956 = vld [vmem:[%s315 + $0x728] sm:$0xff]
        %v957 = vld [vmem:[%s315 + $0x730] sm:$0xff]
        %v958 = vld [vmem:[%s315 + $0x738] sm:$0xff]
        %v959 = vld [vmem:[%s315 + $0x740] sm:$0xff]
        %v960 = vld [vmem:[%s315 + $0x748] sm:$0xff]
        %v961 = vld [vmem:[%s315 + $0x750] sm:$0xff]
        %v962 = vld [vmem:[%s315 + $0x758] sm:$0xff]
        %v963 = vld [vmem:[%s315 + $0x760] sm:$0xff]
        %v964 = vld [vmem:[%s315 + $0x768] sm:$0xff]
        %v965 = vld [vmem:[%s315 + $0x770] sm:$0xff]
        %v966 = vld [vmem:[%s315 + $0x778] sm:$0xff]
        %v967 = vld [vmem:[%s315 + $0x780] sm:$0xff]
        %v968 = vld [vmem:[%s315 + $0x788] sm:$0xff]
        %v969 = vld [vmem:[%s315 + $0x790] sm:$0xff]
        %v970 = vld [vmem:[%s315 + $0x798] sm:$0xff]
        %v971 = vld [vmem:[%s315 + $0x7a0] sm:$0xff]
        %v972 = vld [vmem:[%s315 + $0x7a8] sm:$0xff]
        %v973 = vld [vmem:[%s315 + $0x7b0] sm:$0xff]
        %v974 = vld [vmem:[%s315 + $0x7b8] sm:$0xff]
        %v975 = vld [vmem:[%s315 + $0x7c0] sm:$0xff]
        %v976 = vld [vmem:[%s315 + $0x7c8] sm:$0xff]
        %v977 = vld [vmem:[%s315 + $0x7d0] sm:$0xff]
        %v978 = vld [vmem:[%s315 + $0x7d8] sm:$0xff]
        %v979 = vld [vmem:[%s315 + $0x7e0] sm:$0xff]
        %v980 = vld [vmem:[%s315 + $0x7e8] sm:$0xff]
        %v981 = vld [vmem:[%s315 + $0x7f0] sm:$0xff]
        %v982 = vld [vmem:[%s315 + $0x7f8] sm:$0xff]
        %v983 = vld [vmem:[%s315 + $0x800] sm:$0xff]
        %v984 = vld [vmem:[%s315 + $0x808] sm:$0xff]
        %v985 = vld [vmem:[%s315 + $0x810] sm:$0xff]
        %v986 = vld [vmem:[%s315 + $0x818] sm:$0xff]
        %v987 = vld [vmem:[%s315 + $0x820] sm:$0xff]
        %v988 = vld [vmem:[%s315 + $0x828] sm:$0xff]
        %v989 = vld [vmem:[%s315 + $0x830] sm:$0xff]
        %v990 = vld [vmem:[%s315 + $0x838] sm:$0xff]
        %v991 = vld [vmem:[%s315 + $0x840] sm:$0xff]
        %v992 = vld [vmem:[%s315 + $0x848] sm:$0xff]
        %v993 = vld [vmem:[%s315 + $0x850] sm:$0xff]
        %v994 = vld [vmem:[%s315 + $0x858] sm:$0xff]
        %v995 = vld [vmem:[%s315 + $0x860] sm:$0xff]
        %v996 = vld [vmem:[%s315 + $0x868] sm:$0xff]
        %v997 = vld [vmem:[%s315 + $0x870] sm:$0xff]
        %v998 = vld [vmem:[%s315 + $0x878] sm:$0xff]
        %v999 = vld [vmem:[%s315 + $0x880] sm:$0xff]
        %v1000 = vld [vmem:[%s315 + $0x888] sm:$0xff]
        %v1001 = vld [vmem:[%s315 + $0x890] sm:$0xff]
        %v1002 = vld [vmem:[%s315 + $0x898] sm:$0xff]
        %v1003 = vld [vmem:[%s315 + $0x8a0] sm:$0xff]
        %v1004 = vld [vmem:[%s315 + $0x8a8] sm:$0xff]
        %v1005 = vld [vmem:[%s315 + $0x8b0] sm:$0xff]
        %v1006 = vld [vmem:[%s315 + $0x8b8] sm:$0xff]
        %v1007 = vld [vmem:[%s315 + $0x8c0] sm:$0xff]
        %v1008 = vld [vmem:[%s315 + $0x8c8] sm:$0xff]
        %v1009 = vld [vmem:[%s315 + $0x8d0] sm:$0xff]
        %v1010 = vld [vmem:[%s315 + $0x8d8] sm:$0xff]
        %v1011 = vld [vmem:[%s315 + $0x8e0] sm:$0xff]
        %v1012 = vld [vmem:[%s315 + $0x8e8] sm:$0xff]
        %v1013 = vld [vmem:[%s315 + $0x8f0] sm:$0xff]
        %v1014 = vld [vmem:[%s315 + $0x8f8] sm:$0xff]
        %v1015 = vld [vmem:[%s315 + $0x900] sm:$0xff]
        %v1016 = vld [vmem:[%s315 + $0x908] sm:$0xff]
        %v1017 = vld [vmem:[%s315 + $0x910] sm:$0xff]
        %v1018 = vld [vmem:[%s315 + $0x918] sm:$0xff]
        %v1019 = vld [vmem:[%s315 + $0x920] sm:$0xff]
        %v1020 = vld [vmem:[%s315 + $0x928] sm:$0xff]
        %v1021 = vld [vmem:[%s315 + $0x930] sm:$0xff]
        %v1022 = vld [vmem:[%s315 + $0x938] sm:$0xff]
        %v1023 = vld [vmem:[%s315 + $0x940] sm:$0xff]
        %v1024 = vld [vmem:[%s315 + $0x948] sm:$0xff]
        %v1025 = vld [vmem:[%s315 + $0x950] sm:$0xff]
        %v1026 = vld [vmem:[%s315 + $0x958] sm:$0xff]
        %v1027 = vld [vmem:[%s315 + $0x960] sm:$0xff]
        %v1028 = vld [vmem:[%s315 + $0x968] sm:$0xff]
        %v1029 = vld [vmem:[%s315 + $0x970] sm:$0xff]
        %v1030 = vld [vmem:[%s315 + $0x978] sm:$0xff]
        %v1031 = vld [vmem:[%s315 + $0x980] sm:$0xff]
        %v1032 = vld [vmem:[%s315 + $0x988] sm:$0xff]
        %v1033 = vld [vmem:[%s315 + $0x990] sm:$0xff]
        %v1034 = vld [vmem:[%s315 + $0x998] sm:$0xff]
        %v1035 = vld [vmem:[%s315 + $0x9a0] sm:$0xff]
        %v1036 = vld [vmem:[%s315 + $0x9a8] sm:$0xff]
        %v1037 = vld [vmem:[%s315 + $0x9b0] sm:$0xff]
        %v1038 = vld [vmem:[%s315 + $0x9b8] sm:$0xff]
        %v1039 = vld [vmem:[%s315 + $0x9c0] sm:$0xff]
        %v1040 = vld [vmem:[%s315 + $0x9c8] sm:$0xff]
        %v1041 = vld [vmem:[%s315 + $0x9d0] sm:$0xff]
        %v1042 = vld [vmem:[%s315 + $0x9d8] sm:$0xff]
        %v1043 = vld [vmem:[%s315 + $0x9e0] sm:$0xff]
        %v1044 = vld [vmem:[%s315 + $0x9e8] sm:$0xff]
        %v1045 = vld [vmem:[%s315 + $0x9f0] sm:$0xff]
        %v1046 = vld [vmem:[%s315 + $0x9f8] sm:$0xff]
        %v1047 = vld [vmem:[%s315 + $0xa00] sm:$0xff]
        %v1048 = vld [vmem:[%s315 + $0xa08] sm:$0xff]
        %v1049 = vld [vmem:[%s315 + $0xa10] sm:$0xff]
        %v1050 = vld [vmem:[%s315 + $0xa18] sm:$0xff]
        %v1051 = vld [vmem:[%s315 + $0xa20] sm:$0xff]
        %v1052 = vld [vmem:[%s315 + $0xa28] sm:$0xff]
        %v1053 = vld [vmem:[%s315 + $0xa30] sm:$0xff]
        %v1054 = vld [vmem:[%s315 + $0xa38] sm:$0xff]
        %v1055 = vld [vmem:[%s315 + $0xa40] sm:$0xff]
        %v1056 = vld [vmem:[%s315 + $0xa48] sm:$0xff]
        %v1057 = vld [vmem:[%s315 + $0xa50] sm:$0xff]
        %v1058 = vld [vmem:[%s315 + $0xa58] sm:$0xff]
        %v1059 = vld [vmem:[%s315 + $0xa60] sm:$0xff]
        %v1060 = vld [vmem:[%s315 + $0xa68] sm:$0xff]
        %v1061 = vld [vmem:[%s315 + $0xa70] sm:$0xff]
        %v1062 = vld [vmem:[%s315 + $0xa78] sm:$0xff]
        %v1063 = vld [vmem:[%s315 + $0xa80] sm:$0xff]
        %v1064 = vld [vmem:[%s315 + $0xa88] sm:$0xff]
        %v1065 = vld [vmem:[%s315 + $0xa90] sm:$0xff]
        %v1066 = vld [vmem:[%s315 + $0xa98] sm:$0xff]
        %v1067 = vld [vmem:[%s315 + $0xaa0] sm:$0xff]
        %v1068 = vld [vmem:[%s315 + $0xaa8] sm:$0xff]
        %v1069 = vld [vmem:[%s315 + $0xab0] sm:$0xff]
        %v1070 = vld [vmem:[%s315 + $0xab8] sm:$0xff]
        %v1071 = vld [vmem:[%s315 + $0xac0] sm:$0xff]
        %v1072 = vld [vmem:[%s315 + $0xac8] sm:$0xff]
        %v1073 = vld [vmem:[%s315 + $0xad0] sm:$0xff]
        %v1074 = vld [vmem:[%s315 + $0xad8] sm:$0xff]
        %v1075 = vld [vmem:[%s315 + $0xae0] sm:$0xff]
        %v1076 = vld [vmem:[%s315 + $0xae8] sm:$0xff]
        %v1077 = vld [vmem:[%s315 + $0xaf0] sm:$0xff]
        %v1078 = vld [vmem:[%s315 + $0xaf8] sm:$0xff]
        %v1079 = vld [vmem:[%s315 + $0xb00] sm:$0xff]
        %v1080 = vld [vmem:[%s315 + $0xb08] sm:$0xff]
        %v1081 = vld [vmem:[%s315 + $0xb10] sm:$0xff]
        %v1082 = vld [vmem:[%s315 + $0xb18] sm:$0xff]
        %v1083 = vld [vmem:[%s315 + $0xb20] sm:$0xff]
        %v1084 = vld [vmem:[%s315 + $0xb28] sm:$0xff]
        %v1085 = vld [vmem:[%s315 + $0xb30] sm:$0xff]
        %v1086 = vld [vmem:[%s315 + $0xb38] sm:$0xff]
        %v1087 = vld [vmem:[%s315 + $0xb40] sm:$0xff]
        %v1088 = vld [vmem:[%s315 + $0xb48] sm:$0xff]
        %v1089 = vld [vmem:[%s315 + $0xb50] sm:$0xff]
        %v1090 = vld [vmem:[%s315 + $0xb58] sm:$0xff]
        %v1091 = vld [vmem:[%s315 + $0xb60] sm:$0xff]
        %v1092 = vld [vmem:[%s315 + $0xb68] sm:$0xff]
        %v1093 = vld [vmem:[%s315 + $0xb70] sm:$0xff]
        %v1094 = vld [vmem:[%s315 + $0xb78] sm:$0xff]
        %v1095 = vld [vmem:[%s315 + $0xb80] sm:$0xff]
        %v1096 = vld [vmem:[%s315 + $0xb88] sm:$0xff]
        %v1097 = vld [vmem:[%s315 + $0xb90] sm:$0xff]
        %v1098 = vld [vmem:[%s315 + $0xb98] sm:$0xff]
        %v1099 = vld [vmem:[%s315 + $0xba0] sm:$0xff]
        %v1100 = vld [vmem:[%s315 + $0xba8] sm:$0xff]
        %v1101 = vld [vmem:[%s315 + $0xbb0] sm:$0xff]
        %v1102 = vld [vmem:[%s315 + $0xbb8] sm:$0xff]
        %v1103 = vld [vmem:[%s315 + $0xbc0] sm:$0xff]
        %v1104 = vld [vmem:[%s315 + $0xbc8] sm:$0xff]
        %v1105 = vld [vmem:[%s315 + $0xbd0] sm:$0xff]
        %v1106 = vld [vmem:[%s315 + $0xbd8] sm:$0xff]
        %v1107 = vld [vmem:[%s315 + $0xbe0] sm:$0xff]
        %v1108 = vld [vmem:[%s315 + $0xbe8] sm:$0xff]
        %v1109 = vld [vmem:[%s315 + $0xbf0] sm:$0xff]
        %v1110 = vld [vmem:[%s315 + $0xbf8] sm:$0xff]
        %v1111 = vld [vmem:[%s315 + $0xc00] sm:$0xff]
        %v1112 = vld [vmem:[%s315 + $0xc08] sm:$0xff]
        %v1113 = vld [vmem:[%s315 + $0xc10] sm:$0xff]
        %v1114 = vld [vmem:[%s315 + $0xc18] sm:$0xff]
        %v1115 = vld [vmem:[%s315 + $0xc20] sm:$0xff]
        %v1116 = vld [vmem:[%s315 + $0xc28] sm:$0xff]
        %v1117 = vld [vmem:[%s315 + $0xc30] sm:$0xff]
        %v1118 = vld [vmem:[%s315 + $0xc38] sm:$0xff]
        %v1119 = vld [vmem:[%s315 + $0xc40] sm:$0xff]
        %v1120 = vld [vmem:[%s315 + $0xc48] sm:$0xff]
        %v1121 = vld [vmem:[%s315 + $0xc50] sm:$0xff]
        %v1122 = vld [vmem:[%s315 + $0xc58] sm:$0xff]
        %v1123 = vld [vmem:[%s315 + $0xc60] sm:$0xff]
        %v1124 = vld [vmem:[%s315 + $0xc68] sm:$0xff]
        %v1125 = vld [vmem:[%s315 + $0xc70] sm:$0xff]
        %v1126 = vld [vmem:[%s315 + $0xc78] sm:$0xff]
        %v1127 = vld [vmem:[%s315 + $0xc80] sm:$0xff]
        %v1128 = vld [vmem:[%s315 + $0xc88] sm:$0xff]
        %v1129 = vld [vmem:[%s315 + $0xc90] sm:$0xff]
        %v1130 = vld [vmem:[%s315 + $0xc98] sm:$0xff]
        %v1131 = vld [vmem:[%s315 + $0xca0] sm:$0xff]
        %v1132 = vld [vmem:[%s315 + $0xca8] sm:$0xff]
        %v1133 = vld [vmem:[%s315 + $0xcb0] sm:$0xff]
        %v1134 = vld [vmem:[%s315 + $0xcb8] sm:$0xff]
        %v1135 = vld [vmem:[%s315 + $0xcc0] sm:$0xff]
        %v1136 = vld [vmem:[%s315 + $0xcc8] sm:$0xff]
        %v1137 = vld [vmem:[%s315 + $0xcd0] sm:$0xff]
        %v1138 = vld [vmem:[%s315 + $0xcd8] sm:$0xff]
        %v1139 = vld [vmem:[%s315 + $0xce0] sm:$0xff]
        %v1140 = vld [vmem:[%s315 + $0xce8] sm:$0xff]
        %v1141 = vld [vmem:[%s315 + $0xcf0] sm:$0xff]
        %v1142 = vld [vmem:[%s315 + $0xcf8] sm:$0xff]
        %v1143 = vld [vmem:[%s315 + $0xd00] sm:$0xff]
        %v1144 = vld [vmem:[%s315 + $0xd08] sm:$0xff]
        %v1145 = vld [vmem:[%s315 + $0xd10] sm:$0xff]
        %v1146 = vld [vmem:[%s315 + $0xd18] sm:$0xff]
        %v1147 = vld [vmem:[%s315 + $0xd20] sm:$0xff]
        %v1148 = vld [vmem:[%s315 + $0xd28] sm:$0xff]
        %v1149 = vld [vmem:[%s315 + $0xd30] sm:$0xff]
        %v1150 = vld [vmem:[%s315 + $0xd38] sm:$0xff]
        %v1151 = vld [vmem:[%s315 + $0xd40] sm:$0xff]
        %v1152 = vld [vmem:[%s315 + $0xd48] sm:$0xff]
        %v1153 = vld [vmem:[%s315 + $0xd50] sm:$0xff]
        %v1154 = vld [vmem:[%s315 + $0xd58] sm:$0xff]
        %v1155 = vld [vmem:[%s315 + $0xd60] sm:$0xff]
        %v1156 = vld [vmem:[%s315 + $0xd68] sm:$0xff]
        %v1157 = vld [vmem:[%s315 + $0xd70] sm:$0xff]
        %v1158 = vld [vmem:[%s315 + $0xd78] sm:$0xff]
        %v1159 = vld [vmem:[%s315 + $0xd80] sm:$0xff]
        %v1160 = vld [vmem:[%s315 + $0xd88] sm:$0xff]
        %v1161 = vld [vmem:[%s315 + $0xd90] sm:$0xff]
        %v1162 = vld [vmem:[%s315 + $0xd98] sm:$0xff]
        %v1163 = vld [vmem:[%s315 + $0xda0] sm:$0xff]
        %v1164 = vld [vmem:[%s315 + $0xda8] sm:$0xff]
        %v1165 = vld [vmem:[%s315 + $0xdb0] sm:$0xff]
        %v1166 = vld [vmem:[%s315 + $0xdb8] sm:$0xff]
        %v1167 = vld [vmem:[%s315 + $0xdc0] sm:$0xff]
        %v1168 = vld [vmem:[%s315 + $0xdc8] sm:$0xff]
        %v1169 = vld [vmem:[%s315 + $0xdd0] sm:$0xff]
        %v1170 = vld [vmem:[%s315 + $0xdd8] sm:$0xff]
        %v1171 = vld [vmem:[%s315 + $0xde0] sm:$0xff]
        %v1172 = vld [vmem:[%s315 + $0xde8] sm:$0xff]
        %v1173 = vld [vmem:[%s315 + $0xdf0] sm:$0xff]
        %v1174 = vld [vmem:[%s315 + $0xdf8] sm:$0xff]
        %v1175 = vld [vmem:[%s315 + $0xe00] sm:$0xff]
        %v1176 = vld [vmem:[%s315 + $0xe08] sm:$0xff]
        %v1177 = vld [vmem:[%s315 + $0xe10] sm:$0xff]
        %v1178 = vld [vmem:[%s315 + $0xe18] sm:$0xff]
        %v1179 = vld [vmem:[%s315 + $0xe20] sm:$0xff]
        %v1180 = vld [vmem:[%s315 + $0xe28] sm:$0xff]
        %v1181 = vld [vmem:[%s315 + $0xe30] sm:$0xff]
        %v1182 = vld [vmem:[%s315 + $0xe38] sm:$0xff]
        %v1183 = vld [vmem:[%s315 + $0xe40] sm:$0xff]
        %v1184 = vld [vmem:[%s315 + $0xe48] sm:$0xff]
        %v1185 = vld [vmem:[%s315 + $0xe50] sm:$0xff]
        %v1186 = vld [vmem:[%s315 + $0xe58] sm:$0xff]
        %v1187 = vld [vmem:[%s315 + $0xe60] sm:$0xff]
        %v1188 = vld [vmem:[%s315 + $0xe68] sm:$0xff]
        %v1189 = vld [vmem:[%s315 + $0xe70] sm:$0xff]
        %v1190 = vld [vmem:[%s315 + $0xe78] sm:$0xff]
        %v1191 = vld [vmem:[%s315 + $0xe80] sm:$0xff]
        %v1192 = vld [vmem:[%s315 + $0xe88] sm:$0xff]
        %v1193 = vld [vmem:[%s315 + $0xe90] sm:$0xff]
        %v1194 = vld [vmem:[%s315 + $0xe98] sm:$0xff]
        %v1195 = vld [vmem:[%s315 + $0xea0] sm:$0xff]
        %v1196 = vld [vmem:[%s315 + $0xea8] sm:$0xff]
        %v1197 = vld [vmem:[%s315 + $0xeb0] sm:$0xff]
        %v1198 = vld [vmem:[%s315 + $0xeb8] sm:$0xff]
        %v1199 = vld [vmem:[%s315 + $0xec0] sm:$0xff]
        %v1200 = vld [vmem:[%s315 + $0xec8] sm:$0xff]
        %v1201 = vld [vmem:[%s315 + $0xed0] sm:$0xff]
        %v1202 = vld [vmem:[%s315 + $0xed8] sm:$0xff]
        %v1203 = vld [vmem:[%s315 + $0xee0] sm:$0xff]
        %v1204 = vld [vmem:[%s315 + $0xee8] sm:$0xff]
        %v1205 = vld [vmem:[%s315 + $0xef0] sm:$0xff]
        %v1206 = vld [vmem:[%s315 + $0xef8] sm:$0xff]
        %v1207 = vld [vmem:[%s315 + $0xf00] sm:$0xff]
        %v1208 = vld [vmem:[%s315 + $0xf08] sm:$0xff]
        %v1209 = vld [vmem:[%s315 + $0xf10] sm:$0xff]
        %v1210 = vld [vmem:[%s315 + $0xf18] sm:$0xff]
        %v1211 = vld [vmem:[%s315 + $0xf20] sm:$0xff]
        %v1212 = vld [vmem:[%s315 + $0xf28] sm:$0xff]
        %v1213 = vld [vmem:[%s315 + $0xf30] sm:$0xff]
        %v1214 = vld [vmem:[%s315 + $0xf38] sm:$0xff]
        %v1215 = vld [vmem:[%s315 + $0xf40] sm:$0xff]
        %v1216 = vld [vmem:[%s315 + $0xf48] sm:$0xff]
        %v1217 = vld [vmem:[%s315 + $0xf50] sm:$0xff]
        %v1218 = vld [vmem:[%s315 + $0xf58] sm:$0xff]
        %v1219 = vld [vmem:[%s315 + $0xf60] sm:$0xff]
        %v1220 = vld [vmem:[%s315 + $0xf68] sm:$0xff]
        %v1221 = vld [vmem:[%s315 + $0xf70] sm:$0xff]
        %v1222 = vld [vmem:[%s315 + $0xf78] sm:$0xff]
        %v1223 = vld [vmem:[%s315 + $0xf80] sm:$0xff]
        %v1224 = vld [vmem:[%s315 + $0xf88] sm:$0xff]
        %v1225 = vld [vmem:[%s315 + $0xf90] sm:$0xff]
        %v1226 = vld [vmem:[%s315 + $0xf98] sm:$0xff]
        %v1227 = vld [vmem:[%s315 + $0xfa0] sm:$0xff]
        %v1228 = vld [vmem:[%s315 + $0xfa8] sm:$0xff]
        %v1229 = vld [vmem:[%s315 + $0xfb0] sm:$0xff]
        %v1230 = vld [vmem:[%s315 + $0xfb8] sm:$0xff]
        %v1231 = vld [vmem:[%s315 + $0xfc0] sm:$0xff]
        %v1232 = vld [vmem:[%s315 + $0xfc8] sm:$0xff]
        %v1233 = vld [vmem:[%s315 + $0xfd0] sm:$0xff]
        %v1234 = vld [vmem:[%s315 + $0xfd8] sm:$0xff]
        %v1235 = vld [vmem:[%s315 + $0xfe0] sm:$0xff]
        %v1236 = vld [vmem:[%s315 + $0xfe8] sm:$0xff]
        %v1237 = vld [vmem:[%s315 + $0xff0] sm:$0xff]
        %v1238 = vld [vmem:[%s315 + $0xff8] sm:$0xff]
        %v1239 = vld [vmem:[%s315 + $0x1000] sm:$0xff]
        %v1240 = vld [vmem:[%s315 + $0x1008] sm:$0xff]
        %v1241 = vld [vmem:[%s315 + $0x1010] sm:$0xff]
        %v1242 = vld [vmem:[%s315 + $0x1018] sm:$0xff]
        %v1243 = vld [vmem:[%s315 + $0x1020] sm:$0xff]
        %v1244 = vld [vmem:[%s315 + $0x1028] sm:$0xff]
        %v1245 = vld [vmem:[%s315 + $0x1030] sm:$0xff]
        %v1246 = vld [vmem:[%s315 + $0x1038] sm:$0xff]
        %v1247 = vld [vmem:[%s315 + $0x1040] sm:$0xff]
        %v1248 = vld [vmem:[%s315 + $0x1048] sm:$0xff]
        %v1249 = vld [vmem:[%s315 + $0x1050] sm:$0xff]
        %v1250 = vld [vmem:[%s315 + $0x1058] sm:$0xff]
        %v1251 = vld [vmem:[%s315 + $0x1060] sm:$0xff]
        %v1252 = vld [vmem:[%s315 + $0x1068] sm:$0xff]
        %v1253 = vld [vmem:[%s315 + $0x1070] sm:$0xff]
        %v1254 = vld [vmem:[%s315 + $0x1078] sm:$0xff]
        %v1255 = vld [vmem:[%s315 + $0x1080] sm:$0xff]
        %v1256 = vld [vmem:[%s315 + $0x1088] sm:$0xff]
        %v1257 = vld [vmem:[%s315 + $0x1090] sm:$0xff]
        %v1258 = vld [vmem:[%s315 + $0x1098] sm:$0xff]
        %v1259 = vld [vmem:[%s315 + $0x10a0] sm:$0xff]
        %v1260 = vld [vmem:[%s315 + $0x10a8] sm:$0xff]
        %v1261 = vld [vmem:[%s315 + $0x10b0] sm:$0xff]
        %v1262 = vld [vmem:[%s315 + $0x10b8] sm:$0xff]
        %v1263 = vld [vmem:[%s315 + $0x10c0] sm:$0xff]
        %v1264 = vld [vmem:[%s315 + $0x10c8] sm:$0xff]
        %v1265 = vld [vmem:[%s315 + $0x10d0] sm:$0xff]
        %v1266 = vld [vmem:[%s315 + $0x10d8] sm:$0xff]
        %v1267 = vld [vmem:[%s315 + $0x10e0] sm:$0xff]
        %v1268 = vld [vmem:[%s315 + $0x10e8] sm:$0xff]
        %v1269 = vld [vmem:[%s315 + $0x10f0] sm:$0xff]
        %v1270 = vld [vmem:[%s315 + $0x10f8] sm:$0xff]
        %v1271 = vld [vmem:[%s315 + $0x1100] sm:$0xff]
        %v1272 = vld [vmem:[%s315 + $0x1108] sm:$0xff]
        %v1273 = vld [vmem:[%s315 + $0x1110] sm:$0xff]
        %v1274 = vld [vmem:[%s315 + $0x1118] sm:$0xff]
        %v1275 = vld [vmem:[%s315 + $0x1120] sm:$0xff]
        %v1276 = vld [vmem:[%s315 + $0x1128] sm:$0xff]
        %v1277 = vld [vmem:[%s315 + $0x1130] sm:$0xff]
        %v1278 = vld [vmem:[%s315 + $0x1138] sm:$0xff]
        %v1279 = vld [vmem:[%s315 + $0x1140] sm:$0xff]
        %v1280 = vld [vmem:[%s315 + $0x1148] sm:$0xff]
        %v1281 = vld [vmem:[%s315 + $0x1150] sm:$0xff]
        %v1282 = vld [vmem:[%s315 + $0x1158] sm:$0xff]
        %v1283 = vld [vmem:[%s315 + $0x1160] sm:$0xff]
        %v1284 = vld [vmem:[%s315 + $0x1168] sm:$0xff]
        %v1285 = vld [vmem:[%s315 + $0x1170] sm:$0xff]
        %v1286 = vld [vmem:[%s315 + $0x1178] sm:$0xff]
        %v1287 = vld [vmem:[%s315 + $0x1180] sm:$0xff]
        %v1288 = vld [vmem:[%s315 + $0x1188] sm:$0xff]
        %v1289 = vld [vmem:[%s315 + $0x1190] sm:$0xff]
        %v1290 = vld [vmem:[%s315 + $0x1198] sm:$0xff]
        %v1291 = vld [vmem:[%s315 + $0x11a0] sm:$0xff]
        %v1292 = vld [vmem:[%s315 + $0x11a8] sm:$0xff]
        %v1293 = vld [vmem:[%s315 + $0x11b0] sm:$0xff]
        %v1294 = vld [vmem:[%s315 + $0x11b8] sm:$0xff]
        %v1295 = vld [vmem:[%s315 + $0x11c0] sm:$0xff]
        %v1296 = vld [vmem:[%s315 + $0x11c8] sm:$0xff]
        %v1297 = vld [vmem:[%s315 + $0x11d0] sm:$0xff]
        %v1298 = vld [vmem:[%s315 + $0x11d8] sm:$0xff]
        %v1299 = vld [vmem:[%s315 + $0x11e0] sm:$0xff]
        %v1300 = vld [vmem:[%s315 + $0x11e8] sm:$0xff]
        %v1301 = vld [vmem:[%s315 + $0x11f0] sm:$0xff]
        %v1302 = vld [vmem:[%s315 + $0x11f8] sm:$0xff]
        %v1303 = vld [vmem:[%s315 + $0x1200] sm:$0xff]
        %v1304 = vld [vmem:[%s315 + $0x1208] sm:$0xff]
        %v1305 = vld [vmem:[%s315 + $0x1210] sm:$0xff]
        %v1306 = vld [vmem:[%s315 + $0x1218] sm:$0xff]
        %v1307 = vld [vmem:[%s315 + $0x1220] sm:$0xff]
        %v1308 = vld [vmem:[%s315 + $0x1228] sm:$0xff]
        %v1309 = vld [vmem:[%s315 + $0x1230] sm:$0xff]
        %v1310 = vld [vmem:[%s315 + $0x1238] sm:$0xff]
        %v1311 = vld [vmem:[%s315 + $0x1240] sm:$0xff]
        %v1312 = vld [vmem:[%s315 + $0x1248] sm:$0xff]
        %v1313 = vld [vmem:[%s315 + $0x1250] sm:$0xff]
        %v1314 = vld [vmem:[%s315 + $0x1258] sm:$0xff]
        %v1315 = vld [vmem:[%s315 + $0x1260] sm:$0xff]
        %v1316 = vld [vmem:[%s315 + $0x1268] sm:$0xff]
        %v1317 = vld [vmem:[%s315 + $0x1270] sm:$0xff]
        %v1318 = vld [vmem:[%s315 + $0x1278] sm:$0xff]
        %v1319 = vld [vmem:[%s315 + $0x1280] sm:$0xff]
        %v1320 = vld [vmem:[%s315 + $0x1288] sm:$0xff]
        %v1321 = vld [vmem:[%s315 + $0x1290] sm:$0xff]
        %v1322 = vld [vmem:[%s315 + $0x1298] sm:$0xff]
        %v1323 = vld [vmem:[%s315 + $0x12a0] sm:$0xff]
        %v1324 = vld [vmem:[%s315 + $0x12a8] sm:$0xff]
        %v1325 = vld [vmem:[%s315 + $0x12b0] sm:$0xff]
        %v1326 = vld [vmem:[%s315 + $0x12b8] sm:$0xff]
        %v1327 = vld [vmem:[%s315 + $0x12c0] sm:$0xff]
        %v1328 = vld [vmem:[%s315 + $0x12c8] sm:$0xff]
        %v1329 = vld [vmem:[%s315 + $0x12d0] sm:$0xff]
        %v1330 = vld [vmem:[%s315 + $0x12d8] sm:$0xff]
        %v1331 = vld [vmem:[%s315 + $0x12e0] sm:$0xff]
        %v1332 = vld [vmem:[%s315 + $0x12e8] sm:$0xff]
        %v1333 = vld [vmem:[%s315 + $0x12f0] sm:$0xff]
        %v1334 = vld [vmem:[%s315 + $0x12f8] sm:$0xff]
        %v1335 = vld [vmem:[%s315 + $0x1300] sm:$0xff]
        %v1336 = vld [vmem:[%s315 + $0x1308] sm:$0xff]
        %v1337 = vld [vmem:[%s315 + $0x1310] sm:$0xff]
        %v1338 = vld [vmem:[%s315 + $0x1318] sm:$0xff]
        %v1339 = vld [vmem:[%s315 + $0x1320] sm:$0xff]
        %v1340 = vld [vmem:[%s315 + $0x1328] sm:$0xff]
        %v1341 = vld [vmem:[%s315 + $0x1330] sm:$0xff]
        %v1342 = vld [vmem:[%s315 + $0x1338] sm:$0xff]
        %v1343 = vld [vmem:[%s315 + $0x1340] sm:$0xff]
        %v1344 = vld [vmem:[%s315 + $0x1348] sm:$0xff]
        %v1345 = vld [vmem:[%s315 + $0x1350] sm:$0xff]
        %v1346 = vld [vmem:[%s315 + $0x1358] sm:$0xff]
        %v1347 = vld [vmem:[%s315 + $0x1360] sm:$0xff]
        %v1348 = vld [vmem:[%s315 + $0x1368] sm:$0xff]
        %v1349 = vld [vmem:[%s315 + $0x1370] sm:$0xff]
        %v1350 = vld [vmem:[%s315 + $0x1378] sm:$0xff]
        %v1351 = vld [vmem:[%s315 + $0x1380] sm:$0xff]
        %v1352 = vld [vmem:[%s315 + $0x1388] sm:$0xff]
        %v1353 = vld [vmem:[%s315 + $0x1390] sm:$0xff]
        %v1354 = vld [vmem:[%s315 + $0x1398] sm:$0xff]
        %v1355 = vld [vmem:[%s315 + $0x13a0] sm:$0xff]
        %v1356 = vld [vmem:[%s315 + $0x13a8] sm:$0xff]
        %v1357 = vld [vmem:[%s315 + $0x13b0] sm:$0xff]
        %v1358 = vld [vmem:[%s315 + $0x13b8] sm:$0xff]
        %v1359 = vld [vmem:[%s315 + $0x13c0] sm:$0xff]
        %v1360 = vld [vmem:[%s315 + $0x13c8] sm:$0xff]
        %v1361 = vld [vmem:[%s315 + $0x13d0] sm:$0xff]
        %v1362 = vld [vmem:[%s315 + $0x13d8] sm:$0xff]
        %v1363 = vld [vmem:[%s315 + $0x13e0] sm:$0xff]
        %v1364 = vld [vmem:[%s315 + $0x13e8] sm:$0xff]
        %v1365 = vld [vmem:[%s315 + $0x13f0] sm:$0xff]
        %v1366 = vld [vmem:[%s315 + $0x13f8] sm:$0xff]
        %v1367 = vld [vmem:[%s315 + $0x1400] sm:$0xff]
        %v1368 = vld [vmem:[%s315 + $0x1408] sm:$0xff]
        %v1369 = vld [vmem:[%s315 + $0x1410] sm:$0xff]
        %v1370 = vld [vmem:[%s315 + $0x1418] sm:$0xff]
        %v1371 = vld [vmem:[%s315 + $0x1420] sm:$0xff]
        %v1372 = vld [vmem:[%s315 + $0x1428] sm:$0xff]
        %v1373 = vld [vmem:[%s315 + $0x1430] sm:$0xff]
        %v1374 = vld [vmem:[%s315 + $0x1438] sm:$0xff]
        %v1375 = vld [vmem:[%s315 + $0x1440] sm:$0xff]
        %v1376 = vld [vmem:[%s315 + $0x1448] sm:$0xff]
        %v1377 = vld [vmem:[%s315 + $0x1450] sm:$0xff]
        %v1378 = vld [vmem:[%s315 + $0x1458] sm:$0xff]
        %v1379 = vld [vmem:[%s315 + $0x1460] sm:$0xff]
        %v1380 = vld [vmem:[%s315 + $0x1468] sm:$0xff]
        %v1381 = vld [vmem:[%s315 + $0x1470] sm:$0xff]
        %v1382 = vld [vmem:[%s315 + $0x1478] sm:$0xff]
        %v1383 = vld [vmem:[%s315 + $0x1480] sm:$0xff]
        %v1384 = vld [vmem:[%s315 + $0x1488] sm:$0xff]
        %v1385 = vld [vmem:[%s315 + $0x1490] sm:$0xff]
        %v1386 = vld [vmem:[%s315 + $0x1498] sm:$0xff]
        %v1387 = vld [vmem:[%s315 + $0x14a0] sm:$0xff]
        %v1388 = vld [vmem:[%s315 + $0x14a8] sm:$0xff]
        %v1389 = vld [vmem:[%s315 + $0x14b0] sm:$0xff]
        %v1390 = vld [vmem:[%s315 + $0x14b8] sm:$0xff]
        %v1391 = vld [vmem:[%s315 + $0x14c0] sm:$0xff]
        %v1392 = vld [vmem:[%s315 + $0x14c8] sm:$0xff]
        %v1393 = vld [vmem:[%s315 + $0x14d0] sm:$0xff]
        %v1394 = vld [vmem:[%s315 + $0x14d8] sm:$0xff]
        %v1395 = vld [vmem:[%s315 + $0x14e0] sm:$0xff]
        %v1396 = vld [vmem:[%s315 + $0x14e8] sm:$0xff]
        %v1397 = vld [vmem:[%s315 + $0x14f0] sm:$0xff]
        %v1398 = vld [vmem:[%s315 + $0x14f8] sm:$0xff]
        %v1399 = vld [vmem:[%s315 + $0x1500] sm:$0xff]
        %v1400 = vld [vmem:[%s315 + $0x1508] sm:$0xff]
        %v1401 = vld [vmem:[%s315 + $0x1510] sm:$0xff]
        %v1402 = vld [vmem:[%s315 + $0x1518] sm:$0xff]
        %v1403 = vld [vmem:[%s315 + $0x1520] sm:$0xff]
        %v1404 = vld [vmem:[%s315 + $0x1528] sm:$0xff]
        %v1405 = vld [vmem:[%s315 + $0x1530] sm:$0xff]
        %v1406 = vld [vmem:[%s315 + $0x1538] sm:$0xff]
        %v1407 = vld [vmem:[%s315 + $0x1540] sm:$0xff]
        %v1408 = vld [vmem:[%s315 + $0x1548] sm:$0xff]
        %v1409 = vld [vmem:[%s315 + $0x1550] sm:$0xff]
        %v1410 = vld [vmem:[%s315 + $0x1558] sm:$0xff]
        %v1411 = vld [vmem:[%s315 + $0x1560] sm:$0xff]
        %v1412 = vld [vmem:[%s315 + $0x1568] sm:$0xff]
        %v1413 = vld [vmem:[%s315 + $0x1570] sm:$0xff]
        %v1414 = vld [vmem:[%s315 + $0x1578] sm:$0xff]
        %v1415 = vld [vmem:[%s315 + $0x1580] sm:$0xff]
        %v1416 = vld [vmem:[%s315 + $0x1588] sm:$0xff]
        %v1417 = vld [vmem:[%s315 + $0x1590] sm:$0xff]
        %v1418 = vld [vmem:[%s315 + $0x1598] sm:$0xff]
        %v1419 = vld [vmem:[%s315 + $0x15a0] sm:$0xff]
        %v1420 = vld [vmem:[%s315 + $0x15a8] sm:$0xff]
        %v1421 = vld [vmem:[%s315 + $0x15b0] sm:$0xff]
        %v1422 = vld [vmem:[%s315 + $0x15b8] sm:$0xff]
        %v1423 = vld [vmem:[%s315 + $0x15c0] sm:$0xff]
        %v1424 = vld [vmem:[%s315 + $0x15c8] sm:$0xff]
        %v1425 = vld [vmem:[%s315 + $0x15d0] sm:$0xff]
        %v1426 = vld [vmem:[%s315 + $0x15d8] sm:$0xff]
        %v1427 = vld [vmem:[%s315 + $0x15e0] sm:$0xff]
        %v1428 = vld [vmem:[%s315 + $0x15e8] sm:$0xff]
        %v1429 = vld [vmem:[%s315 + $0x15f0] sm:$0xff]
        %v1430 = vld [vmem:[%s315 + $0x15f8] sm:$0xff]
        %v1431 = vld [vmem:[%s315 + $0x1600] sm:$0xff]
        %v1432 = vld [vmem:[%s315 + $0x1608] sm:$0xff]
        %v1433 = vld [vmem:[%s315 + $0x1610] sm:$0xff]
        %v1434 = vld [vmem:[%s315 + $0x1618] sm:$0xff]
        %v1435 = vld [vmem:[%s315 + $0x1620] sm:$0xff]
        %v1436 = vld [vmem:[%s315 + $0x1628] sm:$0xff]
        %v1437 = vld [vmem:[%s315 + $0x1630] sm:$0xff]
        %v1438 = vld [vmem:[%s315 + $0x1638] sm:$0xff]
        %v1439 = vld [vmem:[%s315 + $0x1640] sm:$0xff]
        %v1440 = vld [vmem:[%s315 + $0x1648] sm:$0xff]
        %v1441 = vld [vmem:[%s315 + $0x1650] sm:$0xff]
        %v1442 = vld [vmem:[%s315 + $0x1658] sm:$0xff]
        %v1443 = vld [vmem:[%s315 + $0x1660] sm:$0xff]
        %v1444 = vld [vmem:[%s315 + $0x1668] sm:$0xff]
        %v1445 = vld [vmem:[%s315 + $0x1670] sm:$0xff]
        %v1446 = vld [vmem:[%s315 + $0x1678] sm:$0xff]
        %v1447 = vld [vmem:[%s315 + $0x1680] sm:$0xff]
        %v1448 = vld [vmem:[%s315 + $0x1688] sm:$0xff]
        %v1449 = vld [vmem:[%s315 + $0x1690] sm:$0xff]
        %v1450 = vld [vmem:[%s315 + $0x1698] sm:$0xff]
        %v1451 = vld [vmem:[%s315 + $0x16a0] sm:$0xff]
        %v1452 = vld [vmem:[%s315 + $0x16a8] sm:$0xff]
        %v1453 = vld [vmem:[%s315 + $0x16b0] sm:$0xff]
        %v1454 = vld [vmem:[%s315 + $0x16b8] sm:$0xff]
        %v1455 = vld [vmem:[%s315 + $0x16c0] sm:$0xff]
        %v1456 = vld [vmem:[%s315 + $0x16c8] sm:$0xff]
        %v1457 = vld [vmem:[%s315 + $0x16d0] sm:$0xff]
        %v1458 = vld [vmem:[%s315 + $0x16d8] sm:$0xff]
        %v1459 = vld [vmem:[%s315 + $0x16e0] sm:$0xff]
        %v1460 = vld [vmem:[%s315 + $0x16e8] sm:$0xff]
        %v1461 = vld [vmem:[%s315 + $0x16f0] sm:$0xff]
        %v1462 = vld [vmem:[%s315 + $0x16f8] sm:$0xff]
        %v1463 = vld [vmem:[%s315 + $0x1700] sm:$0xff]
        %v1464 = vld [vmem:[%s315 + $0x1708] sm:$0xff]
        %v1465 = vld [vmem:[%s315 + $0x1710] sm:$0xff]
        %v1466 = vld [vmem:[%s315 + $0x1718] sm:$0xff]
        %v1467 = vld [vmem:[%s315 + $0x1720] sm:$0xff]
        %v1468 = vld [vmem:[%s315 + $0x1728] sm:$0xff]
        %v1469 = vld [vmem:[%s315 + $0x1730] sm:$0xff]
        %v1470 = vld [vmem:[%s315 + $0x1738] sm:$0xff]
        %v1471 = vld [vmem:[%s315 + $0x1740] sm:$0xff]
        %v1472 = vld [vmem:[%s315 + $0x1748] sm:$0xff]
        %v1473 = vld [vmem:[%s315 + $0x1750] sm:$0xff]
        %v1474 = vld [vmem:[%s315 + $0x1758] sm:$0xff]
        %v1475 = vld [vmem:[%s315 + $0x1760] sm:$0xff]
        %v1476 = vld [vmem:[%s315 + $0x1768] sm:$0xff]
        %v1477 = vld [vmem:[%s315 + $0x1770] sm:$0xff]
        %v1478 = vld [vmem:[%s315 + $0x1778] sm:$0xff]
        %v1479 = vld [vmem:[%s315 + $0x1780] sm:$0xff]
        %v1480 = vld [vmem:[%s315 + $0x1788] sm:$0xff]
        %v1481 = vld [vmem:[%s315 + $0x1790] sm:$0xff]
        %v1482 = vld [vmem:[%s315 + $0x1798] sm:$0xff]
        %v1483 = vld [vmem:[%s315 + $0x17a0] sm:$0xff]
        %v1484 = vld [vmem:[%s315 + $0x17a8] sm:$0xff]
        %v1485 = vld [vmem:[%s315 + $0x17b0] sm:$0xff]
        %v1486 = vld [vmem:[%s315 + $0x17b8] sm:$0xff]
        %v1487 = vld [vmem:[%s315 + $0x17c0] sm:$0xff]
        %v1488 = vld [vmem:[%s315 + $0x17c8] sm:$0xff]
        %v1489 = vld [vmem:[%s315 + $0x17d0] sm:$0xff]
        %v1490 = vld [vmem:[%s315 + $0x17d8] sm:$0xff]
        %v1491 = vld [vmem:[%s315 + $0x17e0] sm:$0xff]
        %v1492 = vld [vmem:[%s315 + $0x17e8] sm:$0xff]
        %v1493 = vld [vmem:[%s315 + $0x17f0] sm:$0xff]
        %v1494 = vld [vmem:[%s315 + $0x17f8] sm:$0xff]
        %v1495 = vld [vmem:[%s315 + $0x1800] sm:$0xff]
        %v1496 = vld [vmem:[%s315 + $0x1808] sm:$0xff]
        %v1497 = vld [vmem:[%s315 + $0x1810] sm:$0xff]
        %v1498 = vld [vmem:[%s315 + $0x1818] sm:$0xff]
        %v1499 = vld [vmem:[%s315 + $0x1820] sm:$0xff]
        %v1500 = vld [vmem:[%s315 + $0x1828] sm:$0xff]
        %v1501 = vld [vmem:[%s315 + $0x1830] sm:$0xff]
        %v1502 = vld [vmem:[%s315 + $0x1838] sm:$0xff]
        %v1503 = vld [vmem:[%s315 + $0x1840] sm:$0xff]
        %v1504 = vld [vmem:[%s315 + $0x1848] sm:$0xff]
        %v1505 = vld [vmem:[%s315 + $0x1850] sm:$0xff]
        %v1506 = vld [vmem:[%s315 + $0x1858] sm:$0xff]
        %v1507 = vld [vmem:[%s315 + $0x1860] sm:$0xff]
        %v1508 = vld [vmem:[%s315 + $0x1868] sm:$0xff]
        %v1509 = vld [vmem:[%s315 + $0x1870] sm:$0xff]
        %v1510 = vld [vmem:[%s315 + $0x1878] sm:$0xff]
        %v1511 = vld [vmem:[%s315 + $0x1880] sm:$0xff]
        %v1512 = vld [vmem:[%s315 + $0x1888] sm:$0xff]
        %v1513 = vld [vmem:[%s315 + $0x1890] sm:$0xff]
        %v1514 = vld [vmem:[%s315 + $0x1898] sm:$0xff]
        %v1515 = vld [vmem:[%s315 + $0x18a0] sm:$0xff]
        %v1516 = vld [vmem:[%s315 + $0x18a8] sm:$0xff]
        %v1517 = vld [vmem:[%s315 + $0x18b0] sm:$0xff]
        %v1518 = vld [vmem:[%s315 + $0x18b8] sm:$0xff]
        %v1519 = vld [vmem:[%s315 + $0x18c0] sm:$0xff]
        %v1520 = vld [vmem:[%s315 + $0x18c8] sm:$0xff]
        %v1521 = vld [vmem:[%s315 + $0x18d0] sm:$0xff]
        %v1522 = vld [vmem:[%s315 + $0x18d8] sm:$0xff]
        %v1523 = vld [vmem:[%s315 + $0x18e0] sm:$0xff]
        %v1524 = vld [vmem:[%s315 + $0x18e8] sm:$0xff]
        %v1525 = vld [vmem:[%s315 + $0x18f0] sm:$0xff]
        %v1526 = vld [vmem:[%s315 + $0x18f8] sm:$0xff]
        %v1527 = vld [vmem:[%s315 + $0x1900] sm:$0xff]
        %v1528 = vld [vmem:[%s315 + $0x1908] sm:$0xff]
        %v1529 = vld [vmem:[%s315 + $0x1910] sm:$0xff]
        %v1530 = vld [vmem:[%s315 + $0x1918] sm:$0xff]
        %v1531 = vld [vmem:[%s315 + $0x1920] sm:$0xff]
        %v1532 = vld [vmem:[%s315 + $0x1928] sm:$0xff]
        %v1533 = vld [vmem:[%s315 + $0x1930] sm:$0xff]
        %v1534 = vld [vmem:[%s315 + $0x1938] sm:$0xff]
        %v1535 = vld [vmem:[%s315 + $0x1940] sm:$0xff]
        %v1536 = vld [vmem:[%s315 + $0x1948] sm:$0xff]
        %v1537 = vld [vmem:[%s315 + $0x1950] sm:$0xff]
        %v1538 = vld [vmem:[%s315 + $0x1958] sm:$0xff]
        %v1539 = vld [vmem:[%s315 + $0x1960] sm:$0xff]
        %v1540 = vld [vmem:[%s315 + $0x1968] sm:$0xff]
        %v1541 = vld [vmem:[%s315 + $0x1970] sm:$0xff]
        %v1542 = vld [vmem:[%s315 + $0x1978] sm:$0xff]
        %v1543 = vld [vmem:[%s315 + $0x1980] sm:$0xff]
        %v1544 = vld [vmem:[%s315 + $0x1988] sm:$0xff]
        %v1545 = vld [vmem:[%s315 + $0x1990] sm:$0xff]
        %v1546 = vld [vmem:[%s315 + $0x1998] sm:$0xff]
        %v1547 = vld [vmem:[%s315 + $0x19a0] sm:$0xff]
        %v1548 = vld [vmem:[%s315 + $0x19a8] sm:$0xff]
        %v1549 = vld [vmem:[%s315 + $0x19b0] sm:$0xff]
        %v1550 = vld [vmem:[%s315 + $0x19b8] sm:$0xff]
        %v1551 = vld [vmem:[%s315 + $0x19c0] sm:$0xff]
        %v1552 = vld [vmem:[%s315 + $0x19c8] sm:$0xff]
        %v1553 = vld [vmem:[%s315 + $0x19d0] sm:$0xff]
        %v1554 = vld [vmem:[%s315 + $0x19d8] sm:$0xff]
        %v1555 = vld [vmem:[%s315 + $0x19e0] sm:$0xff]
        %v1556 = vld [vmem:[%s315 + $0x19e8] sm:$0xff]
        %v1557 = vld [vmem:[%s315 + $0x19f0] sm:$0xff]
        %v1558 = vld [vmem:[%s315 + $0x19f8] sm:$0xff]
        %v1559 = vld [vmem:[%s315 + $0x1a00] sm:$0xff]
        %v1560 = vld [vmem:[%s315 + $0x1a08] sm:$0xff]
        %v1561 = vld [vmem:[%s315 + $0x1a10] sm:$0xff]
        %v1562 = vld [vmem:[%s315 + $0x1a18] sm:$0xff]
        %v1563 = vld [vmem:[%s315 + $0x1a20] sm:$0xff]
        %v1564 = vld [vmem:[%s315 + $0x1a28] sm:$0xff]
        %v1565 = vld [vmem:[%s315 + $0x1a30] sm:$0xff]
        %v1566 = vld [vmem:[%s315 + $0x1a38] sm:$0xff]
        %v1567 = vld [vmem:[%s315 + $0x1a40] sm:$0xff]
        %v1568 = vld [vmem:[%s315 + $0x1a48] sm:$0xff]
        %v1569 = vld [vmem:[%s315 + $0x1a50] sm:$0xff]
        %v1570 = vld [vmem:[%s315 + $0x1a58] sm:$0xff]
        %v1571 = vld [vmem:[%s315 + $0x1a60] sm:$0xff]
        %v1572 = vld [vmem:[%s315 + $0x1a68] sm:$0xff]
        %v1573 = vld [vmem:[%s315 + $0x1a70] sm:$0xff]
        %v1574 = vld [vmem:[%s315 + $0x1a78] sm:$0xff]
        %v1575 = vld [vmem:[%s315 + $0x1a80] sm:$0xff]
        %v1576 = vld [vmem:[%s315 + $0x1a88] sm:$0xff]
        %v1577 = vld [vmem:[%s315 + $0x1a90] sm:$0xff]
        %v1578 = vld [vmem:[%s315 + $0x1a98] sm:$0xff]
        %v1579 = vld [vmem:[%s315 + $0x1aa0] sm:$0xff]
        %v1580 = vld [vmem:[%s315 + $0x1aa8] sm:$0xff]
        %v1581 = vld [vmem:[%s315 + $0x1ab0] sm:$0xff]
        %v1582 = vld [vmem:[%s315 + $0x1ab8] sm:$0xff]
        %v1583 = vld [vmem:[%s315 + $0x1ac0] sm:$0xff]
        %v1584 = vld [vmem:[%s315 + $0x1ac8] sm:$0xff]
        %v1585 = vld [vmem:[%s315 + $0x1ad0] sm:$0xff]
        %v1586 = vld [vmem:[%s315 + $0x1ad8] sm:$0xff]
        %v1587 = vld [vmem:[%s315 + $0x1ae0] sm:$0xff]
        %v1588 = vld [vmem:[%s315 + $0x1ae8] sm:$0xff]
        %v1589 = vld [vmem:[%s315 + $0x1af0] sm:$0xff]
        %v1590 = vld [vmem:[%s315 + $0x1af8] sm:$0xff]
        %v1591 = vld [vmem:[%s315 + $0x1b00] sm:$0xff]
        %v1592 = vld [vmem:[%s315 + $0x1b08] sm:$0xff]
        %v1593 = vld [vmem:[%s315 + $0x1b10] sm:$0xff]
        %v1594 = vld [vmem:[%s315 + $0x1b18] sm:$0xff]
        %v1595 = vld [vmem:[%s315 + $0x1b20] sm:$0xff]
        %v1596 = vld [vmem:[%s315 + $0x1b28] sm:$0xff]
        %v1597 = vld [vmem:[%s315 + $0x1b30] sm:$0xff]
        %v1598 = vld [vmem:[%s315 + $0x1b38] sm:$0xff]
        %v1599 = vld [vmem:[%s315 + $0x1b40] sm:$0xff]
        %v1600 = vld [vmem:[%s315 + $0x1b48] sm:$0xff]
        %v1601 = vld [vmem:[%s315 + $0x1b50] sm:$0xff]
        %v1602 = vld [vmem:[%s315 + $0x1b58] sm:$0xff]
        %v1603 = vld [vmem:[%s315 + $0x1b60] sm:$0xff]
        %v1604 = vld [vmem:[%s315 + $0x1b68] sm:$0xff]
        %v1605 = vld [vmem:[%s315 + $0x1b70] sm:$0xff]
        %v1606 = vld [vmem:[%s315 + $0x1b78] sm:$0xff]
        %v1607 = vld [vmem:[%s315 + $0x1b80] sm:$0xff]
        %v1608 = vld [vmem:[%s315 + $0x1b88] sm:$0xff]
        %v1609 = vld [vmem:[%s315 + $0x1b90] sm:$0xff]
        %v1610 = vld [vmem:[%s315 + $0x1b98] sm:$0xff]
        %v1611 = vld [vmem:[%s315 + $0x1ba0] sm:$0xff]
        %v1612 = vld [vmem:[%s315 + $0x1ba8] sm:$0xff]
        %v1613 = vld [vmem:[%s315 + $0x1bb0] sm:$0xff]
        %v1614 = vld [vmem:[%s315 + $0x1bb8] sm:$0xff]
        %v1615 = vld [vmem:[%s315 + $0x1bc0] sm:$0xff]
        %v1616 = vld [vmem:[%s315 + $0x1bc8] sm:$0xff]
        %v1617 = vld [vmem:[%s315 + $0x1bd0] sm:$0xff]
        %v1618 = vld [vmem:[%s315 + $0x1bd8] sm:$0xff]
        %v1619 = vld [vmem:[%s315 + $0x1be0] sm:$0xff]
        %v1620 = vld [vmem:[%s315 + $0x1be8] sm:$0xff]
        %v1621 = vld [vmem:[%s315 + $0x1bf0] sm:$0xff]
        %v1622 = vld [vmem:[%s315 + $0x1bf8] sm:$0xff]
        %v1623 = vld [vmem:[%s315 + $0x1c00] sm:$0xff]
        %v1624 = vld [vmem:[%s315 + $0x1c08] sm:$0xff]
        %v1625 = vld [vmem:[%s315 + $0x1c10] sm:$0xff]
        %v1626 = vld [vmem:[%s315 + $0x1c18] sm:$0xff]
        %v1627 = vld [vmem:[%s315 + $0x1c20] sm:$0xff]
        %v1628 = vld [vmem:[%s315 + $0x1c28] sm:$0xff]
        %v1629 = vld [vmem:[%s315 + $0x1c30] sm:$0xff]
        %v1630 = vld [vmem:[%s315 + $0x1c38] sm:$0xff]
        %v1631 = vld [vmem:[%s315 + $0x1c40] sm:$0xff]
        %v1632 = vld [vmem:[%s315 + $0x1c48] sm:$0xff]
        %v1633 = vld [vmem:[%s315 + $0x1c50] sm:$0xff]
        %v1634 = vld [vmem:[%s315 + $0x1c58] sm:$0xff]
        %v1635 = vld [vmem:[%s315 + $0x1c60] sm:$0xff]
        %v1636 = vld [vmem:[%s315 + $0x1c68] sm:$0xff]
        %v1637 = vld [vmem:[%s315 + $0x1c70] sm:$0xff]
        %v1638 = vld [vmem:[%s315 + $0x1c78] sm:$0xff]
        %v1639 = vld [vmem:[%s315 + $0x1c80] sm:$0xff]
        %v1640 = vld [vmem:[%s315 + $0x1c88] sm:$0xff]
        %v1641 = vld [vmem:[%s315 + $0x1c90] sm:$0xff]
        %v1642 = vld [vmem:[%s315 + $0x1c98] sm:$0xff]
        %v1643 = vld [vmem:[%s315 + $0x1ca0] sm:$0xff]
        %v1644 = vld [vmem:[%s315 + $0x1ca8] sm:$0xff]
        %v1645 = vld [vmem:[%s315 + $0x1cb0] sm:$0xff]
        %v1646 = vld [vmem:[%s315 + $0x1cb8] sm:$0xff]
        %v1647 = vld [vmem:[%s315 + $0x1cc0] sm:$0xff]
        %v1648 = vld [vmem:[%s315 + $0x1cc8] sm:$0xff]
        %v1649 = vld [vmem:[%s315 + $0x1cd0] sm:$0xff]
        %v1650 = vld [vmem:[%s315 + $0x1cd8] sm:$0xff]
        %v1651 = vld [vmem:[%s315 + $0x1ce0] sm:$0xff]
        %v1652 = vld [vmem:[%s315 + $0x1ce8] sm:$0xff]
        %v1653 = vld [vmem:[%s315 + $0x1cf0] sm:$0xff]
        %v1654 = vld [vmem:[%s315 + $0x1cf8] sm:$0xff]
        %v1655 = vld [vmem:[%s315 + $0x1d00] sm:$0xff]
        %v1656 = vld [vmem:[%s315 + $0x1d08] sm:$0xff]
        %v1657 = vld [vmem:[%s315 + $0x1d10] sm:$0xff]
        %v1658 = vld [vmem:[%s315 + $0x1d18] sm:$0xff]
        %v1659 = vld [vmem:[%s315 + $0x1d20] sm:$0xff]
        %v1660 = vld [vmem:[%s315 + $0x1d28] sm:$0xff]
        %v1661 = vld [vmem:[%s315 + $0x1d30] sm:$0xff]
        %v1662 = vld [vmem:[%s315 + $0x1d38] sm:$0xff]
        %v1663 = vld [vmem:[%s315 + $0x1d40] sm:$0xff]
        %v1664 = vld [vmem:[%s315 + $0x1d48] sm:$0xff]
        %v1665 = vld [vmem:[%s315 + $0x1d50] sm:$0xff]
        %v1666 = vld [vmem:[%s315 + $0x1d58] sm:$0xff]
        %v1667 = vld [vmem:[%s315 + $0x1d60] sm:$0xff]
        %v1668 = vld [vmem:[%s315 + $0x1d68] sm:$0xff]
        %v1669 = vld [vmem:[%s315 + $0x1d70] sm:$0xff]
        %v1670 = vld [vmem:[%s315 + $0x1d78] sm:$0xff]
        %v1671 = vld [vmem:[%s315 + $0x1d80] sm:$0xff]
        %v1672 = vld [vmem:[%s315 + $0x1d88] sm:$0xff]
        %v1673 = vld [vmem:[%s315 + $0x1d90] sm:$0xff]
        %v1674 = vld [vmem:[%s315 + $0x1d98] sm:$0xff]
        %v1675 = vld [vmem:[%s315 + $0x1da0] sm:$0xff]
        %v1676 = vld [vmem:[%s315 + $0x1da8] sm:$0xff]
        %v1677 = vld [vmem:[%s315 + $0x1db0] sm:$0xff]
        %v1678 = vld [vmem:[%s315 + $0x1db8] sm:$0xff]
        %v1679 = vld [vmem:[%s315 + $0x1dc0] sm:$0xff]
        %v1680 = vld [vmem:[%s315 + $0x1dc8] sm:$0xff]
        %v1681 = vld [vmem:[%s315 + $0x1dd0] sm:$0xff]
        %v1682 = vld [vmem:[%s315 + $0x1dd8] sm:$0xff]
        %v1683 = vld [vmem:[%s315 + $0x1de0] sm:$0xff]
        %v1684 = vld [vmem:[%s315 + $0x1de8] sm:$0xff]
        %v1685 = vld [vmem:[%s315 + $0x1df0] sm:$0xff]
        %v1686 = vld [vmem:[%s315 + $0x1df8] sm:$0xff]
        %v1687 = vld [vmem:[%s315 + $0x1e00] sm:$0xff]
        %v1688 = vld [vmem:[%s315 + $0x1e08] sm:$0xff]
        %v1689 = vld [vmem:[%s315 + $0x1e10] sm:$0xff]
        %v1690 = vld [vmem:[%s315 + $0x1e18] sm:$0xff]
        %v1691 = vld [vmem:[%s315 + $0x1e20] sm:$0xff]
        %v1692 = vld [vmem:[%s315 + $0x1e28] sm:$0xff]
        %v1693 = vld [vmem:[%s315 + $0x1e30] sm:$0xff]
        %v1694 = vld [vmem:[%s315 + $0x1e38] sm:$0xff]
        %v1695 = vld [vmem:[%s315 + $0x1e40] sm:$0xff]
        %v1696 = vld [vmem:[%s315 + $0x1e48] sm:$0xff]
        %v1697 = vld [vmem:[%s315 + $0x1e50] sm:$0xff]
        %v1698 = vld [vmem:[%s315 + $0x1e58] sm:$0xff]
        %v1699 = vld [vmem:[%s315 + $0x1e60] sm:$0xff]
        %v1700 = vld [vmem:[%s315 + $0x1e68] sm:$0xff]
        %v1701 = vld [vmem:[%s315 + $0x1e70] sm:$0xff]
        %v1702 = vld [vmem:[%s315 + $0x1e78] sm:$0xff]
        %v1703 = vld [vmem:[%s315 + $0x1e80] sm:$0xff]
        %v1704 = vld [vmem:[%s315 + $0x1e88] sm:$0xff]
        %v1705 = vld [vmem:[%s315 + $0x1e90] sm:$0xff]
        %v1706 = vld [vmem:[%s315 + $0x1e98] sm:$0xff]
        %v1707 = vld [vmem:[%s315 + $0x1ea0] sm:$0xff]
        %v1708 = vld [vmem:[%s315 + $0x1ea8] sm:$0xff]
        %v1709 = vld [vmem:[%s315 + $0x1eb0] sm:$0xff]
        %v1710 = vld [vmem:[%s315 + $0x1eb8] sm:$0xff]
        %v1711 = vld [vmem:[%s315 + $0x1ec0] sm:$0xff]
        %v1712 = vld [vmem:[%s315 + $0x1ec8] sm:$0xff]
        %v1713 = vld [vmem:[%s315 + $0x1ed0] sm:$0xff]
        %v1714 = vld [vmem:[%s315 + $0x1ed8] sm:$0xff]
        %v1715 = vld [vmem:[%s315 + $0x1ee0] sm:$0xff]
        %v1716 = vld [vmem:[%s315 + $0x1ee8] sm:$0xff]
        %v1717 = vld [vmem:[%s315 + $0x1ef0] sm:$0xff]
        %v1718 = vld [vmem:[%s315 + $0x1ef8] sm:$0xff]
        %v1719 = vld [vmem:[%s315 + $0x1f00] sm:$0xff]
        %v1720 = vld [vmem:[%s315 + $0x1f08] sm:$0xff]
        %v1721 = vld [vmem:[%s315 + $0x1f10] sm:$0xff]
        %v1722 = vld [vmem:[%s315 + $0x1f18] sm:$0xff]
        %v1723 = vld [vmem:[%s315 + $0x1f20] sm:$0xff]
        %v1724 = vld [vmem:[%s315 + $0x1f28] sm:$0xff]
        %v1725 = vld [vmem:[%s315 + $0x1f30] sm:$0xff]
        %v1726 = vld [vmem:[%s315 + $0x1f38] sm:$0xff]
        %v1727 = vld [vmem:[%s315 + $0x1f40] sm:$0xff]
        %v1728 = vld [vmem:[%s315 + $0x1f48] sm:$0xff]
        %v1729 = vld [vmem:[%s315 + $0x1f50] sm:$0xff]
        %v1730 = vld [vmem:[%s315 + $0x1f58] sm:$0xff]
        %v1731 = vld [vmem:[%s315 + $0x1f60] sm:$0xff]
        %v1732 = vld [vmem:[%s315 + $0x1f68] sm:$0xff]
        %v1733 = vld [vmem:[%s315 + $0x1f70] sm:$0xff]
        %v1734 = vld [vmem:[%s315 + $0x1f78] sm:$0xff]
        %v1735 = vld [vmem:[%s315 + $0x1f80] sm:$0xff]
        %v1736 = vld [vmem:[%s315 + $0x1f88] sm:$0xff]
        %v1737 = vld [vmem:[%s315 + $0x1f90] sm:$0xff]
        %v1738 = vld [vmem:[%s315 + $0x1f98] sm:$0xff]
        %v1739 = vld [vmem:[%s315 + $0x1fa0] sm:$0xff]
        %v1740 = vld [vmem:[%s315 + $0x1fa8] sm:$0xff]
        %v1741 = vld [vmem:[%s315 + $0x1fb0] sm:$0xff]
        %v1742 = vld [vmem:[%s315 + $0x1fb8] sm:$0xff]
        %v1743 = vld [vmem:[%s315 + $0x1fc0] sm:$0xff]
        %v1744 = vld [vmem:[%s315 + $0x1fc8] sm:$0xff]
        %v1745 = vld [vmem:[%s315 + $0x1fd0] sm:$0xff]
        %v1746 = vld [vmem:[%s315 + $0x1fd8] sm:$0xff]
        %v1747 = vld [vmem:[%s315 + $0x1fe0] sm:$0xff]
        %v1748 = vld [vmem:[%s315 + $0x1fe8] sm:$0xff]
        %v1749 = vld [vmem:[%s315 + $0x1ff0] sm:$0xff]
        %v1750 = vld [vmem:[%s315 + $0x1ff8] sm:$0xff]
        %v2775 = vunpack.c.l.b16 %v727
        %v2776 = vunpack.c.h.b16 %v727
        %v2777 = vunpack.c.l.b16 %v728
        %v2778 = vunpack.c.h.b16 %v728
        %v2779 = vunpack.c.l.b16 %v729
        %v2780 = vunpack.c.h.b16 %v729
        %v2781 = vunpack.c.l.b16 %v730
        %v2782 = vunpack.c.h.b16 %v730
        %v2783 = vunpack.c.l.b16 %v731
        %v2784 = vunpack.c.h.b16 %v731
        %v2785 = vunpack.c.l.b16 %v732
        %v2786 = vunpack.c.h.b16 %v732
        %v2787 = vunpack.c.l.b16 %v733
        %v2788 = vunpack.c.h.b16 %v733
        %v2789 = vunpack.c.l.b16 %v734
        %v2790 = vunpack.c.h.b16 %v734
        %v2791 = vunpack.c.l.b16 %v735
        %v2792 = vunpack.c.h.b16 %v735
        %v2793 = vunpack.c.l.b16 %v736
        %v2794 = vunpack.c.h.b16 %v736
        %v2795 = vunpack.c.l.b16 %v737
        %v2796 = vunpack.c.h.b16 %v737
        %v2797 = vunpack.c.l.b16 %v738
        %v2798 = vunpack.c.h.b16 %v738
        %v2799 = vunpack.c.l.b16 %v739
        %v2800 = vunpack.c.h.b16 %v739
        %v2801 = vunpack.c.l.b16 %v740
        %v2802 = vunpack.c.h.b16 %v740
        %v2803 = vunpack.c.l.b16 %v741
        %v2804 = vunpack.c.h.b16 %v741
        %v2805 = vunpack.c.l.b16 %v742
        %v2806 = vunpack.c.h.b16 %v742
        %v2807 = vunpack.c.l.b16 %v743
        %v2808 = vunpack.c.h.b16 %v743
        %v2809 = vunpack.c.l.b16 %v744
        %v2810 = vunpack.c.h.b16 %v744
        %v2811 = vunpack.c.l.b16 %v745
        %v2812 = vunpack.c.h.b16 %v745
        %v2813 = vunpack.c.l.b16 %v746
        %v2814 = vunpack.c.h.b16 %v746
        %v2815 = vunpack.c.l.b16 %v747
        %v2816 = vunpack.c.h.b16 %v747
        %v2817 = vunpack.c.l.b16 %v748
        %v2818 = vunpack.c.h.b16 %v748
        %v2819 = vunpack.c.l.b16 %v749
        %v2820 = vunpack.c.h.b16 %v749
        %v2821 = vunpack.c.l.b16 %v750
        %v2822 = vunpack.c.h.b16 %v750
        %v2823 = vunpack.c.l.b16 %v751
        %v2824 = vunpack.c.h.b16 %v751
        %v2825 = vunpack.c.l.b16 %v752
        %v2826 = vunpack.c.h.b16 %v752
        %v2827 = vunpack.c.l.b16 %v753
        %v2828 = vunpack.c.h.b16 %v753
        %v2829 = vunpack.c.l.b16 %v754
        %v2830 = vunpack.c.h.b16 %v754
        %v2831 = vunpack.c.l.b16 %v755
        %v2832 = vunpack.c.h.b16 %v755
        %v2833 = vunpack.c.l.b16 %v756
        %v2834 = vunpack.c.h.b16 %v756
        %v2835 = vunpack.c.l.b16 %v757
        %v2836 = vunpack.c.h.b16 %v757
        %v2837 = vunpack.c.l.b16 %v758
        %v2838 = vunpack.c.h.b16 %v758
        %v2839 = vunpack.c.l.b16 %v759
        %v2840 = vunpack.c.h.b16 %v759
        %v2841 = vunpack.c.l.b16 %v760
        %v2842 = vunpack.c.h.b16 %v760
        %v2843 = vunpack.c.l.b16 %v761
        %v2844 = vunpack.c.h.b16 %v761
        %v2845 = vunpack.c.l.b16 %v762
        %v2846 = vunpack.c.h.b16 %v762
        %v2847 = vunpack.c.l.b16 %v763
        %v2848 = vunpack.c.h.b16 %v763
        %v2849 = vunpack.c.l.b16 %v764
        %v2850 = vunpack.c.h.b16 %v764
        %v2851 = vunpack.c.l.b16 %v765
        %v2852 = vunpack.c.h.b16 %v765
        %v2853 = vunpack.c.l.b16 %v766
        %v2854 = vunpack.c.h.b16 %v766
        %v2855 = vunpack.c.l.b16 %v767
        %v2856 = vunpack.c.h.b16 %v767
        %v2857 = vunpack.c.l.b16 %v768
        %v2858 = vunpack.c.h.b16 %v768
        %v2859 = vunpack.c.l.b16 %v769
        %v2860 = vunpack.c.h.b16 %v769
        %v2861 = vunpack.c.l.b16 %v770
        %v2862 = vunpack.c.h.b16 %v770
        %v2863 = vunpack.c.l.b16 %v771
        %v2864 = vunpack.c.h.b16 %v771
        %v2865 = vunpack.c.l.b16 %v772
        %v2866 = vunpack.c.h.b16 %v772
        %v2867 = vunpack.c.l.b16 %v773
        %v2868 = vunpack.c.h.b16 %v773
        %v2869 = vunpack.c.l.b16 %v774
        %v2870 = vunpack.c.h.b16 %v774
        %v2871 = vunpack.c.l.b16 %v775
        %v2872 = vunpack.c.h.b16 %v775
        %v2873 = vunpack.c.l.b16 %v776
        %v2874 = vunpack.c.h.b16 %v776
        %v2875 = vunpack.c.l.b16 %v777
        %v2876 = vunpack.c.h.b16 %v777
        %v2877 = vunpack.c.l.b16 %v778
        %v2878 = vunpack.c.h.b16 %v778
        %v2879 = vunpack.c.l.b16 %v779
        %v2880 = vunpack.c.h.b16 %v779
        %v2881 = vunpack.c.l.b16 %v780
        %v2882 = vunpack.c.h.b16 %v780
        %v2883 = vunpack.c.l.b16 %v781
        %v2884 = vunpack.c.h.b16 %v781
        %v2885 = vunpack.c.l.b16 %v782
        %v2886 = vunpack.c.h.b16 %v782
        %v2887 = vunpack.c.l.b16 %v783
        %v2888 = vunpack.c.h.b16 %v783
        %v2889 = vunpack.c.l.b16 %v784
        %v2890 = vunpack.c.h.b16 %v784
        %v2891 = vunpack.c.l.b16 %v785
        %v2892 = vunpack.c.h.b16 %v785
        %v2893 = vunpack.c.l.b16 %v786
        %v2894 = vunpack.c.h.b16 %v786
        %v2895 = vunpack.c.l.b16 %v787
        %v2896 = vunpack.c.h.b16 %v787
        %v2897 = vunpack.c.l.b16 %v788
        %v2898 = vunpack.c.h.b16 %v788
        %v2899 = vunpack.c.l.b16 %v789
        %v2900 = vunpack.c.h.b16 %v789
        %v2901 = vunpack.c.l.b16 %v790
        %v2902 = vunpack.c.h.b16 %v790
        %v2903 = vunpack.c.l.b16 %v791
        %v2904 = vunpack.c.h.b16 %v791
        %v2905 = vunpack.c.l.b16 %v792
        %v2906 = vunpack.c.h.b16 %v792
        %v2907 = vunpack.c.l.b16 %v793
        %v2908 = vunpack.c.h.b16 %v793
        %v2909 = vunpack.c.l.b16 %v794
        %v2910 = vunpack.c.h.b16 %v794
        %v2911 = vunpack.c.l.b16 %v795
        %v2912 = vunpack.c.h.b16 %v795
        %v2913 = vunpack.c.l.b16 %v796
        %v2914 = vunpack.c.h.b16 %v796
        %v2915 = vunpack.c.l.b16 %v797
        %v2916 = vunpack.c.h.b16 %v797
        %v2917 = vunpack.c.l.b16 %v798
        %v2918 = vunpack.c.h.b16 %v798
        %v2919 = vunpack.c.l.b16 %v799
        %v2920 = vunpack.c.h.b16 %v799
        %v2921 = vunpack.c.l.b16 %v800
        %v2922 = vunpack.c.h.b16 %v800
        %v2923 = vunpack.c.l.b16 %v801
        %v2924 = vunpack.c.h.b16 %v801
        %v2925 = vunpack.c.l.b16 %v802
        %v2926 = vunpack.c.h.b16 %v802
        %v2927 = vunpack.c.l.b16 %v803
        %v2928 = vunpack.c.h.b16 %v803
        %v2929 = vunpack.c.l.b16 %v804
        %v2930 = vunpack.c.h.b16 %v804
        %v2931 = vunpack.c.l.b16 %v805
        %v2932 = vunpack.c.h.b16 %v805
        %v2933 = vunpack.c.l.b16 %v806
        %v2934 = vunpack.c.h.b16 %v806
        %v2935 = vunpack.c.l.b16 %v807
        %v2936 = vunpack.c.h.b16 %v807
        %v2937 = vunpack.c.l.b16 %v808
        %v2938 = vunpack.c.h.b16 %v808
        %v2939 = vunpack.c.l.b16 %v809
        %v2940 = vunpack.c.h.b16 %v809
        %v2941 = vunpack.c.l.b16 %v810
        %v2942 = vunpack.c.h.b16 %v810
        %v2943 = vunpack.c.l.b16 %v811
        %v2944 = vunpack.c.h.b16 %v811
        %v2945 = vunpack.c.l.b16 %v812
        %v2946 = vunpack.c.h.b16 %v812
        %v2947 = vunpack.c.l.b16 %v813
        %v2948 = vunpack.c.h.b16 %v813
        %v2949 = vunpack.c.l.b16 %v814
        %v2950 = vunpack.c.h.b16 %v814
        %v2951 = vunpack.c.l.b16 %v815
        %v2952 = vunpack.c.h.b16 %v815
        %v2953 = vunpack.c.l.b16 %v816
        %v2954 = vunpack.c.h.b16 %v816
        %v2955 = vunpack.c.l.b16 %v817
        %v2956 = vunpack.c.h.b16 %v817
        %v2957 = vunpack.c.l.b16 %v818
        %v2958 = vunpack.c.h.b16 %v818
        %v2959 = vunpack.c.l.b16 %v819
        %v2960 = vunpack.c.h.b16 %v819
        %v2961 = vunpack.c.l.b16 %v820
        %v2962 = vunpack.c.h.b16 %v820
        %v2963 = vunpack.c.l.b16 %v821
        %v2964 = vunpack.c.h.b16 %v821
        %v2965 = vunpack.c.l.b16 %v822
        %v2966 = vunpack.c.h.b16 %v822
        %v2967 = vunpack.c.l.b16 %v823
        %v2968 = vunpack.c.h.b16 %v823
        %v2969 = vunpack.c.l.b16 %v824
        %v2970 = vunpack.c.h.b16 %v824
        %v2971 = vunpack.c.l.b16 %v825
        %v2972 = vunpack.c.h.b16 %v825
        %v2973 = vunpack.c.l.b16 %v826
        %v2974 = vunpack.c.h.b16 %v826
        %v2975 = vunpack.c.l.b16 %v827
        %v2976 = vunpack.c.h.b16 %v827
        %v2977 = vunpack.c.l.b16 %v828
        %v2978 = vunpack.c.h.b16 %v828
        %v2979 = vunpack.c.l.b16 %v829
        %v2980 = vunpack.c.h.b16 %v829
        %v2981 = vunpack.c.l.b16 %v830
        %v2982 = vunpack.c.h.b16 %v830
        %v2983 = vunpack.c.l.b16 %v831
        %v2984 = vunpack.c.h.b16 %v831
        %v2985 = vunpack.c.l.b16 %v832
        %v2986 = vunpack.c.h.b16 %v832
        %v2987 = vunpack.c.l.b16 %v833
        %v2988 = vunpack.c.h.b16 %v833
        %v2989 = vunpack.c.l.b16 %v834
        %v2990 = vunpack.c.h.b16 %v834
        %v2991 = vunpack.c.l.b16 %v835
        %v2992 = vunpack.c.h.b16 %v835
        %v2993 = vunpack.c.l.b16 %v836
        %v2994 = vunpack.c.h.b16 %v836
        %v2995 = vunpack.c.l.b16 %v837
        %v2996 = vunpack.c.h.b16 %v837
        %v2997 = vunpack.c.l.b16 %v838
        %v2998 = vunpack.c.h.b16 %v838
        %v2999 = vunpack.c.l.b16 %v839
        %v3000 = vunpack.c.h.b16 %v839
        %v3001 = vunpack.c.l.b16 %v840
        %v3002 = vunpack.c.h.b16 %v840
        %v3003 = vunpack.c.l.b16 %v841
        %v3004 = vunpack.c.h.b16 %v841
        %v3005 = vunpack.c.l.b16 %v842
        %v3006 = vunpack.c.h.b16 %v842
        %v3007 = vunpack.c.l.b16 %v843
        %v3008 = vunpack.c.h.b16 %v843
        %v3009 = vunpack.c.l.b16 %v844
        %v3010 = vunpack.c.h.b16 %v844
        %v3011 = vunpack.c.l.b16 %v845
        %v3012 = vunpack.c.h.b16 %v845
        %v3013 = vunpack.c.l.b16 %v846
        %v3014 = vunpack.c.h.b16 %v846
        %v3015 = vunpack.c.l.b16 %v847
        %v3016 = vunpack.c.h.b16 %v847
        %v3017 = vunpack.c.l.b16 %v848
        %v3018 = vunpack.c.h.b16 %v848
        %v3019 = vunpack.c.l.b16 %v849
        %v3020 = vunpack.c.h.b16 %v849
        %v3021 = vunpack.c.l.b16 %v850
        %v3022 = vunpack.c.h.b16 %v850
        %v3023 = vunpack.c.l.b16 %v851
        %v3024 = vunpack.c.h.b16 %v851
        %v3025 = vunpack.c.l.b16 %v852
        %v3026 = vunpack.c.h.b16 %v852
        %v3027 = vunpack.c.l.b16 %v853
        %v3028 = vunpack.c.h.b16 %v853
        %v3029 = vunpack.c.l.b16 %v854
        %v3030 = vunpack.c.h.b16 %v854
        %v3031 = vunpack.c.l.b16 %v855
        %v3032 = vunpack.c.h.b16 %v855
        %v3033 = vunpack.c.l.b16 %v856
        %v3034 = vunpack.c.h.b16 %v856
        %v3035 = vunpack.c.l.b16 %v857
        %v3036 = vunpack.c.h.b16 %v857
        %v3037 = vunpack.c.l.b16 %v858
        %v3038 = vunpack.c.h.b16 %v858
        %v3039 = vunpack.c.l.b16 %v859
        %v3040 = vunpack.c.h.b16 %v859
        %v3041 = vunpack.c.l.b16 %v860
        %v3042 = vunpack.c.h.b16 %v860
        %v3043 = vunpack.c.l.b16 %v861
        %v3044 = vunpack.c.h.b16 %v861
        %v3045 = vunpack.c.l.b16 %v862
        %v3046 = vunpack.c.h.b16 %v862
        %v3047 = vunpack.c.l.b16 %v863
        %v3048 = vunpack.c.h.b16 %v863
        %v3049 = vunpack.c.l.b16 %v864
        %v3050 = vunpack.c.h.b16 %v864
        %v3051 = vunpack.c.l.b16 %v865
        %v3052 = vunpack.c.h.b16 %v865
        %v3053 = vunpack.c.l.b16 %v866
        %v3054 = vunpack.c.h.b16 %v866
        %v3055 = vunpack.c.l.b16 %v867
        %v3056 = vunpack.c.h.b16 %v867
        %v3057 = vunpack.c.l.b16 %v868
        %v3058 = vunpack.c.h.b16 %v868
        %v3059 = vunpack.c.l.b16 %v869
        %v3060 = vunpack.c.h.b16 %v869
        %v3061 = vunpack.c.l.b16 %v870
        %v3062 = vunpack.c.h.b16 %v870
        %v3063 = vunpack.c.l.b16 %v871
        %v3064 = vunpack.c.h.b16 %v871
        %v3065 = vunpack.c.l.b16 %v872
        %v3066 = vunpack.c.h.b16 %v872
        %v3067 = vunpack.c.l.b16 %v873
        %v3068 = vunpack.c.h.b16 %v873
        %v3069 = vunpack.c.l.b16 %v874
        %v3070 = vunpack.c.h.b16 %v874
        %v3071 = vunpack.c.l.b16 %v875
        %v3072 = vunpack.c.h.b16 %v875
        %v3073 = vunpack.c.l.b16 %v876
        %v3074 = vunpack.c.h.b16 %v876
        %v3075 = vunpack.c.l.b16 %v877
        %v3076 = vunpack.c.h.b16 %v877
        %v3077 = vunpack.c.l.b16 %v878
        %v3078 = vunpack.c.h.b16 %v878
        %v3079 = vunpack.c.l.b16 %v879
        %v3080 = vunpack.c.h.b16 %v879
        %v3081 = vunpack.c.l.b16 %v880
        %v3082 = vunpack.c.h.b16 %v880
        %v3083 = vunpack.c.l.b16 %v881
        %v3084 = vunpack.c.h.b16 %v881
        %v3085 = vunpack.c.l.b16 %v882
        %v3086 = vunpack.c.h.b16 %v882
        %v3087 = vunpack.c.l.b16 %v883
        %v3088 = vunpack.c.h.b16 %v883
        %v3089 = vunpack.c.l.b16 %v884
        %v3090 = vunpack.c.h.b16 %v884
        %v3091 = vunpack.c.l.b16 %v885
        %v3092 = vunpack.c.h.b16 %v885
        %v3093 = vunpack.c.l.b16 %v886
        %v3094 = vunpack.c.h.b16 %v886
        %v3095 = vunpack.c.l.b16 %v887
        %v3096 = vunpack.c.h.b16 %v887
        %v3097 = vunpack.c.l.b16 %v888
        %v3098 = vunpack.c.h.b16 %v888
        %v3099 = vunpack.c.l.b16 %v889
        %v3100 = vunpack.c.h.b16 %v889
        %v3101 = vunpack.c.l.b16 %v890
        %v3102 = vunpack.c.h.b16 %v890
        %v3103 = vunpack.c.l.b16 %v891
        %v3104 = vunpack.c.h.b16 %v891
        %v3105 = vunpack.c.l.b16 %v892
        %v3106 = vunpack.c.h.b16 %v892
        %v3107 = vunpack.c.l.b16 %v893
        %v3108 = vunpack.c.h.b16 %v893
        %v3109 = vunpack.c.l.b16 %v894
        %v3110 = vunpack.c.h.b16 %v894
        %v3111 = vunpack.c.l.b16 %v895
        %v3112 = vunpack.c.h.b16 %v895
        %v3113 = vunpack.c.l.b16 %v896
        %v3114 = vunpack.c.h.b16 %v896
        %v3115 = vunpack.c.l.b16 %v897
        %v3116 = vunpack.c.h.b16 %v897
        %v3117 = vunpack.c.l.b16 %v898
        %v3118 = vunpack.c.h.b16 %v898
        %v3119 = vunpack.c.l.b16 %v899
        %v3120 = vunpack.c.h.b16 %v899
        %v3121 = vunpack.c.l.b16 %v900
        %v3122 = vunpack.c.h.b16 %v900
        %v3123 = vunpack.c.l.b16 %v901
        %v3124 = vunpack.c.h.b16 %v901
        %v3125 = vunpack.c.l.b16 %v902
        %v3126 = vunpack.c.h.b16 %v902
        %v3127 = vunpack.c.l.b16 %v903
        %v3128 = vunpack.c.h.b16 %v903
        %v3129 = vunpack.c.l.b16 %v904
        %v3130 = vunpack.c.h.b16 %v904
        %v3131 = vunpack.c.l.b16 %v905
        %v3132 = vunpack.c.h.b16 %v905
        %v3133 = vunpack.c.l.b16 %v906
        %v3134 = vunpack.c.h.b16 %v906
        %v3135 = vunpack.c.l.b16 %v907
        %v3136 = vunpack.c.h.b16 %v907
        %v3137 = vunpack.c.l.b16 %v908
        %v3138 = vunpack.c.h.b16 %v908
        %v3139 = vunpack.c.l.b16 %v909
        %v3140 = vunpack.c.h.b16 %v909
        %v3141 = vunpack.c.l.b16 %v910
        %v3142 = vunpack.c.h.b16 %v910
        %v3143 = vunpack.c.l.b16 %v911
        %v3144 = vunpack.c.h.b16 %v911
        %v3145 = vunpack.c.l.b16 %v912
        %v3146 = vunpack.c.h.b16 %v912
        %v3147 = vunpack.c.l.b16 %v913
        %v3148 = vunpack.c.h.b16 %v913
        %v3149 = vunpack.c.l.b16 %v914
        %v3150 = vunpack.c.h.b16 %v914
        %v3151 = vunpack.c.l.b16 %v915
        %v3152 = vunpack.c.h.b16 %v915
        %v3153 = vunpack.c.l.b16 %v916
        %v3154 = vunpack.c.h.b16 %v916
        %v3155 = vunpack.c.l.b16 %v917
        %v3156 = vunpack.c.h.b16 %v917
        %v3157 = vunpack.c.l.b16 %v918
        %v3158 = vunpack.c.h.b16 %v918
        %v3159 = vunpack.c.l.b16 %v919
        %v3160 = vunpack.c.h.b16 %v919
        %v3161 = vunpack.c.l.b16 %v920
        %v3162 = vunpack.c.h.b16 %v920
        %v3163 = vunpack.c.l.b16 %v921
        %v3164 = vunpack.c.h.b16 %v921
        %v3165 = vunpack.c.l.b16 %v922
        %v3166 = vunpack.c.h.b16 %v922
        %v3167 = vunpack.c.l.b16 %v923
        %v3168 = vunpack.c.h.b16 %v923
        %v3169 = vunpack.c.l.b16 %v924
        %v3170 = vunpack.c.h.b16 %v924
        %v3171 = vunpack.c.l.b16 %v925
        %v3172 = vunpack.c.h.b16 %v925
        %v3173 = vunpack.c.l.b16 %v926
        %v3174 = vunpack.c.h.b16 %v926
        %v3175 = vunpack.c.l.b16 %v927
        %v3176 = vunpack.c.h.b16 %v927
        %v3177 = vunpack.c.l.b16 %v928
        %v3178 = vunpack.c.h.b16 %v928
        %v3179 = vunpack.c.l.b16 %v929
        %v3180 = vunpack.c.h.b16 %v929
        %v3181 = vunpack.c.l.b16 %v930
        %v3182 = vunpack.c.h.b16 %v930
        %v3183 = vunpack.c.l.b16 %v931
        %v3184 = vunpack.c.h.b16 %v931
        %v3185 = vunpack.c.l.b16 %v932
        %v3186 = vunpack.c.h.b16 %v932
        %v3187 = vunpack.c.l.b16 %v933
        %v3188 = vunpack.c.h.b16 %v933
        %v3189 = vunpack.c.l.b16 %v934
        %v3190 = vunpack.c.h.b16 %v934
        %v3191 = vunpack.c.l.b16 %v935
        %v3192 = vunpack.c.h.b16 %v935
        %v3193 = vunpack.c.l.b16 %v936
        %v3194 = vunpack.c.h.b16 %v936
        %v3195 = vunpack.c.l.b16 %v937
        %v3196 = vunpack.c.h.b16 %v937
        %v3197 = vunpack.c.l.b16 %v938
        %v3198 = vunpack.c.h.b16 %v938
        %v3199 = vunpack.c.l.b16 %v939
        %v3200 = vunpack.c.h.b16 %v939
        %v3201 = vunpack.c.l.b16 %v940
        %v3202 = vunpack.c.h.b16 %v940
        %v3203 = vunpack.c.l.b16 %v941
        %v3204 = vunpack.c.h.b16 %v941
        %v3205 = vunpack.c.l.b16 %v942
        %v3206 = vunpack.c.h.b16 %v942
        %v3207 = vunpack.c.l.b16 %v943
        %v3208 = vunpack.c.h.b16 %v943
        %v3209 = vunpack.c.l.b16 %v944
        %v3210 = vunpack.c.h.b16 %v944
        %v3211 = vunpack.c.l.b16 %v945
        %v3212 = vunpack.c.h.b16 %v945
        %v3213 = vunpack.c.l.b16 %v946
        %v3214 = vunpack.c.h.b16 %v946
        %v3215 = vunpack.c.l.b16 %v947
        %v3216 = vunpack.c.h.b16 %v947
        %v3217 = vunpack.c.l.b16 %v948
        %v3218 = vunpack.c.h.b16 %v948
        %v3219 = vunpack.c.l.b16 %v949
        %v3220 = vunpack.c.h.b16 %v949
        %v3221 = vunpack.c.l.b16 %v950
        %v3222 = vunpack.c.h.b16 %v950
        %v3223 = vunpack.c.l.b16 %v951
        %v3224 = vunpack.c.h.b16 %v951
        %v3225 = vunpack.c.l.b16 %v952
        %v3226 = vunpack.c.h.b16 %v952
        %v3227 = vunpack.c.l.b16 %v953
        %v3228 = vunpack.c.h.b16 %v953
        %v3229 = vunpack.c.l.b16 %v954
        %v3230 = vunpack.c.h.b16 %v954
        %v3231 = vunpack.c.l.b16 %v955
        %v3232 = vunpack.c.h.b16 %v955
        %v3233 = vunpack.c.l.b16 %v956
        %v3234 = vunpack.c.h.b16 %v956
        %v3235 = vunpack.c.l.b16 %v957
        %v3236 = vunpack.c.h.b16 %v957
        %v3237 = vunpack.c.l.b16 %v958
        %v3238 = vunpack.c.h.b16 %v958
        %v3239 = vunpack.c.l.b16 %v959
        %v3240 = vunpack.c.h.b16 %v959
        %v3241 = vunpack.c.l.b16 %v960
        %v3242 = vunpack.c.h.b16 %v960
        %v3243 = vunpack.c.l.b16 %v961
        %v3244 = vunpack.c.h.b16 %v961
        %v3245 = vunpack.c.l.b16 %v962
        %v3246 = vunpack.c.h.b16 %v962
        %v3247 = vunpack.c.l.b16 %v963
        %v3248 = vunpack.c.h.b16 %v963
        %v3249 = vunpack.c.l.b16 %v964
        %v3250 = vunpack.c.h.b16 %v964
        %v3251 = vunpack.c.l.b16 %v965
        %v3252 = vunpack.c.h.b16 %v965
        %v3253 = vunpack.c.l.b16 %v966
        %v3254 = vunpack.c.h.b16 %v966
        %v3255 = vunpack.c.l.b16 %v967
        %v3256 = vunpack.c.h.b16 %v967
        %v3257 = vunpack.c.l.b16 %v968
        %v3258 = vunpack.c.h.b16 %v968
        %v3259 = vunpack.c.l.b16 %v969
        %v3260 = vunpack.c.h.b16 %v969
        %v3261 = vunpack.c.l.b16 %v970
        %v3262 = vunpack.c.h.b16 %v970
        %v3263 = vunpack.c.l.b16 %v971
        %v3264 = vunpack.c.h.b16 %v971
        %v3265 = vunpack.c.l.b16 %v972
        %v3266 = vunpack.c.h.b16 %v972
        %v3267 = vunpack.c.l.b16 %v973
        %v3268 = vunpack.c.h.b16 %v973
        %v3269 = vunpack.c.l.b16 %v974
        %v3270 = vunpack.c.h.b16 %v974
        %v3271 = vunpack.c.l.b16 %v975
        %v3272 = vunpack.c.h.b16 %v975
        %v3273 = vunpack.c.l.b16 %v976
        %v3274 = vunpack.c.h.b16 %v976
        %v3275 = vunpack.c.l.b16 %v977
        %v3276 = vunpack.c.h.b16 %v977
        %v3277 = vunpack.c.l.b16 %v978
        %v3278 = vunpack.c.h.b16 %v978
        %v3279 = vunpack.c.l.b16 %v979
        %v3280 = vunpack.c.h.b16 %v979
        %v3281 = vunpack.c.l.b16 %v980
        %v3282 = vunpack.c.h.b16 %v980
        %v3283 = vunpack.c.l.b16 %v981
        %v3284 = vunpack.c.h.b16 %v981
        %v3285 = vunpack.c.l.b16 %v982
        %v3286 = vunpack.c.h.b16 %v982
        %v3287 = vunpack.c.l.b16 %v983
        %v3288 = vunpack.c.h.b16 %v983
        %v3289 = vunpack.c.l.b16 %v984
        %v3290 = vunpack.c.h.b16 %v984
        %v3291 = vunpack.c.l.b16 %v985
        %v3292 = vunpack.c.h.b16 %v985
        %v3293 = vunpack.c.l.b16 %v986
        %v3294 = vunpack.c.h.b16 %v986
        %v3295 = vunpack.c.l.b16 %v987
        %v3296 = vunpack.c.h.b16 %v987
        %v3297 = vunpack.c.l.b16 %v988
        %v3298 = vunpack.c.h.b16 %v988
        %v3299 = vunpack.c.l.b16 %v989
        %v3300 = vunpack.c.h.b16 %v989
        %v3301 = vunpack.c.l.b16 %v990
        %v3302 = vunpack.c.h.b16 %v990
        %v3303 = vunpack.c.l.b16 %v991
        %v3304 = vunpack.c.h.b16 %v991
        %v3305 = vunpack.c.l.b16 %v992
        %v3306 = vunpack.c.h.b16 %v992
        %v3307 = vunpack.c.l.b16 %v993
        %v3308 = vunpack.c.h.b16 %v993
        %v3309 = vunpack.c.l.b16 %v994
        %v3310 = vunpack.c.h.b16 %v994
        %v3311 = vunpack.c.l.b16 %v995
        %v3312 = vunpack.c.h.b16 %v995
        %v3313 = vunpack.c.l.b16 %v996
        %v3314 = vunpack.c.h.b16 %v996
        %v3315 = vunpack.c.l.b16 %v997
        %v3316 = vunpack.c.h.b16 %v997
        %v3317 = vunpack.c.l.b16 %v998
        %v3318 = vunpack.c.h.b16 %v998
        %v3319 = vunpack.c.l.b16 %v999
        %v3320 = vunpack.c.h.b16 %v999
        %v3321 = vunpack.c.l.b16 %v1000
        %v3322 = vunpack.c.h.b16 %v1000
        %v3323 = vunpack.c.l.b16 %v1001
        %v3324 = vunpack.c.h.b16 %v1001
        %v3325 = vunpack.c.l.b16 %v1002
        %v3326 = vunpack.c.h.b16 %v1002
        %v3327 = vunpack.c.l.b16 %v1003
        %v3328 = vunpack.c.h.b16 %v1003
        %v3329 = vunpack.c.l.b16 %v1004
        %v3330 = vunpack.c.h.b16 %v1004
        %v3331 = vunpack.c.l.b16 %v1005
        %v3332 = vunpack.c.h.b16 %v1005
        %v3333 = vunpack.c.l.b16 %v1006
        %v3334 = vunpack.c.h.b16 %v1006
        %v3335 = vunpack.c.l.b16 %v1007
        %v3336 = vunpack.c.h.b16 %v1007
        %v3337 = vunpack.c.l.b16 %v1008
        %v3338 = vunpack.c.h.b16 %v1008
        %v3339 = vunpack.c.l.b16 %v1009
        %v3340 = vunpack.c.h.b16 %v1009
        %v3341 = vunpack.c.l.b16 %v1010
        %v3342 = vunpack.c.h.b16 %v1010
        %v3343 = vunpack.c.l.b16 %v1011
        %v3344 = vunpack.c.h.b16 %v1011
        %v3345 = vunpack.c.l.b16 %v1012
        %v3346 = vunpack.c.h.b16 %v1012
        %v3347 = vunpack.c.l.b16 %v1013
        %v3348 = vunpack.c.h.b16 %v1013
        %v3349 = vunpack.c.l.b16 %v1014
        %v3350 = vunpack.c.h.b16 %v1014
        %v3351 = vunpack.c.l.b16 %v1015
        %v3352 = vunpack.c.h.b16 %v1015
        %v3353 = vunpack.c.l.b16 %v1016
        %v3354 = vunpack.c.h.b16 %v1016
        %v3355 = vunpack.c.l.b16 %v1017
        %v3356 = vunpack.c.h.b16 %v1017
        %v3357 = vunpack.c.l.b16 %v1018
        %v3358 = vunpack.c.h.b16 %v1018
        %v3359 = vunpack.c.l.b16 %v1019
        %v3360 = vunpack.c.h.b16 %v1019
        %v3361 = vunpack.c.l.b16 %v1020
        %v3362 = vunpack.c.h.b16 %v1020
        %v3363 = vunpack.c.l.b16 %v1021
        %v3364 = vunpack.c.h.b16 %v1021
        %v3365 = vunpack.c.l.b16 %v1022
        %v3366 = vunpack.c.h.b16 %v1022
        %v3367 = vunpack.c.l.b16 %v1023
        %v3368 = vunpack.c.h.b16 %v1023
        %v3369 = vunpack.c.l.b16 %v1024
        %v3370 = vunpack.c.h.b16 %v1024
        %v3371 = vunpack.c.l.b16 %v1025
        %v3372 = vunpack.c.h.b16 %v1025
        %v3373 = vunpack.c.l.b16 %v1026
        %v3374 = vunpack.c.h.b16 %v1026
        %v3375 = vunpack.c.l.b16 %v1027
        %v3376 = vunpack.c.h.b16 %v1027
        %v3377 = vunpack.c.l.b16 %v1028
        %v3378 = vunpack.c.h.b16 %v1028
        %v3379 = vunpack.c.l.b16 %v1029
        %v3380 = vunpack.c.h.b16 %v1029
        %v3381 = vunpack.c.l.b16 %v1030
        %v3382 = vunpack.c.h.b16 %v1030
        %v3383 = vunpack.c.l.b16 %v1031
        %v3384 = vunpack.c.h.b16 %v1031
        %v3385 = vunpack.c.l.b16 %v1032
        %v3386 = vunpack.c.h.b16 %v1032
        %v3387 = vunpack.c.l.b16 %v1033
        %v3388 = vunpack.c.h.b16 %v1033
        %v3389 = vunpack.c.l.b16 %v1034
        %v3390 = vunpack.c.h.b16 %v1034
        %v3391 = vunpack.c.l.b16 %v1035
        %v3392 = vunpack.c.h.b16 %v1035
        %v3393 = vunpack.c.l.b16 %v1036
        %v3394 = vunpack.c.h.b16 %v1036
        %v3395 = vunpack.c.l.b16 %v1037
        %v3396 = vunpack.c.h.b16 %v1037
        %v3397 = vunpack.c.l.b16 %v1038
        %v3398 = vunpack.c.h.b16 %v1038
        %v3399 = vunpack.c.l.b16 %v1039
        %v3400 = vunpack.c.h.b16 %v1039
        %v3401 = vunpack.c.l.b16 %v1040
        %v3402 = vunpack.c.h.b16 %v1040
        %v3403 = vunpack.c.l.b16 %v1041
        %v3404 = vunpack.c.h.b16 %v1041
        %v3405 = vunpack.c.l.b16 %v1042
        %v3406 = vunpack.c.h.b16 %v1042
        %v3407 = vunpack.c.l.b16 %v1043
        %v3408 = vunpack.c.h.b16 %v1043
        %v3409 = vunpack.c.l.b16 %v1044
        %v3410 = vunpack.c.h.b16 %v1044
        %v3411 = vunpack.c.l.b16 %v1045
        %v3412 = vunpack.c.h.b16 %v1045
        %v3413 = vunpack.c.l.b16 %v1046
        %v3414 = vunpack.c.h.b16 %v1046
        %v3415 = vunpack.c.l.b16 %v1047
        %v3416 = vunpack.c.h.b16 %v1047
        %v3417 = vunpack.c.l.b16 %v1048
        %v3418 = vunpack.c.h.b16 %v1048
        %v3419 = vunpack.c.l.b16 %v1049
        %v3420 = vunpack.c.h.b16 %v1049
        %v3421 = vunpack.c.l.b16 %v1050
        %v3422 = vunpack.c.h.b16 %v1050
        %v3423 = vunpack.c.l.b16 %v1051
        %v3424 = vunpack.c.h.b16 %v1051
        %v3425 = vunpack.c.l.b16 %v1052
        %v3426 = vunpack.c.h.b16 %v1052
        %v3427 = vunpack.c.l.b16 %v1053
        %v3428 = vunpack.c.h.b16 %v1053
        %v3429 = vunpack.c.l.b16 %v1054
        %v3430 = vunpack.c.h.b16 %v1054
        %v3431 = vunpack.c.l.b16 %v1055
        %v3432 = vunpack.c.h.b16 %v1055
        %v3433 = vunpack.c.l.b16 %v1056
        %v3434 = vunpack.c.h.b16 %v1056
        %v3435 = vunpack.c.l.b16 %v1057
        %v3436 = vunpack.c.h.b16 %v1057
        %v3437 = vunpack.c.l.b16 %v1058
        %v3438 = vunpack.c.h.b16 %v1058
        %v3439 = vunpack.c.l.b16 %v1059
        %v3440 = vunpack.c.h.b16 %v1059
        %v3441 = vunpack.c.l.b16 %v1060
        %v3442 = vunpack.c.h.b16 %v1060
        %v3443 = vunpack.c.l.b16 %v1061
        %v3444 = vunpack.c.h.b16 %v1061
        %v3445 = vunpack.c.l.b16 %v1062
        %v3446 = vunpack.c.h.b16 %v1062
        %v3447 = vunpack.c.l.b16 %v1063
        %v3448 = vunpack.c.h.b16 %v1063
        %v3449 = vunpack.c.l.b16 %v1064
        %v3450 = vunpack.c.h.b16 %v1064
        %v3451 = vunpack.c.l.b16 %v1065
        %v3452 = vunpack.c.h.b16 %v1065
        %v3453 = vunpack.c.l.b16 %v1066
        %v3454 = vunpack.c.h.b16 %v1066
        %v3455 = vunpack.c.l.b16 %v1067
        %v3456 = vunpack.c.h.b16 %v1067
        %v3457 = vunpack.c.l.b16 %v1068
        %v3458 = vunpack.c.h.b16 %v1068
        %v3459 = vunpack.c.l.b16 %v1069
        %v3460 = vunpack.c.h.b16 %v1069
        %v3461 = vunpack.c.l.b16 %v1070
        %v3462 = vunpack.c.h.b16 %v1070
        %v3463 = vunpack.c.l.b16 %v1071
        %v3464 = vunpack.c.h.b16 %v1071
        %v3465 = vunpack.c.l.b16 %v1072
        %v3466 = vunpack.c.h.b16 %v1072
        %v3467 = vunpack.c.l.b16 %v1073
        %v3468 = vunpack.c.h.b16 %v1073
        %v3469 = vunpack.c.l.b16 %v1074
        %v3470 = vunpack.c.h.b16 %v1074
        %v3471 = vunpack.c.l.b16 %v1075
        %v3472 = vunpack.c.h.b16 %v1075
        %v3473 = vunpack.c.l.b16 %v1076
        %v3474 = vunpack.c.h.b16 %v1076
        %v3475 = vunpack.c.l.b16 %v1077
        %v3476 = vunpack.c.h.b16 %v1077
        %v3477 = vunpack.c.l.b16 %v1078
        %v3478 = vunpack.c.h.b16 %v1078
        %v3479 = vunpack.c.l.b16 %v1079
        %v3480 = vunpack.c.h.b16 %v1079
        %v3481 = vunpack.c.l.b16 %v1080
        %v3482 = vunpack.c.h.b16 %v1080
        %v3483 = vunpack.c.l.b16 %v1081
        %v3484 = vunpack.c.h.b16 %v1081
        %v3485 = vunpack.c.l.b16 %v1082
        %v3486 = vunpack.c.h.b16 %v1082
        %v3487 = vunpack.c.l.b16 %v1083
        %v3488 = vunpack.c.h.b16 %v1083
        %v3489 = vunpack.c.l.b16 %v1084
        %v3490 = vunpack.c.h.b16 %v1084
        %v3491 = vunpack.c.l.b16 %v1085
        %v3492 = vunpack.c.h.b16 %v1085
        %v3493 = vunpack.c.l.b16 %v1086
        %v3494 = vunpack.c.h.b16 %v1086
        %v3495 = vunpack.c.l.b16 %v1087
        %v3496 = vunpack.c.h.b16 %v1087
        %v3497 = vunpack.c.l.b16 %v1088
        %v3498 = vunpack.c.h.b16 %v1088
        %v3499 = vunpack.c.l.b16 %v1089
        %v3500 = vunpack.c.h.b16 %v1089
        %v3501 = vunpack.c.l.b16 %v1090
        %v3502 = vunpack.c.h.b16 %v1090
        %v3503 = vunpack.c.l.b16 %v1091
        %v3504 = vunpack.c.h.b16 %v1091
        %v3505 = vunpack.c.l.b16 %v1092
        %v3506 = vunpack.c.h.b16 %v1092
        %v3507 = vunpack.c.l.b16 %v1093
        %v3508 = vunpack.c.h.b16 %v1093
        %v3509 = vunpack.c.l.b16 %v1094
        %v3510 = vunpack.c.h.b16 %v1094
        %v3511 = vunpack.c.l.b16 %v1095
        %v3512 = vunpack.c.h.b16 %v1095
        %v3513 = vunpack.c.l.b16 %v1096
        %v3514 = vunpack.c.h.b16 %v1096
        %v3515 = vunpack.c.l.b16 %v1097
        %v3516 = vunpack.c.h.b16 %v1097
        %v3517 = vunpack.c.l.b16 %v1098
        %v3518 = vunpack.c.h.b16 %v1098
        %v3519 = vunpack.c.l.b16 %v1099
        %v3520 = vunpack.c.h.b16 %v1099
        %v3521 = vunpack.c.l.b16 %v1100
        %v3522 = vunpack.c.h.b16 %v1100
        %v3523 = vunpack.c.l.b16 %v1101
        %v3524 = vunpack.c.h.b16 %v1101
        %v3525 = vunpack.c.l.b16 %v1102
        %v3526 = vunpack.c.h.b16 %v1102
        %v3527 = vunpack.c.l.b16 %v1103
        %v3528 = vunpack.c.h.b16 %v1103
        %v3529 = vunpack.c.l.b16 %v1104
        %v3530 = vunpack.c.h.b16 %v1104
        %v3531 = vunpack.c.l.b16 %v1105
        %v3532 = vunpack.c.h.b16 %v1105
        %v3533 = vunpack.c.l.b16 %v1106
        %v3534 = vunpack.c.h.b16 %v1106
        %v3535 = vunpack.c.l.b16 %v1107
        %v3536 = vunpack.c.h.b16 %v1107
        %v3537 = vunpack.c.l.b16 %v1108
        %v3538 = vunpack.c.h.b16 %v1108
        %v3539 = vunpack.c.l.b16 %v1109
        %v3540 = vunpack.c.h.b16 %v1109
        %v3541 = vunpack.c.l.b16 %v1110
        %v3542 = vunpack.c.h.b16 %v1110
        %v3543 = vunpack.c.l.b16 %v1111
        %v3544 = vunpack.c.h.b16 %v1111
        %v3545 = vunpack.c.l.b16 %v1112
        %v3546 = vunpack.c.h.b16 %v1112
        %v3547 = vunpack.c.l.b16 %v1113
        %v3548 = vunpack.c.h.b16 %v1113
        %v3549 = vunpack.c.l.b16 %v1114
        %v3550 = vunpack.c.h.b16 %v1114
        %v3551 = vunpack.c.l.b16 %v1115
        %v3552 = vunpack.c.h.b16 %v1115
        %v3553 = vunpack.c.l.b16 %v1116
        %v3554 = vunpack.c.h.b16 %v1116
        %v3555 = vunpack.c.l.b16 %v1117
        %v3556 = vunpack.c.h.b16 %v1117
        %v3557 = vunpack.c.l.b16 %v1118
        %v3558 = vunpack.c.h.b16 %v1118
        %v3559 = vunpack.c.l.b16 %v1119
        %v3560 = vunpack.c.h.b16 %v1119
        %v3561 = vunpack.c.l.b16 %v1120
        %v3562 = vunpack.c.h.b16 %v1120
        %v3563 = vunpack.c.l.b16 %v1121
        %v3564 = vunpack.c.h.b16 %v1121
        %v3565 = vunpack.c.l.b16 %v1122
        %v3566 = vunpack.c.h.b16 %v1122
        %v3567 = vunpack.c.l.b16 %v1123
        %v3568 = vunpack.c.h.b16 %v1123
        %v3569 = vunpack.c.l.b16 %v1124
        %v3570 = vunpack.c.h.b16 %v1124
        %v3571 = vunpack.c.l.b16 %v1125
        %v3572 = vunpack.c.h.b16 %v1125
        %v3573 = vunpack.c.l.b16 %v1126
        %v3574 = vunpack.c.h.b16 %v1126
        %v3575 = vunpack.c.l.b16 %v1127
        %v3576 = vunpack.c.h.b16 %v1127
        %v3577 = vunpack.c.l.b16 %v1128
        %v3578 = vunpack.c.h.b16 %v1128
        %v3579 = vunpack.c.l.b16 %v1129
        %v3580 = vunpack.c.h.b16 %v1129
        %v3581 = vunpack.c.l.b16 %v1130
        %v3582 = vunpack.c.h.b16 %v1130
        %v3583 = vunpack.c.l.b16 %v1131
        %v3584 = vunpack.c.h.b16 %v1131
        %v3585 = vunpack.c.l.b16 %v1132
        %v3586 = vunpack.c.h.b16 %v1132
        %v3587 = vunpack.c.l.b16 %v1133
        %v3588 = vunpack.c.h.b16 %v1133
        %v3589 = vunpack.c.l.b16 %v1134
        %v3590 = vunpack.c.h.b16 %v1134
        %v3591 = vunpack.c.l.b16 %v1135
        %v3592 = vunpack.c.h.b16 %v1135
        %v3593 = vunpack.c.l.b16 %v1136
        %v3594 = vunpack.c.h.b16 %v1136
        %v3595 = vunpack.c.l.b16 %v1137
        %v3596 = vunpack.c.h.b16 %v1137
        %v3597 = vunpack.c.l.b16 %v1138
        %v3598 = vunpack.c.h.b16 %v1138
        %v3599 = vunpack.c.l.b16 %v1139
        %v3600 = vunpack.c.h.b16 %v1139
        %v3601 = vunpack.c.l.b16 %v1140
        %v3602 = vunpack.c.h.b16 %v1140
        %v3603 = vunpack.c.l.b16 %v1141
        %v3604 = vunpack.c.h.b16 %v1141
        %v3605 = vunpack.c.l.b16 %v1142
        %v3606 = vunpack.c.h.b16 %v1142
        %v3607 = vunpack.c.l.b16 %v1143
        %v3608 = vunpack.c.h.b16 %v1143
        %v3609 = vunpack.c.l.b16 %v1144
        %v3610 = vunpack.c.h.b16 %v1144
        %v3611 = vunpack.c.l.b16 %v1145
        %v3612 = vunpack.c.h.b16 %v1145
        %v3613 = vunpack.c.l.b16 %v1146
        %v3614 = vunpack.c.h.b16 %v1146
        %v3615 = vunpack.c.l.b16 %v1147
        %v3616 = vunpack.c.h.b16 %v1147
        %v3617 = vunpack.c.l.b16 %v1148
        %v3618 = vunpack.c.h.b16 %v1148
        %v3619 = vunpack.c.l.b16 %v1149
        %v3620 = vunpack.c.h.b16 %v1149
        %v3621 = vunpack.c.l.b16 %v1150
        %v3622 = vunpack.c.h.b16 %v1150
        %v3623 = vunpack.c.l.b16 %v1151
        %v3624 = vunpack.c.h.b16 %v1151
        %v3625 = vunpack.c.l.b16 %v1152
        %v3626 = vunpack.c.h.b16 %v1152
        %v3627 = vunpack.c.l.b16 %v1153
        %v3628 = vunpack.c.h.b16 %v1153
        %v3629 = vunpack.c.l.b16 %v1154
        %v3630 = vunpack.c.h.b16 %v1154
        %v3631 = vunpack.c.l.b16 %v1155
        %v3632 = vunpack.c.h.b16 %v1155
        %v3633 = vunpack.c.l.b16 %v1156
        %v3634 = vunpack.c.h.b16 %v1156
        %v3635 = vunpack.c.l.b16 %v1157
        %v3636 = vunpack.c.h.b16 %v1157
        %v3637 = vunpack.c.l.b16 %v1158
        %v3638 = vunpack.c.h.b16 %v1158
        %v3639 = vunpack.c.l.b16 %v1159
        %v3640 = vunpack.c.h.b16 %v1159
        %v3641 = vunpack.c.l.b16 %v1160
        %v3642 = vunpack.c.h.b16 %v1160
        %v3643 = vunpack.c.l.b16 %v1161
        %v3644 = vunpack.c.h.b16 %v1161
        %v3645 = vunpack.c.l.b16 %v1162
        %v3646 = vunpack.c.h.b16 %v1162
        %v3647 = vunpack.c.l.b16 %v1163
        %v3648 = vunpack.c.h.b16 %v1163
        %v3649 = vunpack.c.l.b16 %v1164
        %v3650 = vunpack.c.h.b16 %v1164
        %v3651 = vunpack.c.l.b16 %v1165
        %v3652 = vunpack.c.h.b16 %v1165
        %v3653 = vunpack.c.l.b16 %v1166
        %v3654 = vunpack.c.h.b16 %v1166
        %v3655 = vunpack.c.l.b16 %v1167
        %v3656 = vunpack.c.h.b16 %v1167
        %v3657 = vunpack.c.l.b16 %v1168
        %v3658 = vunpack.c.h.b16 %v1168
        %v3659 = vunpack.c.l.b16 %v1169
        %v3660 = vunpack.c.h.b16 %v1169
        %v3661 = vunpack.c.l.b16 %v1170
        %v3662 = vunpack.c.h.b16 %v1170
        %v3663 = vunpack.c.l.b16 %v1171
        %v3664 = vunpack.c.h.b16 %v1171
        %v3665 = vunpack.c.l.b16 %v1172
        %v3666 = vunpack.c.h.b16 %v1172
        %v3667 = vunpack.c.l.b16 %v1173
        %v3668 = vunpack.c.h.b16 %v1173
        %v3669 = vunpack.c.l.b16 %v1174
        %v3670 = vunpack.c.h.b16 %v1174
        %v3671 = vunpack.c.l.b16 %v1175
        %v3672 = vunpack.c.h.b16 %v1175
        %v3673 = vunpack.c.l.b16 %v1176
        %v3674 = vunpack.c.h.b16 %v1176
        %v3675 = vunpack.c.l.b16 %v1177
        %v3676 = vunpack.c.h.b16 %v1177
        %v3677 = vunpack.c.l.b16 %v1178
        %v3678 = vunpack.c.h.b16 %v1178
        %v3679 = vunpack.c.l.b16 %v1179
        %v3680 = vunpack.c.h.b16 %v1179
        %v3681 = vunpack.c.l.b16 %v1180
        %v3682 = vunpack.c.h.b16 %v1180
        %v3683 = vunpack.c.l.b16 %v1181
        %v3684 = vunpack.c.h.b16 %v1181
        %v3685 = vunpack.c.l.b16 %v1182
        %v3686 = vunpack.c.h.b16 %v1182
        %v3687 = vunpack.c.l.b16 %v1183
        %v3688 = vunpack.c.h.b16 %v1183
        %v3689 = vunpack.c.l.b16 %v1184
        %v3690 = vunpack.c.h.b16 %v1184
        %v3691 = vunpack.c.l.b16 %v1185
        %v3692 = vunpack.c.h.b16 %v1185
        %v3693 = vunpack.c.l.b16 %v1186
        %v3694 = vunpack.c.h.b16 %v1186
        %v3695 = vunpack.c.l.b16 %v1187
        %v3696 = vunpack.c.h.b16 %v1187
        %v3697 = vunpack.c.l.b16 %v1188
        %v3698 = vunpack.c.h.b16 %v1188
        %v3699 = vunpack.c.l.b16 %v1189
        %v3700 = vunpack.c.h.b16 %v1189
        %v3701 = vunpack.c.l.b16 %v1190
        %v3702 = vunpack.c.h.b16 %v1190
        %v3703 = vunpack.c.l.b16 %v1191
        %v3704 = vunpack.c.h.b16 %v1191
        %v3705 = vunpack.c.l.b16 %v1192
        %v3706 = vunpack.c.h.b16 %v1192
        %v3707 = vunpack.c.l.b16 %v1193
        %v3708 = vunpack.c.h.b16 %v1193
        %v3709 = vunpack.c.l.b16 %v1194
        %v3710 = vunpack.c.h.b16 %v1194
        %v3711 = vunpack.c.l.b16 %v1195
        %v3712 = vunpack.c.h.b16 %v1195
        %v3713 = vunpack.c.l.b16 %v1196
        %v3714 = vunpack.c.h.b16 %v1196
        %v3715 = vunpack.c.l.b16 %v1197
        %v3716 = vunpack.c.h.b16 %v1197
        %v3717 = vunpack.c.l.b16 %v1198
        %v3718 = vunpack.c.h.b16 %v1198
        %v3719 = vunpack.c.l.b16 %v1199
        %v3720 = vunpack.c.h.b16 %v1199
        %v3721 = vunpack.c.l.b16 %v1200
        %v3722 = vunpack.c.h.b16 %v1200
        %v3723 = vunpack.c.l.b16 %v1201
        %v3724 = vunpack.c.h.b16 %v1201
        %v3725 = vunpack.c.l.b16 %v1202
        %v3726 = vunpack.c.h.b16 %v1202
        %v3727 = vunpack.c.l.b16 %v1203
        %v3728 = vunpack.c.h.b16 %v1203
        %v3729 = vunpack.c.l.b16 %v1204
        %v3730 = vunpack.c.h.b16 %v1204
        %v3731 = vunpack.c.l.b16 %v1205
        %v3732 = vunpack.c.h.b16 %v1205
        %v3733 = vunpack.c.l.b16 %v1206
        %v3734 = vunpack.c.h.b16 %v1206
        %v3735 = vunpack.c.l.b16 %v1207
        %v3736 = vunpack.c.h.b16 %v1207
        %v3737 = vunpack.c.l.b16 %v1208
        %v3738 = vunpack.c.h.b16 %v1208
        %v3739 = vunpack.c.l.b16 %v1209
        %v3740 = vunpack.c.h.b16 %v1209
        %v3741 = vunpack.c.l.b16 %v1210
        %v3742 = vunpack.c.h.b16 %v1210
        %v3743 = vunpack.c.l.b16 %v1211
        %v3744 = vunpack.c.h.b16 %v1211
        %v3745 = vunpack.c.l.b16 %v1212
        %v3746 = vunpack.c.h.b16 %v1212
        %v3747 = vunpack.c.l.b16 %v1213
        %v3748 = vunpack.c.h.b16 %v1213
        %v3749 = vunpack.c.l.b16 %v1214
        %v3750 = vunpack.c.h.b16 %v1214
        %v3751 = vunpack.c.l.b16 %v1215
        %v3752 = vunpack.c.h.b16 %v1215
        %v3753 = vunpack.c.l.b16 %v1216
        %v3754 = vunpack.c.h.b16 %v1216
        %v3755 = vunpack.c.l.b16 %v1217
        %v3756 = vunpack.c.h.b16 %v1217
        %v3757 = vunpack.c.l.b16 %v1218
        %v3758 = vunpack.c.h.b16 %v1218
        %v3759 = vunpack.c.l.b16 %v1219
        %v3760 = vunpack.c.h.b16 %v1219
        %v3761 = vunpack.c.l.b16 %v1220
        %v3762 = vunpack.c.h.b16 %v1220
        %v3763 = vunpack.c.l.b16 %v1221
        %v3764 = vunpack.c.h.b16 %v1221
        %v3765 = vunpack.c.l.b16 %v1222
        %v3766 = vunpack.c.h.b16 %v1222
        %v3767 = vunpack.c.l.b16 %v1223
        %v3768 = vunpack.c.h.b16 %v1223
        %v3769 = vunpack.c.l.b16 %v1224
        %v3770 = vunpack.c.h.b16 %v1224
        %v3771 = vunpack.c.l.b16 %v1225
        %v3772 = vunpack.c.h.b16 %v1225
        %v3773 = vunpack.c.l.b16 %v1226
        %v3774 = vunpack.c.h.b16 %v1226
        %v3775 = vunpack.c.l.b16 %v1227
        %v3776 = vunpack.c.h.b16 %v1227
        %v3777 = vunpack.c.l.b16 %v1228
        %v3778 = vunpack.c.h.b16 %v1228
        %v3779 = vunpack.c.l.b16 %v1229
        %v3780 = vunpack.c.h.b16 %v1229
        %v3781 = vunpack.c.l.b16 %v1230
        %v3782 = vunpack.c.h.b16 %v1230
        %v3783 = vunpack.c.l.b16 %v1231
        %v3784 = vunpack.c.h.b16 %v1231
        %v3785 = vunpack.c.l.b16 %v1232
        %v3786 = vunpack.c.h.b16 %v1232
        %v3787 = vunpack.c.l.b16 %v1233
        %v3788 = vunpack.c.h.b16 %v1233
        %v3789 = vunpack.c.l.b16 %v1234
        %v3790 = vunpack.c.h.b16 %v1234
        %v3791 = vunpack.c.l.b16 %v1235
        %v3792 = vunpack.c.h.b16 %v1235
        %v3793 = vunpack.c.l.b16 %v1236
        %v3794 = vunpack.c.h.b16 %v1236
        %v3795 = vunpack.c.l.b16 %v1237
        %v3796 = vunpack.c.h.b16 %v1237
        %v3797 = vunpack.c.l.b16 %v1238
        %v3798 = vunpack.c.h.b16 %v1238
        %v3799 = vunpack.c.l.b16 %v1239
        %v3800 = vunpack.c.h.b16 %v1239
        %v3801 = vunpack.c.l.b16 %v1240
        %v3802 = vunpack.c.h.b16 %v1240
        %v3803 = vunpack.c.l.b16 %v1241
        %v3804 = vunpack.c.h.b16 %v1241
        %v3805 = vunpack.c.l.b16 %v1242
        %v3806 = vunpack.c.h.b16 %v1242
        %v3807 = vunpack.c.l.b16 %v1243
        %v3808 = vunpack.c.h.b16 %v1243
        %v3809 = vunpack.c.l.b16 %v1244
        %v3810 = vunpack.c.h.b16 %v1244
        %v3811 = vunpack.c.l.b16 %v1245
        %v3812 = vunpack.c.h.b16 %v1245
        %v3813 = vunpack.c.l.b16 %v1246
        %v3814 = vunpack.c.h.b16 %v1246
        %v3815 = vunpack.c.l.b16 %v1247
        %v3816 = vunpack.c.h.b16 %v1247
        %v3817 = vunpack.c.l.b16 %v1248
        %v3818 = vunpack.c.h.b16 %v1248
        %v3819 = vunpack.c.l.b16 %v1249
        %v3820 = vunpack.c.h.b16 %v1249
        %v3821 = vunpack.c.l.b16 %v1250
        %v3822 = vunpack.c.h.b16 %v1250
        %v3823 = vunpack.c.l.b16 %v1251
        %v3824 = vunpack.c.h.b16 %v1251
        %v3825 = vunpack.c.l.b16 %v1252
        %v3826 = vunpack.c.h.b16 %v1252
        %v3827 = vunpack.c.l.b16 %v1253
        %v3828 = vunpack.c.h.b16 %v1253
        %v3829 = vunpack.c.l.b16 %v1254
        %v3830 = vunpack.c.h.b16 %v1254
        %v3831 = vunpack.c.l.b16 %v1255
        %v3832 = vunpack.c.h.b16 %v1255
        %v3833 = vunpack.c.l.b16 %v1256
        %v3834 = vunpack.c.h.b16 %v1256
        %v3835 = vunpack.c.l.b16 %v1257
        %v3836 = vunpack.c.h.b16 %v1257
        %v3837 = vunpack.c.l.b16 %v1258
        %v3838 = vunpack.c.h.b16 %v1258
        %v3839 = vunpack.c.l.b16 %v1259
        %v3840 = vunpack.c.h.b16 %v1259
        %v3841 = vunpack.c.l.b16 %v1260
        %v3842 = vunpack.c.h.b16 %v1260
        %v3843 = vunpack.c.l.b16 %v1261
        %v3844 = vunpack.c.h.b16 %v1261
        %v3845 = vunpack.c.l.b16 %v1262
        %v3846 = vunpack.c.h.b16 %v1262
        %v3847 = vunpack.c.l.b16 %v1263
        %v3848 = vunpack.c.h.b16 %v1263
        %v3849 = vunpack.c.l.b16 %v1264
        %v3850 = vunpack.c.h.b16 %v1264
        %v3851 = vunpack.c.l.b16 %v1265
        %v3852 = vunpack.c.h.b16 %v1265
        %v3853 = vunpack.c.l.b16 %v1266
        %v3854 = vunpack.c.h.b16 %v1266
        %v3855 = vunpack.c.l.b16 %v1267
        %v3856 = vunpack.c.h.b16 %v1267
        %v3857 = vunpack.c.l.b16 %v1268
        %v3858 = vunpack.c.h.b16 %v1268
        %v3859 = vunpack.c.l.b16 %v1269
        %v3860 = vunpack.c.h.b16 %v1269
        %v3861 = vunpack.c.l.b16 %v1270
        %v3862 = vunpack.c.h.b16 %v1270
        %v3863 = vunpack.c.l.b16 %v1271
        %v3864 = vunpack.c.h.b16 %v1271
        %v3865 = vunpack.c.l.b16 %v1272
        %v3866 = vunpack.c.h.b16 %v1272
        %v3867 = vunpack.c.l.b16 %v1273
        %v3868 = vunpack.c.h.b16 %v1273
        %v3869 = vunpack.c.l.b16 %v1274
        %v3870 = vunpack.c.h.b16 %v1274
        %v3871 = vunpack.c.l.b16 %v1275
        %v3872 = vunpack.c.h.b16 %v1275
        %v3873 = vunpack.c.l.b16 %v1276
        %v3874 = vunpack.c.h.b16 %v1276
        %v3875 = vunpack.c.l.b16 %v1277
        %v3876 = vunpack.c.h.b16 %v1277
        %v3877 = vunpack.c.l.b16 %v1278
        %v3878 = vunpack.c.h.b16 %v1278
        %v3879 = vunpack.c.l.b16 %v1279
        %v3880 = vunpack.c.h.b16 %v1279
        %v3881 = vunpack.c.l.b16 %v1280
        %v3882 = vunpack.c.h.b16 %v1280
        %v3883 = vunpack.c.l.b16 %v1281
        %v3884 = vunpack.c.h.b16 %v1281
        %v3885 = vunpack.c.l.b16 %v1282
        %v3886 = vunpack.c.h.b16 %v1282
        %v3887 = vunpack.c.l.b16 %v1283
        %v3888 = vunpack.c.h.b16 %v1283
        %v3889 = vunpack.c.l.b16 %v1284
        %v3890 = vunpack.c.h.b16 %v1284
        %v3891 = vunpack.c.l.b16 %v1285
        %v3892 = vunpack.c.h.b16 %v1285
        %v3893 = vunpack.c.l.b16 %v1286
        %v3894 = vunpack.c.h.b16 %v1286
        %v3895 = vunpack.c.l.b16 %v1287
        %v3896 = vunpack.c.h.b16 %v1287
        %v3897 = vunpack.c.l.b16 %v1288
        %v3898 = vunpack.c.h.b16 %v1288
        %v3899 = vunpack.c.l.b16 %v1289
        %v3900 = vunpack.c.h.b16 %v1289
        %v3901 = vunpack.c.l.b16 %v1290
        %v3902 = vunpack.c.h.b16 %v1290
        %v3903 = vunpack.c.l.b16 %v1291
        %v3904 = vunpack.c.h.b16 %v1291
        %v3905 = vunpack.c.l.b16 %v1292
        %v3906 = vunpack.c.h.b16 %v1292
        %v3907 = vunpack.c.l.b16 %v1293
        %v3908 = vunpack.c.h.b16 %v1293
        %v3909 = vunpack.c.l.b16 %v1294
        %v3910 = vunpack.c.h.b16 %v1294
        %v3911 = vunpack.c.l.b16 %v1295
        %v3912 = vunpack.c.h.b16 %v1295
        %v3913 = vunpack.c.l.b16 %v1296
        %v3914 = vunpack.c.h.b16 %v1296
        %v3915 = vunpack.c.l.b16 %v1297
        %v3916 = vunpack.c.h.b16 %v1297
        %v3917 = vunpack.c.l.b16 %v1298
        %v3918 = vunpack.c.h.b16 %v1298
        %v3919 = vunpack.c.l.b16 %v1299
        %v3920 = vunpack.c.h.b16 %v1299
        %v3921 = vunpack.c.l.b16 %v1300
        %v3922 = vunpack.c.h.b16 %v1300
        %v3923 = vunpack.c.l.b16 %v1301
        %v3924 = vunpack.c.h.b16 %v1301
        %v3925 = vunpack.c.l.b16 %v1302
        %v3926 = vunpack.c.h.b16 %v1302
        %v3927 = vunpack.c.l.b16 %v1303
        %v3928 = vunpack.c.h.b16 %v1303
        %v3929 = vunpack.c.l.b16 %v1304
        %v3930 = vunpack.c.h.b16 %v1304
        %v3931 = vunpack.c.l.b16 %v1305
        %v3932 = vunpack.c.h.b16 %v1305
        %v3933 = vunpack.c.l.b16 %v1306
        %v3934 = vunpack.c.h.b16 %v1306
        %v3935 = vunpack.c.l.b16 %v1307
        %v3936 = vunpack.c.h.b16 %v1307
        %v3937 = vunpack.c.l.b16 %v1308
        %v3938 = vunpack.c.h.b16 %v1308
        %v3939 = vunpack.c.l.b16 %v1309
        %v3940 = vunpack.c.h.b16 %v1309
        %v3941 = vunpack.c.l.b16 %v1310
        %v3942 = vunpack.c.h.b16 %v1310
        %v3943 = vunpack.c.l.b16 %v1311
        %v3944 = vunpack.c.h.b16 %v1311
        %v3945 = vunpack.c.l.b16 %v1312
        %v3946 = vunpack.c.h.b16 %v1312
        %v3947 = vunpack.c.l.b16 %v1313
        %v3948 = vunpack.c.h.b16 %v1313
        %v3949 = vunpack.c.l.b16 %v1314
        %v3950 = vunpack.c.h.b16 %v1314
        %v3951 = vunpack.c.l.b16 %v1315
        %v3952 = vunpack.c.h.b16 %v1315
        %v3953 = vunpack.c.l.b16 %v1316
        %v3954 = vunpack.c.h.b16 %v1316
        %v3955 = vunpack.c.l.b16 %v1317
        %v3956 = vunpack.c.h.b16 %v1317
        %v3957 = vunpack.c.l.b16 %v1318
        %v3958 = vunpack.c.h.b16 %v1318
        %v3959 = vunpack.c.l.b16 %v1319
        %v3960 = vunpack.c.h.b16 %v1319
        %v3961 = vunpack.c.l.b16 %v1320
        %v3962 = vunpack.c.h.b16 %v1320
        %v3963 = vunpack.c.l.b16 %v1321
        %v3964 = vunpack.c.h.b16 %v1321
        %v3965 = vunpack.c.l.b16 %v1322
        %v3966 = vunpack.c.h.b16 %v1322
        %v3967 = vunpack.c.l.b16 %v1323
        %v3968 = vunpack.c.h.b16 %v1323
        %v3969 = vunpack.c.l.b16 %v1324
        %v3970 = vunpack.c.h.b16 %v1324
        %v3971 = vunpack.c.l.b16 %v1325
        %v3972 = vunpack.c.h.b16 %v1325
        %v3973 = vunpack.c.l.b16 %v1326
        %v3974 = vunpack.c.h.b16 %v1326
        %v3975 = vunpack.c.l.b16 %v1327
        %v3976 = vunpack.c.h.b16 %v1327
        %v3977 = vunpack.c.l.b16 %v1328
        %v3978 = vunpack.c.h.b16 %v1328
        %v3979 = vunpack.c.l.b16 %v1329
        %v3980 = vunpack.c.h.b16 %v1329
        %v3981 = vunpack.c.l.b16 %v1330
        %v3982 = vunpack.c.h.b16 %v1330
        %v3983 = vunpack.c.l.b16 %v1331
        %v3984 = vunpack.c.h.b16 %v1331
        %v3985 = vunpack.c.l.b16 %v1332
        %v3986 = vunpack.c.h.b16 %v1332
        %v3987 = vunpack.c.l.b16 %v1333
        %v3988 = vunpack.c.h.b16 %v1333
        %v3989 = vunpack.c.l.b16 %v1334
        %v3990 = vunpack.c.h.b16 %v1334
        %v3991 = vunpack.c.l.b16 %v1335
        %v3992 = vunpack.c.h.b16 %v1335
        %v3993 = vunpack.c.l.b16 %v1336
        %v3994 = vunpack.c.h.b16 %v1336
        %v3995 = vunpack.c.l.b16 %v1337
        %v3996 = vunpack.c.h.b16 %v1337
        %v3997 = vunpack.c.l.b16 %v1338
        %v3998 = vunpack.c.h.b16 %v1338
        %v3999 = vunpack.c.l.b16 %v1339
        %v4000 = vunpack.c.h.b16 %v1339
        %v4001 = vunpack.c.l.b16 %v1340
        %v4002 = vunpack.c.h.b16 %v1340
        %v4003 = vunpack.c.l.b16 %v1341
        %v4004 = vunpack.c.h.b16 %v1341
        %v4005 = vunpack.c.l.b16 %v1342
        %v4006 = vunpack.c.h.b16 %v1342
        %v4007 = vunpack.c.l.b16 %v1343
        %v4008 = vunpack.c.h.b16 %v1343
        %v4009 = vunpack.c.l.b16 %v1344
        %v4010 = vunpack.c.h.b16 %v1344
        %v4011 = vunpack.c.l.b16 %v1345
        %v4012 = vunpack.c.h.b16 %v1345
        %v4013 = vunpack.c.l.b16 %v1346
        %v4014 = vunpack.c.h.b16 %v1346
        %v4015 = vunpack.c.l.b16 %v1347
        %v4016 = vunpack.c.h.b16 %v1347
        %v4017 = vunpack.c.l.b16 %v1348
        %v4018 = vunpack.c.h.b16 %v1348
        %v4019 = vunpack.c.l.b16 %v1349
        %v4020 = vunpack.c.h.b16 %v1349
        %v4021 = vunpack.c.l.b16 %v1350
        %v4022 = vunpack.c.h.b16 %v1350
        %v4023 = vunpack.c.l.b16 %v1351
        %v4024 = vunpack.c.h.b16 %v1351
        %v4025 = vunpack.c.l.b16 %v1352
        %v4026 = vunpack.c.h.b16 %v1352
        %v4027 = vunpack.c.l.b16 %v1353
        %v4028 = vunpack.c.h.b16 %v1353
        %v4029 = vunpack.c.l.b16 %v1354
        %v4030 = vunpack.c.h.b16 %v1354
        %v4031 = vunpack.c.l.b16 %v1355
        %v4032 = vunpack.c.h.b16 %v1355
        %v4033 = vunpack.c.l.b16 %v1356
        %v4034 = vunpack.c.h.b16 %v1356
        %v4035 = vunpack.c.l.b16 %v1357
        %v4036 = vunpack.c.h.b16 %v1357
        %v4037 = vunpack.c.l.b16 %v1358
        %v4038 = vunpack.c.h.b16 %v1358
        %v4039 = vunpack.c.l.b16 %v1359
        %v4040 = vunpack.c.h.b16 %v1359
        %v4041 = vunpack.c.l.b16 %v1360
        %v4042 = vunpack.c.h.b16 %v1360
        %v4043 = vunpack.c.l.b16 %v1361
        %v4044 = vunpack.c.h.b16 %v1361
        %v4045 = vunpack.c.l.b16 %v1362
        %v4046 = vunpack.c.h.b16 %v1362
        %v4047 = vunpack.c.l.b16 %v1363
        %v4048 = vunpack.c.h.b16 %v1363
        %v4049 = vunpack.c.l.b16 %v1364
        %v4050 = vunpack.c.h.b16 %v1364
        %v4051 = vunpack.c.l.b16 %v1365
        %v4052 = vunpack.c.h.b16 %v1365
        %v4053 = vunpack.c.l.b16 %v1366
        %v4054 = vunpack.c.h.b16 %v1366
        %v4055 = vunpack.c.l.b16 %v1367
        %v4056 = vunpack.c.h.b16 %v1367
        %v4057 = vunpack.c.l.b16 %v1368
        %v4058 = vunpack.c.h.b16 %v1368
        %v4059 = vunpack.c.l.b16 %v1369
        %v4060 = vunpack.c.h.b16 %v1369
        %v4061 = vunpack.c.l.b16 %v1370
        %v4062 = vunpack.c.h.b16 %v1370
        %v4063 = vunpack.c.l.b16 %v1371
        %v4064 = vunpack.c.h.b16 %v1371
        %v4065 = vunpack.c.l.b16 %v1372
        %v4066 = vunpack.c.h.b16 %v1372
        %v4067 = vunpack.c.l.b16 %v1373
        %v4068 = vunpack.c.h.b16 %v1373
        %v4069 = vunpack.c.l.b16 %v1374
        %v4070 = vunpack.c.h.b16 %v1374
        %v4071 = vunpack.c.l.b16 %v1375
        %v4072 = vunpack.c.h.b16 %v1375
        %v4073 = vunpack.c.l.b16 %v1376
        %v4074 = vunpack.c.h.b16 %v1376
        %v4075 = vunpack.c.l.b16 %v1377
        %v4076 = vunpack.c.h.b16 %v1377
        %v4077 = vunpack.c.l.b16 %v1378
        %v4078 = vunpack.c.h.b16 %v1378
        %v4079 = vunpack.c.l.b16 %v1379
        %v4080 = vunpack.c.h.b16 %v1379
        %v4081 = vunpack.c.l.b16 %v1380
        %v4082 = vunpack.c.h.b16 %v1380
        %v4083 = vunpack.c.l.b16 %v1381
        %v4084 = vunpack.c.h.b16 %v1381
        %v4085 = vunpack.c.l.b16 %v1382
        %v4086 = vunpack.c.h.b16 %v1382
        %v4087 = vunpack.c.l.b16 %v1383
        %v4088 = vunpack.c.h.b16 %v1383
        %v4089 = vunpack.c.l.b16 %v1384
        %v4090 = vunpack.c.h.b16 %v1384
        %v4091 = vunpack.c.l.b16 %v1385
        %v4092 = vunpack.c.h.b16 %v1385
        %v4093 = vunpack.c.l.b16 %v1386
        %v4094 = vunpack.c.h.b16 %v1386
        %v4095 = vunpack.c.l.b16 %v1387
        %v4096 = vunpack.c.h.b16 %v1387
        %v4097 = vunpack.c.l.b16 %v1388
        %v4098 = vunpack.c.h.b16 %v1388
        %v4099 = vunpack.c.l.b16 %v1389
        %v4100 = vunpack.c.h.b16 %v1389
        %v4101 = vunpack.c.l.b16 %v1390
        %v4102 = vunpack.c.h.b16 %v1390
        %v4103 = vunpack.c.l.b16 %v1391
        %v4104 = vunpack.c.h.b16 %v1391
        %v4105 = vunpack.c.l.b16 %v1392
        %v4106 = vunpack.c.h.b16 %v1392
        %v4107 = vunpack.c.l.b16 %v1393
        %v4108 = vunpack.c.h.b16 %v1393
        %v4109 = vunpack.c.l.b16 %v1394
        %v4110 = vunpack.c.h.b16 %v1394
        %v4111 = vunpack.c.l.b16 %v1395
        %v4112 = vunpack.c.h.b16 %v1395
        %v4113 = vunpack.c.l.b16 %v1396
        %v4114 = vunpack.c.h.b16 %v1396
        %v4115 = vunpack.c.l.b16 %v1397
        %v4116 = vunpack.c.h.b16 %v1397
        %v4117 = vunpack.c.l.b16 %v1398
        %v4118 = vunpack.c.h.b16 %v1398
        %v4119 = vunpack.c.l.b16 %v1399
        %v4120 = vunpack.c.h.b16 %v1399
        %v4121 = vunpack.c.l.b16 %v1400
        %v4122 = vunpack.c.h.b16 %v1400
        %v4123 = vunpack.c.l.b16 %v1401
        %v4124 = vunpack.c.h.b16 %v1401
        %v4125 = vunpack.c.l.b16 %v1402
        %v4126 = vunpack.c.h.b16 %v1402
        %v4127 = vunpack.c.l.b16 %v1403
        %v4128 = vunpack.c.h.b16 %v1403
        %v4129 = vunpack.c.l.b16 %v1404
        %v4130 = vunpack.c.h.b16 %v1404
        %v4131 = vunpack.c.l.b16 %v1405
        %v4132 = vunpack.c.h.b16 %v1405
        %v4133 = vunpack.c.l.b16 %v1406
        %v4134 = vunpack.c.h.b16 %v1406
        %v4135 = vunpack.c.l.b16 %v1407
        %v4136 = vunpack.c.h.b16 %v1407
        %v4137 = vunpack.c.l.b16 %v1408
        %v4138 = vunpack.c.h.b16 %v1408
        %v4139 = vunpack.c.l.b16 %v1409
        %v4140 = vunpack.c.h.b16 %v1409
        %v4141 = vunpack.c.l.b16 %v1410
        %v4142 = vunpack.c.h.b16 %v1410
        %v4143 = vunpack.c.l.b16 %v1411
        %v4144 = vunpack.c.h.b16 %v1411
        %v4145 = vunpack.c.l.b16 %v1412
        %v4146 = vunpack.c.h.b16 %v1412
        %v4147 = vunpack.c.l.b16 %v1413
        %v4148 = vunpack.c.h.b16 %v1413
        %v4149 = vunpack.c.l.b16 %v1414
        %v4150 = vunpack.c.h.b16 %v1414
        %v4151 = vunpack.c.l.b16 %v1415
        %v4152 = vunpack.c.h.b16 %v1415
        %v4153 = vunpack.c.l.b16 %v1416
        %v4154 = vunpack.c.h.b16 %v1416
        %v4155 = vunpack.c.l.b16 %v1417
        %v4156 = vunpack.c.h.b16 %v1417
        %v4157 = vunpack.c.l.b16 %v1418
        %v4158 = vunpack.c.h.b16 %v1418
        %v4159 = vunpack.c.l.b16 %v1419
        %v4160 = vunpack.c.h.b16 %v1419
        %v4161 = vunpack.c.l.b16 %v1420
        %v4162 = vunpack.c.h.b16 %v1420
        %v4163 = vunpack.c.l.b16 %v1421
        %v4164 = vunpack.c.h.b16 %v1421
        %v4165 = vunpack.c.l.b16 %v1422
        %v4166 = vunpack.c.h.b16 %v1422
        %v4167 = vunpack.c.l.b16 %v1423
        %v4168 = vunpack.c.h.b16 %v1423
        %v4169 = vunpack.c.l.b16 %v1424
        %v4170 = vunpack.c.h.b16 %v1424
        %v4171 = vunpack.c.l.b16 %v1425
        %v4172 = vunpack.c.h.b16 %v1425
        %v4173 = vunpack.c.l.b16 %v1426
        %v4174 = vunpack.c.h.b16 %v1426
        %v4175 = vunpack.c.l.b16 %v1427
        %v4176 = vunpack.c.h.b16 %v1427
        %v4177 = vunpack.c.l.b16 %v1428
        %v4178 = vunpack.c.h.b16 %v1428
        %v4179 = vunpack.c.l.b16 %v1429
        %v4180 = vunpack.c.h.b16 %v1429
        %v4181 = vunpack.c.l.b16 %v1430
        %v4182 = vunpack.c.h.b16 %v1430
        %v4183 = vunpack.c.l.b16 %v1431
        %v4184 = vunpack.c.h.b16 %v1431
        %v4185 = vunpack.c.l.b16 %v1432
        %v4186 = vunpack.c.h.b16 %v1432
        %v4187 = vunpack.c.l.b16 %v1433
        %v4188 = vunpack.c.h.b16 %v1433
        %v4189 = vunpack.c.l.b16 %v1434
        %v4190 = vunpack.c.h.b16 %v1434
        %v4191 = vunpack.c.l.b16 %v1435
        %v4192 = vunpack.c.h.b16 %v1435
        %v4193 = vunpack.c.l.b16 %v1436
        %v4194 = vunpack.c.h.b16 %v1436
        %v4195 = vunpack.c.l.b16 %v1437
        %v4196 = vunpack.c.h.b16 %v1437
        %v4197 = vunpack.c.l.b16 %v1438
        %v4198 = vunpack.c.h.b16 %v1438
        %v4199 = vunpack.c.l.b16 %v1439
        %v4200 = vunpack.c.h.b16 %v1439
        %v4201 = vunpack.c.l.b16 %v1440
        %v4202 = vunpack.c.h.b16 %v1440
        %v4203 = vunpack.c.l.b16 %v1441
        %v4204 = vunpack.c.h.b16 %v1441
        %v4205 = vunpack.c.l.b16 %v1442
        %v4206 = vunpack.c.h.b16 %v1442
        %v4207 = vunpack.c.l.b16 %v1443
        %v4208 = vunpack.c.h.b16 %v1443
        %v4209 = vunpack.c.l.b16 %v1444
        %v4210 = vunpack.c.h.b16 %v1444
        %v4211 = vunpack.c.l.b16 %v1445
        %v4212 = vunpack.c.h.b16 %v1445
        %v4213 = vunpack.c.l.b16 %v1446
        %v4214 = vunpack.c.h.b16 %v1446
        %v4215 = vunpack.c.l.b16 %v1447
        %v4216 = vunpack.c.h.b16 %v1447
        %v4217 = vunpack.c.l.b16 %v1448
        %v4218 = vunpack.c.h.b16 %v1448
        %v4219 = vunpack.c.l.b16 %v1449
        %v4220 = vunpack.c.h.b16 %v1449
        %v4221 = vunpack.c.l.b16 %v1450
        %v4222 = vunpack.c.h.b16 %v1450
        %v4223 = vunpack.c.l.b16 %v1451
        %v4224 = vunpack.c.h.b16 %v1451
        %v4225 = vunpack.c.l.b16 %v1452
        %v4226 = vunpack.c.h.b16 %v1452
        %v4227 = vunpack.c.l.b16 %v1453
        %v4228 = vunpack.c.h.b16 %v1453
        %v4229 = vunpack.c.l.b16 %v1454
        %v4230 = vunpack.c.h.b16 %v1454
        %v4231 = vunpack.c.l.b16 %v1455
        %v4232 = vunpack.c.h.b16 %v1455
        %v4233 = vunpack.c.l.b16 %v1456
        %v4234 = vunpack.c.h.b16 %v1456
        %v4235 = vunpack.c.l.b16 %v1457
        %v4236 = vunpack.c.h.b16 %v1457
        %v4237 = vunpack.c.l.b16 %v1458
        %v4238 = vunpack.c.h.b16 %v1458
        %v4239 = vunpack.c.l.b16 %v1459
        %v4240 = vunpack.c.h.b16 %v1459
        %v4241 = vunpack.c.l.b16 %v1460
        %v4242 = vunpack.c.h.b16 %v1460
        %v4243 = vunpack.c.l.b16 %v1461
        %v4244 = vunpack.c.h.b16 %v1461
        %v4245 = vunpack.c.l.b16 %v1462
        %v4246 = vunpack.c.h.b16 %v1462
        %v4247 = vunpack.c.l.b16 %v1463
        %v4248 = vunpack.c.h.b16 %v1463
        %v4249 = vunpack.c.l.b16 %v1464
        %v4250 = vunpack.c.h.b16 %v1464
        %v4251 = vunpack.c.l.b16 %v1465
        %v4252 = vunpack.c.h.b16 %v1465
        %v4253 = vunpack.c.l.b16 %v1466
        %v4254 = vunpack.c.h.b16 %v1466
        %v4255 = vunpack.c.l.b16 %v1467
        %v4256 = vunpack.c.h.b16 %v1467
        %v4257 = vunpack.c.l.b16 %v1468
        %v4258 = vunpack.c.h.b16 %v1468
        %v4259 = vunpack.c.l.b16 %v1469
        %v4260 = vunpack.c.h.b16 %v1469
        %v4261 = vunpack.c.l.b16 %v1470
        %v4262 = vunpack.c.h.b16 %v1470
        %v4263 = vunpack.c.l.b16 %v1471
        %v4264 = vunpack.c.h.b16 %v1471
        %v4265 = vunpack.c.l.b16 %v1472
        %v4266 = vunpack.c.h.b16 %v1472
        %v4267 = vunpack.c.l.b16 %v1473
        %v4268 = vunpack.c.h.b16 %v1473
        %v4269 = vunpack.c.l.b16 %v1474
        %v4270 = vunpack.c.h.b16 %v1474
        %v4271 = vunpack.c.l.b16 %v1475
        %v4272 = vunpack.c.h.b16 %v1475
        %v4273 = vunpack.c.l.b16 %v1476
        %v4274 = vunpack.c.h.b16 %v1476
        %v4275 = vunpack.c.l.b16 %v1477
        %v4276 = vunpack.c.h.b16 %v1477
        %v4277 = vunpack.c.l.b16 %v1478
        %v4278 = vunpack.c.h.b16 %v1478
        %v4279 = vunpack.c.l.b16 %v1479
        %v4280 = vunpack.c.h.b16 %v1479
        %v4281 = vunpack.c.l.b16 %v1480
        %v4282 = vunpack.c.h.b16 %v1480
        %v4283 = vunpack.c.l.b16 %v1481
        %v4284 = vunpack.c.h.b16 %v1481
        %v4285 = vunpack.c.l.b16 %v1482
        %v4286 = vunpack.c.h.b16 %v1482
        %v4287 = vunpack.c.l.b16 %v1483
        %v4288 = vunpack.c.h.b16 %v1483
        %v4289 = vunpack.c.l.b16 %v1484
        %v4290 = vunpack.c.h.b16 %v1484
        %v4291 = vunpack.c.l.b16 %v1485
        %v4292 = vunpack.c.h.b16 %v1485
        %v4293 = vunpack.c.l.b16 %v1486
        %v4294 = vunpack.c.h.b16 %v1486
        %v4295 = vunpack.c.l.b16 %v1487
        %v4296 = vunpack.c.h.b16 %v1487
        %v4297 = vunpack.c.l.b16 %v1488
        %v4298 = vunpack.c.h.b16 %v1488
        %v4299 = vunpack.c.l.b16 %v1489
        %v4300 = vunpack.c.h.b16 %v1489
        %v4301 = vunpack.c.l.b16 %v1490
        %v4302 = vunpack.c.h.b16 %v1490
        %v4303 = vunpack.c.l.b16 %v1491
        %v4304 = vunpack.c.h.b16 %v1491
        %v4305 = vunpack.c.l.b16 %v1492
        %v4306 = vunpack.c.h.b16 %v1492
        %v4307 = vunpack.c.l.b16 %v1493
        %v4308 = vunpack.c.h.b16 %v1493
        %v4309 = vunpack.c.l.b16 %v1494
        %v4310 = vunpack.c.h.b16 %v1494
        %v4311 = vunpack.c.l.b16 %v1495
        %v4312 = vunpack.c.h.b16 %v1495
        %v4313 = vunpack.c.l.b16 %v1496
        %v4314 = vunpack.c.h.b16 %v1496
        %v4315 = vunpack.c.l.b16 %v1497
        %v4316 = vunpack.c.h.b16 %v1497
        %v4317 = vunpack.c.l.b16 %v1498
        %v4318 = vunpack.c.h.b16 %v1498
        %v4319 = vunpack.c.l.b16 %v1499
        %v4320 = vunpack.c.h.b16 %v1499
        %v4321 = vunpack.c.l.b16 %v1500
        %v4322 = vunpack.c.h.b16 %v1500
        %v4323 = vunpack.c.l.b16 %v1501
        %v4324 = vunpack.c.h.b16 %v1501
        %v4325 = vunpack.c.l.b16 %v1502
        %v4326 = vunpack.c.h.b16 %v1502
        %v4327 = vunpack.c.l.b16 %v1503
        %v4328 = vunpack.c.h.b16 %v1503
        %v4329 = vunpack.c.l.b16 %v1504
        %v4330 = vunpack.c.h.b16 %v1504
        %v4331 = vunpack.c.l.b16 %v1505
        %v4332 = vunpack.c.h.b16 %v1505
        %v4333 = vunpack.c.l.b16 %v1506
        %v4334 = vunpack.c.h.b16 %v1506
        %v4335 = vunpack.c.l.b16 %v1507
        %v4336 = vunpack.c.h.b16 %v1507
        %v4337 = vunpack.c.l.b16 %v1508
        %v4338 = vunpack.c.h.b16 %v1508
        %v4339 = vunpack.c.l.b16 %v1509
        %v4340 = vunpack.c.h.b16 %v1509
        %v4341 = vunpack.c.l.b16 %v1510
        %v4342 = vunpack.c.h.b16 %v1510
        %v4343 = vunpack.c.l.b16 %v1511
        %v4344 = vunpack.c.h.b16 %v1511
        %v4345 = vunpack.c.l.b16 %v1512
        %v4346 = vunpack.c.h.b16 %v1512
        %v4347 = vunpack.c.l.b16 %v1513
        %v4348 = vunpack.c.h.b16 %v1513
        %v4349 = vunpack.c.l.b16 %v1514
        %v4350 = vunpack.c.h.b16 %v1514
        %v4351 = vunpack.c.l.b16 %v1515
        %v4352 = vunpack.c.h.b16 %v1515
        %v4353 = vunpack.c.l.b16 %v1516
        %v4354 = vunpack.c.h.b16 %v1516
        %v4355 = vunpack.c.l.b16 %v1517
        %v4356 = vunpack.c.h.b16 %v1517
        %v4357 = vunpack.c.l.b16 %v1518
        %v4358 = vunpack.c.h.b16 %v1518
        %v4359 = vunpack.c.l.b16 %v1519
        %v4360 = vunpack.c.h.b16 %v1519
        %v4361 = vunpack.c.l.b16 %v1520
        %v4362 = vunpack.c.h.b16 %v1520
        %v4363 = vunpack.c.l.b16 %v1521
        %v4364 = vunpack.c.h.b16 %v1521
        %v4365 = vunpack.c.l.b16 %v1522
        %v4366 = vunpack.c.h.b16 %v1522
        %v4367 = vunpack.c.l.b16 %v1523
        %v4368 = vunpack.c.h.b16 %v1523
        %v4369 = vunpack.c.l.b16 %v1524
        %v4370 = vunpack.c.h.b16 %v1524
        %v4371 = vunpack.c.l.b16 %v1525
        %v4372 = vunpack.c.h.b16 %v1525
        %v4373 = vunpack.c.l.b16 %v1526
        %v4374 = vunpack.c.h.b16 %v1526
        %v4375 = vunpack.c.l.b16 %v1527
        %v4376 = vunpack.c.h.b16 %v1527
        %v4377 = vunpack.c.l.b16 %v1528
        %v4378 = vunpack.c.h.b16 %v1528
        %v4379 = vunpack.c.l.b16 %v1529
        %v4380 = vunpack.c.h.b16 %v1529
        %v4381 = vunpack.c.l.b16 %v1530
        %v4382 = vunpack.c.h.b16 %v1530
        %v4383 = vunpack.c.l.b16 %v1531
        %v4384 = vunpack.c.h.b16 %v1531
        %v4385 = vunpack.c.l.b16 %v1532
        %v4386 = vunpack.c.h.b16 %v1532
        %v4387 = vunpack.c.l.b16 %v1533
        %v4388 = vunpack.c.h.b16 %v1533
        %v4389 = vunpack.c.l.b16 %v1534
        %v4390 = vunpack.c.h.b16 %v1534
        %v4391 = vunpack.c.l.b16 %v1535
        %v4392 = vunpack.c.h.b16 %v1535
        %v4393 = vunpack.c.l.b16 %v1536
        %v4394 = vunpack.c.h.b16 %v1536
        %v4395 = vunpack.c.l.b16 %v1537
        %v4396 = vunpack.c.h.b16 %v1537
        %v4397 = vunpack.c.l.b16 %v1538
        %v4398 = vunpack.c.h.b16 %v1538
        %v4399 = vunpack.c.l.b16 %v1539
        %v4400 = vunpack.c.h.b16 %v1539
        %v4401 = vunpack.c.l.b16 %v1540
        %v4402 = vunpack.c.h.b16 %v1540
        %v4403 = vunpack.c.l.b16 %v1541
        %v4404 = vunpack.c.h.b16 %v1541
        %v4405 = vunpack.c.l.b16 %v1542
        %v4406 = vunpack.c.h.b16 %v1542
        %v4407 = vunpack.c.l.b16 %v1543
        %v4408 = vunpack.c.h.b16 %v1543
        %v4409 = vunpack.c.l.b16 %v1544
        %v4410 = vunpack.c.h.b16 %v1544
        %v4411 = vunpack.c.l.b16 %v1545
        %v4412 = vunpack.c.h.b16 %v1545
        %v4413 = vunpack.c.l.b16 %v1546
        %v4414 = vunpack.c.h.b16 %v1546
        %v4415 = vunpack.c.l.b16 %v1547
        %v4416 = vunpack.c.h.b16 %v1547
        %v4417 = vunpack.c.l.b16 %v1548
        %v4418 = vunpack.c.h.b16 %v1548
        %v4419 = vunpack.c.l.b16 %v1549
        %v4420 = vunpack.c.h.b16 %v1549
        %v4421 = vunpack.c.l.b16 %v1550
        %v4422 = vunpack.c.h.b16 %v1550
        %v4423 = vunpack.c.l.b16 %v1551
        %v4424 = vunpack.c.h.b16 %v1551
        %v4425 = vunpack.c.l.b16 %v1552
        %v4426 = vunpack.c.h.b16 %v1552
        %v4427 = vunpack.c.l.b16 %v1553
        %v4428 = vunpack.c.h.b16 %v1553
        %v4429 = vunpack.c.l.b16 %v1554
        %v4430 = vunpack.c.h.b16 %v1554
        %v4431 = vunpack.c.l.b16 %v1555
        %v4432 = vunpack.c.h.b16 %v1555
        %v4433 = vunpack.c.l.b16 %v1556
        %v4434 = vunpack.c.h.b16 %v1556
        %v4435 = vunpack.c.l.b16 %v1557
        %v4436 = vunpack.c.h.b16 %v1557
        %v4437 = vunpack.c.l.b16 %v1558
        %v4438 = vunpack.c.h.b16 %v1558
        %v4439 = vunpack.c.l.b16 %v1559
        %v4440 = vunpack.c.h.b16 %v1559
        %v4441 = vunpack.c.l.b16 %v1560
        %v4442 = vunpack.c.h.b16 %v1560
        %v4443 = vunpack.c.l.b16 %v1561
        %v4444 = vunpack.c.h.b16 %v1561
        %v4445 = vunpack.c.l.b16 %v1562
        %v4446 = vunpack.c.h.b16 %v1562
        %v4447 = vunpack.c.l.b16 %v1563
        %v4448 = vunpack.c.h.b16 %v1563
        %v4449 = vunpack.c.l.b16 %v1564
        %v4450 = vunpack.c.h.b16 %v1564
        %v4451 = vunpack.c.l.b16 %v1565
        %v4452 = vunpack.c.h.b16 %v1565
        %v4453 = vunpack.c.l.b16 %v1566
        %v4454 = vunpack.c.h.b16 %v1566
        %v4455 = vunpack.c.l.b16 %v1567
        %v4456 = vunpack.c.h.b16 %v1567
        %v4457 = vunpack.c.l.b16 %v1568
        %v4458 = vunpack.c.h.b16 %v1568
        %v4459 = vunpack.c.l.b16 %v1569
        %v4460 = vunpack.c.h.b16 %v1569
        %v4461 = vunpack.c.l.b16 %v1570
        %v4462 = vunpack.c.h.b16 %v1570
        %v4463 = vunpack.c.l.b16 %v1571
        %v4464 = vunpack.c.h.b16 %v1571
        %v4465 = vunpack.c.l.b16 %v1572
        %v4466 = vunpack.c.h.b16 %v1572
        %v4467 = vunpack.c.l.b16 %v1573
        %v4468 = vunpack.c.h.b16 %v1573
        %v4469 = vunpack.c.l.b16 %v1574
        %v4470 = vunpack.c.h.b16 %v1574
        %v4471 = vunpack.c.l.b16 %v1575
        %v4472 = vunpack.c.h.b16 %v1575
        %v4473 = vunpack.c.l.b16 %v1576
        %v4474 = vunpack.c.h.b16 %v1576
        %v4475 = vunpack.c.l.b16 %v1577
        %v4476 = vunpack.c.h.b16 %v1577
        %v4477 = vunpack.c.l.b16 %v1578
        %v4478 = vunpack.c.h.b16 %v1578
        %v4479 = vunpack.c.l.b16 %v1579
        %v4480 = vunpack.c.h.b16 %v1579
        %v4481 = vunpack.c.l.b16 %v1580
        %v4482 = vunpack.c.h.b16 %v1580
        %v4483 = vunpack.c.l.b16 %v1581
        %v4484 = vunpack.c.h.b16 %v1581
        %v4485 = vunpack.c.l.b16 %v1582
        %v4486 = vunpack.c.h.b16 %v1582
        %v4487 = vunpack.c.l.b16 %v1583
        %v4488 = vunpack.c.h.b16 %v1583
        %v4489 = vunpack.c.l.b16 %v1584
        %v4490 = vunpack.c.h.b16 %v1584
        %v4491 = vunpack.c.l.b16 %v1585
        %v4492 = vunpack.c.h.b16 %v1585
        %v4493 = vunpack.c.l.b16 %v1586
        %v4494 = vunpack.c.h.b16 %v1586
        %v4495 = vunpack.c.l.b16 %v1587
        %v4496 = vunpack.c.h.b16 %v1587
        %v4497 = vunpack.c.l.b16 %v1588
        %v4498 = vunpack.c.h.b16 %v1588
        %v4499 = vunpack.c.l.b16 %v1589
        %v4500 = vunpack.c.h.b16 %v1589
        %v4501 = vunpack.c.l.b16 %v1590
        %v4502 = vunpack.c.h.b16 %v1590
        %v4503 = vunpack.c.l.b16 %v1591
        %v4504 = vunpack.c.h.b16 %v1591
        %v4505 = vunpack.c.l.b16 %v1592
        %v4506 = vunpack.c.h.b16 %v1592
        %v4507 = vunpack.c.l.b16 %v1593
        %v4508 = vunpack.c.h.b16 %v1593
        %v4509 = vunpack.c.l.b16 %v1594
        %v4510 = vunpack.c.h.b16 %v1594
        %v4511 = vunpack.c.l.b16 %v1595
        %v4512 = vunpack.c.h.b16 %v1595
        %v4513 = vunpack.c.l.b16 %v1596
        %v4514 = vunpack.c.h.b16 %v1596
        %v4515 = vunpack.c.l.b16 %v1597
        %v4516 = vunpack.c.h.b16 %v1597
        %v4517 = vunpack.c.l.b16 %v1598
        %v4518 = vunpack.c.h.b16 %v1598
        %v4519 = vunpack.c.l.b16 %v1599
        %v4520 = vunpack.c.h.b16 %v1599
        %v4521 = vunpack.c.l.b16 %v1600
        %v4522 = vunpack.c.h.b16 %v1600
        %v4523 = vunpack.c.l.b16 %v1601
        %v4524 = vunpack.c.h.b16 %v1601
        %v4525 = vunpack.c.l.b16 %v1602
        %v4526 = vunpack.c.h.b16 %v1602
        %v4527 = vunpack.c.l.b16 %v1603
        %v4528 = vunpack.c.h.b16 %v1603
        %v4529 = vunpack.c.l.b16 %v1604
        %v4530 = vunpack.c.h.b16 %v1604
        %v4531 = vunpack.c.l.b16 %v1605
        %v4532 = vunpack.c.h.b16 %v1605
        %v4533 = vunpack.c.l.b16 %v1606
        %v4534 = vunpack.c.h.b16 %v1606
        %v4535 = vunpack.c.l.b16 %v1607
        %v4536 = vunpack.c.h.b16 %v1607
        %v4537 = vunpack.c.l.b16 %v1608
        %v4538 = vunpack.c.h.b16 %v1608
        %v4539 = vunpack.c.l.b16 %v1609
        %v4540 = vunpack.c.h.b16 %v1609
        %v4541 = vunpack.c.l.b16 %v1610
        %v4542 = vunpack.c.h.b16 %v1610
        %v4543 = vunpack.c.l.b16 %v1611
        %v4544 = vunpack.c.h.b16 %v1611
        %v4545 = vunpack.c.l.b16 %v1612
        %v4546 = vunpack.c.h.b16 %v1612
        %v4547 = vunpack.c.l.b16 %v1613
        %v4548 = vunpack.c.h.b16 %v1613
        %v4549 = vunpack.c.l.b16 %v1614
        %v4550 = vunpack.c.h.b16 %v1614
        %v4551 = vunpack.c.l.b16 %v1615
        %v4552 = vunpack.c.h.b16 %v1615
        %v4553 = vunpack.c.l.b16 %v1616
        %v4554 = vunpack.c.h.b16 %v1616
        %v4555 = vunpack.c.l.b16 %v1617
        %v4556 = vunpack.c.h.b16 %v1617
        %v4557 = vunpack.c.l.b16 %v1618
        %v4558 = vunpack.c.h.b16 %v1618
        %v4559 = vunpack.c.l.b16 %v1619
        %v4560 = vunpack.c.h.b16 %v1619
        %v4561 = vunpack.c.l.b16 %v1620
        %v4562 = vunpack.c.h.b16 %v1620
        %v4563 = vunpack.c.l.b16 %v1621
        %v4564 = vunpack.c.h.b16 %v1621
        %v4565 = vunpack.c.l.b16 %v1622
        %v4566 = vunpack.c.h.b16 %v1622
        %v4567 = vunpack.c.l.b16 %v1623
        %v4568 = vunpack.c.h.b16 %v1623
        %v4569 = vunpack.c.l.b16 %v1624
        %v4570 = vunpack.c.h.b16 %v1624
        %v4571 = vunpack.c.l.b16 %v1625
        %v4572 = vunpack.c.h.b16 %v1625
        %v4573 = vunpack.c.l.b16 %v1626
        %v4574 = vunpack.c.h.b16 %v1626
        %v4575 = vunpack.c.l.b16 %v1627
        %v4576 = vunpack.c.h.b16 %v1627
        %v4577 = vunpack.c.l.b16 %v1628
        %v4578 = vunpack.c.h.b16 %v1628
        %v4579 = vunpack.c.l.b16 %v1629
        %v4580 = vunpack.c.h.b16 %v1629
        %v4581 = vunpack.c.l.b16 %v1630
        %v4582 = vunpack.c.h.b16 %v1630
        %v4583 = vunpack.c.l.b16 %v1631
        %v4584 = vunpack.c.h.b16 %v1631
        %v4585 = vunpack.c.l.b16 %v1632
        %v4586 = vunpack.c.h.b16 %v1632
        %v4587 = vunpack.c.l.b16 %v1633
        %v4588 = vunpack.c.h.b16 %v1633
        %v4589 = vunpack.c.l.b16 %v1634
        %v4590 = vunpack.c.h.b16 %v1634
        %v4591 = vunpack.c.l.b16 %v1635
        %v4592 = vunpack.c.h.b16 %v1635
        %v4593 = vunpack.c.l.b16 %v1636
        %v4594 = vunpack.c.h.b16 %v1636
        %v4595 = vunpack.c.l.b16 %v1637
        %v4596 = vunpack.c.h.b16 %v1637
        %v4597 = vunpack.c.l.b16 %v1638
        %v4598 = vunpack.c.h.b16 %v1638
        %v4599 = vunpack.c.l.b16 %v1639
        %v4600 = vunpack.c.h.b16 %v1639
        %v4601 = vunpack.c.l.b16 %v1640
        %v4602 = vunpack.c.h.b16 %v1640
        %v4603 = vunpack.c.l.b16 %v1641
        %v4604 = vunpack.c.h.b16 %v1641
        %v4605 = vunpack.c.l.b16 %v1642
        %v4606 = vunpack.c.h.b16 %v1642
        %v4607 = vunpack.c.l.b16 %v1643
        %v4608 = vunpack.c.h.b16 %v1643
        %v4609 = vunpack.c.l.b16 %v1644
        %v4610 = vunpack.c.h.b16 %v1644
        %v4611 = vunpack.c.l.b16 %v1645
        %v4612 = vunpack.c.h.b16 %v1645
        %v4613 = vunpack.c.l.b16 %v1646
        %v4614 = vunpack.c.h.b16 %v1646
        %v4615 = vunpack.c.l.b16 %v1647
        %v4616 = vunpack.c.h.b16 %v1647
        %v4617 = vunpack.c.l.b16 %v1648
        %v4618 = vunpack.c.h.b16 %v1648
        %v4619 = vunpack.c.l.b16 %v1649
        %v4620 = vunpack.c.h.b16 %v1649
        %v4621 = vunpack.c.l.b16 %v1650
        %v4622 = vunpack.c.h.b16 %v1650
        %v4623 = vunpack.c.l.b16 %v1651
        %v4624 = vunpack.c.h.b16 %v1651
        %v4625 = vunpack.c.l.b16 %v1652
        %v4626 = vunpack.c.h.b16 %v1652
        %v4627 = vunpack.c.l.b16 %v1653
        %v4628 = vunpack.c.h.b16 %v1653
        %v4629 = vunpack.c.l.b16 %v1654
        %v4630 = vunpack.c.h.b16 %v1654
        %v4631 = vunpack.c.l.b16 %v1655
        %v4632 = vunpack.c.h.b16 %v1655
        %v4633 = vunpack.c.l.b16 %v1656
        %v4634 = vunpack.c.h.b16 %v1656
        %v4635 = vunpack.c.l.b16 %v1657
        %v4636 = vunpack.c.h.b16 %v1657
        %v4637 = vunpack.c.l.b16 %v1658
        %v4638 = vunpack.c.h.b16 %v1658
        %v4639 = vunpack.c.l.b16 %v1659
        %v4640 = vunpack.c.h.b16 %v1659
        %v4641 = vunpack.c.l.b16 %v1660
        %v4642 = vunpack.c.h.b16 %v1660
        %v4643 = vunpack.c.l.b16 %v1661
        %v4644 = vunpack.c.h.b16 %v1661
        %v4645 = vunpack.c.l.b16 %v1662
        %v4646 = vunpack.c.h.b16 %v1662
        %v4647 = vunpack.c.l.b16 %v1663
        %v4648 = vunpack.c.h.b16 %v1663
        %v4649 = vunpack.c.l.b16 %v1664
        %v4650 = vunpack.c.h.b16 %v1664
        %v4651 = vunpack.c.l.b16 %v1665
        %v4652 = vunpack.c.h.b16 %v1665
        %v4653 = vunpack.c.l.b16 %v1666
        %v4654 = vunpack.c.h.b16 %v1666
        %v4655 = vunpack.c.l.b16 %v1667
        %v4656 = vunpack.c.h.b16 %v1667
        %v4657 = vunpack.c.l.b16 %v1668
        %v4658 = vunpack.c.h.b16 %v1668
        %v4659 = vunpack.c.l.b16 %v1669
        %v4660 = vunpack.c.h.b16 %v1669
        %v4661 = vunpack.c.l.b16 %v1670
        %v4662 = vunpack.c.h.b16 %v1670
        %v4663 = vunpack.c.l.b16 %v1671
        %v4664 = vunpack.c.h.b16 %v1671
        %v4665 = vunpack.c.l.b16 %v1672
        %v4666 = vunpack.c.h.b16 %v1672
        %v4667 = vunpack.c.l.b16 %v1673
        %v4668 = vunpack.c.h.b16 %v1673
        %v4669 = vunpack.c.l.b16 %v1674
        %v4670 = vunpack.c.h.b16 %v1674
        %v4671 = vunpack.c.l.b16 %v1675
        %v4672 = vunpack.c.h.b16 %v1675
        %v4673 = vunpack.c.l.b16 %v1676
        %v4674 = vunpack.c.h.b16 %v1676
        %v4675 = vunpack.c.l.b16 %v1677
        %v4676 = vunpack.c.h.b16 %v1677
        %v4677 = vunpack.c.l.b16 %v1678
        %v4678 = vunpack.c.h.b16 %v1678
        %v4679 = vunpack.c.l.b16 %v1679
        %v4680 = vunpack.c.h.b16 %v1679
        %v4681 = vunpack.c.l.b16 %v1680
        %v4682 = vunpack.c.h.b16 %v1680
        %v4683 = vunpack.c.l.b16 %v1681
        %v4684 = vunpack.c.h.b16 %v1681
        %v4685 = vunpack.c.l.b16 %v1682
        %v4686 = vunpack.c.h.b16 %v1682
        %v4687 = vunpack.c.l.b16 %v1683
        %v4688 = vunpack.c.h.b16 %v1683
        %v4689 = vunpack.c.l.b16 %v1684
        %v4690 = vunpack.c.h.b16 %v1684
        %v4691 = vunpack.c.l.b16 %v1685
        %v4692 = vunpack.c.h.b16 %v1685
        %v4693 = vunpack.c.l.b16 %v1686
        %v4694 = vunpack.c.h.b16 %v1686
        %v4695 = vunpack.c.l.b16 %v1687
        %v4696 = vunpack.c.h.b16 %v1687
        %v4697 = vunpack.c.l.b16 %v1688
        %v4698 = vunpack.c.h.b16 %v1688
        %v4699 = vunpack.c.l.b16 %v1689
        %v4700 = vunpack.c.h.b16 %v1689
        %v4701 = vunpack.c.l.b16 %v1690
        %v4702 = vunpack.c.h.b16 %v1690
        %v4703 = vunpack.c.l.b16 %v1691
        %v4704 = vunpack.c.h.b16 %v1691
        %v4705 = vunpack.c.l.b16 %v1692
        %v4706 = vunpack.c.h.b16 %v1692
        %v4707 = vunpack.c.l.b16 %v1693
        %v4708 = vunpack.c.h.b16 %v1693
        %v4709 = vunpack.c.l.b16 %v1694
        %v4710 = vunpack.c.h.b16 %v1694
        %v4711 = vunpack.c.l.b16 %v1695
        %v4712 = vunpack.c.h.b16 %v1695
        %v4713 = vunpack.c.l.b16 %v1696
        %v4714 = vunpack.c.h.b16 %v1696
        %v4715 = vunpack.c.l.b16 %v1697
        %v4716 = vunpack.c.h.b16 %v1697
        %v4717 = vunpack.c.l.b16 %v1698
        %v4718 = vunpack.c.h.b16 %v1698
        %v4719 = vunpack.c.l.b16 %v1699
        %v4720 = vunpack.c.h.b16 %v1699
        %v4721 = vunpack.c.l.b16 %v1700
        %v4722 = vunpack.c.h.b16 %v1700
        %v4723 = vunpack.c.l.b16 %v1701
        %v4724 = vunpack.c.h.b16 %v1701
        %v4725 = vunpack.c.l.b16 %v1702
        %v4726 = vunpack.c.h.b16 %v1702
        %v4727 = vunpack.c.l.b16 %v1703
        %v4728 = vunpack.c.h.b16 %v1703
        %v4729 = vunpack.c.l.b16 %v1704
        %v4730 = vunpack.c.h.b16 %v1704
        %v4731 = vunpack.c.l.b16 %v1705
        %v4732 = vunpack.c.h.b16 %v1705
        %v4733 = vunpack.c.l.b16 %v1706
        %v4734 = vunpack.c.h.b16 %v1706
        %v4735 = vunpack.c.l.b16 %v1707
        %v4736 = vunpack.c.h.b16 %v1707
        %v4737 = vunpack.c.l.b16 %v1708
        %v4738 = vunpack.c.h.b16 %v1708
        %v4739 = vunpack.c.l.b16 %v1709
        %v4740 = vunpack.c.h.b16 %v1709
        %v4741 = vunpack.c.l.b16 %v1710
        %v4742 = vunpack.c.h.b16 %v1710
        %v4743 = vunpack.c.l.b16 %v1711
        %v4744 = vunpack.c.h.b16 %v1711
        %v4745 = vunpack.c.l.b16 %v1712
        %v4746 = vunpack.c.h.b16 %v1712
        %v4747 = vunpack.c.l.b16 %v1713
        %v4748 = vunpack.c.h.b16 %v1713
        %v4749 = vunpack.c.l.b16 %v1714
        %v4750 = vunpack.c.h.b16 %v1714
        %v4751 = vunpack.c.l.b16 %v1715
        %v4752 = vunpack.c.h.b16 %v1715
        %v4753 = vunpack.c.l.b16 %v1716
        %v4754 = vunpack.c.h.b16 %v1716
        %v4755 = vunpack.c.l.b16 %v1717
        %v4756 = vunpack.c.h.b16 %v1717
        %v4757 = vunpack.c.l.b16 %v1718
        %v4758 = vunpack.c.h.b16 %v1718
        %v4759 = vunpack.c.l.b16 %v1719
        %v4760 = vunpack.c.h.b16 %v1719
        %v4761 = vunpack.c.l.b16 %v1720
        %v4762 = vunpack.c.h.b16 %v1720
        %v4763 = vunpack.c.l.b16 %v1721
        %v4764 = vunpack.c.h.b16 %v1721
        %v4765 = vunpack.c.l.b16 %v1722
        %v4766 = vunpack.c.h.b16 %v1722
        %v4767 = vunpack.c.l.b16 %v1723
        %v4768 = vunpack.c.h.b16 %v1723
        %v4769 = vunpack.c.l.b16 %v1724
        %v4770 = vunpack.c.h.b16 %v1724
        %v4771 = vunpack.c.l.b16 %v1725
        %v4772 = vunpack.c.h.b16 %v1725
        %v4773 = vunpack.c.l.b16 %v1726
        %v4774 = vunpack.c.h.b16 %v1726
        %v4775 = vunpack.c.l.b16 %v1727
        %v4776 = vunpack.c.h.b16 %v1727
        %v4777 = vunpack.c.l.b16 %v1728
        %v4778 = vunpack.c.h.b16 %v1728
        %v4779 = vunpack.c.l.b16 %v1729
        %v4780 = vunpack.c.h.b16 %v1729
        %v4781 = vunpack.c.l.b16 %v1730
        %v4782 = vunpack.c.h.b16 %v1730
        %v4783 = vunpack.c.l.b16 %v1731
        %v4784 = vunpack.c.h.b16 %v1731
        %v4785 = vunpack.c.l.b16 %v1732
        %v4786 = vunpack.c.h.b16 %v1732
        %v4787 = vunpack.c.l.b16 %v1733
        %v4788 = vunpack.c.h.b16 %v1733
        %v4789 = vunpack.c.l.b16 %v1734
        %v4790 = vunpack.c.h.b16 %v1734
        %v4791 = vunpack.c.l.b16 %v1735
        %v4792 = vunpack.c.h.b16 %v1735
        %v4793 = vunpack.c.l.b16 %v1736
        %v4794 = vunpack.c.h.b16 %v1736
        %v4795 = vunpack.c.l.b16 %v1737
        %v4796 = vunpack.c.h.b16 %v1737
        %v4797 = vunpack.c.l.b16 %v1738
        %v4798 = vunpack.c.h.b16 %v1738
        %v4799 = vunpack.c.l.b16 %v1739
        %v4800 = vunpack.c.h.b16 %v1739
        %v4801 = vunpack.c.l.b16 %v1740
        %v4802 = vunpack.c.h.b16 %v1740
        %v4803 = vunpack.c.l.b16 %v1741
        %v4804 = vunpack.c.h.b16 %v1741
        %v4805 = vunpack.c.l.b16 %v1742
        %v4806 = vunpack.c.h.b16 %v1742
        %v4807 = vunpack.c.l.b16 %v1743
        %v4808 = vunpack.c.h.b16 %v1743
        %v4809 = vunpack.c.l.b16 %v1744
        %v4810 = vunpack.c.h.b16 %v1744
        %v4811 = vunpack.c.l.b16 %v1745
        %v4812 = vunpack.c.h.b16 %v1745
        %v4813 = vunpack.c.l.b16 %v1746
        %v4814 = vunpack.c.h.b16 %v1746
        %v4815 = vunpack.c.l.b16 %v1747
        %v4816 = vunpack.c.h.b16 %v1747
        %v4817 = vunpack.c.l.b16 %v1748
        %v4818 = vunpack.c.h.b16 %v1748
        %v4819 = vunpack.c.l.b16 %v1749
        %v4820 = vunpack.c.h.b16 %v1749
        %v4821 = vunpack.c.l.b16 %v1750
        %v4822 = vunpack.c.h.b16 %v1750
        %v4823 = vpack.c.b16 %v2783, %v2775
        %v4824 = vpack.c.b16 %v2784, %v2776
        %v4825 = vpack.c.b16 %v2785, %v2777
        %v4826 = vpack.c.b16 %v2786, %v2778
        %v4827 = vpack.c.b16 %v2787, %v2779
        %v4828 = vpack.c.b16 %v2788, %v2780
        %v4829 = vpack.c.b16 %v2789, %v2781
        %v4830 = vpack.c.b16 %v2790, %v2782
        %v4831 = vpack.c.b16 %v2799, %v2791
        %v4832 = vpack.c.b16 %v2800, %v2792
        %v4833 = vpack.c.b16 %v2801, %v2793
        %v4834 = vpack.c.b16 %v2802, %v2794
        %v4835 = vpack.c.b16 %v2803, %v2795
        %v4836 = vpack.c.b16 %v2804, %v2796
        %v4837 = vpack.c.b16 %v2805, %v2797
        %v4838 = vpack.c.b16 %v2806, %v2798
        %v4839 = vpack.c.b16 %v2815, %v2807
        %v4840 = vpack.c.b16 %v2816, %v2808
        %v4841 = vpack.c.b16 %v2817, %v2809
        %v4842 = vpack.c.b16 %v2818, %v2810
        %v4843 = vpack.c.b16 %v2819, %v2811
        %v4844 = vpack.c.b16 %v2820, %v2812
        %v4845 = vpack.c.b16 %v2821, %v2813
        %v4846 = vpack.c.b16 %v2822, %v2814
        %v4847 = vpack.c.b16 %v2831, %v2823
        %v4848 = vpack.c.b16 %v2832, %v2824
        %v4849 = vpack.c.b16 %v2833, %v2825
        %v4850 = vpack.c.b16 %v2834, %v2826
        %v4851 = vpack.c.b16 %v2835, %v2827
        %v4852 = vpack.c.b16 %v2836, %v2828
        %v4853 = vpack.c.b16 %v2837, %v2829
        %v4854 = vpack.c.b16 %v2838, %v2830
        %v4855 = vpack.c.b16 %v2847, %v2839
        %v4856 = vpack.c.b16 %v2848, %v2840
        %v4857 = vpack.c.b16 %v2849, %v2841
        %v4858 = vpack.c.b16 %v2850, %v2842
        %v4859 = vpack.c.b16 %v2851, %v2843
        %v4860 = vpack.c.b16 %v2852, %v2844
        %v4861 = vpack.c.b16 %v2853, %v2845
        %v4862 = vpack.c.b16 %v2854, %v2846
        %v4863 = vpack.c.b16 %v2863, %v2855
        %v4864 = vpack.c.b16 %v2864, %v2856
        %v4865 = vpack.c.b16 %v2865, %v2857
        %v4866 = vpack.c.b16 %v2866, %v2858
        %v4867 = vpack.c.b16 %v2867, %v2859
        %v4868 = vpack.c.b16 %v2868, %v2860
        %v4869 = vpack.c.b16 %v2869, %v2861
        %v4870 = vpack.c.b16 %v2870, %v2862
        %v4871 = vpack.c.b16 %v2879, %v2871
        %v4872 = vpack.c.b16 %v2880, %v2872
        %v4873 = vpack.c.b16 %v2881, %v2873
        %v4874 = vpack.c.b16 %v2882, %v2874
        %v4875 = vpack.c.b16 %v2883, %v2875
        %v4876 = vpack.c.b16 %v2884, %v2876
        %v4877 = vpack.c.b16 %v2885, %v2877
        %v4878 = vpack.c.b16 %v2886, %v2878
        %v4879 = vpack.c.b16 %v2895, %v2887
        %v4880 = vpack.c.b16 %v2896, %v2888
        %v4881 = vpack.c.b16 %v2897, %v2889
        %v4882 = vpack.c.b16 %v2898, %v2890
        %v4883 = vpack.c.b16 %v2899, %v2891
        %v4884 = vpack.c.b16 %v2900, %v2892
        %v4885 = vpack.c.b16 %v2901, %v2893
        %v4886 = vpack.c.b16 %v2902, %v2894
        %v4887 = vpack.c.b16 %v2911, %v2903
        %v4888 = vpack.c.b16 %v2912, %v2904
        %v4889 = vpack.c.b16 %v2913, %v2905
        %v4890 = vpack.c.b16 %v2914, %v2906
        %v4891 = vpack.c.b16 %v2915, %v2907
        %v4892 = vpack.c.b16 %v2916, %v2908
        %v4893 = vpack.c.b16 %v2917, %v2909
        %v4894 = vpack.c.b16 %v2918, %v2910
        %v4895 = vpack.c.b16 %v2927, %v2919
        %v4896 = vpack.c.b16 %v2928, %v2920
        %v4897 = vpack.c.b16 %v2929, %v2921
        %v4898 = vpack.c.b16 %v2930, %v2922
        %v4899 = vpack.c.b16 %v2931, %v2923
        %v4900 = vpack.c.b16 %v2932, %v2924
        %v4901 = vpack.c.b16 %v2933, %v2925
        %v4902 = vpack.c.b16 %v2934, %v2926
        %v4903 = vpack.c.b16 %v2943, %v2935
        %v4904 = vpack.c.b16 %v2944, %v2936
        %v4905 = vpack.c.b16 %v2945, %v2937
        %v4906 = vpack.c.b16 %v2946, %v2938
        %v4907 = vpack.c.b16 %v2947, %v2939
        %v4908 = vpack.c.b16 %v2948, %v2940
        %v4909 = vpack.c.b16 %v2949, %v2941
        %v4910 = vpack.c.b16 %v2950, %v2942
        %v4911 = vpack.c.b16 %v2959, %v2951
        %v4912 = vpack.c.b16 %v2960, %v2952
        %v4913 = vpack.c.b16 %v2961, %v2953
        %v4914 = vpack.c.b16 %v2962, %v2954
        %v4915 = vpack.c.b16 %v2963, %v2955
        %v4916 = vpack.c.b16 %v2964, %v2956
        %v4917 = vpack.c.b16 %v2965, %v2957
        %v4918 = vpack.c.b16 %v2966, %v2958
        %v4919 = vpack.c.b16 %v2975, %v2967
        %v4920 = vpack.c.b16 %v2976, %v2968
        %v4921 = vpack.c.b16 %v2977, %v2969
        %v4922 = vpack.c.b16 %v2978, %v2970
        %v4923 = vpack.c.b16 %v2979, %v2971
        %v4924 = vpack.c.b16 %v2980, %v2972
        %v4925 = vpack.c.b16 %v2981, %v2973
        %v4926 = vpack.c.b16 %v2982, %v2974
        %v4927 = vpack.c.b16 %v2991, %v2983
        %v4928 = vpack.c.b16 %v2992, %v2984
        %v4929 = vpack.c.b16 %v2993, %v2985
        %v4930 = vpack.c.b16 %v2994, %v2986
        %v4931 = vpack.c.b16 %v2995, %v2987
        %v4932 = vpack.c.b16 %v2996, %v2988
        %v4933 = vpack.c.b16 %v2997, %v2989
        %v4934 = vpack.c.b16 %v2998, %v2990
        %v4935 = vpack.c.b16 %v3007, %v2999
        %v4936 = vpack.c.b16 %v3008, %v3000
        %v4937 = vpack.c.b16 %v3009, %v3001
        %v4938 = vpack.c.b16 %v3010, %v3002
        %v4939 = vpack.c.b16 %v3011, %v3003
        %v4940 = vpack.c.b16 %v3012, %v3004
        %v4941 = vpack.c.b16 %v3013, %v3005
        %v4942 = vpack.c.b16 %v3014, %v3006
        %v4943 = vpack.c.b16 %v3023, %v3015
        %v4944 = vpack.c.b16 %v3024, %v3016
        %v4945 = vpack.c.b16 %v3025, %v3017
        %v4946 = vpack.c.b16 %v3026, %v3018
        %v4947 = vpack.c.b16 %v3027, %v3019
        %v4948 = vpack.c.b16 %v3028, %v3020
        %v4949 = vpack.c.b16 %v3029, %v3021
        %v4950 = vpack.c.b16 %v3030, %v3022
        %v4951 = vpack.c.b16 %v3039, %v3031
        %v4952 = vpack.c.b16 %v3040, %v3032
        %v4953 = vpack.c.b16 %v3041, %v3033
        %v4954 = vpack.c.b16 %v3042, %v3034
        %v4955 = vpack.c.b16 %v3043, %v3035
        %v4956 = vpack.c.b16 %v3044, %v3036
        %v4957 = vpack.c.b16 %v3045, %v3037
        %v4958 = vpack.c.b16 %v3046, %v3038
        %v4959 = vpack.c.b16 %v3055, %v3047
        %v4960 = vpack.c.b16 %v3056, %v3048
        %v4961 = vpack.c.b16 %v3057, %v3049
        %v4962 = vpack.c.b16 %v3058, %v3050
        %v4963 = vpack.c.b16 %v3059, %v3051
        %v4964 = vpack.c.b16 %v3060, %v3052
        %v4965 = vpack.c.b16 %v3061, %v3053
        %v4966 = vpack.c.b16 %v3062, %v3054
        %v4967 = vpack.c.b16 %v3071, %v3063
        %v4968 = vpack.c.b16 %v3072, %v3064
        %v4969 = vpack.c.b16 %v3073, %v3065
        %v4970 = vpack.c.b16 %v3074, %v3066
        %v4971 = vpack.c.b16 %v3075, %v3067
        %v4972 = vpack.c.b16 %v3076, %v3068
        %v4973 = vpack.c.b16 %v3077, %v3069
        %v4974 = vpack.c.b16 %v3078, %v3070
        %v4975 = vpack.c.b16 %v3087, %v3079
        %v4976 = vpack.c.b16 %v3088, %v3080
        %v4977 = vpack.c.b16 %v3089, %v3081
        %v4978 = vpack.c.b16 %v3090, %v3082
        %v4979 = vpack.c.b16 %v3091, %v3083
        %v4980 = vpack.c.b16 %v3092, %v3084
        %v4981 = vpack.c.b16 %v3093, %v3085
        %v4982 = vpack.c.b16 %v3094, %v3086
        %v4983 = vpack.c.b16 %v3103, %v3095
        %v4984 = vpack.c.b16 %v3104, %v3096
        %v4985 = vpack.c.b16 %v3105, %v3097
        %v4986 = vpack.c.b16 %v3106, %v3098
        %v4987 = vpack.c.b16 %v3107, %v3099
        %v4988 = vpack.c.b16 %v3108, %v3100
        %v4989 = vpack.c.b16 %v3109, %v3101
        %v4990 = vpack.c.b16 %v3110, %v3102
        %v4991 = vpack.c.b16 %v3119, %v3111
        %v4992 = vpack.c.b16 %v3120, %v3112
        %v4993 = vpack.c.b16 %v3121, %v3113
        %v4994 = vpack.c.b16 %v3122, %v3114
        %v4995 = vpack.c.b16 %v3123, %v3115
        %v4996 = vpack.c.b16 %v3124, %v3116
        %v4997 = vpack.c.b16 %v3125, %v3117
        %v4998 = vpack.c.b16 %v3126, %v3118
        %v4999 = vpack.c.b16 %v3135, %v3127
        %v5000 = vpack.c.b16 %v3136, %v3128
        %v5001 = vpack.c.b16 %v3137, %v3129
        %v5002 = vpack.c.b16 %v3138, %v3130
        %v5003 = vpack.c.b16 %v3139, %v3131
        %v5004 = vpack.c.b16 %v3140, %v3132
        %v5005 = vpack.c.b16 %v3141, %v3133
        %v5006 = vpack.c.b16 %v3142, %v3134
        %v5007 = vpack.c.b16 %v3151, %v3143
        %v5008 = vpack.c.b16 %v3152, %v3144
        %v5009 = vpack.c.b16 %v3153, %v3145
        %v5010 = vpack.c.b16 %v3154, %v3146
        %v5011 = vpack.c.b16 %v3155, %v3147
        %v5012 = vpack.c.b16 %v3156, %v3148
        %v5013 = vpack.c.b16 %v3157, %v3149
        %v5014 = vpack.c.b16 %v3158, %v3150
        %v5015 = vpack.c.b16 %v3167, %v3159
        %v5016 = vpack.c.b16 %v3168, %v3160
        %v5017 = vpack.c.b16 %v3169, %v3161
        %v5018 = vpack.c.b16 %v3170, %v3162
        %v5019 = vpack.c.b16 %v3171, %v3163
        %v5020 = vpack.c.b16 %v3172, %v3164
        %v5021 = vpack.c.b16 %v3173, %v3165
        %v5022 = vpack.c.b16 %v3174, %v3166
        %v5023 = vpack.c.b16 %v3183, %v3175
        %v5024 = vpack.c.b16 %v3184, %v3176
        %v5025 = vpack.c.b16 %v3185, %v3177
        %v5026 = vpack.c.b16 %v3186, %v3178
        %v5027 = vpack.c.b16 %v3187, %v3179
        %v5028 = vpack.c.b16 %v3188, %v3180
        %v5029 = vpack.c.b16 %v3189, %v3181
        %v5030 = vpack.c.b16 %v3190, %v3182
        %v5031 = vpack.c.b16 %v3199, %v3191
        %v5032 = vpack.c.b16 %v3200, %v3192
        %v5033 = vpack.c.b16 %v3201, %v3193
        %v5034 = vpack.c.b16 %v3202, %v3194
        %v5035 = vpack.c.b16 %v3203, %v3195
        %v5036 = vpack.c.b16 %v3204, %v3196
        %v5037 = vpack.c.b16 %v3205, %v3197
        %v5038 = vpack.c.b16 %v3206, %v3198
        %v5039 = vpack.c.b16 %v3215, %v3207
        %v5040 = vpack.c.b16 %v3216, %v3208
        %v5041 = vpack.c.b16 %v3217, %v3209
        %v5042 = vpack.c.b16 %v3218, %v3210
        %v5043 = vpack.c.b16 %v3219, %v3211
        %v5044 = vpack.c.b16 %v3220, %v3212
        %v5045 = vpack.c.b16 %v3221, %v3213
        %v5046 = vpack.c.b16 %v3222, %v3214
        %v5047 = vpack.c.b16 %v3231, %v3223
        %v5048 = vpack.c.b16 %v3232, %v3224
        %v5049 = vpack.c.b16 %v3233, %v3225
        %v5050 = vpack.c.b16 %v3234, %v3226
        %v5051 = vpack.c.b16 %v3235, %v3227
        %v5052 = vpack.c.b16 %v3236, %v3228
        %v5053 = vpack.c.b16 %v3237, %v3229
        %v5054 = vpack.c.b16 %v3238, %v3230
        %v5055 = vpack.c.b16 %v3247, %v3239
        %v5056 = vpack.c.b16 %v3248, %v3240
        %v5057 = vpack.c.b16 %v3249, %v3241
        %v5058 = vpack.c.b16 %v3250, %v3242
        %v5059 = vpack.c.b16 %v3251, %v3243
        %v5060 = vpack.c.b16 %v3252, %v3244
        %v5061 = vpack.c.b16 %v3253, %v3245
        %v5062 = vpack.c.b16 %v3254, %v3246
        %v5063 = vpack.c.b16 %v3263, %v3255
        %v5064 = vpack.c.b16 %v3264, %v3256
        %v5065 = vpack.c.b16 %v3265, %v3257
        %v5066 = vpack.c.b16 %v3266, %v3258
        %v5067 = vpack.c.b16 %v3267, %v3259
        %v5068 = vpack.c.b16 %v3268, %v3260
        %v5069 = vpack.c.b16 %v3269, %v3261
        %v5070 = vpack.c.b16 %v3270, %v3262
        %v5071 = vpack.c.b16 %v3279, %v3271
        %v5072 = vpack.c.b16 %v3280, %v3272
        %v5073 = vpack.c.b16 %v3281, %v3273
        %v5074 = vpack.c.b16 %v3282, %v3274
        %v5075 = vpack.c.b16 %v3283, %v3275
        %v5076 = vpack.c.b16 %v3284, %v3276
        %v5077 = vpack.c.b16 %v3285, %v3277
        %v5078 = vpack.c.b16 %v3286, %v3278
        %v5079 = vpack.c.b16 %v3295, %v3287
        %v5080 = vpack.c.b16 %v3296, %v3288
        %v5081 = vpack.c.b16 %v3297, %v3289
        %v5082 = vpack.c.b16 %v3298, %v3290
        %v5083 = vpack.c.b16 %v3299, %v3291
        %v5084 = vpack.c.b16 %v3300, %v3292
        %v5085 = vpack.c.b16 %v3301, %v3293
        %v5086 = vpack.c.b16 %v3302, %v3294
        %v5087 = vpack.c.b16 %v3311, %v3303
        %v5088 = vpack.c.b16 %v3312, %v3304
        %v5089 = vpack.c.b16 %v3313, %v3305
        %v5090 = vpack.c.b16 %v3314, %v3306
        %v5091 = vpack.c.b16 %v3315, %v3307
        %v5092 = vpack.c.b16 %v3316, %v3308
        %v5093 = vpack.c.b16 %v3317, %v3309
        %v5094 = vpack.c.b16 %v3318, %v3310
        %v5095 = vpack.c.b16 %v3327, %v3319
        %v5096 = vpack.c.b16 %v3328, %v3320
        %v5097 = vpack.c.b16 %v3329, %v3321
        %v5098 = vpack.c.b16 %v3330, %v3322
        %v5099 = vpack.c.b16 %v3331, %v3323
        %v5100 = vpack.c.b16 %v3332, %v3324
        %v5101 = vpack.c.b16 %v3333, %v3325
        %v5102 = vpack.c.b16 %v3334, %v3326
        %v5103 = vpack.c.b16 %v3343, %v3335
        %v5104 = vpack.c.b16 %v3344, %v3336
        %v5105 = vpack.c.b16 %v3345, %v3337
        %v5106 = vpack.c.b16 %v3346, %v3338
        %v5107 = vpack.c.b16 %v3347, %v3339
        %v5108 = vpack.c.b16 %v3348, %v3340
        %v5109 = vpack.c.b16 %v3349, %v3341
        %v5110 = vpack.c.b16 %v3350, %v3342
        %v5111 = vpack.c.b16 %v3359, %v3351
        %v5112 = vpack.c.b16 %v3360, %v3352
        %v5113 = vpack.c.b16 %v3361, %v3353
        %v5114 = vpack.c.b16 %v3362, %v3354
        %v5115 = vpack.c.b16 %v3363, %v3355
        %v5116 = vpack.c.b16 %v3364, %v3356
        %v5117 = vpack.c.b16 %v3365, %v3357
        %v5118 = vpack.c.b16 %v3366, %v3358
        %v5119 = vpack.c.b16 %v3375, %v3367
        %v5120 = vpack.c.b16 %v3376, %v3368
        %v5121 = vpack.c.b16 %v3377, %v3369
        %v5122 = vpack.c.b16 %v3378, %v3370
        %v5123 = vpack.c.b16 %v3379, %v3371
        %v5124 = vpack.c.b16 %v3380, %v3372
        %v5125 = vpack.c.b16 %v3381, %v3373
        %v5126 = vpack.c.b16 %v3382, %v3374
        %v5127 = vpack.c.b16 %v3391, %v3383
        %v5128 = vpack.c.b16 %v3392, %v3384
        %v5129 = vpack.c.b16 %v3393, %v3385
        %v5130 = vpack.c.b16 %v3394, %v3386
        %v5131 = vpack.c.b16 %v3395, %v3387
        %v5132 = vpack.c.b16 %v3396, %v3388
        %v5133 = vpack.c.b16 %v3397, %v3389
        %v5134 = vpack.c.b16 %v3398, %v3390
        %v5135 = vpack.c.b16 %v3407, %v3399
        %v5136 = vpack.c.b16 %v3408, %v3400
        %v5137 = vpack.c.b16 %v3409, %v3401
        %v5138 = vpack.c.b16 %v3410, %v3402
        %v5139 = vpack.c.b16 %v3411, %v3403
        %v5140 = vpack.c.b16 %v3412, %v3404
        %v5141 = vpack.c.b16 %v3413, %v3405
        %v5142 = vpack.c.b16 %v3414, %v3406
        %v5143 = vpack.c.b16 %v3423, %v3415
        %v5144 = vpack.c.b16 %v3424, %v3416
        %v5145 = vpack.c.b16 %v3425, %v3417
        %v5146 = vpack.c.b16 %v3426, %v3418
        %v5147 = vpack.c.b16 %v3427, %v3419
        %v5148 = vpack.c.b16 %v3428, %v3420
        %v5149 = vpack.c.b16 %v3429, %v3421
        %v5150 = vpack.c.b16 %v3430, %v3422
        %v5151 = vpack.c.b16 %v3439, %v3431
        %v5152 = vpack.c.b16 %v3440, %v3432
        %v5153 = vpack.c.b16 %v3441, %v3433
        %v5154 = vpack.c.b16 %v3442, %v3434
        %v5155 = vpack.c.b16 %v3443, %v3435
        %v5156 = vpack.c.b16 %v3444, %v3436
        %v5157 = vpack.c.b16 %v3445, %v3437
        %v5158 = vpack.c.b16 %v3446, %v3438
        %v5159 = vpack.c.b16 %v3455, %v3447
        %v5160 = vpack.c.b16 %v3456, %v3448
        %v5161 = vpack.c.b16 %v3457, %v3449
        %v5162 = vpack.c.b16 %v3458, %v3450
        %v5163 = vpack.c.b16 %v3459, %v3451
        %v5164 = vpack.c.b16 %v3460, %v3452
        %v5165 = vpack.c.b16 %v3461, %v3453
        %v5166 = vpack.c.b16 %v3462, %v3454
        %v5167 = vpack.c.b16 %v3471, %v3463
        %v5168 = vpack.c.b16 %v3472, %v3464
        %v5169 = vpack.c.b16 %v3473, %v3465
        %v5170 = vpack.c.b16 %v3474, %v3466
        %v5171 = vpack.c.b16 %v3475, %v3467
        %v5172 = vpack.c.b16 %v3476, %v3468
        %v5173 = vpack.c.b16 %v3477, %v3469
        %v5174 = vpack.c.b16 %v3478, %v3470
        %v5175 = vpack.c.b16 %v3487, %v3479
        %v5176 = vpack.c.b16 %v3488, %v3480
        %v5177 = vpack.c.b16 %v3489, %v3481
        %v5178 = vpack.c.b16 %v3490, %v3482
        %v5179 = vpack.c.b16 %v3491, %v3483
        %v5180 = vpack.c.b16 %v3492, %v3484
        %v5181 = vpack.c.b16 %v3493, %v3485
        %v5182 = vpack.c.b16 %v3494, %v3486
        %v5183 = vpack.c.b16 %v3503, %v3495
        %v5184 = vpack.c.b16 %v3504, %v3496
        %v5185 = vpack.c.b16 %v3505, %v3497
        %v5186 = vpack.c.b16 %v3506, %v3498
        %v5187 = vpack.c.b16 %v3507, %v3499
        %v5188 = vpack.c.b16 %v3508, %v3500
        %v5189 = vpack.c.b16 %v3509, %v3501
        %v5190 = vpack.c.b16 %v3510, %v3502
        %v5191 = vpack.c.b16 %v3519, %v3511
        %v5192 = vpack.c.b16 %v3520, %v3512
        %v5193 = vpack.c.b16 %v3521, %v3513
        %v5194 = vpack.c.b16 %v3522, %v3514
        %v5195 = vpack.c.b16 %v3523, %v3515
        %v5196 = vpack.c.b16 %v3524, %v3516
        %v5197 = vpack.c.b16 %v3525, %v3517
        %v5198 = vpack.c.b16 %v3526, %v3518
        %v5199 = vpack.c.b16 %v3535, %v3527
        %v5200 = vpack.c.b16 %v3536, %v3528
        %v5201 = vpack.c.b16 %v3537, %v3529
        %v5202 = vpack.c.b16 %v3538, %v3530
        %v5203 = vpack.c.b16 %v3539, %v3531
        %v5204 = vpack.c.b16 %v3540, %v3532
        %v5205 = vpack.c.b16 %v3541, %v3533
        %v5206 = vpack.c.b16 %v3542, %v3534
        %v5207 = vpack.c.b16 %v3551, %v3543
        %v5208 = vpack.c.b16 %v3552, %v3544
        %v5209 = vpack.c.b16 %v3553, %v3545
        %v5210 = vpack.c.b16 %v3554, %v3546
        %v5211 = vpack.c.b16 %v3555, %v3547
        %v5212 = vpack.c.b16 %v3556, %v3548
        %v5213 = vpack.c.b16 %v3557, %v3549
        %v5214 = vpack.c.b16 %v3558, %v3550
        %v5215 = vpack.c.b16 %v3567, %v3559
        %v5216 = vpack.c.b16 %v3568, %v3560
        %v5217 = vpack.c.b16 %v3569, %v3561
        %v5218 = vpack.c.b16 %v3570, %v3562
        %v5219 = vpack.c.b16 %v3571, %v3563
        %v5220 = vpack.c.b16 %v3572, %v3564
        %v5221 = vpack.c.b16 %v3573, %v3565
        %v5222 = vpack.c.b16 %v3574, %v3566
        %v5223 = vpack.c.b16 %v3583, %v3575
        %v5224 = vpack.c.b16 %v3584, %v3576
        %v5225 = vpack.c.b16 %v3585, %v3577
        %v5226 = vpack.c.b16 %v3586, %v3578
        %v5227 = vpack.c.b16 %v3587, %v3579
        %v5228 = vpack.c.b16 %v3588, %v3580
        %v5229 = vpack.c.b16 %v3589, %v3581
        %v5230 = vpack.c.b16 %v3590, %v3582
        %v5231 = vpack.c.b16 %v3599, %v3591
        %v5232 = vpack.c.b16 %v3600, %v3592
        %v5233 = vpack.c.b16 %v3601, %v3593
        %v5234 = vpack.c.b16 %v3602, %v3594
        %v5235 = vpack.c.b16 %v3603, %v3595
        %v5236 = vpack.c.b16 %v3604, %v3596
        %v5237 = vpack.c.b16 %v3605, %v3597
        %v5238 = vpack.c.b16 %v3606, %v3598
        %v5239 = vpack.c.b16 %v3615, %v3607
        %v5240 = vpack.c.b16 %v3616, %v3608
        %v5241 = vpack.c.b16 %v3617, %v3609
        %v5242 = vpack.c.b16 %v3618, %v3610
        %v5243 = vpack.c.b16 %v3619, %v3611
        %v5244 = vpack.c.b16 %v3620, %v3612
        %v5245 = vpack.c.b16 %v3621, %v3613
        %v5246 = vpack.c.b16 %v3622, %v3614
        %v5247 = vpack.c.b16 %v3631, %v3623
        %v5248 = vpack.c.b16 %v3632, %v3624
        %v5249 = vpack.c.b16 %v3633, %v3625
        %v5250 = vpack.c.b16 %v3634, %v3626
        %v5251 = vpack.c.b16 %v3635, %v3627
        %v5252 = vpack.c.b16 %v3636, %v3628
        %v5253 = vpack.c.b16 %v3637, %v3629
        %v5254 = vpack.c.b16 %v3638, %v3630
        %v5255 = vpack.c.b16 %v3647, %v3639
        %v5256 = vpack.c.b16 %v3648, %v3640
        %v5257 = vpack.c.b16 %v3649, %v3641
        %v5258 = vpack.c.b16 %v3650, %v3642
        %v5259 = vpack.c.b16 %v3651, %v3643
        %v5260 = vpack.c.b16 %v3652, %v3644
        %v5261 = vpack.c.b16 %v3653, %v3645
        %v5262 = vpack.c.b16 %v3654, %v3646
        %v5263 = vpack.c.b16 %v3663, %v3655
        %v5264 = vpack.c.b16 %v3664, %v3656
        %v5265 = vpack.c.b16 %v3665, %v3657
        %v5266 = vpack.c.b16 %v3666, %v3658
        %v5267 = vpack.c.b16 %v3667, %v3659
        %v5268 = vpack.c.b16 %v3668, %v3660
        %v5269 = vpack.c.b16 %v3669, %v3661
        %v5270 = vpack.c.b16 %v3670, %v3662
        %v5271 = vpack.c.b16 %v3679, %v3671
        %v5272 = vpack.c.b16 %v3680, %v3672
        %v5273 = vpack.c.b16 %v3681, %v3673
        %v5274 = vpack.c.b16 %v3682, %v3674
        %v5275 = vpack.c.b16 %v3683, %v3675
        %v5276 = vpack.c.b16 %v3684, %v3676
        %v5277 = vpack.c.b16 %v3685, %v3677
        %v5278 = vpack.c.b16 %v3686, %v3678
        %v5279 = vpack.c.b16 %v3695, %v3687
        %v5280 = vpack.c.b16 %v3696, %v3688
        %v5281 = vpack.c.b16 %v3697, %v3689
        %v5282 = vpack.c.b16 %v3698, %v3690
        %v5283 = vpack.c.b16 %v3699, %v3691
        %v5284 = vpack.c.b16 %v3700, %v3692
        %v5285 = vpack.c.b16 %v3701, %v3693
        %v5286 = vpack.c.b16 %v3702, %v3694
        %v5287 = vpack.c.b16 %v3711, %v3703
        %v5288 = vpack.c.b16 %v3712, %v3704
        %v5289 = vpack.c.b16 %v3713, %v3705
        %v5290 = vpack.c.b16 %v3714, %v3706
        %v5291 = vpack.c.b16 %v3715, %v3707
        %v5292 = vpack.c.b16 %v3716, %v3708
        %v5293 = vpack.c.b16 %v3717, %v3709
        %v5294 = vpack.c.b16 %v3718, %v3710
        %v5295 = vpack.c.b16 %v3727, %v3719
        %v5296 = vpack.c.b16 %v3728, %v3720
        %v5297 = vpack.c.b16 %v3729, %v3721
        %v5298 = vpack.c.b16 %v3730, %v3722
        %v5299 = vpack.c.b16 %v3731, %v3723
        %v5300 = vpack.c.b16 %v3732, %v3724
        %v5301 = vpack.c.b16 %v3733, %v3725
        %v5302 = vpack.c.b16 %v3734, %v3726
        %v5303 = vpack.c.b16 %v3743, %v3735
        %v5304 = vpack.c.b16 %v3744, %v3736
        %v5305 = vpack.c.b16 %v3745, %v3737
        %v5306 = vpack.c.b16 %v3746, %v3738
        %v5307 = vpack.c.b16 %v3747, %v3739
        %v5308 = vpack.c.b16 %v3748, %v3740
        %v5309 = vpack.c.b16 %v3749, %v3741
        %v5310 = vpack.c.b16 %v3750, %v3742
        %v5311 = vpack.c.b16 %v3759, %v3751
        %v5312 = vpack.c.b16 %v3760, %v3752
        %v5313 = vpack.c.b16 %v3761, %v3753
        %v5314 = vpack.c.b16 %v3762, %v3754
        %v5315 = vpack.c.b16 %v3763, %v3755
        %v5316 = vpack.c.b16 %v3764, %v3756
        %v5317 = vpack.c.b16 %v3765, %v3757
        %v5318 = vpack.c.b16 %v3766, %v3758
        %v5319 = vpack.c.b16 %v3775, %v3767
        %v5320 = vpack.c.b16 %v3776, %v3768
        %v5321 = vpack.c.b16 %v3777, %v3769
        %v5322 = vpack.c.b16 %v3778, %v3770
        %v5323 = vpack.c.b16 %v3779, %v3771
        %v5324 = vpack.c.b16 %v3780, %v3772
        %v5325 = vpack.c.b16 %v3781, %v3773
        %v5326 = vpack.c.b16 %v3782, %v3774
        %v5327 = vpack.c.b16 %v3791, %v3783
        %v5328 = vpack.c.b16 %v3792, %v3784
        %v5329 = vpack.c.b16 %v3793, %v3785
        %v5330 = vpack.c.b16 %v3794, %v3786
        %v5331 = vpack.c.b16 %v3795, %v3787
        %v5332 = vpack.c.b16 %v3796, %v3788
        %v5333 = vpack.c.b16 %v3797, %v3789
        %v5334 = vpack.c.b16 %v3798, %v3790
        %v5335 = vpack.c.b16 %v3807, %v3799
        %v5336 = vpack.c.b16 %v3808, %v3800
        %v5337 = vpack.c.b16 %v3809, %v3801
        %v5338 = vpack.c.b16 %v3810, %v3802
        %v5339 = vpack.c.b16 %v3811, %v3803
        %v5340 = vpack.c.b16 %v3812, %v3804
        %v5341 = vpack.c.b16 %v3813, %v3805
        %v5342 = vpack.c.b16 %v3814, %v3806
        %v5343 = vpack.c.b16 %v3823, %v3815
        %v5344 = vpack.c.b16 %v3824, %v3816
        %v5345 = vpack.c.b16 %v3825, %v3817
        %v5346 = vpack.c.b16 %v3826, %v3818
        %v5347 = vpack.c.b16 %v3827, %v3819
        %v5348 = vpack.c.b16 %v3828, %v3820
        %v5349 = vpack.c.b16 %v3829, %v3821
        %v5350 = vpack.c.b16 %v3830, %v3822
        %v5351 = vpack.c.b16 %v3839, %v3831
        %v5352 = vpack.c.b16 %v3840, %v3832
        %v5353 = vpack.c.b16 %v3841, %v3833
        %v5354 = vpack.c.b16 %v3842, %v3834
        %v5355 = vpack.c.b16 %v3843, %v3835
        %v5356 = vpack.c.b16 %v3844, %v3836
        %v5357 = vpack.c.b16 %v3845, %v3837
        %v5358 = vpack.c.b16 %v3846, %v3838
        %v5359 = vpack.c.b16 %v3855, %v3847
        %v5360 = vpack.c.b16 %v3856, %v3848
        %v5361 = vpack.c.b16 %v3857, %v3849
        %v5362 = vpack.c.b16 %v3858, %v3850
        %v5363 = vpack.c.b16 %v3859, %v3851
        %v5364 = vpack.c.b16 %v3860, %v3852
        %v5365 = vpack.c.b16 %v3861, %v3853
        %v5366 = vpack.c.b16 %v3862, %v3854
        %v5367 = vpack.c.b16 %v3871, %v3863
        %v5368 = vpack.c.b16 %v3872, %v3864
        %v5369 = vpack.c.b16 %v3873, %v3865
        %v5370 = vpack.c.b16 %v3874, %v3866
        %v5371 = vpack.c.b16 %v3875, %v3867
        %v5372 = vpack.c.b16 %v3876, %v3868
        %v5373 = vpack.c.b16 %v3877, %v3869
        %v5374 = vpack.c.b16 %v3878, %v3870
        %v5375 = vpack.c.b16 %v3887, %v3879
        %v5376 = vpack.c.b16 %v3888, %v3880
        %v5377 = vpack.c.b16 %v3889, %v3881
        %v5378 = vpack.c.b16 %v3890, %v3882
        %v5379 = vpack.c.b16 %v3891, %v3883
        %v5380 = vpack.c.b16 %v3892, %v3884
        %v5381 = vpack.c.b16 %v3893, %v3885
        %v5382 = vpack.c.b16 %v3894, %v3886
        %v5383 = vpack.c.b16 %v3903, %v3895
        %v5384 = vpack.c.b16 %v3904, %v3896
        %v5385 = vpack.c.b16 %v3905, %v3897
        %v5386 = vpack.c.b16 %v3906, %v3898
        %v5387 = vpack.c.b16 %v3907, %v3899
        %v5388 = vpack.c.b16 %v3908, %v3900
        %v5389 = vpack.c.b16 %v3909, %v3901
        %v5390 = vpack.c.b16 %v3910, %v3902
        %v5391 = vpack.c.b16 %v3919, %v3911
        %v5392 = vpack.c.b16 %v3920, %v3912
        %v5393 = vpack.c.b16 %v3921, %v3913
        %v5394 = vpack.c.b16 %v3922, %v3914
        %v5395 = vpack.c.b16 %v3923, %v3915
        %v5396 = vpack.c.b16 %v3924, %v3916
        %v5397 = vpack.c.b16 %v3925, %v3917
        %v5398 = vpack.c.b16 %v3926, %v3918
        %v5399 = vpack.c.b16 %v3935, %v3927
        %v5400 = vpack.c.b16 %v3936, %v3928
        %v5401 = vpack.c.b16 %v3937, %v3929
        %v5402 = vpack.c.b16 %v3938, %v3930
        %v5403 = vpack.c.b16 %v3939, %v3931
        %v5404 = vpack.c.b16 %v3940, %v3932
        %v5405 = vpack.c.b16 %v3941, %v3933
        %v5406 = vpack.c.b16 %v3942, %v3934
        %v5407 = vpack.c.b16 %v3951, %v3943
        %v5408 = vpack.c.b16 %v3952, %v3944
        %v5409 = vpack.c.b16 %v3953, %v3945
        %v5410 = vpack.c.b16 %v3954, %v3946
        %v5411 = vpack.c.b16 %v3955, %v3947
        %v5412 = vpack.c.b16 %v3956, %v3948
        %v5413 = vpack.c.b16 %v3957, %v3949
        %v5414 = vpack.c.b16 %v3958, %v3950
        %v5415 = vpack.c.b16 %v3967, %v3959
        %v5416 = vpack.c.b16 %v3968, %v3960
        %v5417 = vpack.c.b16 %v3969, %v3961
        %v5418 = vpack.c.b16 %v3970, %v3962
        %v5419 = vpack.c.b16 %v3971, %v3963
        %v5420 = vpack.c.b16 %v3972, %v3964
        %v5421 = vpack.c.b16 %v3973, %v3965
        %v5422 = vpack.c.b16 %v3974, %v3966
        %v5423 = vpack.c.b16 %v3983, %v3975
        %v5424 = vpack.c.b16 %v3984, %v3976
        %v5425 = vpack.c.b16 %v3985, %v3977
        %v5426 = vpack.c.b16 %v3986, %v3978
        %v5427 = vpack.c.b16 %v3987, %v3979
        %v5428 = vpack.c.b16 %v3988, %v3980
        %v5429 = vpack.c.b16 %v3989, %v3981
        %v5430 = vpack.c.b16 %v3990, %v3982
        %v5431 = vpack.c.b16 %v3999, %v3991
        %v5432 = vpack.c.b16 %v4000, %v3992
        %v5433 = vpack.c.b16 %v4001, %v3993
        %v5434 = vpack.c.b16 %v4002, %v3994
        %v5435 = vpack.c.b16 %v4003, %v3995
        %v5436 = vpack.c.b16 %v4004, %v3996
        %v5437 = vpack.c.b16 %v4005, %v3997
        %v5438 = vpack.c.b16 %v4006, %v3998
        %v5439 = vpack.c.b16 %v4015, %v4007
        %v5440 = vpack.c.b16 %v4016, %v4008
        %v5441 = vpack.c.b16 %v4017, %v4009
        %v5442 = vpack.c.b16 %v4018, %v4010
        %v5443 = vpack.c.b16 %v4019, %v4011
        %v5444 = vpack.c.b16 %v4020, %v4012
        %v5445 = vpack.c.b16 %v4021, %v4013
        %v5446 = vpack.c.b16 %v4022, %v4014
        %v5447 = vpack.c.b16 %v4031, %v4023
        %v5448 = vpack.c.b16 %v4032, %v4024
        %v5449 = vpack.c.b16 %v4033, %v4025
        %v5450 = vpack.c.b16 %v4034, %v4026
        %v5451 = vpack.c.b16 %v4035, %v4027
        %v5452 = vpack.c.b16 %v4036, %v4028
        %v5453 = vpack.c.b16 %v4037, %v4029
        %v5454 = vpack.c.b16 %v4038, %v4030
        %v5455 = vpack.c.b16 %v4047, %v4039
        %v5456 = vpack.c.b16 %v4048, %v4040
        %v5457 = vpack.c.b16 %v4049, %v4041
        %v5458 = vpack.c.b16 %v4050, %v4042
        %v5459 = vpack.c.b16 %v4051, %v4043
        %v5460 = vpack.c.b16 %v4052, %v4044
        %v5461 = vpack.c.b16 %v4053, %v4045
        %v5462 = vpack.c.b16 %v4054, %v4046
        %v5463 = vpack.c.b16 %v4063, %v4055
        %v5464 = vpack.c.b16 %v4064, %v4056
        %v5465 = vpack.c.b16 %v4065, %v4057
        %v5466 = vpack.c.b16 %v4066, %v4058
        %v5467 = vpack.c.b16 %v4067, %v4059
        %v5468 = vpack.c.b16 %v4068, %v4060
        %v5469 = vpack.c.b16 %v4069, %v4061
        %v5470 = vpack.c.b16 %v4070, %v4062
        %v5471 = vpack.c.b16 %v4079, %v4071
        %v5472 = vpack.c.b16 %v4080, %v4072
        %v5473 = vpack.c.b16 %v4081, %v4073
        %v5474 = vpack.c.b16 %v4082, %v4074
        %v5475 = vpack.c.b16 %v4083, %v4075
        %v5476 = vpack.c.b16 %v4084, %v4076
        %v5477 = vpack.c.b16 %v4085, %v4077
        %v5478 = vpack.c.b16 %v4086, %v4078
        %v5479 = vpack.c.b16 %v4095, %v4087
        %v5480 = vpack.c.b16 %v4096, %v4088
        %v5481 = vpack.c.b16 %v4097, %v4089
        %v5482 = vpack.c.b16 %v4098, %v4090
        %v5483 = vpack.c.b16 %v4099, %v4091
        %v5484 = vpack.c.b16 %v4100, %v4092
        %v5485 = vpack.c.b16 %v4101, %v4093
        %v5486 = vpack.c.b16 %v4102, %v4094
        %v5487 = vpack.c.b16 %v4111, %v4103
        %v5488 = vpack.c.b16 %v4112, %v4104
        %v5489 = vpack.c.b16 %v4113, %v4105
        %v5490 = vpack.c.b16 %v4114, %v4106
        %v5491 = vpack.c.b16 %v4115, %v4107
        %v5492 = vpack.c.b16 %v4116, %v4108
        %v5493 = vpack.c.b16 %v4117, %v4109
        %v5494 = vpack.c.b16 %v4118, %v4110
        %v5495 = vpack.c.b16 %v4127, %v4119
        %v5496 = vpack.c.b16 %v4128, %v4120
        %v5497 = vpack.c.b16 %v4129, %v4121
        %v5498 = vpack.c.b16 %v4130, %v4122
        %v5499 = vpack.c.b16 %v4131, %v4123
        %v5500 = vpack.c.b16 %v4132, %v4124
        %v5501 = vpack.c.b16 %v4133, %v4125
        %v5502 = vpack.c.b16 %v4134, %v4126
        %v5503 = vpack.c.b16 %v4143, %v4135
        %v5504 = vpack.c.b16 %v4144, %v4136
        %v5505 = vpack.c.b16 %v4145, %v4137
        %v5506 = vpack.c.b16 %v4146, %v4138
        %v5507 = vpack.c.b16 %v4147, %v4139
        %v5508 = vpack.c.b16 %v4148, %v4140
        %v5509 = vpack.c.b16 %v4149, %v4141
        %v5510 = vpack.c.b16 %v4150, %v4142
        %v5511 = vpack.c.b16 %v4159, %v4151
        %v5512 = vpack.c.b16 %v4160, %v4152
        %v5513 = vpack.c.b16 %v4161, %v4153
        %v5514 = vpack.c.b16 %v4162, %v4154
        %v5515 = vpack.c.b16 %v4163, %v4155
        %v5516 = vpack.c.b16 %v4164, %v4156
        %v5517 = vpack.c.b16 %v4165, %v4157
        %v5518 = vpack.c.b16 %v4166, %v4158
        %v5519 = vpack.c.b16 %v4175, %v4167
        %v5520 = vpack.c.b16 %v4176, %v4168
        %v5521 = vpack.c.b16 %v4177, %v4169
        %v5522 = vpack.c.b16 %v4178, %v4170
        %v5523 = vpack.c.b16 %v4179, %v4171
        %v5524 = vpack.c.b16 %v4180, %v4172
        %v5525 = vpack.c.b16 %v4181, %v4173
        %v5526 = vpack.c.b16 %v4182, %v4174
        %v5527 = vpack.c.b16 %v4191, %v4183
        %v5528 = vpack.c.b16 %v4192, %v4184
        %v5529 = vpack.c.b16 %v4193, %v4185
        %v5530 = vpack.c.b16 %v4194, %v4186
        %v5531 = vpack.c.b16 %v4195, %v4187
        %v5532 = vpack.c.b16 %v4196, %v4188
        %v5533 = vpack.c.b16 %v4197, %v4189
        %v5534 = vpack.c.b16 %v4198, %v4190
        %v5535 = vpack.c.b16 %v4207, %v4199
        %v5536 = vpack.c.b16 %v4208, %v4200
        %v5537 = vpack.c.b16 %v4209, %v4201
        %v5538 = vpack.c.b16 %v4210, %v4202
        %v5539 = vpack.c.b16 %v4211, %v4203
        %v5540 = vpack.c.b16 %v4212, %v4204
        %v5541 = vpack.c.b16 %v4213, %v4205
        %v5542 = vpack.c.b16 %v4214, %v4206
        %v5543 = vpack.c.b16 %v4223, %v4215
        %v5544 = vpack.c.b16 %v4224, %v4216
        %v5545 = vpack.c.b16 %v4225, %v4217
        %v5546 = vpack.c.b16 %v4226, %v4218
        %v5547 = vpack.c.b16 %v4227, %v4219
        %v5548 = vpack.c.b16 %v4228, %v4220
        %v5549 = vpack.c.b16 %v4229, %v4221
        %v5550 = vpack.c.b16 %v4230, %v4222
        %v5551 = vpack.c.b16 %v4239, %v4231
        %v5552 = vpack.c.b16 %v4240, %v4232
        %v5553 = vpack.c.b16 %v4241, %v4233
        %v5554 = vpack.c.b16 %v4242, %v4234
        %v5555 = vpack.c.b16 %v4243, %v4235
        %v5556 = vpack.c.b16 %v4244, %v4236
        %v5557 = vpack.c.b16 %v4245, %v4237
        %v5558 = vpack.c.b16 %v4246, %v4238
        %v5559 = vpack.c.b16 %v4255, %v4247
        %v5560 = vpack.c.b16 %v4256, %v4248
        %v5561 = vpack.c.b16 %v4257, %v4249
        %v5562 = vpack.c.b16 %v4258, %v4250
        %v5563 = vpack.c.b16 %v4259, %v4251
        %v5564 = vpack.c.b16 %v4260, %v4252
        %v5565 = vpack.c.b16 %v4261, %v4253
        %v5566 = vpack.c.b16 %v4262, %v4254
        %v5567 = vpack.c.b16 %v4271, %v4263
        %v5568 = vpack.c.b16 %v4272, %v4264
        %v5569 = vpack.c.b16 %v4273, %v4265
        %v5570 = vpack.c.b16 %v4274, %v4266
        %v5571 = vpack.c.b16 %v4275, %v4267
        %v5572 = vpack.c.b16 %v4276, %v4268
        %v5573 = vpack.c.b16 %v4277, %v4269
        %v5574 = vpack.c.b16 %v4278, %v4270
        %v5575 = vpack.c.b16 %v4287, %v4279
        %v5576 = vpack.c.b16 %v4288, %v4280
        %v5577 = vpack.c.b16 %v4289, %v4281
        %v5578 = vpack.c.b16 %v4290, %v4282
        %v5579 = vpack.c.b16 %v4291, %v4283
        %v5580 = vpack.c.b16 %v4292, %v4284
        %v5581 = vpack.c.b16 %v4293, %v4285
        %v5582 = vpack.c.b16 %v4294, %v4286
        %v5583 = vpack.c.b16 %v4303, %v4295
        %v5584 = vpack.c.b16 %v4304, %v4296
        %v5585 = vpack.c.b16 %v4305, %v4297
        %v5586 = vpack.c.b16 %v4306, %v4298
        %v5587 = vpack.c.b16 %v4307, %v4299
        %v5588 = vpack.c.b16 %v4308, %v4300
        %v5589 = vpack.c.b16 %v4309, %v4301
        %v5590 = vpack.c.b16 %v4310, %v4302
        %v5591 = vpack.c.b16 %v4319, %v4311
        %v5592 = vpack.c.b16 %v4320, %v4312
        %v5593 = vpack.c.b16 %v4321, %v4313
        %v5594 = vpack.c.b16 %v4322, %v4314
        %v5595 = vpack.c.b16 %v4323, %v4315
        %v5596 = vpack.c.b16 %v4324, %v4316
        %v5597 = vpack.c.b16 %v4325, %v4317
        %v5598 = vpack.c.b16 %v4326, %v4318
        %v5599 = vpack.c.b16 %v4335, %v4327
        %v5600 = vpack.c.b16 %v4336, %v4328
        %v5601 = vpack.c.b16 %v4337, %v4329
        %v5602 = vpack.c.b16 %v4338, %v4330
        %v5603 = vpack.c.b16 %v4339, %v4331
        %v5604 = vpack.c.b16 %v4340, %v4332
        %v5605 = vpack.c.b16 %v4341, %v4333
        %v5606 = vpack.c.b16 %v4342, %v4334
        %v5607 = vpack.c.b16 %v4351, %v4343
        %v5608 = vpack.c.b16 %v4352, %v4344
        %v5609 = vpack.c.b16 %v4353, %v4345
        %v5610 = vpack.c.b16 %v4354, %v4346
        %v5611 = vpack.c.b16 %v4355, %v4347
        %v5612 = vpack.c.b16 %v4356, %v4348
        %v5613 = vpack.c.b16 %v4357, %v4349
        %v5614 = vpack.c.b16 %v4358, %v4350
        %v5615 = vpack.c.b16 %v4367, %v4359
        %v5616 = vpack.c.b16 %v4368, %v4360
        %v5617 = vpack.c.b16 %v4369, %v4361
        %v5618 = vpack.c.b16 %v4370, %v4362
        %v5619 = vpack.c.b16 %v4371, %v4363
        %v5620 = vpack.c.b16 %v4372, %v4364
        %v5621 = vpack.c.b16 %v4373, %v4365
        %v5622 = vpack.c.b16 %v4374, %v4366
        %v5623 = vpack.c.b16 %v4383, %v4375
        %v5624 = vpack.c.b16 %v4384, %v4376
        %v5625 = vpack.c.b16 %v4385, %v4377
        %v5626 = vpack.c.b16 %v4386, %v4378
        %v5627 = vpack.c.b16 %v4387, %v4379
        %v5628 = vpack.c.b16 %v4388, %v4380
        %v5629 = vpack.c.b16 %v4389, %v4381
        %v5630 = vpack.c.b16 %v4390, %v4382
        %v5631 = vpack.c.b16 %v4399, %v4391
        %v5632 = vpack.c.b16 %v4400, %v4392
        %v5633 = vpack.c.b16 %v4401, %v4393
        %v5634 = vpack.c.b16 %v4402, %v4394
        %v5635 = vpack.c.b16 %v4403, %v4395
        %v5636 = vpack.c.b16 %v4404, %v4396
        %v5637 = vpack.c.b16 %v4405, %v4397
        %v5638 = vpack.c.b16 %v4406, %v4398
        %v5639 = vpack.c.b16 %v4415, %v4407
        %v5640 = vpack.c.b16 %v4416, %v4408
        %v5641 = vpack.c.b16 %v4417, %v4409
        %v5642 = vpack.c.b16 %v4418, %v4410
        %v5643 = vpack.c.b16 %v4419, %v4411
        %v5644 = vpack.c.b16 %v4420, %v4412
        %v5645 = vpack.c.b16 %v4421, %v4413
        %v5646 = vpack.c.b16 %v4422, %v4414
        %v5647 = vpack.c.b16 %v4431, %v4423
        %v5648 = vpack.c.b16 %v4432, %v4424
        %v5649 = vpack.c.b16 %v4433, %v4425
        %v5650 = vpack.c.b16 %v4434, %v4426
        %v5651 = vpack.c.b16 %v4435, %v4427
        %v5652 = vpack.c.b16 %v4436, %v4428
        %v5653 = vpack.c.b16 %v4437, %v4429
        %v5654 = vpack.c.b16 %v4438, %v4430
        %v5655 = vpack.c.b16 %v4447, %v4439
        %v5656 = vpack.c.b16 %v4448, %v4440
        %v5657 = vpack.c.b16 %v4449, %v4441
        %v5658 = vpack.c.b16 %v4450, %v4442
        %v5659 = vpack.c.b16 %v4451, %v4443
        %v5660 = vpack.c.b16 %v4452, %v4444
        %v5661 = vpack.c.b16 %v4453, %v4445
        %v5662 = vpack.c.b16 %v4454, %v4446
        %v5663 = vpack.c.b16 %v4463, %v4455
        %v5664 = vpack.c.b16 %v4464, %v4456
        %v5665 = vpack.c.b16 %v4465, %v4457
        %v5666 = vpack.c.b16 %v4466, %v4458
        %v5667 = vpack.c.b16 %v4467, %v4459
        %v5668 = vpack.c.b16 %v4468, %v4460
        %v5669 = vpack.c.b16 %v4469, %v4461
        %v5670 = vpack.c.b16 %v4470, %v4462
        %v5671 = vpack.c.b16 %v4479, %v4471
        %v5672 = vpack.c.b16 %v4480, %v4472
        %v5673 = vpack.c.b16 %v4481, %v4473
        %v5674 = vpack.c.b16 %v4482, %v4474
        %v5675 = vpack.c.b16 %v4483, %v4475
        %v5676 = vpack.c.b16 %v4484, %v4476
        %v5677 = vpack.c.b16 %v4485, %v4477
        %v5678 = vpack.c.b16 %v4486, %v4478
        %v5679 = vpack.c.b16 %v4495, %v4487
        %v5680 = vpack.c.b16 %v4496, %v4488
        %v5681 = vpack.c.b16 %v4497, %v4489
        %v5682 = vpack.c.b16 %v4498, %v4490
        %v5683 = vpack.c.b16 %v4499, %v4491
        %v5684 = vpack.c.b16 %v4500, %v4492
        %v5685 = vpack.c.b16 %v4501, %v4493
        %v5686 = vpack.c.b16 %v4502, %v4494
        %v5687 = vpack.c.b16 %v4511, %v4503
        %v5688 = vpack.c.b16 %v4512, %v4504
        %v5689 = vpack.c.b16 %v4513, %v4505
        %v5690 = vpack.c.b16 %v4514, %v4506
        %v5691 = vpack.c.b16 %v4515, %v4507
        %v5692 = vpack.c.b16 %v4516, %v4508
        %v5693 = vpack.c.b16 %v4517, %v4509
        %v5694 = vpack.c.b16 %v4518, %v4510
        %v5695 = vpack.c.b16 %v4527, %v4519
        %v5696 = vpack.c.b16 %v4528, %v4520
        %v5697 = vpack.c.b16 %v4529, %v4521
        %v5698 = vpack.c.b16 %v4530, %v4522
        %v5699 = vpack.c.b16 %v4531, %v4523
        %v5700 = vpack.c.b16 %v4532, %v4524
        %v5701 = vpack.c.b16 %v4533, %v4525
        %v5702 = vpack.c.b16 %v4534, %v4526
        %v5703 = vpack.c.b16 %v4543, %v4535
        %v5704 = vpack.c.b16 %v4544, %v4536
        %v5705 = vpack.c.b16 %v4545, %v4537
        %v5706 = vpack.c.b16 %v4546, %v4538
        %v5707 = vpack.c.b16 %v4547, %v4539
        %v5708 = vpack.c.b16 %v4548, %v4540
        %v5709 = vpack.c.b16 %v4549, %v4541
        %v5710 = vpack.c.b16 %v4550, %v4542
        %v5711 = vpack.c.b16 %v4559, %v4551
        %v5712 = vpack.c.b16 %v4560, %v4552
        %v5713 = vpack.c.b16 %v4561, %v4553
        %v5714 = vpack.c.b16 %v4562, %v4554
        %v5715 = vpack.c.b16 %v4563, %v4555
        %v5716 = vpack.c.b16 %v4564, %v4556
        %v5717 = vpack.c.b16 %v4565, %v4557
        %v5718 = vpack.c.b16 %v4566, %v4558
        %v5719 = vpack.c.b16 %v4575, %v4567
        %v5720 = vpack.c.b16 %v4576, %v4568
        %v5721 = vpack.c.b16 %v4577, %v4569
        %v5722 = vpack.c.b16 %v4578, %v4570
        %v5723 = vpack.c.b16 %v4579, %v4571
        %v5724 = vpack.c.b16 %v4580, %v4572
        %v5725 = vpack.c.b16 %v4581, %v4573
        %v5726 = vpack.c.b16 %v4582, %v4574
        %v5727 = vpack.c.b16 %v4591, %v4583
        %v5728 = vpack.c.b16 %v4592, %v4584
        %v5729 = vpack.c.b16 %v4593, %v4585
        %v5730 = vpack.c.b16 %v4594, %v4586
        %v5731 = vpack.c.b16 %v4595, %v4587
        %v5732 = vpack.c.b16 %v4596, %v4588
        %v5733 = vpack.c.b16 %v4597, %v4589
        %v5734 = vpack.c.b16 %v4598, %v4590
        %v5735 = vpack.c.b16 %v4607, %v4599
        %v5736 = vpack.c.b16 %v4608, %v4600
        %v5737 = vpack.c.b16 %v4609, %v4601
        %v5738 = vpack.c.b16 %v4610, %v4602
        %v5739 = vpack.c.b16 %v4611, %v4603
        %v5740 = vpack.c.b16 %v4612, %v4604
        %v5741 = vpack.c.b16 %v4613, %v4605
        %v5742 = vpack.c.b16 %v4614, %v4606
        %v5743 = vpack.c.b16 %v4623, %v4615
        %v5744 = vpack.c.b16 %v4624, %v4616
        %v5745 = vpack.c.b16 %v4625, %v4617
        %v5746 = vpack.c.b16 %v4626, %v4618
        %v5747 = vpack.c.b16 %v4627, %v4619
        %v5748 = vpack.c.b16 %v4628, %v4620
        %v5749 = vpack.c.b16 %v4629, %v4621
        %v5750 = vpack.c.b16 %v4630, %v4622
        %v5751 = vpack.c.b16 %v4639, %v4631
        %v5752 = vpack.c.b16 %v4640, %v4632
        %v5753 = vpack.c.b16 %v4641, %v4633
        %v5754 = vpack.c.b16 %v4642, %v4634
        %v5755 = vpack.c.b16 %v4643, %v4635
        %v5756 = vpack.c.b16 %v4644, %v4636
        %v5757 = vpack.c.b16 %v4645, %v4637
        %v5758 = vpack.c.b16 %v4646, %v4638
        %v5759 = vpack.c.b16 %v4655, %v4647
        %v5760 = vpack.c.b16 %v4656, %v4648
        %v5761 = vpack.c.b16 %v4657, %v4649
        %v5762 = vpack.c.b16 %v4658, %v4650
        %v5763 = vpack.c.b16 %v4659, %v4651
        %v5764 = vpack.c.b16 %v4660, %v4652
        %v5765 = vpack.c.b16 %v4661, %v4653
        %v5766 = vpack.c.b16 %v4662, %v4654
        %v5767 = vpack.c.b16 %v4671, %v4663
        %v5768 = vpack.c.b16 %v4672, %v4664
        %v5769 = vpack.c.b16 %v4673, %v4665
        %v5770 = vpack.c.b16 %v4674, %v4666
        %v5771 = vpack.c.b16 %v4675, %v4667
        %v5772 = vpack.c.b16 %v4676, %v4668
        %v5773 = vpack.c.b16 %v4677, %v4669
        %v5774 = vpack.c.b16 %v4678, %v4670
        %v5775 = vpack.c.b16 %v4687, %v4679
        %v5776 = vpack.c.b16 %v4688, %v4680
        %v5777 = vpack.c.b16 %v4689, %v4681
        %v5778 = vpack.c.b16 %v4690, %v4682
        %v5779 = vpack.c.b16 %v4691, %v4683
        %v5780 = vpack.c.b16 %v4692, %v4684
        %v5781 = vpack.c.b16 %v4693, %v4685
        %v5782 = vpack.c.b16 %v4694, %v4686
        %v5783 = vpack.c.b16 %v4703, %v4695
        %v5784 = vpack.c.b16 %v4704, %v4696
        %v5785 = vpack.c.b16 %v4705, %v4697
        %v5786 = vpack.c.b16 %v4706, %v4698
        %v5787 = vpack.c.b16 %v4707, %v4699
        %v5788 = vpack.c.b16 %v4708, %v4700
        %v5789 = vpack.c.b16 %v4709, %v4701
        %v5790 = vpack.c.b16 %v4710, %v4702
        %v5791 = vpack.c.b16 %v4719, %v4711
        %v5792 = vpack.c.b16 %v4720, %v4712
        %v5793 = vpack.c.b16 %v4721, %v4713
        %v5794 = vpack.c.b16 %v4722, %v4714
        %v5795 = vpack.c.b16 %v4723, %v4715
        %v5796 = vpack.c.b16 %v4724, %v4716
        %v5797 = vpack.c.b16 %v4725, %v4717
        %v5798 = vpack.c.b16 %v4726, %v4718
        %v5799 = vpack.c.b16 %v4735, %v4727
        %v5800 = vpack.c.b16 %v4736, %v4728
        %v5801 = vpack.c.b16 %v4737, %v4729
        %v5802 = vpack.c.b16 %v4738, %v4730
        %v5803 = vpack.c.b16 %v4739, %v4731
        %v5804 = vpack.c.b16 %v4740, %v4732
        %v5805 = vpack.c.b16 %v4741, %v4733
        %v5806 = vpack.c.b16 %v4742, %v4734
        %v5807 = vpack.c.b16 %v4751, %v4743
        %v5808 = vpack.c.b16 %v4752, %v4744
        %v5809 = vpack.c.b16 %v4753, %v4745
        %v5810 = vpack.c.b16 %v4754, %v4746
        %v5811 = vpack.c.b16 %v4755, %v4747
        %v5812 = vpack.c.b16 %v4756, %v4748
        %v5813 = vpack.c.b16 %v4757, %v4749
        %v5814 = vpack.c.b16 %v4758, %v4750
        %v5815 = vpack.c.b16 %v4767, %v4759
        %v5816 = vpack.c.b16 %v4768, %v4760
        %v5817 = vpack.c.b16 %v4769, %v4761
        %v5818 = vpack.c.b16 %v4770, %v4762
        %v5819 = vpack.c.b16 %v4771, %v4763
        %v5820 = vpack.c.b16 %v4772, %v4764
        %v5821 = vpack.c.b16 %v4773, %v4765
        %v5822 = vpack.c.b16 %v4774, %v4766
        %v5823 = vpack.c.b16 %v4783, %v4775
        %v5824 = vpack.c.b16 %v4784, %v4776
        %v5825 = vpack.c.b16 %v4785, %v4777
        %v5826 = vpack.c.b16 %v4786, %v4778
        %v5827 = vpack.c.b16 %v4787, %v4779
        %v5828 = vpack.c.b16 %v4788, %v4780
        %v5829 = vpack.c.b16 %v4789, %v4781
        %v5830 = vpack.c.b16 %v4790, %v4782
        %v5831 = vpack.c.b16 %v4799, %v4791
        %v5832 = vpack.c.b16 %v4800, %v4792
        %v5833 = vpack.c.b16 %v4801, %v4793
        %v5834 = vpack.c.b16 %v4802, %v4794
        %v5835 = vpack.c.b16 %v4803, %v4795
        %v5836 = vpack.c.b16 %v4804, %v4796
        %v5837 = vpack.c.b16 %v4805, %v4797
        %v5838 = vpack.c.b16 %v4806, %v4798
        %v5839 = vpack.c.b16 %v4815, %v4807
        %v5840 = vpack.c.b16 %v4816, %v4808
        %v5841 = vpack.c.b16 %v4817, %v4809
        %v5842 = vpack.c.b16 %v4818, %v4810
        %v5843 = vpack.c.b16 %v4819, %v4811
        %v5844 = vpack.c.b16 %v4820, %v4812
        %v5845 = vpack.c.b16 %v4821, %v4813
        %v5846 = vpack.c.b16 %v4822, %v4814
        %6871 = vmatprep.subr.bf16.mxu0 %v4824
        %6872 = vmatpush1.bf16.msra.mxu0 %v4823
        %6873 = vmatprep.subr.bf16.mxu0 %v4832
        %6874 = vmatpush1.bf16.msra.mxu0 %v4831
        %6875 = vmatprep.subr.bf16.mxu0 %v4840
        %6876 = vmatpush1.bf16.msra.mxu0 %v4839
        %6877 = vmatprep.subr.bf16.mxu0 %v4848
        %6878 = vmatpush1.bf16.msra.mxu0 %v4847
        %6879 = vmatprep.subr.bf16.mxu0 %v4856
        %6880 = vmatpush1.bf16.msra.mxu0 %v4855
        %6881 = vmatprep.subr.bf16.mxu0 %v4864
        %6882 = vmatpush1.bf16.msra.mxu0 %v4863
        %6883 = vmatprep.subr.bf16.mxu0 %v4872
        %6884 = vmatpush1.bf16.msra.mxu0 %v4871
        %6885 = vmatprep.subr.bf16.mxu0 %v4880
        %6886 = vmatpush1.bf16.msra.mxu0 %v4879
        %6887 = vmatprep.subr.bf16.mxu0 %v4888
        %6888 = vmatpush1.bf16.msra.mxu0 %v4887
        %6889 = vmatprep.subr.bf16.mxu0 %v4896
        %6890 = vmatpush1.bf16.msra.mxu0 %v4895
        %6891 = vmatprep.subr.bf16.mxu0 %v4904
        %6892 = vmatpush1.bf16.msra.mxu0 %v4903
        %6893 = vmatprep.subr.bf16.mxu0 %v4912
        %6894 = vmatpush1.bf16.msra.mxu0 %v4911
        %6895 = vmatprep.subr.bf16.mxu0 %v4920
        %6896 = vmatpush1.bf16.msra.mxu0 %v4919
        %6897 = vmatprep.subr.bf16.mxu0 %v4928
        %6898 = vmatpush1.bf16.msra.mxu0 %v4927
        %6899 = vmatprep.subr.bf16.mxu0 %v4936
        %6900 = vmatpush1.bf16.msra.mxu0 %v4935
        %6901 = vmatprep.subr.bf16.mxu0 %v4944
        %6902 = vmatpush1.bf16.msra.mxu0 %v4943
        %6903 = vmatprep.mubr.bf16.mxu0 %v712
        %6904 = vmatmul.mubr.bf16.gmra.mrb[0].mxu0 %v711
        %v6905 = vpop.f32.mrb[0].mxu0
        %v6906 = vadd.f32 0.0, %v6905
        %v6907 = vpop.f32.mrb[0].mxu0
        %v6908 = vadd.f32 0.0, %v6907
        %v6909 = vpop.f32.mrb[0].mxu0
        %v6910 = vpop.f32.mrb[0].mxu0
        %6911 = vdwg.mxu0
        %6912 = vmatprep.subr.bf16.mxu0 %v4952
        %6913 = vmatpush1.bf16.msra.mxu0 %v4951
        %6914 = vmatprep.subr.bf16.mxu0 %v4960
        %6915 = vmatpush1.bf16.msra.mxu0 %v4959
        %6916 = vmatprep.subr.bf16.mxu0 %v4968
        %6917 = vmatpush1.bf16.msra.mxu0 %v4967
        %6918 = vmatprep.subr.bf16.mxu0 %v4976
        %6919 = vmatpush1.bf16.msra.mxu0 %v4975
        %6920 = vmatprep.subr.bf16.mxu0 %v4984
        %6921 = vmatpush1.bf16.msra.mxu0 %v4983
        %6922 = vmatprep.subr.bf16.mxu0 %v4992
        %6923 = vmatpush1.bf16.msra.mxu0 %v4991
        %6924 = vmatprep.subr.bf16.mxu0 %v5000
        %6925 = vmatpush1.bf16.msra.mxu0 %v4999
        %6926 = vmatprep.subr.bf16.mxu0 %v5008
        %6927 = vmatpush1.bf16.msra.mxu0 %v5007
        %6928 = vmatprep.subr.bf16.mxu0 %v5016
        %6929 = vmatpush1.bf16.msra.mxu0 %v5015
        %6930 = vmatprep.subr.bf16.mxu0 %v5024
        %6931 = vmatpush1.bf16.msra.mxu0 %v5023
        %6932 = vmatprep.subr.bf16.mxu0 %v5032
        %6933 = vmatpush1.bf16.msra.mxu0 %v5031
        %6934 = vmatprep.subr.bf16.mxu0 %v5040
        %6935 = vmatpush1.bf16.msra.mxu0 %v5039
        %6936 = vmatprep.subr.bf16.mxu0 %v5048
        %6937 = vmatpush1.bf16.msra.mxu0 %v5047
        %6938 = vmatprep.subr.bf16.mxu0 %v5056
        %6939 = vmatpush1.bf16.msra.mxu0 %v5055
        %6940 = vmatprep.subr.bf16.mxu0 %v5064
        %6941 = vmatpush1.bf16.msra.mxu0 %v5063
        %6942 = vmatprep.subr.bf16.mxu0 %v5072
        %6943 = vmatpush1.bf16.msra.mxu0 %v5071
        %6944 = vmatprep.mubr.bf16.mxu0 %v714
        %6945 = vmatmul.mubr.bf16.gmra.mrb[0].mxu0 %v713
        %v6946 = vpop.f32.mrb[0].mxu0
        %v6947 = vadd.f32 %v6906, %v6946
        %v6948 = vpop.f32.mrb[0].mxu0
        %v6949 = vadd.f32 %v6908, %v6948
        %v6950 = vpop.f32.mrb[0].mxu0
        %v6951 = vpop.f32.mrb[0].mxu0
        %6952 = vdwg.mxu0
        %6953 = vmatprep.subr.bf16.mxu0 %v5080
        %6954 = vmatpush1.bf16.msra.mxu0 %v5079
        %6955 = vmatprep.subr.bf16.mxu0 %v5088
        %6956 = vmatpush1.bf16.msra.mxu0 %v5087
        %6957 = vmatprep.subr.bf16.mxu0 %v5096
        %6958 = vmatpush1.bf16.msra.mxu0 %v5095
        %6959 = vmatprep.subr.bf16.mxu0 %v5104
        %6960 = vmatpush1.bf16.msra.mxu0 %v5103
        %6961 = vmatprep.subr.bf16.mxu0 %v5112
        %6962 = vmatpush1.bf16.msra.mxu0 %v5111
        %6963 = vmatprep.subr.bf16.mxu0 %v5120
        %6964 = vmatpush1.bf16.msra.mxu0 %v5119
        %6965 = vmatprep.subr.bf16.mxu0 %v5128
        %6966 = vmatpush1.bf16.msra.mxu0 %v5127
        %6967 = vmatprep.subr.bf16.mxu0 %v5136
        %6968 = vmatpush1.bf16.msra.mxu0 %v5135
        %6969 = vmatprep.subr.bf16.mxu0 %v5144
        %6970 = vmatpush1.bf16.msra.mxu0 %v5143
        %6971 = vmatprep.subr.bf16.mxu0 %v5152
        %6972 = vmatpush1.bf16.msra.mxu0 %v5151
        %6973 = vmatprep.subr.bf16.mxu0 %v5160
        %6974 = vmatpush1.bf16.msra.mxu0 %v5159
        %6975 = vmatprep.subr.bf16.mxu0 %v5168
        %6976 = vmatpush1.bf16.msra.mxu0 %v5167
        %6977 = vmatprep.subr.bf16.mxu0 %v5176
        %6978 = vmatpush1.bf16.msra.mxu0 %v5175
        %6979 = vmatprep.subr.bf16.mxu0 %v5184
        %6980 = vmatpush1.bf16.msra.mxu0 %v5183
        %6981 = vmatprep.subr.bf16.mxu0 %v5192
        %6982 = vmatpush1.bf16.msra.mxu0 %v5191
        %6983 = vmatprep.subr.bf16.mxu0 %v5200
        %6984 = vmatpush1.bf16.msra.mxu0 %v5199
        %6985 = vmatprep.mubr.bf16.mxu0 %v716
        %6986 = vmatmul.mubr.bf16.gmra.mrb[0].mxu0 %v715
        %v6987 = vpop.f32.mrb[0].mxu0
        %v6988 = vadd.f32 %v6947, %v6987
        %v6989 = vpop.f32.mrb[0].mxu0
        %v6990 = vadd.f32 %v6949, %v6989
        %v6991 = vpop.f32.mrb[0].mxu0
        %v6992 = vpop.f32.mrb[0].mxu0
        %6993 = vdwg.mxu0
        %6994 = vmatprep.subr.bf16.mxu0 %v5208
        %6995 = vmatpush1.bf16.msra.mxu0 %v5207
        %6996 = vmatprep.subr.bf16.mxu0 %v5216
        %6997 = vmatpush1.bf16.msra.mxu0 %v5215
        %6998 = vmatprep.subr.bf16.mxu0 %v5224
        %6999 = vmatpush1.bf16.msra.mxu0 %v5223
        %7000 = vmatprep.subr.bf16.mxu0 %v5232
        %7001 = vmatpush1.bf16.msra.mxu0 %v5231
        %7002 = vmatprep.subr.bf16.mxu0 %v5240
        %7003 = vmatpush1.bf16.msra.mxu0 %v5239
        %7004 = vmatprep.subr.bf16.mxu0 %v5248
        %7005 = vmatpush1.bf16.msra.mxu0 %v5247
        %7006 = vmatprep.subr.bf16.mxu0 %v5256
        %7007 = vmatpush1.bf16.msra.mxu0 %v5255
        %7008 = vmatprep.subr.bf16.mxu0 %v5264
        %7009 = vmatpush1.bf16.msra.mxu0 %v5263
        %7010 = vmatprep.subr.bf16.mxu0 %v5272
        %7011 = vmatpush1.bf16.msra.mxu0 %v5271
        %7012 = vmatprep.subr.bf16.mxu0 %v5280
        %7013 = vmatpush1.bf16.msra.mxu0 %v5279
        %7014 = vmatprep.subr.bf16.mxu0 %v5288
        %7015 = vmatpush1.bf16.msra.mxu0 %v5287
        %7016 = vmatprep.subr.bf16.mxu0 %v5296
        %7017 = vmatpush1.bf16.msra.mxu0 %v5295
        %7018 = vmatprep.subr.bf16.mxu0 %v5304
        %7019 = vmatpush1.bf16.msra.mxu0 %v5303
        %7020 = vmatprep.subr.bf16.mxu0 %v5312
        %7021 = vmatpush1.bf16.msra.mxu0 %v5311
        %7022 = vmatprep.subr.bf16.mxu0 %v5320
        %7023 = vmatpush1.bf16.msra.mxu0 %v5319
        %7024 = vmatprep.subr.bf16.mxu0 %v5328
        %7025 = vmatpush1.bf16.msra.mxu0 %v5327
        %7026 = vmatprep.mubr.bf16.mxu0 %v718
        %7027 = vmatmul.mubr.bf16.gmra.mrb[0].mxu0 %v717
        %v7028 = vpop.f32.mrb[0].mxu0
        %v7029 = vadd.f32 %v6988, %v7028
        %v7030 = vpop.f32.mrb[0].mxu0
        %v7031 = vadd.f32 %v6990, %v7030
        %v7032 = vpop.f32.mrb[0].mxu0
        %v7033 = vpop.f32.mrb[0].mxu0
        %7034 = vdwg.mxu0
        %7035 = vmatprep.subr.bf16.mxu0 %v5336
        %7036 = vmatpush1.bf16.msra.mxu0 %v5335
        %7037 = vmatprep.subr.bf16.mxu0 %v5344
        %7038 = vmatpush1.bf16.msra.mxu0 %v5343
        %7039 = vmatprep.subr.bf16.mxu0 %v5352
        %7040 = vmatpush1.bf16.msra.mxu0 %v5351
        %7041 = vmatprep.subr.bf16.mxu0 %v5360
        %7042 = vmatpush1.bf16.msra.mxu0 %v5359
        %7043 = vmatprep.subr.bf16.mxu0 %v5368
        %7044 = vmatpush1.bf16.msra.mxu0 %v5367
        %7045 = vmatprep.subr.bf16.mxu0 %v5376
        %7046 = vmatpush1.bf16.msra.mxu0 %v5375
        %7047 = vmatprep.subr.bf16.mxu0 %v5384
        %7048 = vmatpush1.bf16.msra.mxu0 %v5383
        %7049 = vmatprep.subr.bf16.mxu0 %v5392
        %7050 = vmatpush1.bf16.msra.mxu0 %v5391
        %7051 = vmatprep.subr.bf16.mxu0 %v5400
        %7052 = vmatpush1.bf16.msra.mxu0 %v5399
        %7053 = vmatprep.subr.bf16.mxu0 %v5408
        %7054 = vmatpush1.bf16.msra.mxu0 %v5407
        %7055 = vmatprep.subr.bf16.mxu0 %v5416
        %7056 = vmatpush1.bf16.msra.mxu0 %v5415
        %7057 = vmatprep.subr.bf16.mxu0 %v5424
        %7058 = vmatpush1.bf16.msra.mxu0 %v5423
        %7059 = vmatprep.subr.bf16.mxu0 %v5432
        %7060 = vmatpush1.bf16.msra.mxu0 %v5431
        %7061 = vmatprep.subr.bf16.mxu0 %v5440
        %7062 = vmatpush1.bf16.msra.mxu0 %v5439
        %7063 = vmatprep.subr.bf16.mxu0 %v5448
        %7064 = vmatpush1.bf16.msra.mxu0 %v5447
        %7065 = vmatprep.subr.bf16.mxu0 %v5456
        %7066 = vmatpush1.bf16.msra.mxu0 %v5455
        %7067 = vmatprep.mubr.bf16.mxu0 %v720
        %7068 = vmatmul.mubr.bf16.gmra.mrb[0].mxu0 %v719
        %v7069 = vpop.f32.mrb[0].mxu0
        %v7070 = vadd.f32 %v7029, %v7069
        %v7071 = vpop.f32.mrb[0].mxu0
        %v7072 = vadd.f32 %v7031, %v7071
        %v7073 = vpop.f32.mrb[0].mxu0
        %v7074 = vpop.f32.mrb[0].mxu0
        %7075 = vdwg.mxu0
        %7076 = vmatprep.subr.bf16.mxu0 %v5464
        %7077 = vmatpush1.bf16.msra.mxu0 %v5463
        %7078 = vmatprep.subr.bf16.mxu0 %v5472
        %7079 = vmatpush1.bf16.msra.mxu0 %v5471
        %7080 = vmatprep.subr.bf16.mxu0 %v5480
        %7081 = vmatpush1.bf16.msra.mxu0 %v5479
        %7082 = vmatprep.subr.bf16.mxu0 %v5488
        %7083 = vmatpush1.bf16.msra.mxu0 %v5487
        %7084 = vmatprep.subr.bf16.mxu0 %v5496
        %7085 = vmatpush1.bf16.msra.mxu0 %v5495
        %7086 = vmatprep.subr.bf16.mxu0 %v5504
        %7087 = vmatpush1.bf16.msra.mxu0 %v5503
        %7088 = vmatprep.subr.bf16.mxu0 %v5512
        %7089 = vmatpush1.bf16.msra.mxu0 %v5511
        %7090 = vmatprep.subr.bf16.mxu0 %v5520
        %7091 = vmatpush1.bf16.msra.mxu0 %v5519
        %7092 = vmatprep.subr.bf16.mxu0 %v5528
        %7093 = vmatpush1.bf16.msra.mxu0 %v5527
        %7094 = vmatprep.subr.bf16.mxu0 %v5536
        %7095 = vmatpush1.bf16.msra.mxu0 %v5535
        %7096 = vmatprep.subr.bf16.mxu0 %v5544
        %7097 = vmatpush1.bf16.msra.mxu0 %v5543
        %7098 = vmatprep.subr.bf16.mxu0 %v5552
        %7099 = vmatpush1.bf16.msra.mxu0 %v5551
        %7100 = vmatprep.subr.bf16.mxu0 %v5560
        %7101 = vmatpush1.bf16.msra.mxu0 %v5559
        %7102 = vmatprep.subr.bf16.mxu0 %v5568
        %7103 = vmatpush1.bf16.msra.mxu0 %v5567
        %7104 = vmatprep.subr.bf16.mxu0 %v5576
        %7105 = vmatpush1.bf16.msra.mxu0 %v5575
        %7106 = vmatprep.subr.bf16.mxu0 %v5584
        %7107 = vmatpush1.bf16.msra.mxu0 %v5583
        %7108 = vmatprep.mubr.bf16.mxu0 %v722
        %7109 = vmatmul.mubr.bf16.gmra.mrb[0].mxu0 %v721
        %v7110 = vpop.f32.mrb[0].mxu0
        %v7111 = vadd.f32 %v7070, %v7110
        %v7112 = vpop.f32.mrb[0].mxu0
        %v7113 = vadd.f32 %v7072, %v7112
        %v7114 = vpop.f32.mrb[0].mxu0
        %v7115 = vpop.f32.mrb[0].mxu0
        %7116 = vdwg.mxu0
        %7117 = vmatprep.subr.bf16.mxu0 %v5592
        %7118 = vmatpush1.bf16.msra.mxu0 %v5591
        %7119 = vmatprep.subr.bf16.mxu0 %v5600
        %7120 = vmatpush1.bf16.msra.mxu0 %v5599
        %7121 = vmatprep.subr.bf16.mxu0 %v5608
        %7122 = vmatpush1.bf16.msra.mxu0 %v5607
        %7123 = vmatprep.subr.bf16.mxu0 %v5616
        %7124 = vmatpush1.bf16.msra.mxu0 %v5615
        %7125 = vmatprep.subr.bf16.mxu0 %v5624
        %7126 = vmatpush1.bf16.msra.mxu0 %v5623
        %7127 = vmatprep.subr.bf16.mxu0 %v5632
        %7128 = vmatpush1.bf16.msra.mxu0 %v5631
        %7129 = vmatprep.subr.bf16.mxu0 %v5640
        %7130 = vmatpush1.bf16.msra.mxu0 %v5639
        %7131 = vmatprep.subr.bf16.mxu0 %v5648
        %7132 = vmatpush1.bf16.msra.mxu0 %v5647
        %7133 = vmatprep.subr.bf16.mxu0 %v5656
        %7134 = vmatpush1.bf16.msra.mxu0 %v5655
        %7135 = vmatprep.subr.bf16.mxu0 %v5664
        %7136 = vmatpush1.bf16.msra.mxu0 %v5663
        %7137 = vmatprep.subr.bf16.mxu0 %v5672
        %7138 = vmatpush1.bf16.msra.mxu0 %v5671
        %7139 = vmatprep.subr.bf16.mxu0 %v5680
        %7140 = vmatpush1.bf16.msra.mxu0 %v5679
        %7141 = vmatprep.subr.bf16.mxu0 %v5688
        %7142 = vmatpush1.bf16.msra.mxu0 %v5687
        %7143 = vmatprep.subr.bf16.mxu0 %v5696
        %7144 = vmatpush1.bf16.msra.mxu0 %v5695
        %7145 = vmatprep.subr.bf16.mxu0 %v5704
        %7146 = vmatpush1.bf16.msra.mxu0 %v5703
        %7147 = vmatprep.subr.bf16.mxu0 %v5712
        %7148 = vmatpush1.bf16.msra.mxu0 %v5711
        %7149 = vmatprep.mubr.bf16.mxu0 %v724
        %7150 = vmatmul.mubr.bf16.gmra.mrb[0].mxu0 %v723
        %v7151 = vpop.f32.mrb[0].mxu0
        %v7152 = vadd.f32 %v7111, %v7151
        %v7153 = vpop.f32.mrb[0].mxu0
        %v7154 = vadd.f32 %v7113, %v7153
        %v7155 = vpop.f32.mrb[0].mxu0
        %v7156 = vpop.f32.mrb[0].mxu0
        %7157 = vdwg.mxu0
        %7158 = vmatprep.subr.bf16.mxu0 %v5720
        %7159 = vmatpush1.bf16.msra.mxu0 %v5719
        %7160 = vmatprep.subr.bf16.mxu0 %v5728
        %7161 = vmatpush1.bf16.msra.mxu0 %v5727
        %7162 = vmatprep.subr.bf16.mxu0 %v5736
        %7163 = vmatpush1.bf16.msra.mxu0 %v5735
        %7164 = vmatprep.subr.bf16.mxu0 %v5744
        %7165 = vmatpush1.bf16.msra.mxu0 %v5743
        %7166 = vmatprep.subr.bf16.mxu0 %v5752
        %7167 = vmatpush1.bf16.msra.mxu0 %v5751
        %7168 = vmatprep.subr.bf16.mxu0 %v5760
        %7169 = vmatpush1.bf16.msra.mxu0 %v5759
        %7170 = vmatprep.subr.bf16.mxu0 %v5768
        %7171 = vmatpush1.bf16.msra.mxu0 %v5767
        %7172 = vmatprep.subr.bf16.mxu0 %v5776
        %7173 = vmatpush1.bf16.msra.mxu0 %v5775
        %7174 = vmatprep.subr.bf16.mxu0 %v5784
        %7175 = vmatpush1.bf16.msra.mxu0 %v5783
        %7176 = vmatprep.subr.bf16.mxu0 %v5792
        %7177 = vmatpush1.bf16.msra.mxu0 %v5791
        %7178 = vmatprep.subr.bf16.mxu0 %v5800
        %7179 = vmatpush1.bf16.msra.mxu0 %v5799
        %7180 = vmatprep.subr.bf16.mxu0 %v5808
        %7181 = vmatpush1.bf16.msra.mxu0 %v5807
        %7182 = vmatprep.subr.bf16.mxu0 %v5816
        %7183 = vmatpush1.bf16.msra.mxu0 %v5815
        %7184 = vmatprep.subr.bf16.mxu0 %v5824
        %7185 = vmatpush1.bf16.msra.mxu0 %v5823
        %7186 = vmatprep.subr.bf16.mxu0 %v5832
        %7187 = vmatpush1.bf16.msra.mxu0 %v5831
        %7188 = vmatprep.subr.bf16.mxu0 %v5840
        %7189 = vmatpush1.bf16.msra.mxu0 %v5839
        %7190 = vmatprep.mubr.bf16.mxu0 %v726
        %7191 = vmatmul.mubr.bf16.gmra.mrb[0].mxu0 %v725
        %v7192 = vpop.f32.mrb[0].mxu0
        %v7193 = vadd.f32 %v7152, %v7192
        %v7194 = vpop.f32.mrb[0].mxu0
        %v7195 = vadd.f32 %v7154, %v7194
        %v7196 = vpop.f32.mrb[0].mxu0
        %v7197 = vpop.f32.mrb[0].mxu0
        %7198 = vdwg.mxu0
        %7199 = vmatprep.subr.bf16.mxu0 %v4826
        %7200 = vmatpush1.bf16.msra.mxu0 %v4825
        %7201 = vmatprep.subr.bf16.mxu0 %v4834
        %7202 = vmatpush1.bf16.msra.mxu0 %v4833
        %7203 = vmatprep.subr.bf16.mxu0 %v4842
        %7204 = vmatpush1.bf16.msra.mxu0 %v4841
        %7205 = vmatprep.subr.bf16.mxu0 %v4850
        %7206 = vmatpush1.bf16.msra.mxu0 %v4849
        %7207 = vmatprep.subr.bf16.mxu0 %v4858
        %7208 = vmatpush1.bf16.msra.mxu0 %v4857
        %7209 = vmatprep.subr.bf16.mxu0 %v4866
        %7210 = vmatpush1.bf16.msra.mxu0 %v4865
        %7211 = vmatprep.subr.bf16.mxu0 %v4874
        %7212 = vmatpush1.bf16.msra.mxu0 %v4873
        %7213 = vmatprep.subr.bf16.mxu0 %v4882
        %7214 = vmatpush1.bf16.msra.mxu0 %v4881
        %7215 = vmatprep.subr.bf16.mxu0 %v4890
        %7216 = vmatpush1.bf16.msra.mxu0 %v4889
        %7217 = vmatprep.subr.bf16.mxu0 %v4898
        %7218 = vmatpush1.bf16.msra.mxu0 %v4897
        %7219 = vmatprep.subr.bf16.mxu0 %v4906
        %7220 = vmatpush1.bf16.msra.mxu0 %v4905
        %7221 = vmatprep.subr.bf16.mxu0 %v4914
        %7222 = vmatpush1.bf16.msra.mxu0 %v4913
        %7223 = vmatprep.subr.bf16.mxu0 %v4922
        %7224 = vmatpush1.bf16.msra.mxu0 %v4921
        %7225 = vmatprep.subr.bf16.mxu0 %v4930
        %7226 = vmatpush1.bf16.msra.mxu0 %v4929
        %7227 = vmatprep.subr.bf16.mxu0 %v4938
        %7228 = vmatpush1.bf16.msra.mxu0 %v4937
        %7229 = vmatprep.subr.bf16.mxu0 %v4946
        %7230 = vmatpush1.bf16.msra.mxu0 %v4945
        %7231 = vmatprep.mubr.bf16.mxu0 %v712
        %7232 = vmatmul.mubr.bf16.gmra.mrb[0].mxu0 %v711
        %v7233 = vpop.f32.mrb[0].mxu0
        %v7234 = vadd.f32 0.0, %v7233
        %v7235 = vpop.f32.mrb[0].mxu0
        %v7236 = vadd.f32 0.0, %v7235
        %v7237 = vpop.f32.mrb[0].mxu0
        %v7238 = vpop.f32.mrb[0].mxu0
        %7239 = vdwg.mxu0
        %7240 = vmatprep.subr.bf16.mxu0 %v4954
        %7241 = vmatpush1.bf16.msra.mxu0 %v4953
        %7242 = vmatprep.subr.bf16.mxu0 %v4962
        %7243 = vmatpush1.bf16.msra.mxu0 %v4961
        %7244 = vmatprep.subr.bf16.mxu0 %v4970
        %7245 = vmatpush1.bf16.msra.mxu0 %v4969
        %7246 = vmatprep.subr.bf16.mxu0 %v4978
        %7247 = vmatpush1.bf16.msra.mxu0 %v4977
        %7248 = vmatprep.subr.bf16.mxu0 %v4986
        %7249 = vmatpush1.bf16.msra.mxu0 %v4985
        %7250 = vmatprep.subr.bf16.mxu0 %v4994
        %7251 = vmatpush1.bf16.msra.mxu0 %v4993
        %7252 = vmatprep.subr.bf16.mxu0 %v5002
        %7253 = vmatpush1.bf16.msra.mxu0 %v5001
        %7254 = vmatprep.subr.bf16.mxu0 %v5010
        %7255 = vmatpush1.bf16.msra.mxu0 %v5009
        %7256 = vmatprep.subr.bf16.mxu0 %v5018
        %7257 = vmatpush1.bf16.msra.mxu0 %v5017
        %7258 = vmatprep.subr.bf16.mxu0 %v5026
        %7259 = vmatpush1.bf16.msra.mxu0 %v5025
        %7260 = vmatprep.subr.bf16.mxu0 %v5034
        %7261 = vmatpush1.bf16.msra.mxu0 %v5033
        %7262 = vmatprep.subr.bf16.mxu0 %v5042
        %7263 = vmatpush1.bf16.msra.mxu0 %v5041
        %7264 = vmatprep.subr.bf16.mxu0 %v5050
        %7265 = vmatpush1.bf16.msra.mxu0 %v5049
        %7266 = vmatprep.subr.bf16.mxu0 %v5058
        %7267 = vmatpush1.bf16.msra.mxu0 %v5057
        %7268 = vmatprep.subr.bf16.mxu0 %v5066
        %7269 = vmatpush1.bf16.msra.mxu0 %v5065
        %7270 = vmatprep.subr.bf16.mxu0 %v5074
        %7271 = vmatpush1.bf16.msra.mxu0 %v5073
        %7272 = vmatprep.mubr.bf16.mxu0 %v714
        %7273 = vmatmul.mubr.bf16.gmra.mrb[0].mxu0 %v713
        %v7274 = vpop.f32.mrb[0].mxu0
        %v7275 = vadd.f32 %v7234, %v7274
        %v7276 = vpop.f32.mrb[0].mxu0
        %v7277 = vadd.f32 %v7236, %v7276
        %v7278 = vpop.f32.mrb[0].mxu0
        %v7279 = vpop.f32.mrb[0].mxu0
        %7280 = vdwg.mxu0
        %7281 = vmatprep.subr.bf16.mxu0 %v5082
        %7282 = vmatpush1.bf16.msra.mxu0 %v5081
        %7283 = vmatprep.subr.bf16.mxu0 %v5090
        %7284 = vmatpush1.bf16.msra.mxu0 %v5089
        %7285 = vmatprep.subr.bf16.mxu0 %v5098
        %7286 = vmatpush1.bf16.msra.mxu0 %v5097
        %7287 = vmatprep.subr.bf16.mxu0 %v5106
        %7288 = vmatpush1.bf16.msra.mxu0 %v5105
        %7289 = vmatprep.subr.bf16.mxu0 %v5114
        %7290 = vmatpush1.bf16.msra.mxu0 %v5113
        %7291 = vmatprep.subr.bf16.mxu0 %v5122
        %7292 = vmatpush1.bf16.msra.mxu0 %v5121
        %7293 = vmatprep.subr.bf16.mxu0 %v5130
        %7294 = vmatpush1.bf16.msra.mxu0 %v5129
        %7295 = vmatprep.subr.bf16.mxu0 %v5138
        %7296 = vmatpush1.bf16.msra.mxu0 %v5137
        %7297 = vmatprep.subr.bf16.mxu0 %v5146
        %7298 = vmatpush1.bf16.msra.mxu0 %v5145
        %7299 = vmatprep.subr.bf16.mxu0 %v5154
        %7300 = vmatpush1.bf16.msra.mxu0 %v5153
        %7301 = vmatprep.subr.bf16.mxu0 %v5162
        %7302 = vmatpush1.bf16.msra.mxu0 %v5161
        %7303 = vmatprep.subr.bf16.mxu0 %v5170
        %7304 = vmatpush1.bf16.msra.mxu0 %v5169
        %7305 = vmatprep.subr.bf16.mxu0 %v5178
        %7306 = vmatpush1.bf16.msra.mxu0 %v5177
        %7307 = vmatprep.subr.bf16.mxu0 %v5186
        %7308 = vmatpush1.bf16.msra.mxu0 %v5185
        %7309 = vmatprep.subr.bf16.mxu0 %v5194
        %7310 = vmatpush1.bf16.msra.mxu0 %v5193
        %7311 = vmatprep.subr.bf16.mxu0 %v5202
        %7312 = vmatpush1.bf16.msra.mxu0 %v5201
        %7313 = vmatprep.mubr.bf16.mxu0 %v716
        %7314 = vmatmul.mubr.bf16.gmra.mrb[0].mxu0 %v715
        %v7315 = vpop.f32.mrb[0].mxu0
        %v7316 = vadd.f32 %v7275, %v7315
        %v7317 = vpop.f32.mrb[0].mxu0
        %v7318 = vadd.f32 %v7277, %v7317
        %v7319 = vpop.f32.mrb[0].mxu0
        %v7320 = vpop.f32.mrb[0].mxu0
        %7321 = vdwg.mxu0
        %7322 = vmatprep.subr.bf16.mxu0 %v5210
        %7323 = vmatpush1.bf16.msra.mxu0 %v5209
        %7324 = vmatprep.subr.bf16.mxu0 %v5218
        %7325 = vmatpush1.bf16.msra.mxu0 %v5217
        %7326 = vmatprep.subr.bf16.mxu0 %v5226
        %7327 = vmatpush1.bf16.msra.mxu0 %v5225
        %7328 = vmatprep.subr.bf16.mxu0 %v5234
        %7329 = vmatpush1.bf16.msra.mxu0 %v5233
        %7330 = vmatprep.subr.bf16.mxu0 %v5242
        %7331 = vmatpush1.bf16.msra.mxu0 %v5241
        %7332 = vmatprep.subr.bf16.mxu0 %v5250
        %7333 = vmatpush1.bf16.msra.mxu0 %v5249
        %7334 = vmatprep.subr.bf16.mxu0 %v5258
        %7335 = vmatpush1.bf16.msra.mxu0 %v5257
        %7336 = vmatprep.subr.bf16.mxu0 %v5266
        %7337 = vmatpush1.bf16.msra.mxu0 %v5265
        %7338 = vmatprep.subr.bf16.mxu0 %v5274
        %7339 = vmatpush1.bf16.msra.mxu0 %v5273
        %7340 = vmatprep.subr.bf16.mxu0 %v5282
        %7341 = vmatpush1.bf16.msra.mxu0 %v5281
        %7342 = vmatprep.subr.bf16.mxu0 %v5290
        %7343 = vmatpush1.bf16.msra.mxu0 %v5289
        %7344 = vmatprep.subr.bf16.mxu0 %v5298
        %7345 = vmatpush1.bf16.msra.mxu0 %v5297
        %7346 = vmatprep.subr.bf16.mxu0 %v5306
        %7347 = vmatpush1.bf16.msra.mxu0 %v5305
        %7348 = vmatprep.subr.bf16.mxu0 %v5314
        %7349 = vmatpush1.bf16.msra.mxu0 %v5313
        %7350 = vmatprep.subr.bf16.mxu0 %v5322
        %7351 = vmatpush1.bf16.msra.mxu0 %v5321
        %7352 = vmatprep.subr.bf16.mxu0 %v5330
        %7353 = vmatpush1.bf16.msra.mxu0 %v5329
        %7354 = vmatprep.mubr.bf16.mxu0 %v718
        %7355 = vmatmul.mubr.bf16.gmra.mrb[0].mxu0 %v717
        %v7356 = vpop.f32.mrb[0].mxu0
        %v7357 = vadd.f32 %v7316, %v7356
        %v7358 = vpop.f32.mrb[0].mxu0
        %v7359 = vadd.f32 %v7318, %v7358
        %v7360 = vpop.f32.mrb[0].mxu0
        %v7361 = vpop.f32.mrb[0].mxu0
        %7362 = vdwg.mxu0
        %7363 = vmatprep.subr.bf16.mxu0 %v5338
        %7364 = vmatpush1.bf16.msra.mxu0 %v5337
        %7365 = vmatprep.subr.bf16.mxu0 %v5346
        %7366 = vmatpush1.bf16.msra.mxu0 %v5345
        %7367 = vmatprep.subr.bf16.mxu0 %v5354
        %7368 = vmatpush1.bf16.msra.mxu0 %v5353
        %7369 = vmatprep.subr.bf16.mxu0 %v5362
        %7370 = vmatpush1.bf16.msra.mxu0 %v5361
        %7371 = vmatprep.subr.bf16.mxu0 %v5370
        %7372 = vmatpush1.bf16.msra.mxu0 %v5369
        %7373 = vmatprep.subr.bf16.mxu0 %v5378
        %7374 = vmatpush1.bf16.msra.mxu0 %v5377
        %7375 = vmatprep.subr.bf16.mxu0 %v5386
        %7376 = vmatpush1.bf16.msra.mxu0 %v5385
        %7377 = vmatprep.subr.bf16.mxu0 %v5394
        %7378 = vmatpush1.bf16.msra.mxu0 %v5393
        %7379 = vmatprep.subr.bf16.mxu0 %v5402
        %7380 = vmatpush1.bf16.msra.mxu0 %v5401
        %7381 = vmatprep.subr.bf16.mxu0 %v5410
        %7382 = vmatpush1.bf16.msra.mxu0 %v5409
        %7383 = vmatprep.subr.bf16.mxu0 %v5418
        %7384 = vmatpush1.bf16.msra.mxu0 %v5417
        %7385 = vmatprep.subr.bf16.mxu0 %v5426
        %7386 = vmatpush1.bf16.msra.mxu0 %v5425
        %7387 = vmatprep.subr.bf16.mxu0 %v5434
        %7388 = vmatpush1.bf16.msra.mxu0 %v5433
        %7389 = vmatprep.subr.bf16.mxu0 %v5442
        %7390 = vmatpush1.bf16.msra.mxu0 %v5441
        %7391 = vmatprep.subr.bf16.mxu0 %v5450
        %7392 = vmatpush1.bf16.msra.mxu0 %v5449
        %7393 = vmatprep.subr.bf16.mxu0 %v5458
        %7394 = vmatpush1.bf16.msra.mxu0 %v5457
        %7395 = vmatprep.mubr.bf16.mxu0 %v720
        %7396 = vmatmul.mubr.bf16.gmra.mrb[0].mxu0 %v719
        %v7397 = vpop.f32.mrb[0].mxu0
        %v7398 = vadd.f32 %v7357, %v7397
        %v7399 = vpop.f32.mrb[0].mxu0
        %v7400 = vadd.f32 %v7359, %v7399
        %v7401 = vpop.f32.mrb[0].mxu0
        %v7402 = vpop.f32.mrb[0].mxu0
        %7403 = vdwg.mxu0
        %7404 = vmatprep.subr.bf16.mxu0 %v5466
        %7405 = vmatpush1.bf16.msra.mxu0 %v5465
        %7406 = vmatprep.subr.bf16.mxu0 %v5474
        %7407 = vmatpush1.bf16.msra.mxu0 %v5473
        %7408 = vmatprep.subr.bf16.mxu0 %v5482
        %7409 = vmatpush1.bf16.msra.mxu0 %v5481
        %7410 = vmatprep.subr.bf16.mxu0 %v5490
        %7411 = vmatpush1.bf16.msra.mxu0 %v5489
        %7412 = vmatprep.subr.bf16.mxu0 %v5498
        %7413 = vmatpush1.bf16.msra.mxu0 %v5497
        %7414 = vmatprep.subr.bf16.mxu0 %v5506
        %7415 = vmatpush1.bf16.msra.mxu0 %v5505
        %7416 = vmatprep.subr.bf16.mxu0 %v5514
        %7417 = vmatpush1.bf16.msra.mxu0 %v5513
        %7418 = vmatprep.subr.bf16.mxu0 %v5522
        %7419 = vmatpush1.bf16.msra.mxu0 %v5521
        %7420 = vmatprep.subr.bf16.mxu0 %v5530
        %7421 = vmatpush1.bf16.msra.mxu0 %v5529
        %7422 = vmatprep.subr.bf16.mxu0 %v5538
        %7423 = vmatpush1.bf16.msra.mxu0 %v5537
        %7424 = vmatprep.subr.bf16.mxu0 %v5546
        %7425 = vmatpush1.bf16.msra.mxu0 %v5545
        %7426 = vmatprep.subr.bf16.mxu0 %v5554
        %7427 = vmatpush1.bf16.msra.mxu0 %v5553
        %7428 = vmatprep.subr.bf16.mxu0 %v5562
        %7429 = vmatpush1.bf16.msra.mxu0 %v5561
        %7430 = vmatprep.subr.bf16.mxu0 %v5570
        %7431 = vmatpush1.bf16.msra.mxu0 %v5569
        %7432 = vmatprep.subr.bf16.mxu0 %v5578
        %7433 = vmatpush1.bf16.msra.mxu0 %v5577
        %7434 = vmatprep.subr.bf16.mxu0 %v5586
        %7435 = vmatpush1.bf16.msra.mxu0 %v5585
        %7436 = vmatprep.mubr.bf16.mxu0 %v722
        %7437 = vmatmul.mubr.bf16.gmra.mrb[0].mxu0 %v721
        %v7438 = vpop.f32.mrb[0].mxu0
        %v7439 = vadd.f32 %v7398, %v7438
        %v7440 = vpop.f32.mrb[0].mxu0
        %v7441 = vadd.f32 %v7400, %v7440
        %v7442 = vpop.f32.mrb[0].mxu0
        %v7443 = vpop.f32.mrb[0].mxu0
        %7444 = vdwg.mxu0
        %7445 = vmatprep.subr.bf16.mxu0 %v5594
        %7446 = vmatpush1.bf16.msra.mxu0 %v5593
        %7447 = vmatprep.subr.bf16.mxu0 %v5602
        %7448 = vmatpush1.bf16.msra.mxu0 %v5601
        %7449 = vmatprep.subr.bf16.mxu0 %v5610
        %7450 = vmatpush1.bf16.msra.mxu0 %v5609
        %7451 = vmatprep.subr.bf16.mxu0 %v5618
        %7452 = vmatpush1.bf16.msra.mxu0 %v5617
        %7453 = vmatprep.subr.bf16.mxu0 %v5626
        %7454 = vmatpush1.bf16.msra.mxu0 %v5625
        %7455 = vmatprep.subr.bf16.mxu0 %v5634
        %7456 = vmatpush1.bf16.msra.mxu0 %v5633
        %7457 = vmatprep.subr.bf16.mxu0 %v5642
        %7458 = vmatpush1.bf16.msra.mxu0 %v5641
        %7459 = vmatprep.subr.bf16.mxu0 %v5650
        %7460 = vmatpush1.bf16.msra.mxu0 %v5649
        %7461 = vmatprep.subr.bf16.mxu0 %v5658
        %7462 = vmatpush1.bf16.msra.mxu0 %v5657
        %7463 = vmatprep.subr.bf16.mxu0 %v5666
        %7464 = vmatpush1.bf16.msra.mxu0 %v5665
        %7465 = vmatprep.subr.bf16.mxu0 %v5674
        %7466 = vmatpush1.bf16.msra.mxu0 %v5673
        %7467 = vmatprep.subr.bf16.mxu0 %v5682
        %7468 = vmatpush1.bf16.msra.mxu0 %v5681
        %7469 = vmatprep.subr.bf16.mxu0 %v5690
        %7470 = vmatpush1.bf16.msra.mxu0 %v5689
        %7471 = vmatprep.subr.bf16.mxu0 %v5698
        %7472 = vmatpush1.bf16.msra.mxu0 %v5697
        %7473 = vmatprep.subr.bf16.mxu0 %v5706
        %7474 = vmatpush1.bf16.msra.mxu0 %v5705
        %7475 = vmatprep.subr.bf16.mxu0 %v5714
        %7476 = vmatpush1.bf16.msra.mxu0 %v5713
        %7477 = vmatprep.mubr.bf16.mxu0 %v724
        %7478 = vmatmul.mubr.bf16.gmra.mrb[0].mxu0 %v723
        %v7479 = vpop.f32.mrb[0].mxu0
        %v7480 = vadd.f32 %v7439, %v7479
        %v7481 = vpop.f32.mrb[0].mxu0
        %v7482 = vadd.f32 %v7441, %v7481
        %v7483 = vpop.f32.mrb[0].mxu0
        %v7484 = vpop.f32.mrb[0].mxu0
        %7485 = vdwg.mxu0
        %7486 = vmatprep.subr.bf16.mxu0 %v5722
        %7487 = vmatpush1.bf16.msra.mxu0 %v5721
        %7488 = vmatprep.subr.bf16.mxu0 %v5730
        %7489 = vmatpush1.bf16.msra.mxu0 %v5729
        %7490 = vmatprep.subr.bf16.mxu0 %v5738
        %7491 = vmatpush1.bf16.msra.mxu0 %v5737
        %7492 = vmatprep.subr.bf16.mxu0 %v5746
        %7493 = vmatpush1.bf16.msra.mxu0 %v5745
        %7494 = vmatprep.subr.bf16.mxu0 %v5754
        %7495 = vmatpush1.bf16.msra.mxu0 %v5753
        %7496 = vmatprep.subr.bf16.mxu0 %v5762
        %7497 = vmatpush1.bf16.msra.mxu0 %v5761
        %7498 = vmatprep.subr.bf16.mxu0 %v5770
        %7499 = vmatpush1.bf16.msra.mxu0 %v5769
        %7500 = vmatprep.subr.bf16.mxu0 %v5778
        %7501 = vmatpush1.bf16.msra.mxu0 %v5777
        %7502 = vmatprep.subr.bf16.mxu0 %v5786
        %7503 = vmatpush1.bf16.msra.mxu0 %v5785
        %7504 = vmatprep.subr.bf16.mxu0 %v5794
        %7505 = vmatpush1.bf16.msra.mxu0 %v5793
        %7506 = vmatprep.subr.bf16.mxu0 %v5802
        %7507 = vmatpush1.bf16.msra.mxu0 %v5801
        %7508 = vmatprep.subr.bf16.mxu0 %v5810
        %7509 = vmatpush1.bf16.msra.mxu0 %v5809
        %7510 = vmatprep.subr.bf16.mxu0 %v5818
        %7511 = vmatpush1.bf16.msra.mxu0 %v5817
        %7512 = vmatprep.subr.bf16.mxu0 %v5826
        %7513 = vmatpush1.bf16.msra.mxu0 %v5825
        %7514 = vmatprep.subr.bf16.mxu0 %v5834
        %7515 = vmatpush1.bf16.msra.mxu0 %v5833
        %7516 = vmatprep.subr.bf16.mxu0 %v5842
        %7517 = vmatpush1.bf16.msra.mxu0 %v5841
        %7518 = vmatprep.mubr.bf16.mxu0 %v726
        %7519 = vmatmul.mubr.bf16.gmra.mrb[0].mxu0 %v725
        %v7520 = vpop.f32.mrb[0].mxu0
        %v7521 = vadd.f32 %v7480, %v7520
        %v7522 = vpop.f32.mrb[0].mxu0
        %v7523 = vadd.f32 %v7482, %v7522
        %v7524 = vpop.f32.mrb[0].mxu0
        %v7525 = vpop.f32.mrb[0].mxu0
        %7526 = vdwg.mxu0
        %7527 = vmatprep.subr.bf16.mxu0 %v4828
        %7528 = vmatpush1.bf16.msra.mxu0 %v4827
        %7529 = vmatprep.subr.bf16.mxu0 %v4836
        %7530 = vmatpush1.bf16.msra.mxu0 %v4835
        %7531 = vmatprep.subr.bf16.mxu0 %v4844
        %7532 = vmatpush1.bf16.msra.mxu0 %v4843
        %7533 = vmatprep.subr.bf16.mxu0 %v4852
        %7534 = vmatpush1.bf16.msra.mxu0 %v4851
        %7535 = vmatprep.subr.bf16.mxu0 %v4860
        %7536 = vmatpush1.bf16.msra.mxu0 %v4859
        %7537 = vmatprep.subr.bf16.mxu0 %v4868
        %7538 = vmatpush1.bf16.msra.mxu0 %v4867
        %7539 = vmatprep.subr.bf16.mxu0 %v4876
        %7540 = vmatpush1.bf16.msra.mxu0 %v4875
        %7541 = vmatprep.subr.bf16.mxu0 %v4884
        %7542 = vmatpush1.bf16.msra.mxu0 %v4883
        %7543 = vmatprep.subr.bf16.mxu0 %v4892
        %7544 = vmatpush1.bf16.msra.mxu0 %v4891
        %7545 = vmatprep.subr.bf16.mxu0 %v4900
        %7546 = vmatpush1.bf16.msra.mxu0 %v4899
        %7547 = vmatprep.subr.bf16.mxu0 %v4908
        %7548 = vmatpush1.bf16.msra.mxu0 %v4907
        %7549 = vmatprep.subr.bf16.mxu0 %v4916
        %7550 = vmatpush1.bf16.msra.mxu0 %v4915
        %7551 = vmatprep.subr.bf16.mxu0 %v4924
        %7552 = vmatpush1.bf16.msra.mxu0 %v4923
        %7553 = vmatprep.subr.bf16.mxu0 %v4932
        %7554 = vmatpush1.bf16.msra.mxu0 %v4931
        %7555 = vmatprep.subr.bf16.mxu0 %v4940
        %7556 = vmatpush1.bf16.msra.mxu0 %v4939
        %7557 = vmatprep.subr.bf16.mxu0 %v4948
        %7558 = vmatpush1.bf16.msra.mxu0 %v4947
        %7559 = vmatprep.mubr.bf16.mxu0 %v712
        %7560 = vmatmul.mubr.bf16.gmra.mrb[0].mxu0 %v711
        %v7561 = vpop.f32.mrb[0].mxu0
        %v7562 = vadd.f32 0.0, %v7561
        %v7563 = vpop.f32.mrb[0].mxu0
        %v7564 = vadd.f32 0.0, %v7563
        %v7565 = vpop.f32.mrb[0].mxu0
        %v7566 = vpop.f32.mrb[0].mxu0
        %7567 = vdwg.mxu0
        %7568 = vmatprep.subr.bf16.mxu0 %v4956
        %7569 = vmatpush1.bf16.msra.mxu0 %v4955
        %7570 = vmatprep.subr.bf16.mxu0 %v4964
        %7571 = vmatpush1.bf16.msra.mxu0 %v4963
        %7572 = vmatprep.subr.bf16.mxu0 %v4972
        %7573 = vmatpush1.bf16.msra.mxu0 %v4971
        %7574 = vmatprep.subr.bf16.mxu0 %v4980
        %7575 = vmatpush1.bf16.msra.mxu0 %v4979
        %7576 = vmatprep.subr.bf16.mxu0 %v4988
        %7577 = vmatpush1.bf16.msra.mxu0 %v4987
        %7578 = vmatprep.subr.bf16.mxu0 %v4996
        %7579 = vmatpush1.bf16.msra.mxu0 %v4995
        %7580 = vmatprep.subr.bf16.mxu0 %v5004
        %7581 = vmatpush1.bf16.msra.mxu0 %v5003
        %7582 = vmatprep.subr.bf16.mxu0 %v5012
        %7583 = vmatpush1.bf16.msra.mxu0 %v5011
        %7584 = vmatprep.subr.bf16.mxu0 %v5020
        %7585 = vmatpush1.bf16.msra.mxu0 %v5019
        %7586 = vmatprep.subr.bf16.mxu0 %v5028
        %7587 = vmatpush1.bf16.msra.mxu0 %v5027
        %7588 = vmatprep.subr.bf16.mxu0 %v5036
        %7589 = vmatpush1.bf16.msra.mxu0 %v5035
        %7590 = vmatprep.subr.bf16.mxu0 %v5044
        %7591 = vmatpush1.bf16.msra.mxu0 %v5043
        %7592 = vmatprep.subr.bf16.mxu0 %v5052
        %7593 = vmatpush1.bf16.msra.mxu0 %v5051
        %7594 = vmatprep.subr.bf16.mxu0 %v5060
        %7595 = vmatpush1.bf16.msra.mxu0 %v5059
        %7596 = vmatprep.subr.bf16.mxu0 %v5068
        %7597 = vmatpush1.bf16.msra.mxu0 %v5067
        %7598 = vmatprep.subr.bf16.mxu0 %v5076
        %7599 = vmatpush1.bf16.msra.mxu0 %v5075
        %7600 = vmatprep.mubr.bf16.mxu0 %v714
        %7601 = vmatmul.mubr.bf16.gmra.mrb[0].mxu0 %v713
        %v7602 = vpop.f32.mrb[0].mxu0
        %v7603 = vadd.f32 %v7562, %v7602
        %v7604 = vpop.f32.mrb[0].mxu0
        %v7605 = vadd.f32 %v7564, %v7604
        %v7606 = vpop.f32.mrb[0].mxu0
        %v7607 = vpop.f32.mrb[0].mxu0
        %7608 = vdwg.mxu0
        %7609 = vmatprep.subr.bf16.mxu0 %v5084
        %7610 = vmatpush1.bf16.msra.mxu0 %v5083
        %7611 = vmatprep.subr.bf16.mxu0 %v5092
        %7612 = vmatpush1.bf16.msra.mxu0 %v5091
        %7613 = vmatprep.subr.bf16.mxu0 %v5100
        %7614 = vmatpush1.bf16.msra.mxu0 %v5099
        %7615 = vmatprep.subr.bf16.mxu0 %v5108
        %7616 = vmatpush1.bf16.msra.mxu0 %v5107
        %7617 = vmatprep.subr.bf16.mxu0 %v5116
        %7618 = vmatpush1.bf16.msra.mxu0 %v5115
        %7619 = vmatprep.subr.bf16.mxu0 %v5124
        %7620 = vmatpush1.bf16.msra.mxu0 %v5123
        %7621 = vmatprep.subr.bf16.mxu0 %v5132
        %7622 = vmatpush1.bf16.msra.mxu0 %v5131
        %7623 = vmatprep.subr.bf16.mxu0 %v5140
        %7624 = vmatpush1.bf16.msra.mxu0 %v5139
        %7625 = vmatprep.subr.bf16.mxu0 %v5148
        %7626 = vmatpush1.bf16.msra.mxu0 %v5147
        %7627 = vmatprep.subr.bf16.mxu0 %v5156
        %7628 = vmatpush1.bf16.msra.mxu0 %v5155
        %7629 = vmatprep.subr.bf16.mxu0 %v5164
        %7630 = vmatpush1.bf16.msra.mxu0 %v5163
        %7631 = vmatprep.subr.bf16.mxu0 %v5172
        %7632 = vmatpush1.bf16.msra.mxu0 %v5171
        %7633 = vmatprep.subr.bf16.mxu0 %v5180
        %7634 = vmatpush1.bf16.msra.mxu0 %v5179
        %7635 = vmatprep.subr.bf16.mxu0 %v5188
        %7636 = vmatpush1.bf16.msra.mxu0 %v5187
        %7637 = vmatprep.subr.bf16.mxu0 %v5196
        %7638 = vmatpush1.bf16.msra.mxu0 %v5195
        %7639 = vmatprep.subr.bf16.mxu0 %v5204
        %7640 = vmatpush1.bf16.msra.mxu0 %v5203
        %7641 = vmatprep.mubr.bf16.mxu0 %v716
        %7642 = vmatmul.mubr.bf16.gmra.mrb[0].mxu0 %v715
        %v7643 = vpop.f32.mrb[0].mxu0
        %v7644 = vadd.f32 %v7603, %v7643
        %v7645 = vpop.f32.mrb[0].mxu0
        %v7646 = vadd.f32 %v7605, %v7645
        %v7647 = vpop.f32.mrb[0].mxu0
        %v7648 = vpop.f32.mrb[0].mxu0
        %7649 = vdwg.mxu0
        %7650 = vmatprep.subr.bf16.mxu0 %v5212
        %7651 = vmatpush1.bf16.msra.mxu0 %v5211
        %7652 = vmatprep.subr.bf16.mxu0 %v5220
        %7653 = vmatpush1.bf16.msra.mxu0 %v5219
        %7654 = vmatprep.subr.bf16.mxu0 %v5228
        %7655 = vmatpush1.bf16.msra.mxu0 %v5227
        %7656 = vmatprep.subr.bf16.mxu0 %v5236
        %7657 = vmatpush1.bf16.msra.mxu0 %v5235
        %7658 = vmatprep.subr.bf16.mxu0 %v5244
        %7659 = vmatpush1.bf16.msra.mxu0 %v5243
        %7660 = vmatprep.subr.bf16.mxu0 %v5252
        %7661 = vmatpush1.bf16.msra.mxu0 %v5251
        %7662 = vmatprep.subr.bf16.mxu0 %v5260
        %7663 = vmatpush1.bf16.msra.mxu0 %v5259
        %7664 = vmatprep.subr.bf16.mxu0 %v5268
        %7665 = vmatpush1.bf16.msra.mxu0 %v5267
        %7666 = vmatprep.subr.bf16.mxu0 %v5276
        %7667 = vmatpush1.bf16.msra.mxu0 %v5275
        %7668 = vmatprep.subr.bf16.mxu0 %v5284
        %7669 = vmatpush1.bf16.msra.mxu0 %v5283
        %7670 = vmatprep.subr.bf16.mxu0 %v5292
        %7671 = vmatpush1.bf16.msra.mxu0 %v5291
        %7672 = vmatprep.subr.bf16.mxu0 %v5300
        %7673 = vmatpush1.bf16.msra.mxu0 %v5299
        %7674 = vmatprep.subr.bf16.mxu0 %v5308
        %7675 = vmatpush1.bf16.msra.mxu0 %v5307
        %7676 = vmatprep.subr.bf16.mxu0 %v5316
        %7677 = vmatpush1.bf16.msra.mxu0 %v5315
        %7678 = vmatprep.subr.bf16.mxu0 %v5324
        %7679 = vmatpush1.bf16.msra.mxu0 %v5323
        %7680 = vmatprep.subr.bf16.mxu0 %v5332
        %7681 = vmatpush1.bf16.msra.mxu0 %v5331
        %7682 = vmatprep.mubr.bf16.mxu0 %v718
        %7683 = vmatmul.mubr.bf16.gmra.mrb[0].mxu0 %v717
        %v7684 = vpop.f32.mrb[0].mxu0
        %v7685 = vadd.f32 %v7644, %v7684
        %v7686 = vpop.f32.mrb[0].mxu0
        %v7687 = vadd.f32 %v7646, %v7686
        %v7688 = vpop.f32.mrb[0].mxu0
        %v7689 = vpop.f32.mrb[0].mxu0
        %7690 = vdwg.mxu0
        %7691 = vmatprep.subr.bf16.mxu0 %v5340
        %7692 = vmatpush1.bf16.msra.mxu0 %v5339
        %7693 = vmatprep.subr.bf16.mxu0 %v5348
        %7694 = vmatpush1.bf16.msra.mxu0 %v5347
        %7695 = vmatprep.subr.bf16.mxu0 %v5356
        %7696 = vmatpush1.bf16.msra.mxu0 %v5355
        %7697 = vmatprep.subr.bf16.mxu0 %v5364
        %7698 = vmatpush1.bf16.msra.mxu0 %v5363
        %7699 = vmatprep.subr.bf16.mxu0 %v5372
        %7700 = vmatpush1.bf16.msra.mxu0 %v5371
        %7701 = vmatprep.subr.bf16.mxu0 %v5380
        %7702 = vmatpush1.bf16.msra.mxu0 %v5379
        %7703 = vmatprep.subr.bf16.mxu0 %v5388
        %7704 = vmatpush1.bf16.msra.mxu0 %v5387
        %7705 = vmatprep.subr.bf16.mxu0 %v5396
        %7706 = vmatpush1.bf16.msra.mxu0 %v5395
        %7707 = vmatprep.subr.bf16.mxu0 %v5404
        %7708 = vmatpush1.bf16.msra.mxu0 %v5403
        %7709 = vmatprep.subr.bf16.mxu0 %v5412
        %7710 = vmatpush1.bf16.msra.mxu0 %v5411
        %7711 = vmatprep.subr.bf16.mxu0 %v5420
        %7712 = vmatpush1.bf16.msra.mxu0 %v5419
        %7713 = vmatprep.subr.bf16.mxu0 %v5428
        %7714 = vmatpush1.bf16.msra.mxu0 %v5427
        %7715 = vmatprep.subr.bf16.mxu0 %v5436
        %7716 = vmatpush1.bf16.msra.mxu0 %v5435
        %7717 = vmatprep.subr.bf16.mxu0 %v5444
        %7718 = vmatpush1.bf16.msra.mxu0 %v5443
        %7719 = vmatprep.subr.bf16.mxu0 %v5452
        %7720 = vmatpush1.bf16.msra.mxu0 %v5451
        %7721 = vmatprep.subr.bf16.mxu0 %v5460
        %7722 = vmatpush1.bf16.msra.mxu0 %v5459
        %7723 = vmatprep.mubr.bf16.mxu0 %v720
        %7724 = vmatmul.mubr.bf16.gmra.mrb[0].mxu0 %v719
        %v7725 = vpop.f32.mrb[0].mxu0
        %v7726 = vadd.f32 %v7685, %v7725
        %v7727 = vpop.f32.mrb[0].mxu0
        %v7728 = vadd.f32 %v7687, %v7727
        %v7729 = vpop.f32.mrb[0].mxu0
        %v7730 = vpop.f32.mrb[0].mxu0
        %7731 = vdwg.mxu0
        %7732 = vmatprep.subr.bf16.mxu0 %v5468
        %7733 = vmatpush1.bf16.msra.mxu0 %v5467
        %7734 = vmatprep.subr.bf16.mxu0 %v5476
        %7735 = vmatpush1.bf16.msra.mxu0 %v5475
        %7736 = vmatprep.subr.bf16.mxu0 %v5484
        %7737 = vmatpush1.bf16.msra.mxu0 %v5483
        %7738 = vmatprep.subr.bf16.mxu0 %v5492
        %7739 = vmatpush1.bf16.msra.mxu0 %v5491
        %7740 = vmatprep.subr.bf16.mxu0 %v5500
        %7741 = vmatpush1.bf16.msra.mxu0 %v5499
        %7742 = vmatprep.subr.bf16.mxu0 %v5508
        %7743 = vmatpush1.bf16.msra.mxu0 %v5507
        %7744 = vmatprep.subr.bf16.mxu0 %v5516
        %7745 = vmatpush1.bf16.msra.mxu0 %v5515
        %7746 = vmatprep.subr.bf16.mxu0 %v5524
        %7747 = vmatpush1.bf16.msra.mxu0 %v5523
        %7748 = vmatprep.subr.bf16.mxu0 %v5532
        %7749 = vmatpush1.bf16.msra.mxu0 %v5531
        %7750 = vmatprep.subr.bf16.mxu0 %v5540
        %7751 = vmatpush1.bf16.msra.mxu0 %v5539
        %7752 = vmatprep.subr.bf16.mxu0 %v5548
        %7753 = vmatpush1.bf16.msra.mxu0 %v5547
        %7754 = vmatprep.subr.bf16.mxu0 %v5556
        %7755 = vmatpush1.bf16.msra.mxu0 %v5555
        %7756 = vmatprep.subr.bf16.mxu0 %v5564
        %7757 = vmatpush1.bf16.msra.mxu0 %v5563
        %7758 = vmatprep.subr.bf16.mxu0 %v5572
        %7759 = vmatpush1.bf16.msra.mxu0 %v5571
        %7760 = vmatprep.subr.bf16.mxu0 %v5580
        %7761 = vmatpush1.bf16.msra.mxu0 %v5579
        %7762 = vmatprep.subr.bf16.mxu0 %v5588
        %7763 = vmatpush1.bf16.msra.mxu0 %v5587
        %7764 = vmatprep.mubr.bf16.mxu0 %v722
        %7765 = vmatmul.mubr.bf16.gmra.mrb[0].mxu0 %v721
        %v7766 = vpop.f32.mrb[0].mxu0
        %v7767 = vadd.f32 %v7726, %v7766
        %v7768 = vpop.f32.mrb[0].mxu0
        %v7769 = vadd.f32 %v7728, %v7768
        %v7770 = vpop.f32.mrb[0].mxu0
        %v7771 = vpop.f32.mrb[0].mxu0
        %7772 = vdwg.mxu0
        %7773 = vmatprep.subr.bf16.mxu0 %v5596
        %7774 = vmatpush1.bf16.msra.mxu0 %v5595
        %7775 = vmatprep.subr.bf16.mxu0 %v5604
        %7776 = vmatpush1.bf16.msra.mxu0 %v5603
        %7777 = vmatprep.subr.bf16.mxu0 %v5612
        %7778 = vmatpush1.bf16.msra.mxu0 %v5611
        %7779 = vmatprep.subr.bf16.mxu0 %v5620
        %7780 = vmatpush1.bf16.msra.mxu0 %v5619
        %7781 = vmatprep.subr.bf16.mxu0 %v5628
        %7782 = vmatpush1.bf16.msra.mxu0 %v5627
        %7783 = vmatprep.subr.bf16.mxu0 %v5636
        %7784 = vmatpush1.bf16.msra.mxu0 %v5635
        %7785 = vmatprep.subr.bf16.mxu0 %v5644
        %7786 = vmatpush1.bf16.msra.mxu0 %v5643
        %7787 = vmatprep.subr.bf16.mxu0 %v5652
        %7788 = vmatpush1.bf16.msra.mxu0 %v5651
        %7789 = vmatprep.subr.bf16.mxu0 %v5660
        %7790 = vmatpush1.bf16.msra.mxu0 %v5659
        %7791 = vmatprep.subr.bf16.mxu0 %v5668
        %7792 = vmatpush1.bf16.msra.mxu0 %v5667
        %7793 = vmatprep.subr.bf16.mxu0 %v5676
        %7794 = vmatpush1.bf16.msra.mxu0 %v5675
        %7795 = vmatprep.subr.bf16.mxu0 %v5684
        %7796 = vmatpush1.bf16.msra.mxu0 %v5683
        %7797 = vmatprep.subr.bf16.mxu0 %v5692
        %7798 = vmatpush1.bf16.msra.mxu0 %v5691
        %7799 = vmatprep.subr.bf16.mxu0 %v5700
        %7800 = vmatpush1.bf16.msra.mxu0 %v5699
        %7801 = vmatprep.subr.bf16.mxu0 %v5708
        %7802 = vmatpush1.bf16.msra.mxu0 %v5707
        %7803 = vmatprep.subr.bf16.mxu0 %v5716
        %7804 = vmatpush1.bf16.msra.mxu0 %v5715
        %7805 = vmatprep.mubr.bf16.mxu0 %v724
        %7806 = vmatmul.mubr.bf16.gmra.mrb[0].mxu0 %v723
        %v7807 = vpop.f32.mrb[0].mxu0
        %v7808 = vadd.f32 %v7767, %v7807
        %v7809 = vpop.f32.mrb[0].mxu0
        %v7810 = vadd.f32 %v7769, %v7809
        %v7811 = vpop.f32.mrb[0].mxu0
        %v7812 = vpop.f32.mrb[0].mxu0
        %7813 = vdwg.mxu0
        %7814 = vmatprep.subr.bf16.mxu0 %v5724
        %7815 = vmatpush1.bf16.msra.mxu0 %v5723
        %7816 = vmatprep.subr.bf16.mxu0 %v5732
        %7817 = vmatpush1.bf16.msra.mxu0 %v5731
        %7818 = vmatprep.subr.bf16.mxu0 %v5740
        %7819 = vmatpush1.bf16.msra.mxu0 %v5739
        %7820 = vmatprep.subr.bf16.mxu0 %v5748
        %7821 = vmatpush1.bf16.msra.mxu0 %v5747
        %7822 = vmatprep.subr.bf16.mxu0 %v5756
        %7823 = vmatpush1.bf16.msra.mxu0 %v5755
        %7824 = vmatprep.subr.bf16.mxu0 %v5764
        %7825 = vmatpush1.bf16.msra.mxu0 %v5763
        %7826 = vmatprep.subr.bf16.mxu0 %v5772
        %7827 = vmatpush1.bf16.msra.mxu0 %v5771
        %7828 = vmatprep.subr.bf16.mxu0 %v5780
        %7829 = vmatpush1.bf16.msra.mxu0 %v5779
        %7830 = vmatprep.subr.bf16.mxu0 %v5788
        %7831 = vmatpush1.bf16.msra.mxu0 %v5787
        %7832 = vmatprep.subr.bf16.mxu0 %v5796
        %7833 = vmatpush1.bf16.msra.mxu0 %v5795
        %7834 = vmatprep.subr.bf16.mxu0 %v5804
        %7835 = vmatpush1.bf16.msra.mxu0 %v5803
        %7836 = vmatprep.subr.bf16.mxu0 %v5812
        %7837 = vmatpush1.bf16.msra.mxu0 %v5811
        %7838 = vmatprep.subr.bf16.mxu0 %v5820
        %7839 = vmatpush1.bf16.msra.mxu0 %v5819
        %7840 = vmatprep.subr.bf16.mxu0 %v5828
        %7841 = vmatpush1.bf16.msra.mxu0 %v5827
        %7842 = vmatprep.subr.bf16.mxu0 %v5836
        %7843 = vmatpush1.bf16.msra.mxu0 %v5835
        %7844 = vmatprep.subr.bf16.mxu0 %v5844
        %7845 = vmatpush1.bf16.msra.mxu0 %v5843
        %7846 = vmatprep.mubr.bf16.mxu0 %v726
        %7847 = vmatmul.mubr.bf16.gmra.mrb[0].mxu0 %v725
        %v7848 = vpop.f32.mrb[0].mxu0
        %v7849 = vadd.f32 %v7808, %v7848
        %v7850 = vpop.f32.mrb[0].mxu0
        %v7851 = vadd.f32 %v7810, %v7850
        %v7852 = vpop.f32.mrb[0].mxu0
        %v7853 = vpop.f32.mrb[0].mxu0
        %7854 = vdwg.mxu0
        %7855 = vmatprep.subr.bf16.mxu0 %v4830
        %7856 = vmatpush1.bf16.msra.mxu0 %v4829
        %7857 = vmatprep.subr.bf16.mxu0 %v4838
        %7858 = vmatpush1.bf16.msra.mxu0 %v4837
        %7859 = vmatprep.subr.bf16.mxu0 %v4846
        %7860 = vmatpush1.bf16.msra.mxu0 %v4845
        %7861 = vmatprep.subr.bf16.mxu0 %v4854
        %7862 = vmatpush1.bf16.msra.mxu0 %v4853
        %7863 = vmatprep.subr.bf16.mxu0 %v4862
        %7864 = vmatpush1.bf16.msra.mxu0 %v4861
        %7865 = vmatprep.subr.bf16.mxu0 %v4870
        %7866 = vmatpush1.bf16.msra.mxu0 %v4869
        %7867 = vmatprep.subr.bf16.mxu0 %v4878
        %7868 = vmatpush1.bf16.msra.mxu0 %v4877
        %7869 = vmatprep.subr.bf16.mxu0 %v4886
        %7870 = vmatpush1.bf16.msra.mxu0 %v4885
        %7871 = vmatprep.subr.bf16.mxu0 %v4894
        %7872 = vmatpush1.bf16.msra.mxu0 %v4893
        %7873 = vmatprep.subr.bf16.mxu0 %v4902
        %7874 = vmatpush1.bf16.msra.mxu0 %v4901
        %7875 = vmatprep.subr.bf16.mxu0 %v4910
        %7876 = vmatpush1.bf16.msra.mxu0 %v4909
        %7877 = vmatprep.subr.bf16.mxu0 %v4918
        %7878 = vmatpush1.bf16.msra.mxu0 %v4917
        %7879 = vmatprep.subr.bf16.mxu0 %v4926
        %7880 = vmatpush1.bf16.msra.mxu0 %v4925
        %7881 = vmatprep.subr.bf16.mxu0 %v4934
        %7882 = vmatpush1.bf16.msra.mxu0 %v4933
        %7883 = vmatprep.subr.bf16.mxu0 %v4942
        %7884 = vmatpush1.bf16.msra.mxu0 %v4941
        %7885 = vmatprep.subr.bf16.mxu0 %v4950
        %7886 = vmatpush1.bf16.msra.mxu0 %v4949
        %7887 = vmatprep.mubr.bf16.mxu0 %v712
        %7888 = vmatmul.mubr.bf16.gmra.mrb[0].mxu0 %v711
        %v7889 = vpop.f32.mrb[0].mxu0
        %v7890 = vadd.f32 0.0, %v7889
        %v7891 = vpop.f32.mrb[0].mxu0
        %v7892 = vadd.f32 0.0, %v7891
        %v7893 = vpop.f32.mrb[0].mxu0
        %v7894 = vpop.f32.mrb[0].mxu0
        %7895 = vdwg.mxu0
        %7896 = vmatprep.subr.bf16.mxu0 %v4958
        %7897 = vmatpush1.bf16.msra.mxu0 %v4957
        %7898 = vmatprep.subr.bf16.mxu0 %v4966
        %7899 = vmatpush1.bf16.msra.mxu0 %v4965
        %7900 = vmatprep.subr.bf16.mxu0 %v4974
        %7901 = vmatpush1.bf16.msra.mxu0 %v4973
        %7902 = vmatprep.subr.bf16.mxu0 %v4982
        %7903 = vmatpush1.bf16.msra.mxu0 %v4981
        %7904 = vmatprep.subr.bf16.mxu0 %v4990
        %7905 = vmatpush1.bf16.msra.mxu0 %v4989
        %7906 = vmatprep.subr.bf16.mxu0 %v4998
        %7907 = vmatpush1.bf16.msra.mxu0 %v4997
        %7908 = vmatprep.subr.bf16.mxu0 %v5006
        %7909 = vmatpush1.bf16.msra.mxu0 %v5005
        %7910 = vmatprep.subr.bf16.mxu0 %v5014
        %7911 = vmatpush1.bf16.msra.mxu0 %v5013
        %7912 = vmatprep.subr.bf16.mxu0 %v5022
        %7913 = vmatpush1.bf16.msra.mxu0 %v5021
        %7914 = vmatprep.subr.bf16.mxu0 %v5030
        %7915 = vmatpush1.bf16.msra.mxu0 %v5029
        %7916 = vmatprep.subr.bf16.mxu0 %v5038
        %7917 = vmatpush1.bf16.msra.mxu0 %v5037
        %7918 = vmatprep.subr.bf16.mxu0 %v5046
        %7919 = vmatpush1.bf16.msra.mxu0 %v5045
        %7920 = vmatprep.subr.bf16.mxu0 %v5054
        %7921 = vmatpush1.bf16.msra.mxu0 %v5053
        %7922 = vmatprep.subr.bf16.mxu0 %v5062
        %7923 = vmatpush1.bf16.msra.mxu0 %v5061
        %7924 = vmatprep.subr.bf16.mxu0 %v5070
        %7925 = vmatpush1.bf16.msra.mxu0 %v5069
        %7926 = vmatprep.subr.bf16.mxu0 %v5078
        %7927 = vmatpush1.bf16.msra.mxu0 %v5077
        %7928 = vmatprep.mubr.bf16.mxu0 %v714
        %7929 = vmatmul.mubr.bf16.gmra.mrb[0].mxu0 %v713
        %v7930 = vpop.f32.mrb[0].mxu0
        %v7931 = vadd.f32 %v7890, %v7930
        %v7932 = vpop.f32.mrb[0].mxu0
        %v7933 = vadd.f32 %v7892, %v7932
        %v7934 = vpop.f32.mrb[0].mxu0
        %v7935 = vpop.f32.mrb[0].mxu0
        %7936 = vdwg.mxu0
        %7937 = vmatprep.subr.bf16.mxu0 %v5086
        %7938 = vmatpush1.bf16.msra.mxu0 %v5085
        %7939 = vmatprep.subr.bf16.mxu0 %v5094
        %7940 = vmatpush1.bf16.msra.mxu0 %v5093
        %7941 = vmatprep.subr.bf16.mxu0 %v5102
        %7942 = vmatpush1.bf16.msra.mxu0 %v5101
        %7943 = vmatprep.subr.bf16.mxu0 %v5110
        %7944 = vmatpush1.bf16.msra.mxu0 %v5109
        %7945 = vmatprep.subr.bf16.mxu0 %v5118
        %7946 = vmatpush1.bf16.msra.mxu0 %v5117
        %7947 = vmatprep.subr.bf16.mxu0 %v5126
        %7948 = vmatpush1.bf16.msra.mxu0 %v5125
        %7949 = vmatprep.subr.bf16.mxu0 %v5134
        %7950 = vmatpush1.bf16.msra.mxu0 %v5133
        %7951 = vmatprep.subr.bf16.mxu0 %v5142
        %7952 = vmatpush1.bf16.msra.mxu0 %v5141
        %7953 = vmatprep.subr.bf16.mxu0 %v5150
        %7954 = vmatpush1.bf16.msra.mxu0 %v5149
        %7955 = vmatprep.subr.bf16.mxu0 %v5158
        %7956 = vmatpush1.bf16.msra.mxu0 %v5157
        %7957 = vmatprep.subr.bf16.mxu0 %v5166
        %7958 = vmatpush1.bf16.msra.mxu0 %v5165
        %7959 = vmatprep.subr.bf16.mxu0 %v5174
        %7960 = vmatpush1.bf16.msra.mxu0 %v5173
        %7961 = vmatprep.subr.bf16.mxu0 %v5182
        %7962 = vmatpush1.bf16.msra.mxu0 %v5181
        %7963 = vmatprep.subr.bf16.mxu0 %v5190
        %7964 = vmatpush1.bf16.msra.mxu0 %v5189
        %7965 = vmatprep.subr.bf16.mxu0 %v5198
        %7966 = vmatpush1.bf16.msra.mxu0 %v5197
        %7967 = vmatprep.subr.bf16.mxu0 %v5206
        %7968 = vmatpush1.bf16.msra.mxu0 %v5205
        %7969 = vmatprep.mubr.bf16.mxu0 %v716
        %7970 = vmatmul.mubr.bf16.gmra.mrb[0].mxu0 %v715
        %v7971 = vpop.f32.mrb[0].mxu0
        %v7972 = vadd.f32 %v7931, %v7971
        %v7973 = vpop.f32.mrb[0].mxu0
        %v7974 = vadd.f32 %v7933, %v7973
        %v7975 = vpop.f32.mrb[0].mxu0
        %v7976 = vpop.f32.mrb[0].mxu0
        %7977 = vdwg.mxu0
        %7978 = vmatprep.subr.bf16.mxu0 %v5214
        %7979 = vmatpush1.bf16.msra.mxu0 %v5213
        %7980 = vmatprep.subr.bf16.mxu0 %v5222
        %7981 = vmatpush1.bf16.msra.mxu0 %v5221
        %7982 = vmatprep.subr.bf16.mxu0 %v5230
        %7983 = vmatpush1.bf16.msra.mxu0 %v5229
        %7984 = vmatprep.subr.bf16.mxu0 %v5238
        %7985 = vmatpush1.bf16.msra.mxu0 %v5237
        %7986 = vmatprep.subr.bf16.mxu0 %v5246
        %7987 = vmatpush1.bf16.msra.mxu0 %v5245
        %7988 = vmatprep.subr.bf16.mxu0 %v5254
        %7989 = vmatpush1.bf16.msra.mxu0 %v5253
        %7990 = vmatprep.subr.bf16.mxu0 %v5262
        %7991 = vmatpush1.bf16.msra.mxu0 %v5261
        %7992 = vmatprep.subr.bf16.mxu0 %v5270
        %7993 = vmatpush1.bf16.msra.mxu0 %v5269
        %7994 = vmatprep.subr.bf16.mxu0 %v5278
        %7995 = vmatpush1.bf16.msra.mxu0 %v5277
        %7996 = vmatprep.subr.bf16.mxu0 %v5286
        %7997 = vmatpush1.bf16.msra.mxu0 %v5285
        %7998 = vmatprep.subr.bf16.mxu0 %v5294
        %7999 = vmatpush1.bf16.msra.mxu0 %v5293
        %8000 = vmatprep.subr.bf16.mxu0 %v5302
        %8001 = vmatpush1.bf16.msra.mxu0 %v5301
        %8002 = vmatprep.subr.bf16.mxu0 %v5310
        %8003 = vmatpush1.bf16.msra.mxu0 %v5309
        %8004 = vmatprep.subr.bf16.mxu0 %v5318
        %8005 = vmatpush1.bf16.msra.mxu0 %v5317
        %8006 = vmatprep.subr.bf16.mxu0 %v5326
        %8007 = vmatpush1.bf16.msra.mxu0 %v5325
        %8008 = vmatprep.subr.bf16.mxu0 %v5334
        %8009 = vmatpush1.bf16.msra.mxu0 %v5333
        %8010 = vmatprep.mubr.bf16.mxu0 %v718
        %8011 = vmatmul.mubr.bf16.gmra.mrb[0].mxu0 %v717
        %v8012 = vpop.f32.mrb[0].mxu0
        %v8013 = vadd.f32 %v7972, %v8012
        %v8014 = vpop.f32.mrb[0].mxu0
        %v8015 = vadd.f32 %v7974, %v8014
        %v8016 = vpop.f32.mrb[0].mxu0
        %v8017 = vpop.f32.mrb[0].mxu0
        %8018 = vdwg.mxu0
        %8019 = vmatprep.subr.bf16.mxu0 %v5342
        %8020 = vmatpush1.bf16.msra.mxu0 %v5341
        %8021 = vmatprep.subr.bf16.mxu0 %v5350
        %8022 = vmatpush1.bf16.msra.mxu0 %v5349
        %8023 = vmatprep.subr.bf16.mxu0 %v5358
        %8024 = vmatpush1.bf16.msra.mxu0 %v5357
        %8025 = vmatprep.subr.bf16.mxu0 %v5366
        %8026 = vmatpush1.bf16.msra.mxu0 %v5365
        %8027 = vmatprep.subr.bf16.mxu0 %v5374
        %8028 = vmatpush1.bf16.msra.mxu0 %v5373
        %8029 = vmatprep.subr.bf16.mxu0 %v5382
        %8030 = vmatpush1.bf16.msra.mxu0 %v5381
        %8031 = vmatprep.subr.bf16.mxu0 %v5390
        %8032 = vmatpush1.bf16.msra.mxu0 %v5389
        %8033 = vmatprep.subr.bf16.mxu0 %v5398
        %8034 = vmatpush1.bf16.msra.mxu0 %v5397
        %8035 = vmatprep.subr.bf16.mxu0 %v5406
        %8036 = vmatpush1.bf16.msra.mxu0 %v5405
        %8037 = vmatprep.subr.bf16.mxu0 %v5414
        %8038 = vmatpush1.bf16.msra.mxu0 %v5413
        %8039 = vmatprep.subr.bf16.mxu0 %v5422
        %8040 = vmatpush1.bf16.msra.mxu0 %v5421
        %8041 = vmatprep.subr.bf16.mxu0 %v5430
        %8042 = vmatpush1.bf16.msra.mxu0 %v5429
        %8043 = vmatprep.subr.bf16.mxu0 %v5438
        %8044 = vmatpush1.bf16.msra.mxu0 %v5437
        %8045 = vmatprep.subr.bf16.mxu0 %v5446
        %8046 = vmatpush1.bf16.msra.mxu0 %v5445
        %8047 = vmatprep.subr.bf16.mxu0 %v5454
        %8048 = vmatpush1.bf16.msra.mxu0 %v5453
        %8049 = vmatprep.subr.bf16.mxu0 %v5462
        %8050 = vmatpush1.bf16.msra.mxu0 %v5461
        %8051 = vmatprep.mubr.bf16.mxu0 %v720
        %8052 = vmatmul.mubr.bf16.gmra.mrb[0].mxu0 %v719
        %v8053 = vpop.f32.mrb[0].mxu0
        %v8054 = vadd.f32 %v8013, %v8053
        %v8055 = vpop.f32.mrb[0].mxu0
        %v8056 = vadd.f32 %v8015, %v8055
        %v8057 = vpop.f32.mrb[0].mxu0
        %v8058 = vpop.f32.mrb[0].mxu0
        %8059 = vdwg.mxu0
        %8060 = vmatprep.subr.bf16.mxu0 %v5470
        %8061 = vmatpush1.bf16.msra.mxu0 %v5469
        %8062 = vmatprep.subr.bf16.mxu0 %v5478
        %8063 = vmatpush1.bf16.msra.mxu0 %v5477
        %8064 = vmatprep.subr.bf16.mxu0 %v5486
        %8065 = vmatpush1.bf16.msra.mxu0 %v5485
        %8066 = vmatprep.subr.bf16.mxu0 %v5494
        %8067 = vmatpush1.bf16.msra.mxu0 %v5493
        %8068 = vmatprep.subr.bf16.mxu0 %v5502
        %8069 = vmatpush1.bf16.msra.mxu0 %v5501
        %8070 = vmatprep.subr.bf16.mxu0 %v5510
        %8071 = vmatpush1.bf16.msra.mxu0 %v5509
        %8072 = vmatprep.subr.bf16.mxu0 %v5518
        %8073 = vmatpush1.bf16.msra.mxu0 %v5517
        %8074 = vmatprep.subr.bf16.mxu0 %v5526
        %8075 = vmatpush1.bf16.msra.mxu0 %v5525
        %8076 = vmatprep.subr.bf16.mxu0 %v5534
        %8077 = vmatpush1.bf16.msra.mxu0 %v5533
        %8078 = vmatprep.subr.bf16.mxu0 %v5542
        %8079 = vmatpush1.bf16.msra.mxu0 %v5541
        %8080 = vmatprep.subr.bf16.mxu0 %v5550
        %8081 = vmatpush1.bf16.msra.mxu0 %v5549
        %8082 = vmatprep.subr.bf16.mxu0 %v5558
        %8083 = vmatpush1.bf16.msra.mxu0 %v5557
        %8084 = vmatprep.subr.bf16.mxu0 %v5566
        %8085 = vmatpush1.bf16.msra.mxu0 %v5565
        %8086 = vmatprep.subr.bf16.mxu0 %v5574
        %8087 = vmatpush1.bf16.msra.mxu0 %v5573
        %8088 = vmatprep.subr.bf16.mxu0 %v5582
        %8089 = vmatpush1.bf16.msra.mxu0 %v5581
        %8090 = vmatprep.subr.bf16.mxu0 %v5590
        %8091 = vmatpush1.bf16.msra.mxu0 %v5589
        %8092 = vmatprep.mubr.bf16.mxu0 %v722
        %8093 = vmatmul.mubr.bf16.gmra.mrb[0].mxu0 %v721
        %v8094 = vpop.f32.mrb[0].mxu0
        %v8095 = vadd.f32 %v8054, %v8094
        %v8096 = vpop.f32.mrb[0].mxu0
        %v8097 = vadd.f32 %v8056, %v8096
        %v8098 = vpop.f32.mrb[0].mxu0
        %v8099 = vpop.f32.mrb[0].mxu0
        %8100 = vdwg.mxu0
        %8101 = vmatprep.subr.bf16.mxu0 %v5598
        %8102 = vmatpush1.bf16.msra.mxu0 %v5597
        %8103 = vmatprep.subr.bf16.mxu0 %v5606
        %8104 = vmatpush1.bf16.msra.mxu0 %v5605
        %8105 = vmatprep.subr.bf16.mxu0 %v5614
        %8106 = vmatpush1.bf16.msra.mxu0 %v5613
        %8107 = vmatprep.subr.bf16.mxu0 %v5622
        %8108 = vmatpush1.bf16.msra.mxu0 %v5621
        %8109 = vmatprep.subr.bf16.mxu0 %v5630
        %8110 = vmatpush1.bf16.msra.mxu0 %v5629
        %8111 = vmatprep.subr.bf16.mxu0 %v5638
        %8112 = vmatpush1.bf16.msra.mxu0 %v5637
        %8113 = vmatprep.subr.bf16.mxu0 %v5646
        %8114 = vmatpush1.bf16.msra.mxu0 %v5645
        %8115 = vmatprep.subr.bf16.mxu0 %v5654
        %8116 = vmatpush1.bf16.msra.mxu0 %v5653
        %8117 = vmatprep.subr.bf16.mxu0 %v5662
        %8118 = vmatpush1.bf16.msra.mxu0 %v5661
        %8119 = vmatprep.subr.bf16.mxu0 %v5670
        %8120 = vmatpush1.bf16.msra.mxu0 %v5669
        %8121 = vmatprep.subr.bf16.mxu0 %v5678
        %8122 = vmatpush1.bf16.msra.mxu0 %v5677
        %8123 = vmatprep.subr.bf16.mxu0 %v5686
        %8124 = vmatpush1.bf16.msra.mxu0 %v5685
        %8125 = vmatprep.subr.bf16.mxu0 %v5694
        %8126 = vmatpush1.bf16.msra.mxu0 %v5693
        %8127 = vmatprep.subr.bf16.mxu0 %v5702
        %8128 = vmatpush1.bf16.msra.mxu0 %v5701
        %8129 = vmatprep.subr.bf16.mxu0 %v5710
        %8130 = vmatpush1.bf16.msra.mxu0 %v5709
        %8131 = vmatprep.subr.bf16.mxu0 %v5718
        %8132 = vmatpush1.bf16.msra.mxu0 %v5717
        %8133 = vmatprep.mubr.bf16.mxu0 %v724
        %8134 = vmatmul.mubr.bf16.gmra.mrb[0].mxu0 %v723
        %v8135 = vpop.f32.mrb[0].mxu0
        %v8136 = vadd.f32 %v8095, %v8135
        %v8137 = vpop.f32.mrb[0].mxu0
        %v8138 = vadd.f32 %v8097, %v8137
        %v8139 = vpop.f32.mrb[0].mxu0
        %v8140 = vpop.f32.mrb[0].mxu0
        %8141 = vdwg.mxu0
        %8142 = vmatprep.subr.bf16.mxu0 %v5726
        %8143 = vmatpush1.bf16.msra.mxu0 %v5725
        %8144 = vmatprep.subr.bf16.mxu0 %v5734
        %8145 = vmatpush1.bf16.msra.mxu0 %v5733
        %8146 = vmatprep.subr.bf16.mxu0 %v5742
        %8147 = vmatpush1.bf16.msra.mxu0 %v5741
        %8148 = vmatprep.subr.bf16.mxu0 %v5750
        %8149 = vmatpush1.bf16.msra.mxu0 %v5749
        %8150 = vmatprep.subr.bf16.mxu0 %v5758
        %8151 = vmatpush1.bf16.msra.mxu0 %v5757
        %8152 = vmatprep.subr.bf16.mxu0 %v5766
        %8153 = vmatpush1.bf16.msra.mxu0 %v5765
        %8154 = vmatprep.subr.bf16.mxu0 %v5774
        %8155 = vmatpush1.bf16.msra.mxu0 %v5773
        %8156 = vmatprep.subr.bf16.mxu0 %v5782
        %8157 = vmatpush1.bf16.msra.mxu0 %v5781
        %8158 = vmatprep.subr.bf16.mxu0 %v5790
        %8159 = vmatpush1.bf16.msra.mxu0 %v5789
        %8160 = vmatprep.subr.bf16.mxu0 %v5798
        %8161 = vmatpush1.bf16.msra.mxu0 %v5797
        %8162 = vmatprep.subr.bf16.mxu0 %v5806
        %8163 = vmatpush1.bf16.msra.mxu0 %v5805
        %8164 = vmatprep.subr.bf16.mxu0 %v5814
        %8165 = vmatpush1.bf16.msra.mxu0 %v5813
        %8166 = vmatprep.subr.bf16.mxu0 %v5822
        %8167 = vmatpush1.bf16.msra.mxu0 %v5821
        %8168 = vmatprep.subr.bf16.mxu0 %v5830
        %8169 = vmatpush1.bf16.msra.mxu0 %v5829
        %8170 = vmatprep.subr.bf16.mxu0 %v5838
        %8171 = vmatpush1.bf16.msra.mxu0 %v5837
        %8172 = vmatprep.subr.bf16.mxu0 %v5846
        %8173 = vmatpush1.bf16.msra.mxu0 %v5845
        %8174 = vmatprep.mubr.bf16.mxu0 %v726
        %8175 = vmatmul.mubr.bf16.gmra.mrb[0].mxu0 %v725
        %v8176 = vpop.f32.mrb[0].mxu0
        %v8177 = vadd.f32 %v8136, %v8176
        %v8178 = vpop.f32.mrb[0].mxu0
        %v8179 = vadd.f32 %v8138, %v8178
        %v8180 = vpop.f32.mrb[0].mxu0
        %v8181 = vpop.f32.mrb[0].mxu0
        %8182 = vdwg.mxu0
        %v8191 = vcombine.low %v7193, %v7195
        %v8192 = vcombine.low %v7521, %v7523
        %v8194 = vunpack.c.l.s4 1983009808
        %v8195 = vunpack.c.0.s8 %v8194
        %v8196 = vlaneseq
        %v8197 = vshrl.u32 %v8196, 7
        %v8198 = vsub.s32 %v8195, %v8197
        %v8199 = vrot.slane %v8191, %v8198
        %v8201 = vunpack.c.l.s4 1983009808
        %v8202 = vunpack.c.0.s8 %v8201
        %v8203 = vlaneseq
        %v8204 = vshrl.u32 %v8203, 7
        %v8205 = vsub.s32 %v8202, %v8204
        %v8206 = vrot.slane %v8192, %v8205
        %v8207 = vcombine.low %v8199, %v8206
        %v8208 = vcombine.low %v7849, %v7851
        %v8209 = vcombine.low %v8177, %v8179
        %v8211 = vunpack.c.l.s4 1983009808
        %v8212 = vunpack.c.0.s8 %v8211
        %v8213 = vlaneseq
        %v8214 = vshrl.u32 %v8213, 7
        %v8215 = vsub.s32 %v8212, %v8214
        %v8216 = vrot.slane %v8208, %v8215
        %v8218 = vunpack.c.l.s4 1983009808
        %v8219 = vunpack.c.0.s8 %v8218
        %v8220 = vlaneseq
        %v8221 = vshrl.u32 %v8220, 7
        %v8222 = vsub.s32 %v8219, %v8221
        %v8223 = vrot.slane %v8209, %v8222
        %v8224 = vcombine.low %v8216, %v8223
        %v8227 = vadd.f32 %v709, %v8207
        %v8228 = vadd.f32 %v710, %v8224
        %8229 = vst [vmem:[#allocation2] sm:$0xff] %v8227
        %8230 = vst [vmem:[#allocation2 + $0x8] sm:$0xff] %v8228
        %p8231 = scmp.eq.s32.totalorder %s31, 1
        // Predicated region
        $region57: #{net100_forward.1} parent=35 // pred_check
          %p8232 = pneg %p8231
        $region58: #{net100_forward.1} parent=35 // pred_check_branch
          %8234 = sbr.rel (%p8232) target = $region60
        $region59: #{net100_forward.1} parent=35 // pred_region
          %v8235 = vld [vmem:[#allocation2] sm:$0xff]
          %v8236 = vld [vmem:[#allocation2 + $0x8] sm:$0xff]
          %v8237 = vmax.f32 %v8235, 0.0
          %v8238 = vmax.f32 %v8236, 0.0
          %v8241 = vcombine.high %v8237, %v8237
          %v8243 = vunpack.c.l.s4 1983009808
          %v8244 = vunpack.c.0.s8 %v8243
          %v8245 = vlaneseq
          %v8246 = vshrl.u32 %v8245, 7
          %v8247 = vsub.s32 %v8244, %v8246
          %v8248 = vrot.slane %v8237, %v8247
          %v8250 = vunpack.c.l.s4 1983009808
          %v8251 = vunpack.c.0.s8 %v8250
          %v8252 = vlaneseq
          %v8253 = vshrl.u32 %v8252, 7
          %v8254 = vsub.s32 %v8251, %v8253
          %v8255 = vrot.slane %v8241, %v8254
          %v8256 = vcombine.high %v8248, %v8248
          %v8257 = vcombine.high %v8255, %v8255
          %v8258 = vcombine.high %v8238, %v8238
          %v8260 = vunpack.c.l.s4 1983009808
          %v8261 = vunpack.c.0.s8 %v8260
          %v8262 = vlaneseq
          %v8263 = vshrl.u32 %v8262, 7
          %v8264 = vsub.s32 %v8261, %v8263
          %v8265 = vrot.slane %v8238, %v8264
          %v8267 = vunpack.c.l.s4 1983009808
          %v8268 = vunpack.c.0.s8 %v8267
          %v8269 = vlaneseq
          %v8270 = vshrl.u32 %v8269, 7
          %v8271 = vsub.s32 %v8268, %v8270
          %v8272 = vrot.slane %v8258, %v8271
          %v8273 = vcombine.high %v8265, %v8265
          %v8274 = vcombine.high %v8272, %v8272
          %v8283 = vsel %vm455, %v8248, 0.0
          %v8284 = vrot.slane %v8283, 4
          %v8285 = vadd.f32 %v8283, %v8284
          %v8286 = vrot.slane %v8285, 2
          %v8287 = vadd.f32 %v8285, %v8286
          %v8288 = vrot.slane %v8287, 1
          %v8289 = vadd.f32 %v8287, %v8288
          %v8290 = vsel %vm455, %v8256, 0.0
          %v8291 = vrot.slane %v8290, 4
          %v8292 = vadd.f32 %v8290, %v8291
          %v8293 = vrot.slane %v8292, 2
          %v8294 = vadd.f32 %v8292, %v8293
          %v8295 = vrot.slane %v8294, 1
          %v8296 = vadd.f32 %v8294, %v8295
          %v8297 = vsel %vm455, %v8255, 0.0
          %v8298 = vrot.slane %v8297, 4
          %v8299 = vadd.f32 %v8297, %v8298
          %v8300 = vrot.slane %v8299, 2
          %v8301 = vadd.f32 %v8299, %v8300
          %v8302 = vrot.slane %v8301, 1
          %v8303 = vadd.f32 %v8301, %v8302
          %v8304 = vsel %vm455, %v8257, 0.0
          %v8305 = vrot.slane %v8304, 4
          %v8306 = vadd.f32 %v8304, %v8305
          %v8307 = vrot.slane %v8306, 2
          %v8308 = vadd.f32 %v8306, %v8307
          %v8309 = vrot.slane %v8308, 1
          %v8310 = vadd.f32 %v8308, %v8309
          %v8311 = vsel %vm455, %v8265, 0.0
          %v8312 = vrot.slane %v8311, 4
          %v8313 = vadd.f32 %v8311, %v8312
          %v8314 = vrot.slane %v8313, 2
          %v8315 = vadd.f32 %v8313, %v8314
          %v8316 = vrot.slane %v8315, 1
          %v8317 = vadd.f32 %v8315, %v8316
          %v8318 = vsel %vm455, %v8273, 0.0
          %v8319 = vrot.slane %v8318, 4
          %v8320 = vadd.f32 %v8318, %v8319
          %v8321 = vrot.slane %v8320, 2
          %v8322 = vadd.f32 %v8320, %v8321
          %v8323 = vrot.slane %v8322, 1
          %v8324 = vadd.f32 %v8322, %v8323
          %v8325 = vsel %vm455, %v8272, 0.0
          %v8326 = vrot.slane %v8325, 4
          %v8327 = vadd.f32 %v8325, %v8326
          %v8328 = vrot.slane %v8327, 2
          %v8329 = vadd.f32 %v8327, %v8328
          %v8330 = vrot.slane %v8329, 1
          %v8331 = vadd.f32 %v8329, %v8330
          %v8332 = vsel %vm455, %v8274, 0.0
          %v8333 = vrot.slane %v8332, 4
          %v8334 = vadd.f32 %v8332, %v8333
          %v8335 = vrot.slane %v8334, 2
          %v8336 = vadd.f32 %v8334, %v8335
          %v8337 = vrot.slane %v8336, 1
          %v8338 = vadd.f32 %v8336, %v8337
          %v8339 = vmul.f32 %v8289, %v568
          %v8340 = vmul.f32 %v8296, %v568
          %v8341 = vmul.f32 %v8303, %v568
          %v8342 = vmul.f32 %v8310, %v568
          %v8343 = vmul.f32 %v8317, %v568
          %v8344 = vmul.f32 %v8324, %v568
          %v8345 = vmul.f32 %v8331, %v568
          %v8346 = vmul.f32 %v8338, %v568
          %v8355 = vcombine.low %v8339, %v8340
          %v8356 = vcombine.low %v8341, %v8342
          %v8357 = vcombine.low %v8343, %v8344
          %v8358 = vcombine.low %v8345, %v8346
          %v8360 = vunpack.c.l.s4 1966171168
          %v8361 = vunpack.c.0.s8 %v8360
          %v8362 = vlaneseq
          %v8363 = vshrl.u32 %v8362, 7
          %v8364 = vsub.s32 %v8361, %v8363
          %v8365 = vrot.slane %v8355, %v8364
          %v8367 = vunpack.c.l.s4 1966171168
          %v8368 = vunpack.c.0.s8 %v8367
          %v8369 = vlaneseq
          %v8370 = vshrl.u32 %v8369, 7
          %v8371 = vsub.s32 %v8368, %v8370
          %v8372 = vrot.slane %v8356, %v8371
          %v8374 = vunpack.c.l.s4 1966171168
          %v8375 = vunpack.c.0.s8 %v8374
          %v8376 = vlaneseq
          %v8377 = vshrl.u32 %v8376, 7
          %v8378 = vsub.s32 %v8375, %v8377
          %v8379 = vrot.slane %v8357, %v8378
          %v8381 = vunpack.c.l.s4 1966171168
          %v8382 = vunpack.c.0.s8 %v8381
          %v8383 = vlaneseq
          %v8384 = vshrl.u32 %v8383, 7
          %v8385 = vsub.s32 %v8382, %v8384
          %v8386 = vrot.slane %v8358, %v8385
          %v8387 = vcombine.low %v8365, %v8372
          %v8388 = vcombine.low %v8379, %v8386
          %v8390 = vunpack.c.l.s4 1966171168
          %v8391 = vunpack.c.0.s8 %v8390
          %v8392 = vlaneseq
          %v8393 = vshrl.u32 %v8392, 7
          %v8394 = vsub.s32 %v8391, %v8393
          %v8395 = vrot.slane %v8387, %v8394
          %v8397 = vunpack.c.l.s4 1966171168
          %v8398 = vunpack.c.0.s8 %v8397
          %v8399 = vlaneseq
          %v8400 = vshrl.u32 %v8399, 7
          %v8401 = vsub.s32 %v8398, %v8400
          %v8402 = vrot.slane %v8388, %v8401
          %v8403 = vcombine.low %v8395, %v8402
          %8405 = vst [vmem:[#allocation14] sm:$0xff] %v8403
          %v8406 = vpack.c.bf16 %v8248, %v8248
          %v8407 = vpack.c.bf16 %v8256, %v8256
          %v8408 = vpack.c.bf16 %v8255, %v8255
          %v8409 = vpack.c.bf16 %v8257, %v8257
          %v8410 = vpack.c.bf16 %v8265, %v8265
          %v8411 = vpack.c.bf16 %v8273, %v8273
          %v8412 = vpack.c.bf16 %v8272, %v8272
          %v8413 = vpack.c.bf16 %v8274, %v8274
          %v8414 = vld [vmem:[#allocation8] sm:$0xff]
          %v8415 = vld [vmem:[#allocation8 + $0x8] sm:$0xff]
          %v8416 = vld [vmem:[#allocation8 + $0x10] sm:$0xff]
          %v8417 = vld [vmem:[#allocation8 + $0x18] sm:$0xff]
          %v8418 = vld [vmem:[#allocation8 + $0x20] sm:$0xff]
          %v8419 = vld [vmem:[#allocation8 + $0x28] sm:$0xff]
          %v8420 = vld [vmem:[#allocation8 + $0x30] sm:$0xff]
          %v8421 = vld [vmem:[#allocation8 + $0x38] sm:$0xff]
          %v8422 = vld [vmem:[#allocation8 + $0x40] sm:$0xff]
          %v8423 = vld [vmem:[#allocation8 + $0x48] sm:$0xff]
          %v8424 = vld [vmem:[#allocation8 + $0x50] sm:$0xff]
          %v8425 = vld [vmem:[#allocation8 + $0x58] sm:$0xff]
          %v8426 = vld [vmem:[#allocation8 + $0x60] sm:$0xff]
          %v8427 = vld [vmem:[#allocation8 + $0x68] sm:$0xff]
          %v8428 = vld [vmem:[#allocation8 + $0x70] sm:$0xff]
          %v8429 = vld [vmem:[#allocation8 + $0x78] sm:$0xff]
          %v8430 = vld [vmem:[#allocation8 + $0x80] sm:$0xff]
          %v8431 = vld [vmem:[#allocation8 + $0x88] sm:$0xff]
          %v8432 = vld [vmem:[#allocation8 + $0x90] sm:$0xff]
          %v8433 = vld [vmem:[#allocation8 + $0x98] sm:$0xff]
          %v8434 = vld [vmem:[#allocation8 + $0xa0] sm:$0xff]
          %v8435 = vld [vmem:[#allocation8 + $0xa8] sm:$0xff]
          %v8436 = vld [vmem:[#allocation8 + $0xb0] sm:$0xff]
          %v8437 = vld [vmem:[#allocation8 + $0xb8] sm:$0xff]
          %v8438 = vld [vmem:[#allocation8 + $0xc0] sm:$0xff]
          %v8439 = vld [vmem:[#allocation8 + $0xc8] sm:$0xff]
          %v8440 = vld [vmem:[#allocation8 + $0xd0] sm:$0xff]
          %v8441 = vld [vmem:[#allocation8 + $0xd8] sm:$0xff]
          %v8442 = vld [vmem:[#allocation8 + $0xe0] sm:$0xff]
          %v8443 = vld [vmem:[#allocation8 + $0xe8] sm:$0xff]
          %v8444 = vld [vmem:[#allocation8 + $0xf0] sm:$0xff]
          %v8445 = vld [vmem:[#allocation8 + $0xf8] sm:$0xff]
          %v8446 = vld [vmem:[#allocation8 + $0x100] sm:$0xff]
          %v8447 = vld [vmem:[#allocation8 + $0x108] sm:$0xff]
          %v8448 = vld [vmem:[#allocation8 + $0x110] sm:$0xff]
          %v8449 = vld [vmem:[#allocation8 + $0x118] sm:$0xff]
          %v8450 = vld [vmem:[#allocation8 + $0x120] sm:$0xff]
          %v8451 = vld [vmem:[#allocation8 + $0x128] sm:$0xff]
          %v8452 = vld [vmem:[#allocation8 + $0x130] sm:$0xff]
          %v8453 = vld [vmem:[#allocation8 + $0x138] sm:$0xff]
          %v8454 = vld [vmem:[#allocation8 + $0x140] sm:$0xff]
          %v8455 = vld [vmem:[#allocation8 + $0x148] sm:$0xff]
          %v8456 = vld [vmem:[#allocation8 + $0x150] sm:$0xff]
          %v8457 = vld [vmem:[#allocation8 + $0x158] sm:$0xff]
          %v8458 = vld [vmem:[#allocation8 + $0x160] sm:$0xff]
          %v8459 = vld [vmem:[#allocation8 + $0x168] sm:$0xff]
          %v8460 = vld [vmem:[#allocation8 + $0x170] sm:$0xff]
          %v8461 = vld [vmem:[#allocation8 + $0x178] sm:$0xff]
          %v8462 = vld [vmem:[#allocation8 + $0x180] sm:$0xff]
          %v8463 = vld [vmem:[#allocation8 + $0x188] sm:$0xff]
          %v8464 = vld [vmem:[#allocation8 + $0x190] sm:$0xff]
          %v8465 = vld [vmem:[#allocation8 + $0x198] sm:$0xff]
          %v8466 = vld [vmem:[#allocation8 + $0x1a0] sm:$0xff]
          %v8467 = vld [vmem:[#allocation8 + $0x1a8] sm:$0xff]
          %v8468 = vld [vmem:[#allocation8 + $0x1b0] sm:$0xff]
          %v8469 = vld [vmem:[#allocation8 + $0x1b8] sm:$0xff]
          %v8470 = vld [vmem:[#allocation8 + $0x1c0] sm:$0xff]
          %v8471 = vld [vmem:[#allocation8 + $0x1c8] sm:$0xff]
          %v8472 = vld [vmem:[#allocation8 + $0x1d0] sm:$0xff]
          %v8473 = vld [vmem:[#allocation8 + $0x1d8] sm:$0xff]
          %v8474 = vld [vmem:[#allocation8 + $0x1e0] sm:$0xff]
          %v8475 = vld [vmem:[#allocation8 + $0x1e8] sm:$0xff]
          %v8476 = vld [vmem:[#allocation8 + $0x1f0] sm:$0xff]
          %v8477 = vld [vmem:[#allocation8 + $0x1f8] sm:$0xff]
          %v8478 = vld [vmem:[#allocation8 + $0x200] sm:$0xff]
          %v8479 = vld [vmem:[#allocation8 + $0x208] sm:$0xff]
          %v8480 = vld [vmem:[#allocation8 + $0x210] sm:$0xff]
          %v8481 = vld [vmem:[#allocation8 + $0x218] sm:$0xff]
          %v8482 = vld [vmem:[#allocation8 + $0x220] sm:$0xff]
          %v8483 = vld [vmem:[#allocation8 + $0x228] sm:$0xff]
          %v8484 = vld [vmem:[#allocation8 + $0x230] sm:$0xff]
          %v8485 = vld [vmem:[#allocation8 + $0x238] sm:$0xff]
          %v8486 = vld [vmem:[#allocation8 + $0x240] sm:$0xff]
          %v8487 = vld [vmem:[#allocation8 + $0x248] sm:$0xff]
          %v8488 = vld [vmem:[#allocation8 + $0x250] sm:$0xff]
          %v8489 = vld [vmem:[#allocation8 + $0x258] sm:$0xff]
          %v8490 = vld [vmem:[#allocation8 + $0x260] sm:$0xff]
          %v8491 = vld [vmem:[#allocation8 + $0x268] sm:$0xff]
          %v8492 = vld [vmem:[#allocation8 + $0x270] sm:$0xff]
          %v8493 = vld [vmem:[#allocation8 + $0x278] sm:$0xff]
          %v8494 = vld [vmem:[#allocation8 + $0x280] sm:$0xff]
          %v8495 = vld [vmem:[#allocation8 + $0x288] sm:$0xff]
          %v8496 = vld [vmem:[#allocation8 + $0x290] sm:$0xff]
          %v8497 = vld [vmem:[#allocation8 + $0x298] sm:$0xff]
          %v8498 = vld [vmem:[#allocation8 + $0x2a0] sm:$0xff]
          %v8499 = vld [vmem:[#allocation8 + $0x2a8] sm:$0xff]
          %v8500 = vld [vmem:[#allocation8 + $0x2b0] sm:$0xff]
          %v8501 = vld [vmem:[#allocation8 + $0x2b8] sm:$0xff]
          %v8502 = vld [vmem:[#allocation8 + $0x2c0] sm:$0xff]
          %v8503 = vld [vmem:[#allocation8 + $0x2c8] sm:$0xff]
          %v8504 = vld [vmem:[#allocation8 + $0x2d0] sm:$0xff]
          %v8505 = vld [vmem:[#allocation8 + $0x2d8] sm:$0xff]
          %v8506 = vld [vmem:[#allocation8 + $0x2e0] sm:$0xff]
          %v8507 = vld [vmem:[#allocation8 + $0x2e8] sm:$0xff]
          %v8508 = vld [vmem:[#allocation8 + $0x2f0] sm:$0xff]
          %v8509 = vld [vmem:[#allocation8 + $0x2f8] sm:$0xff]
          %v8510 = vld [vmem:[#allocation8 + $0x300] sm:$0xff]
          %v8511 = vld [vmem:[#allocation8 + $0x308] sm:$0xff]
          %v8512 = vld [vmem:[#allocation8 + $0x310] sm:$0xff]
          %v8513 = vld [vmem:[#allocation8 + $0x318] sm:$0xff]
          %v8514 = vld [vmem:[#allocation8 + $0x320] sm:$0xff]
          %v8515 = vld [vmem:[#allocation8 + $0x328] sm:$0xff]
          %v8516 = vld [vmem:[#allocation8 + $0x330] sm:$0xff]
          %v8517 = vld [vmem:[#allocation8 + $0x338] sm:$0xff]
          %v8518 = vld [vmem:[#allocation8 + $0x340] sm:$0xff]
          %v8519 = vld [vmem:[#allocation8 + $0x348] sm:$0xff]
          %v8520 = vld [vmem:[#allocation8 + $0x350] sm:$0xff]
          %v8521 = vld [vmem:[#allocation8 + $0x358] sm:$0xff]
          %v8522 = vld [vmem:[#allocation8 + $0x360] sm:$0xff]
          %v8523 = vld [vmem:[#allocation8 + $0x368] sm:$0xff]
          %v8524 = vld [vmem:[#allocation8 + $0x370] sm:$0xff]
          %v8525 = vld [vmem:[#allocation8 + $0x378] sm:$0xff]
          %v8526 = vld [vmem:[#allocation8 + $0x380] sm:$0xff]
          %v8527 = vld [vmem:[#allocation8 + $0x388] sm:$0xff]
          %v8528 = vld [vmem:[#allocation8 + $0x390] sm:$0xff]
          %v8529 = vld [vmem:[#allocation8 + $0x398] sm:$0xff]
          %v8530 = vld [vmem:[#allocation8 + $0x3a0] sm:$0xff]
          %v8531 = vld [vmem:[#allocation8 + $0x3a8] sm:$0xff]
          %v8532 = vld [vmem:[#allocation8 + $0x3b0] sm:$0xff]
          %v8533 = vld [vmem:[#allocation8 + $0x3b8] sm:$0xff]
          %v8534 = vld [vmem:[#allocation8 + $0x3c0] sm:$0xff]
          %v8535 = vld [vmem:[#allocation8 + $0x3c8] sm:$0xff]
          %v8536 = vld [vmem:[#allocation8 + $0x3d0] sm:$0xff]
          %v8537 = vld [vmem:[#allocation8 + $0x3d8] sm:$0xff]
          %v8538 = vld [vmem:[#allocation8 + $0x3e0] sm:$0xff]
          %v8539 = vld [vmem:[#allocation8 + $0x3e8] sm:$0xff]
          %v8540 = vld [vmem:[#allocation8 + $0x3f0] sm:$0xff]
          %v8541 = vld [vmem:[#allocation8 + $0x3f8] sm:$0xff]
          %v8542 = vld [vmem:[#allocation8 + $0x400] sm:$0xff]
          %v8543 = vld [vmem:[#allocation8 + $0x408] sm:$0xff]
          %v8544 = vld [vmem:[#allocation8 + $0x410] sm:$0xff]
          %v8545 = vld [vmem:[#allocation8 + $0x418] sm:$0xff]
          %v8546 = vld [vmem:[#allocation8 + $0x420] sm:$0xff]
          %v8547 = vld [vmem:[#allocation8 + $0x428] sm:$0xff]
          %v8548 = vld [vmem:[#allocation8 + $0x430] sm:$0xff]
          %v8549 = vld [vmem:[#allocation8 + $0x438] sm:$0xff]
          %v8550 = vld [vmem:[#allocation8 + $0x440] sm:$0xff]
          %v8551 = vld [vmem:[#allocation8 + $0x448] sm:$0xff]
          %v8552 = vld [vmem:[#allocation8 + $0x450] sm:$0xff]
          %v8553 = vld [vmem:[#allocation8 + $0x458] sm:$0xff]
          %v8554 = vld [vmem:[#allocation8 + $0x460] sm:$0xff]
          %v8555 = vld [vmem:[#allocation8 + $0x468] sm:$0xff]
          %v8556 = vld [vmem:[#allocation8 + $0x470] sm:$0xff]
          %v8557 = vld [vmem:[#allocation8 + $0x478] sm:$0xff]
          %v8558 = vld [vmem:[#allocation8 + $0x480] sm:$0xff]
          %v8559 = vld [vmem:[#allocation8 + $0x488] sm:$0xff]
          %v8560 = vld [vmem:[#allocation8 + $0x490] sm:$0xff]
          %v8561 = vld [vmem:[#allocation8 + $0x498] sm:$0xff]
          %v8562 = vld [vmem:[#allocation8 + $0x4a0] sm:$0xff]
          %v8563 = vld [vmem:[#allocation8 + $0x4a8] sm:$0xff]
          %v8564 = vld [vmem:[#allocation8 + $0x4b0] sm:$0xff]
          %v8565 = vld [vmem:[#allocation8 + $0x4b8] sm:$0xff]
          %v8566 = vld [vmem:[#allocation8 + $0x4c0] sm:$0xff]
          %v8567 = vld [vmem:[#allocation8 + $0x4c8] sm:$0xff]
          %v8568 = vld [vmem:[#allocation8 + $0x4d0] sm:$0xff]
          %v8569 = vld [vmem:[#allocation8 + $0x4d8] sm:$0xff]
          %v8570 = vld [vmem:[#allocation8 + $0x4e0] sm:$0xff]
          %v8571 = vld [vmem:[#allocation8 + $0x4e8] sm:$0xff]
          %v8572 = vld [vmem:[#allocation8 + $0x4f0] sm:$0xff]
          %v8573 = vld [vmem:[#allocation8 + $0x4f8] sm:$0xff]
          %v8574 = vld [vmem:[#allocation8 + $0x500] sm:$0xff]
          %v8575 = vld [vmem:[#allocation8 + $0x508] sm:$0xff]
          %v8576 = vld [vmem:[#allocation8 + $0x510] sm:$0xff]
          %v8577 = vld [vmem:[#allocation8 + $0x518] sm:$0xff]
          %v8578 = vld [vmem:[#allocation8 + $0x520] sm:$0xff]
          %v8579 = vld [vmem:[#allocation8 + $0x528] sm:$0xff]
          %v8580 = vld [vmem:[#allocation8 + $0x530] sm:$0xff]
          %v8581 = vld [vmem:[#allocation8 + $0x538] sm:$0xff]
          %v8582 = vld [vmem:[#allocation8 + $0x540] sm:$0xff]
          %v8583 = vld [vmem:[#allocation8 + $0x548] sm:$0xff]
          %v8584 = vld [vmem:[#allocation8 + $0x550] sm:$0xff]
          %v8585 = vld [vmem:[#allocation8 + $0x558] sm:$0xff]
          %v8586 = vld [vmem:[#allocation8 + $0x560] sm:$0xff]
          %v8587 = vld [vmem:[#allocation8 + $0x568] sm:$0xff]
          %v8588 = vld [vmem:[#allocation8 + $0x570] sm:$0xff]
          %v8589 = vld [vmem:[#allocation8 + $0x578] sm:$0xff]
          %v8590 = vld [vmem:[#allocation8 + $0x580] sm:$0xff]
          %v8591 = vld [vmem:[#allocation8 + $0x588] sm:$0xff]
          %v8592 = vld [vmem:[#allocation8 + $0x590] sm:$0xff]
          %v8593 = vld [vmem:[#allocation8 + $0x598] sm:$0xff]
          %v8594 = vld [vmem:[#allocation8 + $0x5a0] sm:$0xff]
          %v8595 = vld [vmem:[#allocation8 + $0x5a8] sm:$0xff]
          %v8596 = vld [vmem:[#allocation8 + $0x5b0] sm:$0xff]
          %v8597 = vld [vmem:[#allocation8 + $0x5b8] sm:$0xff]
          %v8598 = vld [vmem:[#allocation8 + $0x5c0] sm:$0xff]
          %v8599 = vld [vmem:[#allocation8 + $0x5c8] sm:$0xff]
          %v8600 = vld [vmem:[#allocation8 + $0x5d0] sm:$0xff]
          %v8601 = vld [vmem:[#allocation8 + $0x5d8] sm:$0xff]
          %v8602 = vld [vmem:[#allocation8 + $0x5e0] sm:$0xff]
          %v8603 = vld [vmem:[#allocation8 + $0x5e8] sm:$0xff]
          %v8604 = vld [vmem:[#allocation8 + $0x5f0] sm:$0xff]
          %v8605 = vld [vmem:[#allocation8 + $0x5f8] sm:$0xff]
          %v8606 = vld [vmem:[#allocation8 + $0x600] sm:$0xff]
          %v8607 = vld [vmem:[#allocation8 + $0x608] sm:$0xff]
          %v8608 = vld [vmem:[#allocation8 + $0x610] sm:$0xff]
          %v8609 = vld [vmem:[#allocation8 + $0x618] sm:$0xff]
          %v8610 = vld [vmem:[#allocation8 + $0x620] sm:$0xff]
          %v8611 = vld [vmem:[#allocation8 + $0x628] sm:$0xff]
          %v8612 = vld [vmem:[#allocation8 + $0x630] sm:$0xff]
          %v8613 = vld [vmem:[#allocation8 + $0x638] sm:$0xff]
          %v8614 = vld [vmem:[#allocation8 + $0x640] sm:$0xff]
          %v8615 = vld [vmem:[#allocation8 + $0x648] sm:$0xff]
          %v8616 = vld [vmem:[#allocation8 + $0x650] sm:$0xff]
          %v8617 = vld [vmem:[#allocation8 + $0x658] sm:$0xff]
          %v8618 = vld [vmem:[#allocation8 + $0x660] sm:$0xff]
          %v8619 = vld [vmem:[#allocation8 + $0x668] sm:$0xff]
          %v8620 = vld [vmem:[#allocation8 + $0x670] sm:$0xff]
          %v8621 = vld [vmem:[#allocation8 + $0x678] sm:$0xff]
          %v8622 = vld [vmem:[#allocation8 + $0x680] sm:$0xff]
          %v8623 = vld [vmem:[#allocation8 + $0x688] sm:$0xff]
          %v8624 = vld [vmem:[#allocation8 + $0x690] sm:$0xff]
          %v8625 = vld [vmem:[#allocation8 + $0x698] sm:$0xff]
          %v8626 = vld [vmem:[#allocation8 + $0x6a0] sm:$0xff]
          %v8627 = vld [vmem:[#allocation8 + $0x6a8] sm:$0xff]
          %v8628 = vld [vmem:[#allocation8 + $0x6b0] sm:$0xff]
          %v8629 = vld [vmem:[#allocation8 + $0x6b8] sm:$0xff]
          %v8630 = vld [vmem:[#allocation8 + $0x6c0] sm:$0xff]
          %v8631 = vld [vmem:[#allocation8 + $0x6c8] sm:$0xff]
          %v8632 = vld [vmem:[#allocation8 + $0x6d0] sm:$0xff]
          %v8633 = vld [vmem:[#allocation8 + $0x6d8] sm:$0xff]
          %v8634 = vld [vmem:[#allocation8 + $0x6e0] sm:$0xff]
          %v8635 = vld [vmem:[#allocation8 + $0x6e8] sm:$0xff]
          %v8636 = vld [vmem:[#allocation8 + $0x6f0] sm:$0xff]
          %v8637 = vld [vmem:[#allocation8 + $0x6f8] sm:$0xff]
          %v8638 = vld [vmem:[#allocation8 + $0x700] sm:$0xff]
          %v8639 = vld [vmem:[#allocation8 + $0x708] sm:$0xff]
          %v8640 = vld [vmem:[#allocation8 + $0x710] sm:$0xff]
          %v8641 = vld [vmem:[#allocation8 + $0x718] sm:$0xff]
          %v8642 = vld [vmem:[#allocation8 + $0x720] sm:$0xff]
          %v8643 = vld [vmem:[#allocation8 + $0x728] sm:$0xff]
          %v8644 = vld [vmem:[#allocation8 + $0x730] sm:$0xff]
          %v8645 = vld [vmem:[#allocation8 + $0x738] sm:$0xff]
          %v8646 = vld [vmem:[#allocation8 + $0x740] sm:$0xff]
          %v8647 = vld [vmem:[#allocation8 + $0x748] sm:$0xff]
          %v8648 = vld [vmem:[#allocation8 + $0x750] sm:$0xff]
          %v8649 = vld [vmem:[#allocation8 + $0x758] sm:$0xff]
          %v8650 = vld [vmem:[#allocation8 + $0x760] sm:$0xff]
          %v8651 = vld [vmem:[#allocation8 + $0x768] sm:$0xff]
          %v8652 = vld [vmem:[#allocation8 + $0x770] sm:$0xff]
          %v8653 = vld [vmem:[#allocation8 + $0x778] sm:$0xff]
          %v8654 = vld [vmem:[#allocation8 + $0x780] sm:$0xff]
          %v8655 = vld [vmem:[#allocation8 + $0x788] sm:$0xff]
          %v8656 = vld [vmem:[#allocation8 + $0x790] sm:$0xff]
          %v8657 = vld [vmem:[#allocation8 + $0x798] sm:$0xff]
          %v8658 = vld [vmem:[#allocation8 + $0x7a0] sm:$0xff]
          %v8659 = vld [vmem:[#allocation8 + $0x7a8] sm:$0xff]
          %v8660 = vld [vmem:[#allocation8 + $0x7b0] sm:$0xff]
          %v8661 = vld [vmem:[#allocation8 + $0x7b8] sm:$0xff]
          %v8662 = vld [vmem:[#allocation8 + $0x7c0] sm:$0xff]
          %v8663 = vld [vmem:[#allocation8 + $0x7c8] sm:$0xff]
          %v8664 = vld [vmem:[#allocation8 + $0x7d0] sm:$0xff]
          %v8665 = vld [vmem:[#allocation8 + $0x7d8] sm:$0xff]
          %v8666 = vld [vmem:[#allocation8 + $0x7e0] sm:$0xff]
          %v8667 = vld [vmem:[#allocation8 + $0x7e8] sm:$0xff]
          %v8668 = vld [vmem:[#allocation8 + $0x7f0] sm:$0xff]
          %v8669 = vld [vmem:[#allocation8 + $0x7f8] sm:$0xff]
          %v8670 = vld [vmem:[#allocation8 + $0x800] sm:$0xff]
          %v8671 = vld [vmem:[#allocation8 + $0x808] sm:$0xff]
          %v8672 = vld [vmem:[#allocation8 + $0x810] sm:$0xff]
          %v8673 = vld [vmem:[#allocation8 + $0x818] sm:$0xff]
          %v8674 = vld [vmem:[#allocation8 + $0x820] sm:$0xff]
          %v8675 = vld [vmem:[#allocation8 + $0x828] sm:$0xff]
          %v8676 = vld [vmem:[#allocation8 + $0x830] sm:$0xff]
          %v8677 = vld [vmem:[#allocation8 + $0x838] sm:$0xff]
          %v8678 = vld [vmem:[#allocation8 + $0x840] sm:$0xff]
          %v8679 = vld [vmem:[#allocation8 + $0x848] sm:$0xff]
          %v8680 = vld [vmem:[#allocation8 + $0x850] sm:$0xff]
          %v8681 = vld [vmem:[#allocation8 + $0x858] sm:$0xff]
          %v8682 = vld [vmem:[#allocation8 + $0x860] sm:$0xff]
          %v8683 = vld [vmem:[#allocation8 + $0x868] sm:$0xff]
          %v8684 = vld [vmem:[#allocation8 + $0x870] sm:$0xff]
          %v8685 = vld [vmem:[#allocation8 + $0x878] sm:$0xff]
          %v8686 = vld [vmem:[#allocation8 + $0x880] sm:$0xff]
          %v8687 = vld [vmem:[#allocation8 + $0x888] sm:$0xff]
          %v8688 = vld [vmem:[#allocation8 + $0x890] sm:$0xff]
          %v8689 = vld [vmem:[#allocation8 + $0x898] sm:$0xff]
          %v8690 = vld [vmem:[#allocation8 + $0x8a0] sm:$0xff]
          %v8691 = vld [vmem:[#allocation8 + $0x8a8] sm:$0xff]
          %v8692 = vld [vmem:[#allocation8 + $0x8b0] sm:$0xff]
          %v8693 = vld [vmem:[#allocation8 + $0x8b8] sm:$0xff]
          %v8694 = vld [vmem:[#allocation8 + $0x8c0] sm:$0xff]
          %v8695 = vld [vmem:[#allocation8 + $0x8c8] sm:$0xff]
          %v8696 = vld [vmem:[#allocation8 + $0x8d0] sm:$0xff]
          %v8697 = vld [vmem:[#allocation8 + $0x8d8] sm:$0xff]
          %v8698 = vld [vmem:[#allocation8 + $0x8e0] sm:$0xff]
          %v8699 = vld [vmem:[#allocation8 + $0x8e8] sm:$0xff]
          %v8700 = vld [vmem:[#allocation8 + $0x8f0] sm:$0xff]
          %v8701 = vld [vmem:[#allocation8 + $0x8f8] sm:$0xff]
          %v8702 = vld [vmem:[#allocation8 + $0x900] sm:$0xff]
          %v8703 = vld [vmem:[#allocation8 + $0x908] sm:$0xff]
          %v8704 = vld [vmem:[#allocation8 + $0x910] sm:$0xff]
          %v8705 = vld [vmem:[#allocation8 + $0x918] sm:$0xff]
          %v8706 = vld [vmem:[#allocation8 + $0x920] sm:$0xff]
          %v8707 = vld [vmem:[#allocation8 + $0x928] sm:$0xff]
          %v8708 = vld [vmem:[#allocation8 + $0x930] sm:$0xff]
          %v8709 = vld [vmem:[#allocation8 + $0x938] sm:$0xff]
          %v8710 = vld [vmem:[#allocation8 + $0x940] sm:$0xff]
          %v8711 = vld [vmem:[#allocation8 + $0x948] sm:$0xff]
          %v8712 = vld [vmem:[#allocation8 + $0x950] sm:$0xff]
          %v8713 = vld [vmem:[#allocation8 + $0x958] sm:$0xff]
          %v8714 = vld [vmem:[#allocation8 + $0x960] sm:$0xff]
          %v8715 = vld [vmem:[#allocation8 + $0x968] sm:$0xff]
          %v8716 = vld [vmem:[#allocation8 + $0x970] sm:$0xff]
          %v8717 = vld [vmem:[#allocation8 + $0x978] sm:$0xff]
          %v8718 = vld [vmem:[#allocation8 + $0x980] sm:$0xff]
          %v8719 = vld [vmem:[#allocation8 + $0x988] sm:$0xff]
          %v8720 = vld [vmem:[#allocation8 + $0x990] sm:$0xff]
          %v8721 = vld [vmem:[#allocation8 + $0x998] sm:$0xff]
          %v8722 = vld [vmem:[#allocation8 + $0x9a0] sm:$0xff]
          %v8723 = vld [vmem:[#allocation8 + $0x9a8] sm:$0xff]
          %v8724 = vld [vmem:[#allocation8 + $0x9b0] sm:$0xff]
          %v8725 = vld [vmem:[#allocation8 + $0x9b8] sm:$0xff]
          %v8726 = vld [vmem:[#allocation8 + $0x9c0] sm:$0xff]
          %v8727 = vld [vmem:[#allocation8 + $0x9c8] sm:$0xff]
          %v8728 = vld [vmem:[#allocation8 + $0x9d0] sm:$0xff]
          %v8729 = vld [vmem:[#allocation8 + $0x9d8] sm:$0xff]
          %v8730 = vld [vmem:[#allocation8 + $0x9e0] sm:$0xff]
          %v8731 = vld [vmem:[#allocation8 + $0x9e8] sm:$0xff]
          %v8732 = vld [vmem:[#allocation8 + $0x9f0] sm:$0xff]
          %v8733 = vld [vmem:[#allocation8 + $0x9f8] sm:$0xff]
          %v8734 = vld [vmem:[#allocation8 + $0xa00] sm:$0xff]
          %v8735 = vld [vmem:[#allocation8 + $0xa08] sm:$0xff]
          %v8736 = vld [vmem:[#allocation8 + $0xa10] sm:$0xff]
          %v8737 = vld [vmem:[#allocation8 + $0xa18] sm:$0xff]
          %v8738 = vld [vmem:[#allocation8 + $0xa20] sm:$0xff]
          %v8739 = vld [vmem:[#allocation8 + $0xa28] sm:$0xff]
          %v8740 = vld [vmem:[#allocation8 + $0xa30] sm:$0xff]
          %v8741 = vld [vmem:[#allocation8 + $0xa38] sm:$0xff]
          %v8742 = vld [vmem:[#allocation8 + $0xa40] sm:$0xff]
          %v8743 = vld [vmem:[#allocation8 + $0xa48] sm:$0xff]
          %v8744 = vld [vmem:[#allocation8 + $0xa50] sm:$0xff]
          %v8745 = vld [vmem:[#allocation8 + $0xa58] sm:$0xff]
          %v8746 = vld [vmem:[#allocation8 + $0xa60] sm:$0xff]
          %v8747 = vld [vmem:[#allocation8 + $0xa68] sm:$0xff]
          %v8748 = vld [vmem:[#allocation8 + $0xa70] sm:$0xff]
          %v8749 = vld [vmem:[#allocation8 + $0xa78] sm:$0xff]
          %v8750 = vld [vmem:[#allocation8 + $0xa80] sm:$0xff]
          %v8751 = vld [vmem:[#allocation8 + $0xa88] sm:$0xff]
          %v8752 = vld [vmem:[#allocation8 + $0xa90] sm:$0xff]
          %v8753 = vld [vmem:[#allocation8 + $0xa98] sm:$0xff]
          %v8754 = vld [vmem:[#allocation8 + $0xaa0] sm:$0xff]
          %v8755 = vld [vmem:[#allocation8 + $0xaa8] sm:$0xff]
          %v8756 = vld [vmem:[#allocation8 + $0xab0] sm:$0xff]
          %v8757 = vld [vmem:[#allocation8 + $0xab8] sm:$0xff]
          %v8758 = vld [vmem:[#allocation8 + $0xac0] sm:$0xff]
          %v8759 = vld [vmem:[#allocation8 + $0xac8] sm:$0xff]
          %v8760 = vld [vmem:[#allocation8 + $0xad0] sm:$0xff]
          %v8761 = vld [vmem:[#allocation8 + $0xad8] sm:$0xff]
          %v8762 = vld [vmem:[#allocation8 + $0xae0] sm:$0xff]
          %v8763 = vld [vmem:[#allocation8 + $0xae8] sm:$0xff]
          %v8764 = vld [vmem:[#allocation8 + $0xaf0] sm:$0xff]
          %v8765 = vld [vmem:[#allocation8 + $0xaf8] sm:$0xff]
          %v8766 = vld [vmem:[#allocation8 + $0xb00] sm:$0xff]
          %v8767 = vld [vmem:[#allocation8 + $0xb08] sm:$0xff]
          %v8768 = vld [vmem:[#allocation8 + $0xb10] sm:$0xff]
          %v8769 = vld [vmem:[#allocation8 + $0xb18] sm:$0xff]
          %v8770 = vld [vmem:[#allocation8 + $0xb20] sm:$0xff]
          %v8771 = vld [vmem:[#allocation8 + $0xb28] sm:$0xff]
          %v8772 = vld [vmem:[#allocation8 + $0xb30] sm:$0xff]
          %v8773 = vld [vmem:[#allocation8 + $0xb38] sm:$0xff]
          %v8774 = vld [vmem:[#allocation8 + $0xb40] sm:$0xff]
          %v8775 = vld [vmem:[#allocation8 + $0xb48] sm:$0xff]
          %v8776 = vld [vmem:[#allocation8 + $0xb50] sm:$0xff]
          %v8777 = vld [vmem:[#allocation8 + $0xb58] sm:$0xff]
          %v8778 = vld [vmem:[#allocation8 + $0xb60] sm:$0xff]
          %v8779 = vld [vmem:[#allocation8 + $0xb68] sm:$0xff]
          %v8780 = vld [vmem:[#allocation8 + $0xb70] sm:$0xff]
          %v8781 = vld [vmem:[#allocation8 + $0xb78] sm:$0xff]
          %v8782 = vld [vmem:[#allocation8 + $0xb80] sm:$0xff]
          %v8783 = vld [vmem:[#allocation8 + $0xb88] sm:$0xff]
          %v8784 = vld [vmem:[#allocation8 + $0xb90] sm:$0xff]
          %v8785 = vld [vmem:[#allocation8 + $0xb98] sm:$0xff]
          %v8786 = vld [vmem:[#allocation8 + $0xba0] sm:$0xff]
          %v8787 = vld [vmem:[#allocation8 + $0xba8] sm:$0xff]
          %v8788 = vld [vmem:[#allocation8 + $0xbb0] sm:$0xff]
          %v8789 = vld [vmem:[#allocation8 + $0xbb8] sm:$0xff]
          %v8790 = vld [vmem:[#allocation8 + $0xbc0] sm:$0xff]
          %v8791 = vld [vmem:[#allocation8 + $0xbc8] sm:$0xff]
          %v8792 = vld [vmem:[#allocation8 + $0xbd0] sm:$0xff]
          %v8793 = vld [vmem:[#allocation8 + $0xbd8] sm:$0xff]
          %v8794 = vld [vmem:[#allocation8 + $0xbe0] sm:$0xff]
          %v8795 = vld [vmem:[#allocation8 + $0xbe8] sm:$0xff]
          %v8796 = vld [vmem:[#allocation8 + $0xbf0] sm:$0xff]
          %v8797 = vld [vmem:[#allocation8 + $0xbf8] sm:$0xff]
          %v8798 = vld [vmem:[#allocation8 + $0xc00] sm:$0xff]
          %v8799 = vld [vmem:[#allocation8 + $0xc08] sm:$0xff]
          %v8800 = vld [vmem:[#allocation8 + $0xc10] sm:$0xff]
          %v8801 = vld [vmem:[#allocation8 + $0xc18] sm:$0xff]
          %v8802 = vld [vmem:[#allocation8 + $0xc20] sm:$0xff]
          %v8803 = vld [vmem:[#allocation8 + $0xc28] sm:$0xff]
          %v8804 = vld [vmem:[#allocation8 + $0xc30] sm:$0xff]
          %v8805 = vld [vmem:[#allocation8 + $0xc38] sm:$0xff]
          %v8806 = vld [vmem:[#allocation8 + $0xc40] sm:$0xff]
          %v8807 = vld [vmem:[#allocation8 + $0xc48] sm:$0xff]
          %v8808 = vld [vmem:[#allocation8 + $0xc50] sm:$0xff]
          %v8809 = vld [vmem:[#allocation8 + $0xc58] sm:$0xff]
          %v8810 = vld [vmem:[#allocation8 + $0xc60] sm:$0xff]
          %v8811 = vld [vmem:[#allocation8 + $0xc68] sm:$0xff]
          %v8812 = vld [vmem:[#allocation8 + $0xc70] sm:$0xff]
          %v8813 = vld [vmem:[#allocation8 + $0xc78] sm:$0xff]
          %v8814 = vld [vmem:[#allocation8 + $0xc80] sm:$0xff]
          %v8815 = vld [vmem:[#allocation8 + $0xc88] sm:$0xff]
          %v8816 = vld [vmem:[#allocation8 + $0xc90] sm:$0xff]
          %v8817 = vld [vmem:[#allocation8 + $0xc98] sm:$0xff]
          %v8818 = vld [vmem:[#allocation8 + $0xca0] sm:$0xff]
          %v8819 = vld [vmem:[#allocation8 + $0xca8] sm:$0xff]
          %v8820 = vld [vmem:[#allocation8 + $0xcb0] sm:$0xff]
          %v8821 = vld [vmem:[#allocation8 + $0xcb8] sm:$0xff]
          %v8822 = vld [vmem:[#allocation8 + $0xcc0] sm:$0xff]
          %v8823 = vld [vmem:[#allocation8 + $0xcc8] sm:$0xff]
          %v8824 = vld [vmem:[#allocation8 + $0xcd0] sm:$0xff]
          %v8825 = vld [vmem:[#allocation8 + $0xcd8] sm:$0xff]
          %v8826 = vld [vmem:[#allocation8 + $0xce0] sm:$0xff]
          %v8827 = vld [vmem:[#allocation8 + $0xce8] sm:$0xff]
          %v8828 = vld [vmem:[#allocation8 + $0xcf0] sm:$0xff]
          %v8829 = vld [vmem:[#allocation8 + $0xcf8] sm:$0xff]
          %v8830 = vld [vmem:[#allocation8 + $0xd00] sm:$0xff]
          %v8831 = vld [vmem:[#allocation8 + $0xd08] sm:$0xff]
          %v8832 = vld [vmem:[#allocation8 + $0xd10] sm:$0xff]
          %v8833 = vld [vmem:[#allocation8 + $0xd18] sm:$0xff]
          %v8834 = vld [vmem:[#allocation8 + $0xd20] sm:$0xff]
          %v8835 = vld [vmem:[#allocation8 + $0xd28] sm:$0xff]
          %v8836 = vld [vmem:[#allocation8 + $0xd30] sm:$0xff]
          %v8837 = vld [vmem:[#allocation8 + $0xd38] sm:$0xff]
          %v8838 = vld [vmem:[#allocation8 + $0xd40] sm:$0xff]
          %v8839 = vld [vmem:[#allocation8 + $0xd48] sm:$0xff]
          %v8840 = vld [vmem:[#allocation8 + $0xd50] sm:$0xff]
          %v8841 = vld [vmem:[#allocation8 + $0xd58] sm:$0xff]
          %v8842 = vld [vmem:[#allocation8 + $0xd60] sm:$0xff]
          %v8843 = vld [vmem:[#allocation8 + $0xd68] sm:$0xff]
          %v8844 = vld [vmem:[#allocation8 + $0xd70] sm:$0xff]
          %v8845 = vld [vmem:[#allocation8 + $0xd78] sm:$0xff]
          %v8846 = vld [vmem:[#allocation8 + $0xd80] sm:$0xff]
          %v8847 = vld [vmem:[#allocation8 + $0xd88] sm:$0xff]
          %v8848 = vld [vmem:[#allocation8 + $0xd90] sm:$0xff]
          %v8849 = vld [vmem:[#allocation8 + $0xd98] sm:$0xff]
          %v8850 = vld [vmem:[#allocation8 + $0xda0] sm:$0xff]
          %v8851 = vld [vmem:[#allocation8 + $0xda8] sm:$0xff]
          %v8852 = vld [vmem:[#allocation8 + $0xdb0] sm:$0xff]
          %v8853 = vld [vmem:[#allocation8 + $0xdb8] sm:$0xff]
          %v8854 = vld [vmem:[#allocation8 + $0xdc0] sm:$0xff]
          %v8855 = vld [vmem:[#allocation8 + $0xdc8] sm:$0xff]
          %v8856 = vld [vmem:[#allocation8 + $0xdd0] sm:$0xff]
          %v8857 = vld [vmem:[#allocation8 + $0xdd8] sm:$0xff]
          %v8858 = vld [vmem:[#allocation8 + $0xde0] sm:$0xff]
          %v8859 = vld [vmem:[#allocation8 + $0xde8] sm:$0xff]
          %v8860 = vld [vmem:[#allocation8 + $0xdf0] sm:$0xff]
          %v8861 = vld [vmem:[#allocation8 + $0xdf8] sm:$0xff]
          %v8862 = vld [vmem:[#allocation8 + $0xe00] sm:$0xff]
          %v8863 = vld [vmem:[#allocation8 + $0xe08] sm:$0xff]
          %v8864 = vld [vmem:[#allocation8 + $0xe10] sm:$0xff]
          %v8865 = vld [vmem:[#allocation8 + $0xe18] sm:$0xff]
          %v8866 = vld [vmem:[#allocation8 + $0xe20] sm:$0xff]
          %v8867 = vld [vmem:[#allocation8 + $0xe28] sm:$0xff]
          %v8868 = vld [vmem:[#allocation8 + $0xe30] sm:$0xff]
          %v8869 = vld [vmem:[#allocation8 + $0xe38] sm:$0xff]
          %v8870 = vld [vmem:[#allocation8 + $0xe40] sm:$0xff]
          %v8871 = vld [vmem:[#allocation8 + $0xe48] sm:$0xff]
          %v8872 = vld [vmem:[#allocation8 + $0xe50] sm:$0xff]
          %v8873 = vld [vmem:[#allocation8 + $0xe58] sm:$0xff]
          %v8874 = vld [vmem:[#allocation8 + $0xe60] sm:$0xff]
          %v8875 = vld [vmem:[#allocation8 + $0xe68] sm:$0xff]
          %v8876 = vld [vmem:[#allocation8 + $0xe70] sm:$0xff]
          %v8877 = vld [vmem:[#allocation8 + $0xe78] sm:$0xff]
          %v8878 = vld [vmem:[#allocation8 + $0xe80] sm:$0xff]
          %v8879 = vld [vmem:[#allocation8 + $0xe88] sm:$0xff]
          %v8880 = vld [vmem:[#allocation8 + $0xe90] sm:$0xff]
          %v8881 = vld [vmem:[#allocation8 + $0xe98] sm:$0xff]
          %v8882 = vld [vmem:[#allocation8 + $0xea0] sm:$0xff]
          %v8883 = vld [vmem:[#allocation8 + $0xea8] sm:$0xff]
          %v8884 = vld [vmem:[#allocation8 + $0xeb0] sm:$0xff]
          %v8885 = vld [vmem:[#allocation8 + $0xeb8] sm:$0xff]
          %v8886 = vld [vmem:[#allocation8 + $0xec0] sm:$0xff]
          %v8887 = vld [vmem:[#allocation8 + $0xec8] sm:$0xff]
          %v8888 = vld [vmem:[#allocation8 + $0xed0] sm:$0xff]
          %v8889 = vld [vmem:[#allocation8 + $0xed8] sm:$0xff]
          %v8890 = vld [vmem:[#allocation8 + $0xee0] sm:$0xff]
          %v8891 = vld [vmem:[#allocation8 + $0xee8] sm:$0xff]
          %v8892 = vld [vmem:[#allocation8 + $0xef0] sm:$0xff]
          %v8893 = vld [vmem:[#allocation8 + $0xef8] sm:$0xff]
          %v8894 = vld [vmem:[#allocation8 + $0xf00] sm:$0xff]
          %v8895 = vld [vmem:[#allocation8 + $0xf08] sm:$0xff]
          %v8896 = vld [vmem:[#allocation8 + $0xf10] sm:$0xff]
          %v8897 = vld [vmem:[#allocation8 + $0xf18] sm:$0xff]
          %v8898 = vld [vmem:[#allocation8 + $0xf20] sm:$0xff]
          %v8899 = vld [vmem:[#allocation8 + $0xf28] sm:$0xff]
          %v8900 = vld [vmem:[#allocation8 + $0xf30] sm:$0xff]
          %v8901 = vld [vmem:[#allocation8 + $0xf38] sm:$0xff]
          %v8902 = vld [vmem:[#allocation8 + $0xf40] sm:$0xff]
          %v8903 = vld [vmem:[#allocation8 + $0xf48] sm:$0xff]
          %v8904 = vld [vmem:[#allocation8 + $0xf50] sm:$0xff]
          %v8905 = vld [vmem:[#allocation8 + $0xf58] sm:$0xff]
          %v8906 = vld [vmem:[#allocation8 + $0xf60] sm:$0xff]
          %v8907 = vld [vmem:[#allocation8 + $0xf68] sm:$0xff]
          %v8908 = vld [vmem:[#allocation8 + $0xf70] sm:$0xff]
          %v8909 = vld [vmem:[#allocation8 + $0xf78] sm:$0xff]
          %v8910 = vld [vmem:[#allocation8 + $0xf80] sm:$0xff]
          %v8911 = vld [vmem:[#allocation8 + $0xf88] sm:$0xff]
          %v8912 = vld [vmem:[#allocation8 + $0xf90] sm:$0xff]
          %v8913 = vld [vmem:[#allocation8 + $0xf98] sm:$0xff]
          %v8914 = vld [vmem:[#allocation8 + $0xfa0] sm:$0xff]
          %v8915 = vld [vmem:[#allocation8 + $0xfa8] sm:$0xff]
          %v8916 = vld [vmem:[#allocation8 + $0xfb0] sm:$0xff]
          %v8917 = vld [vmem:[#allocation8 + $0xfb8] sm:$0xff]
          %v8918 = vld [vmem:[#allocation8 + $0xfc0] sm:$0xff]
          %v8919 = vld [vmem:[#allocation8 + $0xfc8] sm:$0xff]
          %v8920 = vld [vmem:[#allocation8 + $0xfd0] sm:$0xff]
          %v8921 = vld [vmem:[#allocation8 + $0xfd8] sm:$0xff]
          %v8922 = vld [vmem:[#allocation8 + $0xfe0] sm:$0xff]
          %v8923 = vld [vmem:[#allocation8 + $0xfe8] sm:$0xff]
          %v8924 = vld [vmem:[#allocation8 + $0xff0] sm:$0xff]
          %v8925 = vld [vmem:[#allocation8 + $0xff8] sm:$0xff]
          %v9438 = vunpack.c.l.b16 %v8414
          %v9439 = vunpack.c.h.b16 %v8414
          %v9440 = vunpack.c.l.b16 %v8415
          %v9441 = vunpack.c.h.b16 %v8415
          %v9442 = vunpack.c.l.b16 %v8416
          %v9443 = vunpack.c.h.b16 %v8416
          %v9444 = vunpack.c.l.b16 %v8417
          %v9445 = vunpack.c.h.b16 %v8417
          %v9446 = vunpack.c.l.b16 %v8418
          %v9447 = vunpack.c.h.b16 %v8418
          %v9448 = vunpack.c.l.b16 %v8419
          %v9449 = vunpack.c.h.b16 %v8419
          %v9450 = vunpack.c.l.b16 %v8420
          %v9451 = vunpack.c.h.b16 %v8420
          %v9452 = vunpack.c.l.b16 %v8421
          %v9453 = vunpack.c.h.b16 %v8421
          %v9454 = vunpack.c.l.b16 %v8422
          %v9455 = vunpack.c.h.b16 %v8422
          %v9456 = vunpack.c.l.b16 %v8423
          %v9457 = vunpack.c.h.b16 %v8423
          %v9458 = vunpack.c.l.b16 %v8424
          %v9459 = vunpack.c.h.b16 %v8424
          %v9460 = vunpack.c.l.b16 %v8425
          %v9461 = vunpack.c.h.b16 %v8425
          %v9462 = vunpack.c.l.b16 %v8426
          %v9463 = vunpack.c.h.b16 %v8426
          %v9464 = vunpack.c.l.b16 %v8427
          %v9465 = vunpack.c.h.b16 %v8427
          %v9466 = vunpack.c.l.b16 %v8428
          %v9467 = vunpack.c.h.b16 %v8428
          %v9468 = vunpack.c.l.b16 %v8429
          %v9469 = vunpack.c.h.b16 %v8429
          %v9470 = vunpack.c.l.b16 %v8430
          %v9471 = vunpack.c.h.b16 %v8430
          %v9472 = vunpack.c.l.b16 %v8431
          %v9473 = vunpack.c.h.b16 %v8431
          %v9474 = vunpack.c.l.b16 %v8432
          %v9475 = vunpack.c.h.b16 %v8432
          %v9476 = vunpack.c.l.b16 %v8433
          %v9477 = vunpack.c.h.b16 %v8433
          %v9478 = vunpack.c.l.b16 %v8434
          %v9479 = vunpack.c.h.b16 %v8434
          %v9480 = vunpack.c.l.b16 %v8435
          %v9481 = vunpack.c.h.b16 %v8435
          %v9482 = vunpack.c.l.b16 %v8436
          %v9483 = vunpack.c.h.b16 %v8436
          %v9484 = vunpack.c.l.b16 %v8437
          %v9485 = vunpack.c.h.b16 %v8437
          %v9486 = vunpack.c.l.b16 %v8438
          %v9487 = vunpack.c.h.b16 %v8438
          %v9488 = vunpack.c.l.b16 %v8439
          %v9489 = vunpack.c.h.b16 %v8439
          %v9490 = vunpack.c.l.b16 %v8440
          %v9491 = vunpack.c.h.b16 %v8440
          %v9492 = vunpack.c.l.b16 %v8441
          %v9493 = vunpack.c.h.b16 %v8441
          %v9494 = vunpack.c.l.b16 %v8442
          %v9495 = vunpack.c.h.b16 %v8442
          %v9496 = vunpack.c.l.b16 %v8443
          %v9497 = vunpack.c.h.b16 %v8443
          %v9498 = vunpack.c.l.b16 %v8444
          %v9499 = vunpack.c.h.b16 %v8444
          %v9500 = vunpack.c.l.b16 %v8445
          %v9501 = vunpack.c.h.b16 %v8445
          %v9502 = vunpack.c.l.b16 %v8446
          %v9503 = vunpack.c.h.b16 %v8446
          %v9504 = vunpack.c.l.b16 %v8447
          %v9505 = vunpack.c.h.b16 %v8447
          %v9506 = vunpack.c.l.b16 %v8448
          %v9507 = vunpack.c.h.b16 %v8448
          %v9508 = vunpack.c.l.b16 %v8449
          %v9509 = vunpack.c.h.b16 %v8449
          %v9510 = vunpack.c.l.b16 %v8450
          %v9511 = vunpack.c.h.b16 %v8450
          %v9512 = vunpack.c.l.b16 %v8451
          %v9513 = vunpack.c.h.b16 %v8451
          %v9514 = vunpack.c.l.b16 %v8452
          %v9515 = vunpack.c.h.b16 %v8452
          %v9516 = vunpack.c.l.b16 %v8453
          %v9517 = vunpack.c.h.b16 %v8453
          %v9518 = vunpack.c.l.b16 %v8454
          %v9519 = vunpack.c.h.b16 %v8454
          %v9520 = vunpack.c.l.b16 %v8455
          %v9521 = vunpack.c.h.b16 %v8455
          %v9522 = vunpack.c.l.b16 %v8456
          %v9523 = vunpack.c.h.b16 %v8456
          %v9524 = vunpack.c.l.b16 %v8457
          %v9525 = vunpack.c.h.b16 %v8457
          %v9526 = vunpack.c.l.b16 %v8458
          %v9527 = vunpack.c.h.b16 %v8458
          %v9528 = vunpack.c.l.b16 %v8459
          %v9529 = vunpack.c.h.b16 %v8459
          %v9530 = vunpack.c.l.b16 %v8460
          %v9531 = vunpack.c.h.b16 %v8460
          %v9532 = vunpack.c.l.b16 %v8461
          %v9533 = vunpack.c.h.b16 %v8461
          %v9534 = vunpack.c.l.b16 %v8462
          %v9535 = vunpack.c.h.b16 %v8462
          %v9536 = vunpack.c.l.b16 %v8463
          %v9537 = vunpack.c.h.b16 %v8463
          %v9538 = vunpack.c.l.b16 %v8464
          %v9539 = vunpack.c.h.b16 %v8464
          %v9540 = vunpack.c.l.b16 %v8465
          %v9541 = vunpack.c.h.b16 %v8465
          %v9542 = vunpack.c.l.b16 %v8466
          %v9543 = vunpack.c.h.b16 %v8466
          %v9544 = vunpack.c.l.b16 %v8467
          %v9545 = vunpack.c.h.b16 %v8467
          %v9546 = vunpack.c.l.b16 %v8468
          %v9547 = vunpack.c.h.b16 %v8468
          %v9548 = vunpack.c.l.b16 %v8469
          %v9549 = vunpack.c.h.b16 %v8469
          %v9550 = vunpack.c.l.b16 %v8470
          %v9551 = vunpack.c.h.b16 %v8470
          %v9552 = vunpack.c.l.b16 %v8471
          %v9553 = vunpack.c.h.b16 %v8471
          %v9554 = vunpack.c.l.b16 %v8472
          %v9555 = vunpack.c.h.b16 %v8472
          %v9556 = vunpack.c.l.b16 %v8473
          %v9557 = vunpack.c.h.b16 %v8473
          %v9558 = vunpack.c.l.b16 %v8474
          %v9559 = vunpack.c.h.b16 %v8474
          %v9560 = vunpack.c.l.b16 %v8475
          %v9561 = vunpack.c.h.b16 %v8475
          %v9562 = vunpack.c.l.b16 %v8476
          %v9563 = vunpack.c.h.b16 %v8476
          %v9564 = vunpack.c.l.b16 %v8477
          %v9565 = vunpack.c.h.b16 %v8477
          %v9566 = vunpack.c.l.b16 %v8478
          %v9567 = vunpack.c.h.b16 %v8478
          %v9568 = vunpack.c.l.b16 %v8479
          %v9569 = vunpack.c.h.b16 %v8479
          %v9570 = vunpack.c.l.b16 %v8480
          %v9571 = vunpack.c.h.b16 %v8480
          %v9572 = vunpack.c.l.b16 %v8481
          %v9573 = vunpack.c.h.b16 %v8481
          %v9574 = vunpack.c.l.b16 %v8482
          %v9575 = vunpack.c.h.b16 %v8482
          %v9576 = vunpack.c.l.b16 %v8483
          %v9577 = vunpack.c.h.b16 %v8483
          %v9578 = vunpack.c.l.b16 %v8484
          %v9579 = vunpack.c.h.b16 %v8484
          %v9580 = vunpack.c.l.b16 %v8485
          %v9581 = vunpack.c.h.b16 %v8485
          %v9582 = vunpack.c.l.b16 %v8486
          %v9583 = vunpack.c.h.b16 %v8486
          %v9584 = vunpack.c.l.b16 %v8487
          %v9585 = vunpack.c.h.b16 %v8487
          %v9586 = vunpack.c.l.b16 %v8488
          %v9587 = vunpack.c.h.b16 %v8488
          %v9588 = vunpack.c.l.b16 %v8489
          %v9589 = vunpack.c.h.b16 %v8489
          %v9590 = vunpack.c.l.b16 %v8490
          %v9591 = vunpack.c.h.b16 %v8490
          %v9592 = vunpack.c.l.b16 %v8491
          %v9593 = vunpack.c.h.b16 %v8491
          %v9594 = vunpack.c.l.b16 %v8492
          %v9595 = vunpack.c.h.b16 %v8492
          %v9596 = vunpack.c.l.b16 %v8493
          %v9597 = vunpack.c.h.b16 %v8493
          %v9598 = vunpack.c.l.b16 %v8494
          %v9599 = vunpack.c.h.b16 %v8494
          %v9600 = vunpack.c.l.b16 %v8495
          %v9601 = vunpack.c.h.b16 %v8495
          %v9602 = vunpack.c.l.b16 %v8496
          %v9603 = vunpack.c.h.b16 %v8496
          %v9604 = vunpack.c.l.b16 %v8497
          %v9605 = vunpack.c.h.b16 %v8497
          %v9606 = vunpack.c.l.b16 %v8498
          %v9607 = vunpack.c.h.b16 %v8498
          %v9608 = vunpack.c.l.b16 %v8499
          %v9609 = vunpack.c.h.b16 %v8499
          %v9610 = vunpack.c.l.b16 %v8500
          %v9611 = vunpack.c.h.b16 %v8500
          %v9612 = vunpack.c.l.b16 %v8501
          %v9613 = vunpack.c.h.b16 %v8501
          %v9614 = vunpack.c.l.b16 %v8502
          %v9615 = vunpack.c.h.b16 %v8502
          %v9616 = vunpack.c.l.b16 %v8503
          %v9617 = vunpack.c.h.b16 %v8503
          %v9618 = vunpack.c.l.b16 %v8504
          %v9619 = vunpack.c.h.b16 %v8504
          %v9620 = vunpack.c.l.b16 %v8505
          %v9621 = vunpack.c.h.b16 %v8505
          %v9622 = vunpack.c.l.b16 %v8506
          %v9623 = vunpack.c.h.b16 %v8506
          %v9624 = vunpack.c.l.b16 %v8507
          %v9625 = vunpack.c.h.b16 %v8507
          %v9626 = vunpack.c.l.b16 %v8508
          %v9627 = vunpack.c.h.b16 %v8508
          %v9628 = vunpack.c.l.b16 %v8509
          %v9629 = vunpack.c.h.b16 %v8509
          %v9630 = vunpack.c.l.b16 %v8510
          %v9631 = vunpack.c.h.b16 %v8510
          %v9632 = vunpack.c.l.b16 %v8511
          %v9633 = vunpack.c.h.b16 %v8511
          %v9634 = vunpack.c.l.b16 %v8512
          %v9635 = vunpack.c.h.b16 %v8512
          %v9636 = vunpack.c.l.b16 %v8513
          %v9637 = vunpack.c.h.b16 %v8513
          %v9638 = vunpack.c.l.b16 %v8514
          %v9639 = vunpack.c.h.b16 %v8514
          %v9640 = vunpack.c.l.b16 %v8515
          %v9641 = vunpack.c.h.b16 %v8515
          %v9642 = vunpack.c.l.b16 %v8516
          %v9643 = vunpack.c.h.b16 %v8516
          %v9644 = vunpack.c.l.b16 %v8517
          %v9645 = vunpack.c.h.b16 %v8517
          %v9646 = vunpack.c.l.b16 %v8518
          %v9647 = vunpack.c.h.b16 %v8518
          %v9648 = vunpack.c.l.b16 %v8519
          %v9649 = vunpack.c.h.b16 %v8519
          %v9650 = vunpack.c.l.b16 %v8520
          %v9651 = vunpack.c.h.b16 %v8520
          %v9652 = vunpack.c.l.b16 %v8521
          %v9653 = vunpack.c.h.b16 %v8521
          %v9654 = vunpack.c.l.b16 %v8522
          %v9655 = vunpack.c.h.b16 %v8522
          %v9656 = vunpack.c.l.b16 %v8523
          %v9657 = vunpack.c.h.b16 %v8523
          %v9658 = vunpack.c.l.b16 %v8524
          %v9659 = vunpack.c.h.b16 %v8524
          %v9660 = vunpack.c.l.b16 %v8525
          %v9661 = vunpack.c.h.b16 %v8525
          %v9662 = vunpack.c.l.b16 %v8526
          %v9663 = vunpack.c.h.b16 %v8526
          %v9664 = vunpack.c.l.b16 %v8527
          %v9665 = vunpack.c.h.b16 %v8527
          %v9666 = vunpack.c.l.b16 %v8528
          %v9667 = vunpack.c.h.b16 %v8528
          %v9668 = vunpack.c.l.b16 %v8529
          %v9669 = vunpack.c.h.b16 %v8529
          %v9670 = vunpack.c.l.b16 %v8530
          %v9671 = vunpack.c.h.b16 %v8530
          %v9672 = vunpack.c.l.b16 %v8531
          %v9673 = vunpack.c.h.b16 %v8531
          %v9674 = vunpack.c.l.b16 %v8532
          %v9675 = vunpack.c.h.b16 %v8532
          %v9676 = vunpack.c.l.b16 %v8533
          %v9677 = vunpack.c.h.b16 %v8533
          %v9678 = vunpack.c.l.b16 %v8534
          %v9679 = vunpack.c.h.b16 %v8534
          %v9680 = vunpack.c.l.b16 %v8535
          %v9681 = vunpack.c.h.b16 %v8535
          %v9682 = vunpack.c.l.b16 %v8536
          %v9683 = vunpack.c.h.b16 %v8536
          %v9684 = vunpack.c.l.b16 %v8537
          %v9685 = vunpack.c.h.b16 %v8537
          %v9686 = vunpack.c.l.b16 %v8538
          %v9687 = vunpack.c.h.b16 %v8538
          %v9688 = vunpack.c.l.b16 %v8539
          %v9689 = vunpack.c.h.b16 %v8539
          %v9690 = vunpack.c.l.b16 %v8540
          %v9691 = vunpack.c.h.b16 %v8540
          %v9692 = vunpack.c.l.b16 %v8541
          %v9693 = vunpack.c.h.b16 %v8541
          %v9694 = vunpack.c.l.b16 %v8542
          %v9695 = vunpack.c.h.b16 %v8542
          %v9696 = vunpack.c.l.b16 %v8543
          %v9697 = vunpack.c.h.b16 %v8543
          %v9698 = vunpack.c.l.b16 %v8544
          %v9699 = vunpack.c.h.b16 %v8544
          %v9700 = vunpack.c.l.b16 %v8545
          %v9701 = vunpack.c.h.b16 %v8545
          %v9702 = vunpack.c.l.b16 %v8546
          %v9703 = vunpack.c.h.b16 %v8546
          %v9704 = vunpack.c.l.b16 %v8547
          %v9705 = vunpack.c.h.b16 %v8547
          %v9706 = vunpack.c.l.b16 %v8548
          %v9707 = vunpack.c.h.b16 %v8548
          %v9708 = vunpack.c.l.b16 %v8549
          %v9709 = vunpack.c.h.b16 %v8549
          %v9710 = vunpack.c.l.b16 %v8550
          %v9711 = vunpack.c.h.b16 %v8550
          %v9712 = vunpack.c.l.b16 %v8551
          %v9713 = vunpack.c.h.b16 %v8551
          %v9714 = vunpack.c.l.b16 %v8552
          %v9715 = vunpack.c.h.b16 %v8552
          %v9716 = vunpack.c.l.b16 %v8553
          %v9717 = vunpack.c.h.b16 %v8553
          %v9718 = vunpack.c.l.b16 %v8554
          %v9719 = vunpack.c.h.b16 %v8554
          %v9720 = vunpack.c.l.b16 %v8555
          %v9721 = vunpack.c.h.b16 %v8555
          %v9722 = vunpack.c.l.b16 %v8556
          %v9723 = vunpack.c.h.b16 %v8556
          %v9724 = vunpack.c.l.b16 %v8557
          %v9725 = vunpack.c.h.b16 %v8557
          %v9726 = vunpack.c.l.b16 %v8558
          %v9727 = vunpack.c.h.b16 %v8558
          %v9728 = vunpack.c.l.b16 %v8559
          %v9729 = vunpack.c.h.b16 %v8559
          %v9730 = vunpack.c.l.b16 %v8560
          %v9731 = vunpack.c.h.b16 %v8560
          %v9732 = vunpack.c.l.b16 %v8561
          %v9733 = vunpack.c.h.b16 %v8561
          %v9734 = vunpack.c.l.b16 %v8562
          %v9735 = vunpack.c.h.b16 %v8562
          %v9736 = vunpack.c.l.b16 %v8563
          %v9737 = vunpack.c.h.b16 %v8563
          %v9738 = vunpack.c.l.b16 %v8564
          %v9739 = vunpack.c.h.b16 %v8564
          %v9740 = vunpack.c.l.b16 %v8565
          %v9741 = vunpack.c.h.b16 %v8565
          %v9742 = vunpack.c.l.b16 %v8566
          %v9743 = vunpack.c.h.b16 %v8566
          %v9744 = vunpack.c.l.b16 %v8567
          %v9745 = vunpack.c.h.b16 %v8567
          %v9746 = vunpack.c.l.b16 %v8568
          %v9747 = vunpack.c.h.b16 %v8568
          %v9748 = vunpack.c.l.b16 %v8569
          %v9749 = vunpack.c.h.b16 %v8569
          %v9750 = vunpack.c.l.b16 %v8570
          %v9751 = vunpack.c.h.b16 %v8570
          %v9752 = vunpack.c.l.b16 %v8571
          %v9753 = vunpack.c.h.b16 %v8571
          %v9754 = vunpack.c.l.b16 %v8572
          %v9755 = vunpack.c.h.b16 %v8572
          %v9756 = vunpack.c.l.b16 %v8573
          %v9757 = vunpack.c.h.b16 %v8573
          %v9758 = vunpack.c.l.b16 %v8574
          %v9759 = vunpack.c.h.b16 %v8574
          %v9760 = vunpack.c.l.b16 %v8575
          %v9761 = vunpack.c.h.b16 %v8575
          %v9762 = vunpack.c.l.b16 %v8576
          %v9763 = vunpack.c.h.b16 %v8576
          %v9764 = vunpack.c.l.b16 %v8577
          %v9765 = vunpack.c.h.b16 %v8577
          %v9766 = vunpack.c.l.b16 %v8578
          %v9767 = vunpack.c.h.b16 %v8578
          %v9768 = vunpack.c.l.b16 %v8579
          %v9769 = vunpack.c.h.b16 %v8579
          %v9770 = vunpack.c.l.b16 %v8580
          %v9771 = vunpack.c.h.b16 %v8580
          %v9772 = vunpack.c.l.b16 %v8581
          %v9773 = vunpack.c.h.b16 %v8581
          %v9774 = vunpack.c.l.b16 %v8582
          %v9775 = vunpack.c.h.b16 %v8582
          %v9776 = vunpack.c.l.b16 %v8583
          %v9777 = vunpack.c.h.b16 %v8583
          %v9778 = vunpack.c.l.b16 %v8584
          %v9779 = vunpack.c.h.b16 %v8584
          %v9780 = vunpack.c.l.b16 %v8585
          %v9781 = vunpack.c.h.b16 %v8585
          %v9782 = vunpack.c.l.b16 %v8586
          %v9783 = vunpack.c.h.b16 %v8586
          %v9784 = vunpack.c.l.b16 %v8587
          %v9785 = vunpack.c.h.b16 %v8587
          %v9786 = vunpack.c.l.b16 %v8588
          %v9787 = vunpack.c.h.b16 %v8588
          %v9788 = vunpack.c.l.b16 %v8589
          %v9789 = vunpack.c.h.b16 %v8589
          %v9790 = vunpack.c.l.b16 %v8590
          %v9791 = vunpack.c.h.b16 %v8590
          %v9792 = vunpack.c.l.b16 %v8591
          %v9793 = vunpack.c.h.b16 %v8591
          %v9794 = vunpack.c.l.b16 %v8592
          %v9795 = vunpack.c.h.b16 %v8592
          %v9796 = vunpack.c.l.b16 %v8593
          %v9797 = vunpack.c.h.b16 %v8593
          %v9798 = vunpack.c.l.b16 %v8594
          %v9799 = vunpack.c.h.b16 %v8594
          %v9800 = vunpack.c.l.b16 %v8595
          %v9801 = vunpack.c.h.b16 %v8595
          %v9802 = vunpack.c.l.b16 %v8596
          %v9803 = vunpack.c.h.b16 %v8596
          %v9804 = vunpack.c.l.b16 %v8597
          %v9805 = vunpack.c.h.b16 %v8597
          %v9806 = vunpack.c.l.b16 %v8598
          %v9807 = vunpack.c.h.b16 %v8598
          %v9808 = vunpack.c.l.b16 %v8599
          %v9809 = vunpack.c.h.b16 %v8599
          %v9810 = vunpack.c.l.b16 %v8600
          %v9811 = vunpack.c.h.b16 %v8600
          %v9812 = vunpack.c.l.b16 %v8601
          %v9813 = vunpack.c.h.b16 %v8601
          %v9814 = vunpack.c.l.b16 %v8602
          %v9815 = vunpack.c.h.b16 %v8602
          %v9816 = vunpack.c.l.b16 %v8603
          %v9817 = vunpack.c.h.b16 %v8603
          %v9818 = vunpack.c.l.b16 %v8604
          %v9819 = vunpack.c.h.b16 %v8604
          %v9820 = vunpack.c.l.b16 %v8605
          %v9821 = vunpack.c.h.b16 %v8605
          %v9822 = vunpack.c.l.b16 %v8606
          %v9823 = vunpack.c.h.b16 %v8606
          %v9824 = vunpack.c.l.b16 %v8607
          %v9825 = vunpack.c.h.b16 %v8607
          %v9826 = vunpack.c.l.b16 %v8608
          %v9827 = vunpack.c.h.b16 %v8608
          %v9828 = vunpack.c.l.b16 %v8609
          %v9829 = vunpack.c.h.b16 %v8609
          %v9830 = vunpack.c.l.b16 %v8610
          %v9831 = vunpack.c.h.b16 %v8610
          %v9832 = vunpack.c.l.b16 %v8611
          %v9833 = vunpack.c.h.b16 %v8611
          %v9834 = vunpack.c.l.b16 %v8612
          %v9835 = vunpack.c.h.b16 %v8612
          %v9836 = vunpack.c.l.b16 %v8613
          %v9837 = vunpack.c.h.b16 %v8613
          %v9838 = vunpack.c.l.b16 %v8614
          %v9839 = vunpack.c.h.b16 %v8614
          %v9840 = vunpack.c.l.b16 %v8615
          %v9841 = vunpack.c.h.b16 %v8615
          %v9842 = vunpack.c.l.b16 %v8616
          %v9843 = vunpack.c.h.b16 %v8616
          %v9844 = vunpack.c.l.b16 %v8617
          %v9845 = vunpack.c.h.b16 %v8617
          %v9846 = vunpack.c.l.b16 %v8618
          %v9847 = vunpack.c.h.b16 %v8618
          %v9848 = vunpack.c.l.b16 %v8619
          %v9849 = vunpack.c.h.b16 %v8619
          %v9850 = vunpack.c.l.b16 %v8620
          %v9851 = vunpack.c.h.b16 %v8620
          %v9852 = vunpack.c.l.b16 %v8621
          %v9853 = vunpack.c.h.b16 %v8621
          %v9854 = vunpack.c.l.b16 %v8622
          %v9855 = vunpack.c.h.b16 %v8622
          %v9856 = vunpack.c.l.b16 %v8623
          %v9857 = vunpack.c.h.b16 %v8623
          %v9858 = vunpack.c.l.b16 %v8624
          %v9859 = vunpack.c.h.b16 %v8624
          %v9860 = vunpack.c.l.b16 %v8625
          %v9861 = vunpack.c.h.b16 %v8625
          %v9862 = vunpack.c.l.b16 %v8626
          %v9863 = vunpack.c.h.b16 %v8626
          %v9864 = vunpack.c.l.b16 %v8627
          %v9865 = vunpack.c.h.b16 %v8627
          %v9866 = vunpack.c.l.b16 %v8628
          %v9867 = vunpack.c.h.b16 %v8628
          %v9868 = vunpack.c.l.b16 %v8629
          %v9869 = vunpack.c.h.b16 %v8629
          %v9870 = vunpack.c.l.b16 %v8630
          %v9871 = vunpack.c.h.b16 %v8630
          %v9872 = vunpack.c.l.b16 %v8631
          %v9873 = vunpack.c.h.b16 %v8631
          %v9874 = vunpack.c.l.b16 %v8632
          %v9875 = vunpack.c.h.b16 %v8632
          %v9876 = vunpack.c.l.b16 %v8633
          %v9877 = vunpack.c.h.b16 %v8633
          %v9878 = vunpack.c.l.b16 %v8634
          %v9879 = vunpack.c.h.b16 %v8634
          %v9880 = vunpack.c.l.b16 %v8635
          %v9881 = vunpack.c.h.b16 %v8635
          %v9882 = vunpack.c.l.b16 %v8636
          %v9883 = vunpack.c.h.b16 %v8636
          %v9884 = vunpack.c.l.b16 %v8637
          %v9885 = vunpack.c.h.b16 %v8637
          %v9886 = vunpack.c.l.b16 %v8638
          %v9887 = vunpack.c.h.b16 %v8638
          %v9888 = vunpack.c.l.b16 %v8639
          %v9889 = vunpack.c.h.b16 %v8639
          %v9890 = vunpack.c.l.b16 %v8640
          %v9891 = vunpack.c.h.b16 %v8640
          %v9892 = vunpack.c.l.b16 %v8641
          %v9893 = vunpack.c.h.b16 %v8641
          %v9894 = vunpack.c.l.b16 %v8642
          %v9895 = vunpack.c.h.b16 %v8642
          %v9896 = vunpack.c.l.b16 %v8643
          %v9897 = vunpack.c.h.b16 %v8643
          %v9898 = vunpack.c.l.b16 %v8644
          %v9899 = vunpack.c.h.b16 %v8644
          %v9900 = vunpack.c.l.b16 %v8645
          %v9901 = vunpack.c.h.b16 %v8645
          %v9902 = vunpack.c.l.b16 %v8646
          %v9903 = vunpack.c.h.b16 %v8646
          %v9904 = vunpack.c.l.b16 %v8647
          %v9905 = vunpack.c.h.b16 %v8647
          %v9906 = vunpack.c.l.b16 %v8648
          %v9907 = vunpack.c.h.b16 %v8648
          %v9908 = vunpack.c.l.b16 %v8649
          %v9909 = vunpack.c.h.b16 %v8649
          %v9910 = vunpack.c.l.b16 %v8650
          %v9911 = vunpack.c.h.b16 %v8650
          %v9912 = vunpack.c.l.b16 %v8651
          %v9913 = vunpack.c.h.b16 %v8651
          %v9914 = vunpack.c.l.b16 %v8652
          %v9915 = vunpack.c.h.b16 %v8652
          %v9916 = vunpack.c.l.b16 %v8653
          %v9917 = vunpack.c.h.b16 %v8653
          %v9918 = vunpack.c.l.b16 %v8654
          %v9919 = vunpack.c.h.b16 %v8654
          %v9920 = vunpack.c.l.b16 %v8655
          %v9921 = vunpack.c.h.b16 %v8655
          %v9922 = vunpack.c.l.b16 %v8656
          %v9923 = vunpack.c.h.b16 %v8656
          %v9924 = vunpack.c.l.b16 %v8657
          %v9925 = vunpack.c.h.b16 %v8657
          %v9926 = vunpack.c.l.b16 %v8658
          %v9927 = vunpack.c.h.b16 %v8658
          %v9928 = vunpack.c.l.b16 %v8659
          %v9929 = vunpack.c.h.b16 %v8659
          %v9930 = vunpack.c.l.b16 %v8660
          %v9931 = vunpack.c.h.b16 %v8660
          %v9932 = vunpack.c.l.b16 %v8661
          %v9933 = vunpack.c.h.b16 %v8661
          %v9934 = vunpack.c.l.b16 %v8662
          %v9935 = vunpack.c.h.b16 %v8662
          %v9936 = vunpack.c.l.b16 %v8663
          %v9937 = vunpack.c.h.b16 %v8663
          %v9938 = vunpack.c.l.b16 %v8664
          %v9939 = vunpack.c.h.b16 %v8664
          %v9940 = vunpack.c.l.b16 %v8665
          %v9941 = vunpack.c.h.b16 %v8665
          %v9942 = vunpack.c.l.b16 %v8666
          %v9943 = vunpack.c.h.b16 %v8666
          %v9944 = vunpack.c.l.b16 %v8667
          %v9945 = vunpack.c.h.b16 %v8667
          %v9946 = vunpack.c.l.b16 %v8668
          %v9947 = vunpack.c.h.b16 %v8668
          %v9948 = vunpack.c.l.b16 %v8669
          %v9949 = vunpack.c.h.b16 %v8669
          %v9950 = vunpack.c.l.b16 %v8670
          %v9951 = vunpack.c.h.b16 %v8670
          %v9952 = vunpack.c.l.b16 %v8671
          %v9953 = vunpack.c.h.b16 %v8671
          %v9954 = vunpack.c.l.b16 %v8672
          %v9955 = vunpack.c.h.b16 %v8672
          %v9956 = vunpack.c.l.b16 %v8673
          %v9957 = vunpack.c.h.b16 %v8673
          %v9958 = vunpack.c.l.b16 %v8674
          %v9959 = vunpack.c.h.b16 %v8674
          %v9960 = vunpack.c.l.b16 %v8675
          %v9961 = vunpack.c.h.b16 %v8675
          %v9962 = vunpack.c.l.b16 %v8676
          %v9963 = vunpack.c.h.b16 %v8676
          %v9964 = vunpack.c.l.b16 %v8677
          %v9965 = vunpack.c.h.b16 %v8677
          %v9966 = vunpack.c.l.b16 %v8678
          %v9967 = vunpack.c.h.b16 %v8678
          %v9968 = vunpack.c.l.b16 %v8679
          %v9969 = vunpack.c.h.b16 %v8679
          %v9970 = vunpack.c.l.b16 %v8680
          %v9971 = vunpack.c.h.b16 %v8680
          %v9972 = vunpack.c.l.b16 %v8681
          %v9973 = vunpack.c.h.b16 %v8681
          %v9974 = vunpack.c.l.b16 %v8682
          %v9975 = vunpack.c.h.b16 %v8682
          %v9976 = vunpack.c.l.b16 %v8683
          %v9977 = vunpack.c.h.b16 %v8683
          %v9978 = vunpack.c.l.b16 %v8684
          %v9979 = vunpack.c.h.b16 %v8684
          %v9980 = vunpack.c.l.b16 %v8685
          %v9981 = vunpack.c.h.b16 %v8685
          %v9982 = vunpack.c.l.b16 %v8686
          %v9983 = vunpack.c.h.b16 %v8686
          %v9984 = vunpack.c.l.b16 %v8687
          %v9985 = vunpack.c.h.b16 %v8687
          %v9986 = vunpack.c.l.b16 %v8688
          %v9987 = vunpack.c.h.b16 %v8688
          %v9988 = vunpack.c.l.b16 %v8689
          %v9989 = vunpack.c.h.b16 %v8689
          %v9990 = vunpack.c.l.b16 %v8690
          %v9991 = vunpack.c.h.b16 %v8690
          %v9992 = vunpack.c.l.b16 %v8691
          %v9993 = vunpack.c.h.b16 %v8691
          %v9994 = vunpack.c.l.b16 %v8692
          %v9995 = vunpack.c.h.b16 %v8692
          %v9996 = vunpack.c.l.b16 %v8693
          %v9997 = vunpack.c.h.b16 %v8693
          %v9998 = vunpack.c.l.b16 %v8694
          %v9999 = vunpack.c.h.b16 %v8694
          %v10000 = vunpack.c.l.b16 %v8695
          %v10001 = vunpack.c.h.b16 %v8695
          %v10002 = vunpack.c.l.b16 %v8696
          %v10003 = vunpack.c.h.b16 %v8696
          %v10004 = vunpack.c.l.b16 %v8697
          %v10005 = vunpack.c.h.b16 %v8697
          %v10006 = vunpack.c.l.b16 %v8698
          %v10007 = vunpack.c.h.b16 %v8698
          %v10008 = vunpack.c.l.b16 %v8699
          %v10009 = vunpack.c.h.b16 %v8699
          %v10010 = vunpack.c.l.b16 %v8700
          %v10011 = vunpack.c.h.b16 %v8700
          %v10012 = vunpack.c.l.b16 %v8701
          %v10013 = vunpack.c.h.b16 %v8701
          %v10014 = vunpack.c.l.b16 %v8702
          %v10015 = vunpack.c.h.b16 %v8702
          %v10016 = vunpack.c.l.b16 %v8703
          %v10017 = vunpack.c.h.b16 %v8703
          %v10018 = vunpack.c.l.b16 %v8704
          %v10019 = vunpack.c.h.b16 %v8704
          %v10020 = vunpack.c.l.b16 %v8705
          %v10021 = vunpack.c.h.b16 %v8705
          %v10022 = vunpack.c.l.b16 %v8706
          %v10023 = vunpack.c.h.b16 %v8706
          %v10024 = vunpack.c.l.b16 %v8707
          %v10025 = vunpack.c.h.b16 %v8707
          %v10026 = vunpack.c.l.b16 %v8708
          %v10027 = vunpack.c.h.b16 %v8708
          %v10028 = vunpack.c.l.b16 %v8709
          %v10029 = vunpack.c.h.b16 %v8709
          %v10030 = vunpack.c.l.b16 %v8710
          %v10031 = vunpack.c.h.b16 %v8710
          %v10032 = vunpack.c.l.b16 %v8711
          %v10033 = vunpack.c.h.b16 %v8711
          %v10034 = vunpack.c.l.b16 %v8712
          %v10035 = vunpack.c.h.b16 %v8712
          %v10036 = vunpack.c.l.b16 %v8713
          %v10037 = vunpack.c.h.b16 %v8713
          %v10038 = vunpack.c.l.b16 %v8714
          %v10039 = vunpack.c.h.b16 %v8714
          %v10040 = vunpack.c.l.b16 %v8715
          %v10041 = vunpack.c.h.b16 %v8715
          %v10042 = vunpack.c.l.b16 %v8716
          %v10043 = vunpack.c.h.b16 %v8716
          %v10044 = vunpack.c.l.b16 %v8717
          %v10045 = vunpack.c.h.b16 %v8717
          %v10046 = vunpack.c.l.b16 %v8718
          %v10047 = vunpack.c.h.b16 %v8718
          %v10048 = vunpack.c.l.b16 %v8719
          %v10049 = vunpack.c.h.b16 %v8719
          %v10050 = vunpack.c.l.b16 %v8720
          %v10051 = vunpack.c.h.b16 %v8720
          %v10052 = vunpack.c.l.b16 %v8721
          %v10053 = vunpack.c.h.b16 %v8721
          %v10054 = vunpack.c.l.b16 %v8722
          %v10055 = vunpack.c.h.b16 %v8722
          %v10056 = vunpack.c.l.b16 %v8723
          %v10057 = vunpack.c.h.b16 %v8723
          %v10058 = vunpack.c.l.b16 %v8724
          %v10059 = vunpack.c.h.b16 %v8724
          %v10060 = vunpack.c.l.b16 %v8725
          %v10061 = vunpack.c.h.b16 %v8725
          %v10062 = vunpack.c.l.b16 %v8726
          %v10063 = vunpack.c.h.b16 %v8726
          %v10064 = vunpack.c.l.b16 %v8727
          %v10065 = vunpack.c.h.b16 %v8727
          %v10066 = vunpack.c.l.b16 %v8728
          %v10067 = vunpack.c.h.b16 %v8728
          %v10068 = vunpack.c.l.b16 %v8729
          %v10069 = vunpack.c.h.b16 %v8729
          %v10070 = vunpack.c.l.b16 %v8730
          %v10071 = vunpack.c.h.b16 %v8730
          %v10072 = vunpack.c.l.b16 %v8731
          %v10073 = vunpack.c.h.b16 %v8731
          %v10074 = vunpack.c.l.b16 %v8732
          %v10075 = vunpack.c.h.b16 %v8732
          %v10076 = vunpack.c.l.b16 %v8733
          %v10077 = vunpack.c.h.b16 %v8733
          %v10078 = vunpack.c.l.b16 %v8734
          %v10079 = vunpack.c.h.b16 %v8734
          %v10080 = vunpack.c.l.b16 %v8735
          %v10081 = vunpack.c.h.b16 %v8735
          %v10082 = vunpack.c.l.b16 %v8736
          %v10083 = vunpack.c.h.b16 %v8736
          %v10084 = vunpack.c.l.b16 %v8737
          %v10085 = vunpack.c.h.b16 %v8737
          %v10086 = vunpack.c.l.b16 %v8738
          %v10087 = vunpack.c.h.b16 %v8738
          %v10088 = vunpack.c.l.b16 %v8739
          %v10089 = vunpack.c.h.b16 %v8739
          %v10090 = vunpack.c.l.b16 %v8740
          %v10091 = vunpack.c.h.b16 %v8740
          %v10092 = vunpack.c.l.b16 %v8741
          %v10093 = vunpack.c.h.b16 %v8741
          %v10094 = vunpack.c.l.b16 %v8742
          %v10095 = vunpack.c.h.b16 %v8742
          %v10096 = vunpack.c.l.b16 %v8743
          %v10097 = vunpack.c.h.b16 %v8743
          %v10098 = vunpack.c.l.b16 %v8744
          %v10099 = vunpack.c.h.b16 %v8744
          %v10100 = vunpack.c.l.b16 %v8745
          %v10101 = vunpack.c.h.b16 %v8745
          %v10102 = vunpack.c.l.b16 %v8746
          %v10103 = vunpack.c.h.b16 %v8746
          %v10104 = vunpack.c.l.b16 %v8747
          %v10105 = vunpack.c.h.b16 %v8747
          %v10106 = vunpack.c.l.b16 %v8748
          %v10107 = vunpack.c.h.b16 %v8748
          %v10108 = vunpack.c.l.b16 %v8749
          %v10109 = vunpack.c.h.b16 %v8749
          %v10110 = vunpack.c.l.b16 %v8750
          %v10111 = vunpack.c.h.b16 %v8750
          %v10112 = vunpack.c.l.b16 %v8751
          %v10113 = vunpack.c.h.b16 %v8751
          %v10114 = vunpack.c.l.b16 %v8752
          %v10115 = vunpack.c.h.b16 %v8752
          %v10116 = vunpack.c.l.b16 %v8753
          %v10117 = vunpack.c.h.b16 %v8753
          %v10118 = vunpack.c.l.b16 %v8754
          %v10119 = vunpack.c.h.b16 %v8754
          %v10120 = vunpack.c.l.b16 %v8755
          %v10121 = vunpack.c.h.b16 %v8755
          %v10122 = vunpack.c.l.b16 %v8756
          %v10123 = vunpack.c.h.b16 %v8756
          %v10124 = vunpack.c.l.b16 %v8757
          %v10125 = vunpack.c.h.b16 %v8757
          %v10126 = vunpack.c.l.b16 %v8758
          %v10127 = vunpack.c.h.b16 %v8758
          %v10128 = vunpack.c.l.b16 %v8759
          %v10129 = vunpack.c.h.b16 %v8759
          %v10130 = vunpack.c.l.b16 %v8760
          %v10131 = vunpack.c.h.b16 %v8760
          %v10132 = vunpack.c.l.b16 %v8761
          %v10133 = vunpack.c.h.b16 %v8761
          %v10134 = vunpack.c.l.b16 %v8762
          %v10135 = vunpack.c.h.b16 %v8762
          %v10136 = vunpack.c.l.b16 %v8763
          %v10137 = vunpack.c.h.b16 %v8763
          %v10138 = vunpack.c.l.b16 %v8764
          %v10139 = vunpack.c.h.b16 %v8764
          %v10140 = vunpack.c.l.b16 %v8765
          %v10141 = vunpack.c.h.b16 %v8765
          %v10142 = vunpack.c.l.b16 %v8766
          %v10143 = vunpack.c.h.b16 %v8766
          %v10144 = vunpack.c.l.b16 %v8767
          %v10145 = vunpack.c.h.b16 %v8767
          %v10146 = vunpack.c.l.b16 %v8768
          %v10147 = vunpack.c.h.b16 %v8768
          %v10148 = vunpack.c.l.b16 %v8769
          %v10149 = vunpack.c.h.b16 %v8769
          %v10150 = vunpack.c.l.b16 %v8770
          %v10151 = vunpack.c.h.b16 %v8770
          %v10152 = vunpack.c.l.b16 %v8771
          %v10153 = vunpack.c.h.b16 %v8771
          %v10154 = vunpack.c.l.b16 %v8772
          %v10155 = vunpack.c.h.b16 %v8772
          %v10156 = vunpack.c.l.b16 %v8773
          %v10157 = vunpack.c.h.b16 %v8773
          %v10158 = vunpack.c.l.b16 %v8774
          %v10159 = vunpack.c.h.b16 %v8774
          %v10160 = vunpack.c.l.b16 %v8775
          %v10161 = vunpack.c.h.b16 %v8775
          %v10162 = vunpack.c.l.b16 %v8776
          %v10163 = vunpack.c.h.b16 %v8776
          %v10164 = vunpack.c.l.b16 %v8777
          %v10165 = vunpack.c.h.b16 %v8777
          %v10166 = vunpack.c.l.b16 %v8778
          %v10167 = vunpack.c.h.b16 %v8778
          %v10168 = vunpack.c.l.b16 %v8779
          %v10169 = vunpack.c.h.b16 %v8779
          %v10170 = vunpack.c.l.b16 %v8780
          %v10171 = vunpack.c.h.b16 %v8780
          %v10172 = vunpack.c.l.b16 %v8781
          %v10173 = vunpack.c.h.b16 %v8781
          %v10174 = vunpack.c.l.b16 %v8782
          %v10175 = vunpack.c.h.b16 %v8782
          %v10176 = vunpack.c.l.b16 %v8783
          %v10177 = vunpack.c.h.b16 %v8783
          %v10178 = vunpack.c.l.b16 %v8784
          %v10179 = vunpack.c.h.b16 %v8784
          %v10180 = vunpack.c.l.b16 %v8785
          %v10181 = vunpack.c.h.b16 %v8785
          %v10182 = vunpack.c.l.b16 %v8786
          %v10183 = vunpack.c.h.b16 %v8786
          %v10184 = vunpack.c.l.b16 %v8787
          %v10185 = vunpack.c.h.b16 %v8787
          %v10186 = vunpack.c.l.b16 %v8788
          %v10187 = vunpack.c.h.b16 %v8788
          %v10188 = vunpack.c.l.b16 %v8789
          %v10189 = vunpack.c.h.b16 %v8789
          %v10190 = vunpack.c.l.b16 %v8790
          %v10191 = vunpack.c.h.b16 %v8790
          %v10192 = vunpack.c.l.b16 %v8791
          %v10193 = vunpack.c.h.b16 %v8791
          %v10194 = vunpack.c.l.b16 %v8792
          %v10195 = vunpack.c.h.b16 %v8792
          %v10196 = vunpack.c.l.b16 %v8793
          %v10197 = vunpack.c.h.b16 %v8793
          %v10198 = vunpack.c.l.b16 %v8794
          %v10199 = vunpack.c.h.b16 %v8794
          %v10200 = vunpack.c.l.b16 %v8795
          %v10201 = vunpack.c.h.b16 %v8795
          %v10202 = vunpack.c.l.b16 %v8796
          %v10203 = vunpack.c.h.b16 %v8796
          %v10204 = vunpack.c.l.b16 %v8797
          %v10205 = vunpack.c.h.b16 %v8797
          %v10206 = vunpack.c.l.b16 %v8798
          %v10207 = vunpack.c.h.b16 %v8798
          %v10208 = vunpack.c.l.b16 %v8799
          %v10209 = vunpack.c.h.b16 %v8799
          %v10210 = vunpack.c.l.b16 %v8800
          %v10211 = vunpack.c.h.b16 %v8800
          %v10212 = vunpack.c.l.b16 %v8801
          %v10213 = vunpack.c.h.b16 %v8801
          %v10214 = vunpack.c.l.b16 %v8802
          %v10215 = vunpack.c.h.b16 %v8802
          %v10216 = vunpack.c.l.b16 %v8803
          %v10217 = vunpack.c.h.b16 %v8803
          %v10218 = vunpack.c.l.b16 %v8804
          %v10219 = vunpack.c.h.b16 %v8804
          %v10220 = vunpack.c.l.b16 %v8805
          %v10221 = vunpack.c.h.b16 %v8805
          %v10222 = vunpack.c.l.b16 %v8806
          %v10223 = vunpack.c.h.b16 %v8806
          %v10224 = vunpack.c.l.b16 %v8807
          %v10225 = vunpack.c.h.b16 %v8807
          %v10226 = vunpack.c.l.b16 %v8808
          %v10227 = vunpack.c.h.b16 %v8808
          %v10228 = vunpack.c.l.b16 %v8809
          %v10229 = vunpack.c.h.b16 %v8809
          %v10230 = vunpack.c.l.b16 %v8810
          %v10231 = vunpack.c.h.b16 %v8810
          %v10232 = vunpack.c.l.b16 %v8811
          %v10233 = vunpack.c.h.b16 %v8811
          %v10234 = vunpack.c.l.b16 %v8812
          %v10235 = vunpack.c.h.b16 %v8812
          %v10236 = vunpack.c.l.b16 %v8813
          %v10237 = vunpack.c.h.b16 %v8813
          %v10238 = vunpack.c.l.b16 %v8814
          %v10239 = vunpack.c.h.b16 %v8814
          %v10240 = vunpack.c.l.b16 %v8815
          %v10241 = vunpack.c.h.b16 %v8815
          %v10242 = vunpack.c.l.b16 %v8816
          %v10243 = vunpack.c.h.b16 %v8816
          %v10244 = vunpack.c.l.b16 %v8817
          %v10245 = vunpack.c.h.b16 %v8817
          %v10246 = vunpack.c.l.b16 %v8818
          %v10247 = vunpack.c.h.b16 %v8818
          %v10248 = vunpack.c.l.b16 %v8819
          %v10249 = vunpack.c.h.b16 %v8819
          %v10250 = vunpack.c.l.b16 %v8820
          %v10251 = vunpack.c.h.b16 %v8820
          %v10252 = vunpack.c.l.b16 %v8821
          %v10253 = vunpack.c.h.b16 %v8821
          %v10254 = vunpack.c.l.b16 %v8822
          %v10255 = vunpack.c.h.b16 %v8822
          %v10256 = vunpack.c.l.b16 %v8823
          %v10257 = vunpack.c.h.b16 %v8823
          %v10258 = vunpack.c.l.b16 %v8824
          %v10259 = vunpack.c.h.b16 %v8824
          %v10260 = vunpack.c.l.b16 %v8825
          %v10261 = vunpack.c.h.b16 %v8825
          %v10262 = vunpack.c.l.b16 %v8826
          %v10263 = vunpack.c.h.b16 %v8826
          %v10264 = vunpack.c.l.b16 %v8827
          %v10265 = vunpack.c.h.b16 %v8827
          %v10266 = vunpack.c.l.b16 %v8828
          %v10267 = vunpack.c.h.b16 %v8828
          %v10268 = vunpack.c.l.b16 %v8829
          %v10269 = vunpack.c.h.b16 %v8829
          %v10270 = vunpack.c.l.b16 %v8830
          %v10271 = vunpack.c.h.b16 %v8830
          %v10272 = vunpack.c.l.b16 %v8831
          %v10273 = vunpack.c.h.b16 %v8831
          %v10274 = vunpack.c.l.b16 %v8832
          %v10275 = vunpack.c.h.b16 %v8832
          %v10276 = vunpack.c.l.b16 %v8833
          %v10277 = vunpack.c.h.b16 %v8833
          %v10278 = vunpack.c.l.b16 %v8834
          %v10279 = vunpack.c.h.b16 %v8834
          %v10280 = vunpack.c.l.b16 %v8835
          %v10281 = vunpack.c.h.b16 %v8835
          %v10282 = vunpack.c.l.b16 %v8836
          %v10283 = vunpack.c.h.b16 %v8836
          %v10284 = vunpack.c.l.b16 %v8837
          %v10285 = vunpack.c.h.b16 %v8837
          %v10286 = vunpack.c.l.b16 %v8838
          %v10287 = vunpack.c.h.b16 %v8838
          %v10288 = vunpack.c.l.b16 %v8839
          %v10289 = vunpack.c.h.b16 %v8839
          %v10290 = vunpack.c.l.b16 %v8840
          %v10291 = vunpack.c.h.b16 %v8840
          %v10292 = vunpack.c.l.b16 %v8841
          %v10293 = vunpack.c.h.b16 %v8841
          %v10294 = vunpack.c.l.b16 %v8842
          %v10295 = vunpack.c.h.b16 %v8842
          %v10296 = vunpack.c.l.b16 %v8843
          %v10297 = vunpack.c.h.b16 %v8843
          %v10298 = vunpack.c.l.b16 %v8844
          %v10299 = vunpack.c.h.b16 %v8844
          %v10300 = vunpack.c.l.b16 %v8845
          %v10301 = vunpack.c.h.b16 %v8845
          %v10302 = vunpack.c.l.b16 %v8846
          %v10303 = vunpack.c.h.b16 %v8846
          %v10304 = vunpack.c.l.b16 %v8847
          %v10305 = vunpack.c.h.b16 %v8847
          %v10306 = vunpack.c.l.b16 %v8848
          %v10307 = vunpack.c.h.b16 %v8848
          %v10308 = vunpack.c.l.b16 %v8849
          %v10309 = vunpack.c.h.b16 %v8849
          %v10310 = vunpack.c.l.b16 %v8850
          %v10311 = vunpack.c.h.b16 %v8850
          %v10312 = vunpack.c.l.b16 %v8851
          %v10313 = vunpack.c.h.b16 %v8851
          %v10314 = vunpack.c.l.b16 %v8852
          %v10315 = vunpack.c.h.b16 %v8852
          %v10316 = vunpack.c.l.b16 %v8853
          %v10317 = vunpack.c.h.b16 %v8853
          %v10318 = vunpack.c.l.b16 %v8854
          %v10319 = vunpack.c.h.b16 %v8854
          %v10320 = vunpack.c.l.b16 %v8855
          %v10321 = vunpack.c.h.b16 %v8855
          %v10322 = vunpack.c.l.b16 %v8856
          %v10323 = vunpack.c.h.b16 %v8856
          %v10324 = vunpack.c.l.b16 %v8857
          %v10325 = vunpack.c.h.b16 %v8857
          %v10326 = vunpack.c.l.b16 %v8858
          %v10327 = vunpack.c.h.b16 %v8858
          %v10328 = vunpack.c.l.b16 %v8859
          %v10329 = vunpack.c.h.b16 %v8859
          %v10330 = vunpack.c.l.b16 %v8860
          %v10331 = vunpack.c.h.b16 %v8860
          %v10332 = vunpack.c.l.b16 %v8861
          %v10333 = vunpack.c.h.b16 %v8861
          %v10334 = vunpack.c.l.b16 %v8862
          %v10335 = vunpack.c.h.b16 %v8862
          %v10336 = vunpack.c.l.b16 %v8863
          %v10337 = vunpack.c.h.b16 %v8863
          %v10338 = vunpack.c.l.b16 %v8864
          %v10339 = vunpack.c.h.b16 %v8864
          %v10340 = vunpack.c.l.b16 %v8865
          %v10341 = vunpack.c.h.b16 %v8865
          %v10342 = vunpack.c.l.b16 %v8866
          %v10343 = vunpack.c.h.b16 %v8866
          %v10344 = vunpack.c.l.b16 %v8867
          %v10345 = vunpack.c.h.b16 %v8867
          %v10346 = vunpack.c.l.b16 %v8868
          %v10347 = vunpack.c.h.b16 %v8868
          %v10348 = vunpack.c.l.b16 %v8869
          %v10349 = vunpack.c.h.b16 %v8869
          %v10350 = vunpack.c.l.b16 %v8870
          %v10351 = vunpack.c.h.b16 %v8870
          %v10352 = vunpack.c.l.b16 %v8871
          %v10353 = vunpack.c.h.b16 %v8871
          %v10354 = vunpack.c.l.b16 %v8872
          %v10355 = vunpack.c.h.b16 %v8872
          %v10356 = vunpack.c.l.b16 %v8873
          %v10357 = vunpack.c.h.b16 %v8873
          %v10358 = vunpack.c.l.b16 %v8874
          %v10359 = vunpack.c.h.b16 %v8874
          %v10360 = vunpack.c.l.b16 %v8875
          %v10361 = vunpack.c.h.b16 %v8875
          %v10362 = vunpack.c.l.b16 %v8876
          %v10363 = vunpack.c.h.b16 %v8876
          %v10364 = vunpack.c.l.b16 %v8877
          %v10365 = vunpack.c.h.b16 %v8877
          %v10366 = vunpack.c.l.b16 %v8878
          %v10367 = vunpack.c.h.b16 %v8878
          %v10368 = vunpack.c.l.b16 %v8879
          %v10369 = vunpack.c.h.b16 %v8879
          %v10370 = vunpack.c.l.b16 %v8880
          %v10371 = vunpack.c.h.b16 %v8880
          %v10372 = vunpack.c.l.b16 %v8881
          %v10373 = vunpack.c.h.b16 %v8881
          %v10374 = vunpack.c.l.b16 %v8882
          %v10375 = vunpack.c.h.b16 %v8882
          %v10376 = vunpack.c.l.b16 %v8883
          %v10377 = vunpack.c.h.b16 %v8883
          %v10378 = vunpack.c.l.b16 %v8884
          %v10379 = vunpack.c.h.b16 %v8884
          %v10380 = vunpack.c.l.b16 %v8885
          %v10381 = vunpack.c.h.b16 %v8885
          %v10382 = vunpack.c.l.b16 %v8886
          %v10383 = vunpack.c.h.b16 %v8886
          %v10384 = vunpack.c.l.b16 %v8887
          %v10385 = vunpack.c.h.b16 %v8887
          %v10386 = vunpack.c.l.b16 %v8888
          %v10387 = vunpack.c.h.b16 %v8888
          %v10388 = vunpack.c.l.b16 %v8889
          %v10389 = vunpack.c.h.b16 %v8889
          %v10390 = vunpack.c.l.b16 %v8890
          %v10391 = vunpack.c.h.b16 %v8890
          %v10392 = vunpack.c.l.b16 %v8891
          %v10393 = vunpack.c.h.b16 %v8891
          %v10394 = vunpack.c.l.b16 %v8892
          %v10395 = vunpack.c.h.b16 %v8892
          %v10396 = vunpack.c.l.b16 %v8893
          %v10397 = vunpack.c.h.b16 %v8893
          %v10398 = vunpack.c.l.b16 %v8894
          %v10399 = vunpack.c.h.b16 %v8894
          %v10400 = vunpack.c.l.b16 %v8895
          %v10401 = vunpack.c.h.b16 %v8895
          %v10402 = vunpack.c.l.b16 %v8896
          %v10403 = vunpack.c.h.b16 %v8896
          %v10404 = vunpack.c.l.b16 %v8897
          %v10405 = vunpack.c.h.b16 %v8897
          %v10406 = vunpack.c.l.b16 %v8898
          %v10407 = vunpack.c.h.b16 %v8898
          %v10408 = vunpack.c.l.b16 %v8899
          %v10409 = vunpack.c.h.b16 %v8899
          %v10410 = vunpack.c.l.b16 %v8900
          %v10411 = vunpack.c.h.b16 %v8900
          %v10412 = vunpack.c.l.b16 %v8901
          %v10413 = vunpack.c.h.b16 %v8901
          %v10414 = vunpack.c.l.b16 %v8902
          %v10415 = vunpack.c.h.b16 %v8902
          %v10416 = vunpack.c.l.b16 %v8903
          %v10417 = vunpack.c.h.b16 %v8903
          %v10418 = vunpack.c.l.b16 %v8904
          %v10419 = vunpack.c.h.b16 %v8904
          %v10420 = vunpack.c.l.b16 %v8905
          %v10421 = vunpack.c.h.b16 %v8905
          %v10422 = vunpack.c.l.b16 %v8906
          %v10423 = vunpack.c.h.b16 %v8906
          %v10424 = vunpack.c.l.b16 %v8907
          %v10425 = vunpack.c.h.b16 %v8907
          %v10426 = vunpack.c.l.b16 %v8908
          %v10427 = vunpack.c.h.b16 %v8908
          %v10428 = vunpack.c.l.b16 %v8909
          %v10429 = vunpack.c.h.b16 %v8909
          %v10430 = vunpack.c.l.b16 %v8910
          %v10431 = vunpack.c.h.b16 %v8910
          %v10432 = vunpack.c.l.b16 %v8911
          %v10433 = vunpack.c.h.b16 %v8911
          %v10434 = vunpack.c.l.b16 %v8912
          %v10435 = vunpack.c.h.b16 %v8912
          %v10436 = vunpack.c.l.b16 %v8913
          %v10437 = vunpack.c.h.b16 %v8913
          %v10438 = vunpack.c.l.b16 %v8914
          %v10439 = vunpack.c.h.b16 %v8914
          %v10440 = vunpack.c.l.b16 %v8915
          %v10441 = vunpack.c.h.b16 %v8915
          %v10442 = vunpack.c.l.b16 %v8916
          %v10443 = vunpack.c.h.b16 %v8916
          %v10444 = vunpack.c.l.b16 %v8917
          %v10445 = vunpack.c.h.b16 %v8917
          %v10446 = vunpack.c.l.b16 %v8918
          %v10447 = vunpack.c.h.b16 %v8918
          %v10448 = vunpack.c.l.b16 %v8919
          %v10449 = vunpack.c.h.b16 %v8919
          %v10450 = vunpack.c.l.b16 %v8920
          %v10451 = vunpack.c.h.b16 %v8920
          %v10452 = vunpack.c.l.b16 %v8921
          %v10453 = vunpack.c.h.b16 %v8921
          %v10454 = vunpack.c.l.b16 %v8922
          %v10455 = vunpack.c.h.b16 %v8922
          %v10456 = vunpack.c.l.b16 %v8923
          %v10457 = vunpack.c.h.b16 %v8923
          %v10458 = vunpack.c.l.b16 %v8924
          %v10459 = vunpack.c.h.b16 %v8924
          %v10460 = vunpack.c.l.b16 %v8925
          %v10461 = vunpack.c.h.b16 %v8925
          %v10462 = vpack.c.b16 %v9446, %v9438
          %v10463 = vpack.c.b16 %v9447, %v9439
          %v10464 = vpack.c.b16 %v9448, %v9440
          %v10465 = vpack.c.b16 %v9449, %v9441
          %v10466 = vpack.c.b16 %v9450, %v9442
          %v10467 = vpack.c.b16 %v9451, %v9443
          %v10468 = vpack.c.b16 %v9452, %v9444
          %v10469 = vpack.c.b16 %v9453, %v9445
          %v10470 = vpack.c.b16 %v9462, %v9454
          %v10471 = vpack.c.b16 %v9463, %v9455
          %v10472 = vpack.c.b16 %v9464, %v9456
          %v10473 = vpack.c.b16 %v9465, %v9457
          %v10474 = vpack.c.b16 %v9466, %v9458
          %v10475 = vpack.c.b16 %v9467, %v9459
          %v10476 = vpack.c.b16 %v9468, %v9460
          %v10477 = vpack.c.b16 %v9469, %v9461
          %v10478 = vpack.c.b16 %v9478, %v9470
          %v10479 = vpack.c.b16 %v9479, %v9471
          %v10480 = vpack.c.b16 %v9480, %v9472
          %v10481 = vpack.c.b16 %v9481, %v9473
          %v10482 = vpack.c.b16 %v9482, %v9474
          %v10483 = vpack.c.b16 %v9483, %v9475
          %v10484 = vpack.c.b16 %v9484, %v9476
          %v10485 = vpack.c.b16 %v9485, %v9477
          %v10486 = vpack.c.b16 %v9494, %v9486
          %v10487 = vpack.c.b16 %v9495, %v9487
          %v10488 = vpack.c.b16 %v9496, %v9488
          %v10489 = vpack.c.b16 %v9497, %v9489
          %v10490 = vpack.c.b16 %v9498, %v9490
          %v10491 = vpack.c.b16 %v9499, %v9491
          %v10492 = vpack.c.b16 %v9500, %v9492
          %v10493 = vpack.c.b16 %v9501, %v9493
          %v10494 = vpack.c.b16 %v9510, %v9502
          %v10495 = vpack.c.b16 %v9511, %v9503
          %v10496 = vpack.c.b16 %v9512, %v9504
          %v10497 = vpack.c.b16 %v9513, %v9505
          %v10498 = vpack.c.b16 %v9514, %v9506
          %v10499 = vpack.c.b16 %v9515, %v9507
          %v10500 = vpack.c.b16 %v9516, %v9508
          %v10501 = vpack.c.b16 %v9517, %v9509
          %v10502 = vpack.c.b16 %v9526, %v9518
          %v10503 = vpack.c.b16 %v9527, %v9519
          %v10504 = vpack.c.b16 %v9528, %v9520
          %v10505 = vpack.c.b16 %v9529, %v9521
          %v10506 = vpack.c.b16 %v9530, %v9522
          %v10507 = vpack.c.b16 %v9531, %v9523
          %v10508 = vpack.c.b16 %v9532, %v9524
          %v10509 = vpack.c.b16 %v9533, %v9525
          %v10510 = vpack.c.b16 %v9542, %v9534
          %v10511 = vpack.c.b16 %v9543, %v9535
          %v10512 = vpack.c.b16 %v9544, %v9536
          %v10513 = vpack.c.b16 %v9545, %v9537
          %v10514 = vpack.c.b16 %v9546, %v9538
          %v10515 = vpack.c.b16 %v9547, %v9539
          %v10516 = vpack.c.b16 %v9548, %v9540
          %v10517 = vpack.c.b16 %v9549, %v9541
          %v10518 = vpack.c.b16 %v9558, %v9550
          %v10519 = vpack.c.b16 %v9559, %v9551
          %v10520 = vpack.c.b16 %v9560, %v9552
          %v10521 = vpack.c.b16 %v9561, %v9553
          %v10522 = vpack.c.b16 %v9562, %v9554
          %v10523 = vpack.c.b16 %v9563, %v9555
          %v10524 = vpack.c.b16 %v9564, %v9556
          %v10525 = vpack.c.b16 %v9565, %v9557
          %v10526 = vpack.c.b16 %v9574, %v9566
          %v10527 = vpack.c.b16 %v9575, %v9567
          %v10528 = vpack.c.b16 %v9576, %v9568
          %v10529 = vpack.c.b16 %v9577, %v9569
          %v10530 = vpack.c.b16 %v9578, %v9570
          %v10531 = vpack.c.b16 %v9579, %v9571
          %v10532 = vpack.c.b16 %v9580, %v9572
          %v10533 = vpack.c.b16 %v9581, %v9573
          %v10534 = vpack.c.b16 %v9590, %v9582
          %v10535 = vpack.c.b16 %v9591, %v9583
          %v10536 = vpack.c.b16 %v9592, %v9584
          %v10537 = vpack.c.b16 %v9593, %v9585
          %v10538 = vpack.c.b16 %v9594, %v9586
          %v10539 = vpack.c.b16 %v9595, %v9587
          %v10540 = vpack.c.b16 %v9596, %v9588
          %v10541 = vpack.c.b16 %v9597, %v9589
          %v10542 = vpack.c.b16 %v9606, %v9598
          %v10543 = vpack.c.b16 %v9607, %v9599
          %v10544 = vpack.c.b16 %v9608, %v9600
          %v10545 = vpack.c.b16 %v9609, %v9601
          %v10546 = vpack.c.b16 %v9610, %v9602
          %v10547 = vpack.c.b16 %v9611, %v9603
          %v10548 = vpack.c.b16 %v9612, %v9604
          %v10549 = vpack.c.b16 %v9613, %v9605
          %v10550 = vpack.c.b16 %v9622, %v9614
          %v10551 = vpack.c.b16 %v9623, %v9615
          %v10552 = vpack.c.b16 %v9624, %v9616
          %v10553 = vpack.c.b16 %v9625, %v9617
          %v10554 = vpack.c.b16 %v9626, %v9618
          %v10555 = vpack.c.b16 %v9627, %v9619
          %v10556 = vpack.c.b16 %v9628, %v9620
          %v10557 = vpack.c.b16 %v9629, %v9621
          %v10558 = vpack.c.b16 %v9638, %v9630
          %v10559 = vpack.c.b16 %v9639, %v9631
          %v10560 = vpack.c.b16 %v9640, %v9632
          %v10561 = vpack.c.b16 %v9641, %v9633
          %v10562 = vpack.c.b16 %v9642, %v9634
          %v10563 = vpack.c.b16 %v9643, %v9635
          %v10564 = vpack.c.b16 %v9644, %v9636
          %v10565 = vpack.c.b16 %v9645, %v9637
          %v10566 = vpack.c.b16 %v9654, %v9646
          %v10567 = vpack.c.b16 %v9655, %v9647
          %v10568 = vpack.c.b16 %v9656, %v9648
          %v10569 = vpack.c.b16 %v9657, %v9649
          %v10570 = vpack.c.b16 %v9658, %v9650
          %v10571 = vpack.c.b16 %v9659, %v9651
          %v10572 = vpack.c.b16 %v9660, %v9652
          %v10573 = vpack.c.b16 %v9661, %v9653
          %v10574 = vpack.c.b16 %v9670, %v9662
          %v10575 = vpack.c.b16 %v9671, %v9663
          %v10576 = vpack.c.b16 %v9672, %v9664
          %v10577 = vpack.c.b16 %v9673, %v9665
          %v10578 = vpack.c.b16 %v9674, %v9666
          %v10579 = vpack.c.b16 %v9675, %v9667
          %v10580 = vpack.c.b16 %v9676, %v9668
          %v10581 = vpack.c.b16 %v9677, %v9669
          %v10582 = vpack.c.b16 %v9686, %v9678
          %v10583 = vpack.c.b16 %v9687, %v9679
          %v10584 = vpack.c.b16 %v9688, %v9680
          %v10585 = vpack.c.b16 %v9689, %v9681
          %v10586 = vpack.c.b16 %v9690, %v9682
          %v10587 = vpack.c.b16 %v9691, %v9683
          %v10588 = vpack.c.b16 %v9692, %v9684
          %v10589 = vpack.c.b16 %v9693, %v9685
          %v10590 = vpack.c.b16 %v9702, %v9694
          %v10591 = vpack.c.b16 %v9703, %v9695
          %v10592 = vpack.c.b16 %v9704, %v9696
          %v10593 = vpack.c.b16 %v9705, %v9697
          %v10594 = vpack.c.b16 %v9706, %v9698
          %v10595 = vpack.c.b16 %v9707, %v9699
          %v10596 = vpack.c.b16 %v9708, %v9700
          %v10597 = vpack.c.b16 %v9709, %v9701
          %v10598 = vpack.c.b16 %v9718, %v9710
          %v10599 = vpack.c.b16 %v9719, %v9711
          %v10600 = vpack.c.b16 %v9720, %v9712
          %v10601 = vpack.c.b16 %v9721, %v9713
          %v10602 = vpack.c.b16 %v9722, %v9714
          %v10603 = vpack.c.b16 %v9723, %v9715
          %v10604 = vpack.c.b16 %v9724, %v9716
          %v10605 = vpack.c.b16 %v9725, %v9717
          %v10606 = vpack.c.b16 %v9734, %v9726
          %v10607 = vpack.c.b16 %v9735, %v9727
          %v10608 = vpack.c.b16 %v9736, %v9728
          %v10609 = vpack.c.b16 %v9737, %v9729
          %v10610 = vpack.c.b16 %v9738, %v9730
          %v10611 = vpack.c.b16 %v9739, %v9731
          %v10612 = vpack.c.b16 %v9740, %v9732
          %v10613 = vpack.c.b16 %v9741, %v9733
          %v10614 = vpack.c.b16 %v9750, %v9742
          %v10615 = vpack.c.b16 %v9751, %v9743
          %v10616 = vpack.c.b16 %v9752, %v9744
          %v10617 = vpack.c.b16 %v9753, %v9745
          %v10618 = vpack.c.b16 %v9754, %v9746
          %v10619 = vpack.c.b16 %v9755, %v9747
          %v10620 = vpack.c.b16 %v9756, %v9748
          %v10621 = vpack.c.b16 %v9757, %v9749
          %v10622 = vpack.c.b16 %v9766, %v9758
          %v10623 = vpack.c.b16 %v9767, %v9759
          %v10624 = vpack.c.b16 %v9768, %v9760
          %v10625 = vpack.c.b16 %v9769, %v9761
          %v10626 = vpack.c.b16 %v9770, %v9762
          %v10627 = vpack.c.b16 %v9771, %v9763
          %v10628 = vpack.c.b16 %v9772, %v9764
          %v10629 = vpack.c.b16 %v9773, %v9765
          %v10630 = vpack.c.b16 %v9782, %v9774
          %v10631 = vpack.c.b16 %v9783, %v9775
          %v10632 = vpack.c.b16 %v9784, %v9776
          %v10633 = vpack.c.b16 %v9785, %v9777
          %v10634 = vpack.c.b16 %v9786, %v9778
          %v10635 = vpack.c.b16 %v9787, %v9779
          %v10636 = vpack.c.b16 %v9788, %v9780
          %v10637 = vpack.c.b16 %v9789, %v9781
          %v10638 = vpack.c.b16 %v9798, %v9790
          %v10639 = vpack.c.b16 %v9799, %v9791
          %v10640 = vpack.c.b16 %v9800, %v9792
          %v10641 = vpack.c.b16 %v9801, %v9793
          %v10642 = vpack.c.b16 %v9802, %v9794
          %v10643 = vpack.c.b16 %v9803, %v9795
          %v10644 = vpack.c.b16 %v9804, %v9796
          %v10645 = vpack.c.b16 %v9805, %v9797
          %v10646 = vpack.c.b16 %v9814, %v9806
          %v10647 = vpack.c.b16 %v9815, %v9807
          %v10648 = vpack.c.b16 %v9816, %v9808
          %v10649 = vpack.c.b16 %v9817, %v9809
          %v10650 = vpack.c.b16 %v9818, %v9810
          %v10651 = vpack.c.b16 %v9819, %v9811
          %v10652 = vpack.c.b16 %v9820, %v9812
          %v10653 = vpack.c.b16 %v9821, %v9813
          %v10654 = vpack.c.b16 %v9830, %v9822
          %v10655 = vpack.c.b16 %v9831, %v9823
          %v10656 = vpack.c.b16 %v9832, %v9824
          %v10657 = vpack.c.b16 %v9833, %v9825
          %v10658 = vpack.c.b16 %v9834, %v9826
          %v10659 = vpack.c.b16 %v9835, %v9827
          %v10660 = vpack.c.b16 %v9836, %v9828
          %v10661 = vpack.c.b16 %v9837, %v9829
          %v10662 = vpack.c.b16 %v9846, %v9838
          %v10663 = vpack.c.b16 %v9847, %v9839
          %v10664 = vpack.c.b16 %v9848, %v9840
          %v10665 = vpack.c.b16 %v9849, %v9841
          %v10666 = vpack.c.b16 %v9850, %v9842
          %v10667 = vpack.c.b16 %v9851, %v9843
          %v10668 = vpack.c.b16 %v9852, %v9844
          %v10669 = vpack.c.b16 %v9853, %v9845
          %v10670 = vpack.c.b16 %v9862, %v9854
          %v10671 = vpack.c.b16 %v9863, %v9855
          %v10672 = vpack.c.b16 %v9864, %v9856
          %v10673 = vpack.c.b16 %v9865, %v9857
          %v10674 = vpack.c.b16 %v9866, %v9858
          %v10675 = vpack.c.b16 %v9867, %v9859
          %v10676 = vpack.c.b16 %v9868, %v9860
          %v10677 = vpack.c.b16 %v9869, %v9861
          %v10678 = vpack.c.b16 %v9878, %v9870
          %v10679 = vpack.c.b16 %v9879, %v9871
          %v10680 = vpack.c.b16 %v9880, %v9872
          %v10681 = vpack.c.b16 %v9881, %v9873
          %v10682 = vpack.c.b16 %v9882, %v9874
          %v10683 = vpack.c.b16 %v9883, %v9875
          %v10684 = vpack.c.b16 %v9884, %v9876
          %v10685 = vpack.c.b16 %v9885, %v9877
          %v10686 = vpack.c.b16 %v9894, %v9886
          %v10687 = vpack.c.b16 %v9895, %v9887
          %v10688 = vpack.c.b16 %v9896, %v9888
          %v10689 = vpack.c.b16 %v9897, %v9889
          %v10690 = vpack.c.b16 %v9898, %v9890
          %v10691 = vpack.c.b16 %v9899, %v9891
          %v10692 = vpack.c.b16 %v9900, %v9892
          %v10693 = vpack.c.b16 %v9901, %v9893
          %v10694 = vpack.c.b16 %v9910, %v9902
          %v10695 = vpack.c.b16 %v9911, %v9903
          %v10696 = vpack.c.b16 %v9912, %v9904
          %v10697 = vpack.c.b16 %v9913, %v9905
          %v10698 = vpack.c.b16 %v9914, %v9906
          %v10699 = vpack.c.b16 %v9915, %v9907
          %v10700 = vpack.c.b16 %v9916, %v9908
          %v10701 = vpack.c.b16 %v9917, %v9909
          %v10702 = vpack.c.b16 %v9926, %v9918
          %v10703 = vpack.c.b16 %v9927, %v9919
          %v10704 = vpack.c.b16 %v9928, %v9920
          %v10705 = vpack.c.b16 %v9929, %v9921
          %v10706 = vpack.c.b16 %v9930, %v9922
          %v10707 = vpack.c.b16 %v9931, %v9923
          %v10708 = vpack.c.b16 %v9932, %v9924
          %v10709 = vpack.c.b16 %v9933, %v9925
          %v10710 = vpack.c.b16 %v9942, %v9934
          %v10711 = vpack.c.b16 %v9943, %v9935
          %v10712 = vpack.c.b16 %v9944, %v9936
          %v10713 = vpack.c.b16 %v9945, %v9937
          %v10714 = vpack.c.b16 %v9946, %v9938
          %v10715 = vpack.c.b16 %v9947, %v9939
          %v10716 = vpack.c.b16 %v9948, %v9940
          %v10717 = vpack.c.b16 %v9949, %v9941
          %v10718 = vpack.c.b16 %v9958, %v9950
          %v10719 = vpack.c.b16 %v9959, %v9951
          %v10720 = vpack.c.b16 %v9960, %v9952
          %v10721 = vpack.c.b16 %v9961, %v9953
          %v10722 = vpack.c.b16 %v9962, %v9954
          %v10723 = vpack.c.b16 %v9963, %v9955
          %v10724 = vpack.c.b16 %v9964, %v9956
          %v10725 = vpack.c.b16 %v9965, %v9957
          %v10726 = vpack.c.b16 %v9974, %v9966
          %v10727 = vpack.c.b16 %v9975, %v9967
          %v10728 = vpack.c.b16 %v9976, %v9968
          %v10729 = vpack.c.b16 %v9977, %v9969
          %v10730 = vpack.c.b16 %v9978, %v9970
          %v10731 = vpack.c.b16 %v9979, %v9971
          %v10732 = vpack.c.b16 %v9980, %v9972
          %v10733 = vpack.c.b16 %v9981, %v9973
          %v10734 = vpack.c.b16 %v9990, %v9982
          %v10735 = vpack.c.b16 %v9991, %v9983
          %v10736 = vpack.c.b16 %v9992, %v9984
          %v10737 = vpack.c.b16 %v9993, %v9985
          %v10738 = vpack.c.b16 %v9994, %v9986
          %v10739 = vpack.c.b16 %v9995, %v9987
          %v10740 = vpack.c.b16 %v9996, %v9988
          %v10741 = vpack.c.b16 %v9997, %v9989
          %v10742 = vpack.c.b16 %v10006, %v9998
          %v10743 = vpack.c.b16 %v10007, %v9999
          %v10744 = vpack.c.b16 %v10008, %v10000
          %v10745 = vpack.c.b16 %v10009, %v10001
          %v10746 = vpack.c.b16 %v10010, %v10002
          %v10747 = vpack.c.b16 %v10011, %v10003
          %v10748 = vpack.c.b16 %v10012, %v10004
          %v10749 = vpack.c.b16 %v10013, %v10005
          %v10750 = vpack.c.b16 %v10022, %v10014
          %v10751 = vpack.c.b16 %v10023, %v10015
          %v10752 = vpack.c.b16 %v10024, %v10016
          %v10753 = vpack.c.b16 %v10025, %v10017
          %v10754 = vpack.c.b16 %v10026, %v10018
          %v10755 = vpack.c.b16 %v10027, %v10019
          %v10756 = vpack.c.b16 %v10028, %v10020
          %v10757 = vpack.c.b16 %v10029, %v10021
          %v10758 = vpack.c.b16 %v10038, %v10030
          %v10759 = vpack.c.b16 %v10039, %v10031
          %v10760 = vpack.c.b16 %v10040, %v10032
          %v10761 = vpack.c.b16 %v10041, %v10033
          %v10762 = vpack.c.b16 %v10042, %v10034
          %v10763 = vpack.c.b16 %v10043, %v10035
          %v10764 = vpack.c.b16 %v10044, %v10036
          %v10765 = vpack.c.b16 %v10045, %v10037
          %v10766 = vpack.c.b16 %v10054, %v10046
          %v10767 = vpack.c.b16 %v10055, %v10047
          %v10768 = vpack.c.b16 %v10056, %v10048
          %v10769 = vpack.c.b16 %v10057, %v10049
          %v10770 = vpack.c.b16 %v10058, %v10050
          %v10771 = vpack.c.b16 %v10059, %v10051
          %v10772 = vpack.c.b16 %v10060, %v10052
          %v10773 = vpack.c.b16 %v10061, %v10053
          %v10774 = vpack.c.b16 %v10070, %v10062
          %v10775 = vpack.c.b16 %v10071, %v10063
          %v10776 = vpack.c.b16 %v10072, %v10064
          %v10777 = vpack.c.b16 %v10073, %v10065
          %v10778 = vpack.c.b16 %v10074, %v10066
          %v10779 = vpack.c.b16 %v10075, %v10067
          %v10780 = vpack.c.b16 %v10076, %v10068
          %v10781 = vpack.c.b16 %v10077, %v10069
          %v10782 = vpack.c.b16 %v10086, %v10078
          %v10783 = vpack.c.b16 %v10087, %v10079
          %v10784 = vpack.c.b16 %v10088, %v10080
          %v10785 = vpack.c.b16 %v10089, %v10081
          %v10786 = vpack.c.b16 %v10090, %v10082
          %v10787 = vpack.c.b16 %v10091, %v10083
          %v10788 = vpack.c.b16 %v10092, %v10084
          %v10789 = vpack.c.b16 %v10093, %v10085
          %v10790 = vpack.c.b16 %v10102, %v10094
          %v10791 = vpack.c.b16 %v10103, %v10095
          %v10792 = vpack.c.b16 %v10104, %v10096
          %v10793 = vpack.c.b16 %v10105, %v10097
          %v10794 = vpack.c.b16 %v10106, %v10098
          %v10795 = vpack.c.b16 %v10107, %v10099
          %v10796 = vpack.c.b16 %v10108, %v10100
          %v10797 = vpack.c.b16 %v10109, %v10101
          %v10798 = vpack.c.b16 %v10118, %v10110
          %v10799 = vpack.c.b16 %v10119, %v10111
          %v10800 = vpack.c.b16 %v10120, %v10112
          %v10801 = vpack.c.b16 %v10121, %v10113
          %v10802 = vpack.c.b16 %v10122, %v10114
          %v10803 = vpack.c.b16 %v10123, %v10115
          %v10804 = vpack.c.b16 %v10124, %v10116
          %v10805 = vpack.c.b16 %v10125, %v10117
          %v10806 = vpack.c.b16 %v10134, %v10126
          %v10807 = vpack.c.b16 %v10135, %v10127
          %v10808 = vpack.c.b16 %v10136, %v10128
          %v10809 = vpack.c.b16 %v10137, %v10129
          %v10810 = vpack.c.b16 %v10138, %v10130
          %v10811 = vpack.c.b16 %v10139, %v10131
          %v10812 = vpack.c.b16 %v10140, %v10132
          %v10813 = vpack.c.b16 %v10141, %v10133
          %v10814 = vpack.c.b16 %v10150, %v10142
          %v10815 = vpack.c.b16 %v10151, %v10143
          %v10816 = vpack.c.b16 %v10152, %v10144
          %v10817 = vpack.c.b16 %v10153, %v10145
          %v10818 = vpack.c.b16 %v10154, %v10146
          %v10819 = vpack.c.b16 %v10155, %v10147
          %v10820 = vpack.c.b16 %v10156, %v10148
          %v10821 = vpack.c.b16 %v10157, %v10149
          %v10822 = vpack.c.b16 %v10166, %v10158
          %v10823 = vpack.c.b16 %v10167, %v10159
          %v10824 = vpack.c.b16 %v10168, %v10160
          %v10825 = vpack.c.b16 %v10169, %v10161
          %v10826 = vpack.c.b16 %v10170, %v10162
          %v10827 = vpack.c.b16 %v10171, %v10163
          %v10828 = vpack.c.b16 %v10172, %v10164
          %v10829 = vpack.c.b16 %v10173, %v10165
          %v10830 = vpack.c.b16 %v10182, %v10174
          %v10831 = vpack.c.b16 %v10183, %v10175
          %v10832 = vpack.c.b16 %v10184, %v10176
          %v10833 = vpack.c.b16 %v10185, %v10177
          %v10834 = vpack.c.b16 %v10186, %v10178
          %v10835 = vpack.c.b16 %v10187, %v10179
          %v10836 = vpack.c.b16 %v10188, %v10180
          %v10837 = vpack.c.b16 %v10189, %v10181
          %v10838 = vpack.c.b16 %v10198, %v10190
          %v10839 = vpack.c.b16 %v10199, %v10191
          %v10840 = vpack.c.b16 %v10200, %v10192
          %v10841 = vpack.c.b16 %v10201, %v10193
          %v10842 = vpack.c.b16 %v10202, %v10194
          %v10843 = vpack.c.b16 %v10203, %v10195
          %v10844 = vpack.c.b16 %v10204, %v10196
          %v10845 = vpack.c.b16 %v10205, %v10197
          %v10846 = vpack.c.b16 %v10214, %v10206
          %v10847 = vpack.c.b16 %v10215, %v10207
          %v10848 = vpack.c.b16 %v10216, %v10208
          %v10849 = vpack.c.b16 %v10217, %v10209
          %v10850 = vpack.c.b16 %v10218, %v10210
          %v10851 = vpack.c.b16 %v10219, %v10211
          %v10852 = vpack.c.b16 %v10220, %v10212
          %v10853 = vpack.c.b16 %v10221, %v10213
          %v10854 = vpack.c.b16 %v10230, %v10222
          %v10855 = vpack.c.b16 %v10231, %v10223
          %v10856 = vpack.c.b16 %v10232, %v10224
          %v10857 = vpack.c.b16 %v10233, %v10225
          %v10858 = vpack.c.b16 %v10234, %v10226
          %v10859 = vpack.c.b16 %v10235, %v10227
          %v10860 = vpack.c.b16 %v10236, %v10228
          %v10861 = vpack.c.b16 %v10237, %v10229
          %v10862 = vpack.c.b16 %v10246, %v10238
          %v10863 = vpack.c.b16 %v10247, %v10239
          %v10864 = vpack.c.b16 %v10248, %v10240
          %v10865 = vpack.c.b16 %v10249, %v10241
          %v10866 = vpack.c.b16 %v10250, %v10242
          %v10867 = vpack.c.b16 %v10251, %v10243
          %v10868 = vpack.c.b16 %v10252, %v10244
          %v10869 = vpack.c.b16 %v10253, %v10245
          %v10870 = vpack.c.b16 %v10262, %v10254
          %v10871 = vpack.c.b16 %v10263, %v10255
          %v10872 = vpack.c.b16 %v10264, %v10256
          %v10873 = vpack.c.b16 %v10265, %v10257
          %v10874 = vpack.c.b16 %v10266, %v10258
          %v10875 = vpack.c.b16 %v10267, %v10259
          %v10876 = vpack.c.b16 %v10268, %v10260
          %v10877 = vpack.c.b16 %v10269, %v10261
          %v10878 = vpack.c.b16 %v10278, %v10270
          %v10879 = vpack.c.b16 %v10279, %v10271
          %v10880 = vpack.c.b16 %v10280, %v10272
          %v10881 = vpack.c.b16 %v10281, %v10273
          %v10882 = vpack.c.b16 %v10282, %v10274
          %v10883 = vpack.c.b16 %v10283, %v10275
          %v10884 = vpack.c.b16 %v10284, %v10276
          %v10885 = vpack.c.b16 %v10285, %v10277
          %v10886 = vpack.c.b16 %v10294, %v10286
          %v10887 = vpack.c.b16 %v10295, %v10287
          %v10888 = vpack.c.b16 %v10296, %v10288
          %v10889 = vpack.c.b16 %v10297, %v10289
          %v10890 = vpack.c.b16 %v10298, %v10290
          %v10891 = vpack.c.b16 %v10299, %v10291
          %v10892 = vpack.c.b16 %v10300, %v10292
          %v10893 = vpack.c.b16 %v10301, %v10293
          %v10894 = vpack.c.b16 %v10310, %v10302
          %v10895 = vpack.c.b16 %v10311, %v10303
          %v10896 = vpack.c.b16 %v10312, %v10304
          %v10897 = vpack.c.b16 %v10313, %v10305
          %v10898 = vpack.c.b16 %v10314, %v10306
          %v10899 = vpack.c.b16 %v10315, %v10307
          %v10900 = vpack.c.b16 %v10316, %v10308
          %v10901 = vpack.c.b16 %v10317, %v10309
          %v10902 = vpack.c.b16 %v10326, %v10318
          %v10903 = vpack.c.b16 %v10327, %v10319
          %v10904 = vpack.c.b16 %v10328, %v10320
          %v10905 = vpack.c.b16 %v10329, %v10321
          %v10906 = vpack.c.b16 %v10330, %v10322
          %v10907 = vpack.c.b16 %v10331, %v10323
          %v10908 = vpack.c.b16 %v10332, %v10324
          %v10909 = vpack.c.b16 %v10333, %v10325
          %v10910 = vpack.c.b16 %v10342, %v10334
          %v10911 = vpack.c.b16 %v10343, %v10335
          %v10912 = vpack.c.b16 %v10344, %v10336
          %v10913 = vpack.c.b16 %v10345, %v10337
          %v10914 = vpack.c.b16 %v10346, %v10338
          %v10915 = vpack.c.b16 %v10347, %v10339
          %v10916 = vpack.c.b16 %v10348, %v10340
          %v10917 = vpack.c.b16 %v10349, %v10341
          %v10918 = vpack.c.b16 %v10358, %v10350
          %v10919 = vpack.c.b16 %v10359, %v10351
          %v10920 = vpack.c.b16 %v10360, %v10352
          %v10921 = vpack.c.b16 %v10361, %v10353
          %v10922 = vpack.c.b16 %v10362, %v10354
          %v10923 = vpack.c.b16 %v10363, %v10355
          %v10924 = vpack.c.b16 %v10364, %v10356
          %v10925 = vpack.c.b16 %v10365, %v10357
          %v10926 = vpack.c.b16 %v10374, %v10366
          %v10927 = vpack.c.b16 %v10375, %v10367
          %v10928 = vpack.c.b16 %v10376, %v10368
          %v10929 = vpack.c.b16 %v10377, %v10369
          %v10930 = vpack.c.b16 %v10378, %v10370
          %v10931 = vpack.c.b16 %v10379, %v10371
          %v10932 = vpack.c.b16 %v10380, %v10372
          %v10933 = vpack.c.b16 %v10381, %v10373
          %v10934 = vpack.c.b16 %v10390, %v10382
          %v10935 = vpack.c.b16 %v10391, %v10383
          %v10936 = vpack.c.b16 %v10392, %v10384
          %v10937 = vpack.c.b16 %v10393, %v10385
          %v10938 = vpack.c.b16 %v10394, %v10386
          %v10939 = vpack.c.b16 %v10395, %v10387
          %v10940 = vpack.c.b16 %v10396, %v10388
          %v10941 = vpack.c.b16 %v10397, %v10389
          %v10942 = vpack.c.b16 %v10406, %v10398
          %v10943 = vpack.c.b16 %v10407, %v10399
          %v10944 = vpack.c.b16 %v10408, %v10400
          %v10945 = vpack.c.b16 %v10409, %v10401
          %v10946 = vpack.c.b16 %v10410, %v10402
          %v10947 = vpack.c.b16 %v10411, %v10403
          %v10948 = vpack.c.b16 %v10412, %v10404
          %v10949 = vpack.c.b16 %v10413, %v10405
          %v10950 = vpack.c.b16 %v10422, %v10414
          %v10951 = vpack.c.b16 %v10423, %v10415
          %v10952 = vpack.c.b16 %v10424, %v10416
          %v10953 = vpack.c.b16 %v10425, %v10417
          %v10954 = vpack.c.b16 %v10426, %v10418
          %v10955 = vpack.c.b16 %v10427, %v10419
          %v10956 = vpack.c.b16 %v10428, %v10420
          %v10957 = vpack.c.b16 %v10429, %v10421
          %v10958 = vpack.c.b16 %v10438, %v10430
          %v10959 = vpack.c.b16 %v10439, %v10431
          %v10960 = vpack.c.b16 %v10440, %v10432
          %v10961 = vpack.c.b16 %v10441, %v10433
          %v10962 = vpack.c.b16 %v10442, %v10434
          %v10963 = vpack.c.b16 %v10443, %v10435
          %v10964 = vpack.c.b16 %v10444, %v10436
          %v10965 = vpack.c.b16 %v10445, %v10437
          %v10966 = vpack.c.b16 %v10454, %v10446
          %v10967 = vpack.c.b16 %v10455, %v10447
          %v10968 = vpack.c.b16 %v10456, %v10448
          %v10969 = vpack.c.b16 %v10457, %v10449
          %v10970 = vpack.c.b16 %v10458, %v10450
          %v10971 = vpack.c.b16 %v10459, %v10451
          %v10972 = vpack.c.b16 %v10460, %v10452
          %v10973 = vpack.c.b16 %v10461, %v10453
          %11486 = vmatprep.subr.bf16.mxu0 %v10463
          %11487 = vmatpush1.bf16.msra.mxu0 %v10462
          %11488 = vmatprep.subr.bf16.mxu0 %v10471
          %11489 = vmatpush1.bf16.msra.mxu0 %v10470
          %11490 = vmatprep.subr.bf16.mxu0 %v10479
          %11491 = vmatpush1.bf16.msra.mxu0 %v10478
          %11492 = vmatprep.subr.bf16.mxu0 %v10487
          %11493 = vmatpush1.bf16.msra.mxu0 %v10486
          %11494 = vmatprep.subr.bf16.mxu0 %v10495
          %11495 = vmatpush1.bf16.msra.mxu0 %v10494
          %11496 = vmatprep.subr.bf16.mxu0 %v10503
          %11497 = vmatpush1.bf16.msra.mxu0 %v10502
          %11498 = vmatprep.subr.bf16.mxu0 %v10511
          %11499 = vmatpush1.bf16.msra.mxu0 %v10510
          %11500 = vmatprep.subr.bf16.mxu0 %v10519
          %11501 = vmatpush1.bf16.msra.mxu0 %v10518
          %11502 = vmatprep.subr.bf16.mxu0 %v10527
          %11503 = vmatpush1.bf16.msra.mxu0 %v10526
          %11504 = vmatprep.subr.bf16.mxu0 %v10535
          %11505 = vmatpush1.bf16.msra.mxu0 %v10534
          %11506 = vmatprep.subr.bf16.mxu0 %v10543
          %11507 = vmatpush1.bf16.msra.mxu0 %v10542
          %11508 = vmatprep.subr.bf16.mxu0 %v10551
          %11509 = vmatpush1.bf16.msra.mxu0 %v10550
          %11510 = vmatprep.subr.bf16.mxu0 %v10559
          %11511 = vmatpush1.bf16.msra.mxu0 %v10558
          %11512 = vmatprep.subr.bf16.mxu0 %v10567
          %11513 = vmatpush1.bf16.msra.mxu0 %v10566
          %11514 = vmatprep.subr.bf16.mxu0 %v10575
          %11515 = vmatpush1.bf16.msra.mxu0 %v10574
          %11516 = vmatprep.subr.bf16.mxu0 %v10583
          %11517 = vmatpush1.bf16.msra.mxu0 %v10582
          %11518 = vmatprep.mubr.bf16.mxu0 %v8407
          %11519 = vmatmul.mubr.bf16.gmra.mrb[0].mxu0 %v8406
          %v11520 = vpop.f32.mrb[0].mxu0
          %v11521 = vadd.f32 0.0, %v11520
          %v11522 = vpop.f32.mrb[0].mxu0
          %v11523 = vadd.f32 0.0, %v11522
          %v11524 = vpop.f32.mrb[0].mxu0
          %v11525 = vpop.f32.mrb[0].mxu0
          %11526 = vdwg.mxu0
          %11527 = vmatprep.subr.bf16.mxu0 %v10591
          %11528 = vmatpush1.bf16.msra.mxu0 %v10590
          %11529 = vmatprep.subr.bf16.mxu0 %v10599
          %11530 = vmatpush1.bf16.msra.mxu0 %v10598
          %11531 = vmatprep.subr.bf16.mxu0 %v10607
          %11532 = vmatpush1.bf16.msra.mxu0 %v10606
          %11533 = vmatprep.subr.bf16.mxu0 %v10615
          %11534 = vmatpush1.bf16.msra.mxu0 %v10614
          %11535 = vmatprep.subr.bf16.mxu0 %v10623
          %11536 = vmatpush1.bf16.msra.mxu0 %v10622
          %11537 = vmatprep.subr.bf16.mxu0 %v10631
          %11538 = vmatpush1.bf16.msra.mxu0 %v10630
          %11539 = vmatprep.subr.bf16.mxu0 %v10639
          %11540 = vmatpush1.bf16.msra.mxu0 %v10638
          %11541 = vmatprep.subr.bf16.mxu0 %v10647
          %11542 = vmatpush1.bf16.msra.mxu0 %v10646
          %11543 = vmatprep.subr.bf16.mxu0 %v10655
          %11544 = vmatpush1.bf16.msra.mxu0 %v10654
          %11545 = vmatprep.subr.bf16.mxu0 %v10663
          %11546 = vmatpush1.bf16.msra.mxu0 %v10662
          %11547 = vmatprep.subr.bf16.mxu0 %v10671
          %11548 = vmatpush1.bf16.msra.mxu0 %v10670
          %11549 = vmatprep.subr.bf16.mxu0 %v10679
          %11550 = vmatpush1.bf16.msra.mxu0 %v10678
          %11551 = vmatprep.subr.bf16.mxu0 %v10687
          %11552 = vmatpush1.bf16.msra.mxu0 %v10686
          %11553 = vmatprep.subr.bf16.mxu0 %v10695
          %11554 = vmatpush1.bf16.msra.mxu0 %v10694
          %11555 = vmatprep.subr.bf16.mxu0 %v10703
          %11556 = vmatpush1.bf16.msra.mxu0 %v10702
          %11557 = vmatprep.subr.bf16.mxu0 %v10711
          %11558 = vmatpush1.bf16.msra.mxu0 %v10710
          %11559 = vmatprep.mubr.bf16.mxu0 %v8409
          %11560 = vmatmul.mubr.bf16.gmra.mrb[0].mxu0 %v8408
          %v11561 = vpop.f32.mrb[0].mxu0
          %v11562 = vadd.f32 %v11521, %v11561
          %v11563 = vpop.f32.mrb[0].mxu0
          %v11564 = vadd.f32 %v11523, %v11563
          %v11565 = vpop.f32.mrb[0].mxu0
          %v11566 = vpop.f32.mrb[0].mxu0
          %11567 = vdwg.mxu0
          %11568 = vmatprep.subr.bf16.mxu0 %v10719
          %11569 = vmatpush1.bf16.msra.mxu0 %v10718
          %11570 = vmatprep.subr.bf16.mxu0 %v10727
          %11571 = vmatpush1.bf16.msra.mxu0 %v10726
          %11572 = vmatprep.subr.bf16.mxu0 %v10735
          %11573 = vmatpush1.bf16.msra.mxu0 %v10734
          %11574 = vmatprep.subr.bf16.mxu0 %v10743
          %11575 = vmatpush1.bf16.msra.mxu0 %v10742
          %11576 = vmatprep.subr.bf16.mxu0 %v10751
          %11577 = vmatpush1.bf16.msra.mxu0 %v10750
          %11578 = vmatprep.subr.bf16.mxu0 %v10759
          %11579 = vmatpush1.bf16.msra.mxu0 %v10758
          %11580 = vmatprep.subr.bf16.mxu0 %v10767
          %11581 = vmatpush1.bf16.msra.mxu0 %v10766
          %11582 = vmatprep.subr.bf16.mxu0 %v10775
          %11583 = vmatpush1.bf16.msra.mxu0 %v10774
          %11584 = vmatprep.subr.bf16.mxu0 %v10783
          %11585 = vmatpush1.bf16.msra.mxu0 %v10782
          %11586 = vmatprep.subr.bf16.mxu0 %v10791
          %11587 = vmatpush1.bf16.msra.mxu0 %v10790
          %11588 = vmatprep.subr.bf16.mxu0 %v10799
          %11589 = vmatpush1.bf16.msra.mxu0 %v10798
          %11590 = vmatprep.subr.bf16.mxu0 %v10807
          %11591 = vmatpush1.bf16.msra.mxu0 %v10806
          %11592 = vmatprep.subr.bf16.mxu0 %v10815
          %11593 = vmatpush1.bf16.msra.mxu0 %v10814
          %11594 = vmatprep.subr.bf16.mxu0 %v10823
          %11595 = vmatpush1.bf16.msra.mxu0 %v10822
          %11596 = vmatprep.subr.bf16.mxu0 %v10831
          %11597 = vmatpush1.bf16.msra.mxu0 %v10830
          %11598 = vmatprep.subr.bf16.mxu0 %v10839
          %11599 = vmatpush1.bf16.msra.mxu0 %v10838
          %11600 = vmatprep.mubr.bf16.mxu0 %v8411
          %11601 = vmatmul.mubr.bf16.gmra.mrb[0].mxu0 %v8410
          %v11602 = vpop.f32.mrb[0].mxu0
          %v11603 = vadd.f32 %v11562, %v11602
          %v11604 = vpop.f32.mrb[0].mxu0
          %v11605 = vadd.f32 %v11564, %v11604
          %v11606 = vpop.f32.mrb[0].mxu0
          %v11607 = vpop.f32.mrb[0].mxu0
          %11608 = vdwg.mxu0
          %11609 = vmatprep.subr.bf16.mxu0 %v10847
          %11610 = vmatpush1.bf16.msra.mxu0 %v10846
          %11611 = vmatprep.subr.bf16.mxu0 %v10855
          %11612 = vmatpush1.bf16.msra.mxu0 %v10854
          %11613 = vmatprep.subr.bf16.mxu0 %v10863
          %11614 = vmatpush1.bf16.msra.mxu0 %v10862
          %11615 = vmatprep.subr.bf16.mxu0 %v10871
          %11616 = vmatpush1.bf16.msra.mxu0 %v10870
          %11617 = vmatprep.subr.bf16.mxu0 %v10879
          %11618 = vmatpush1.bf16.msra.mxu0 %v10878
          %11619 = vmatprep.subr.bf16.mxu0 %v10887
          %11620 = vmatpush1.bf16.msra.mxu0 %v10886
          %11621 = vmatprep.subr.bf16.mxu0 %v10895
          %11622 = vmatpush1.bf16.msra.mxu0 %v10894
          %11623 = vmatprep.subr.bf16.mxu0 %v10903
          %11624 = vmatpush1.bf16.msra.mxu0 %v10902
          %11625 = vmatprep.subr.bf16.mxu0 %v10911
          %11626 = vmatpush1.bf16.msra.mxu0 %v10910
          %11627 = vmatprep.subr.bf16.mxu0 %v10919
          %11628 = vmatpush1.bf16.msra.mxu0 %v10918
          %11629 = vmatprep.subr.bf16.mxu0 %v10927
          %11630 = vmatpush1.bf16.msra.mxu0 %v10926
          %11631 = vmatprep.subr.bf16.mxu0 %v10935
          %11632 = vmatpush1.bf16.msra.mxu0 %v10934
          %11633 = vmatprep.subr.bf16.mxu0 %v10943
          %11634 = vmatpush1.bf16.msra.mxu0 %v10942
          %11635 = vmatprep.subr.bf16.mxu0 %v10951
          %11636 = vmatpush1.bf16.msra.mxu0 %v10950
          %11637 = vmatprep.subr.bf16.mxu0 %v10959
          %11638 = vmatpush1.bf16.msra.mxu0 %v10958
          %11639 = vmatprep.subr.bf16.mxu0 %v10967
          %11640 = vmatpush1.bf16.msra.mxu0 %v10966
          %11641 = vmatprep.mubr.bf16.mxu0 %v8413
          %11642 = vmatmul.mubr.bf16.gmra.mrb[0].mxu0 %v8412
          %v11643 = vpop.f32.mrb[0].mxu0
          %v11644 = vadd.f32 %v11603, %v11643
          %v11645 = vpop.f32.mrb[0].mxu0
          %v11646 = vadd.f32 %v11605, %v11645
          %v11647 = vpop.f32.mrb[0].mxu0
          %v11648 = vpop.f32.mrb[0].mxu0
          %11649 = vdwg.mxu0
          %11650 = vmatprep.subr.bf16.mxu0 %v10465
          %11651 = vmatpush1.bf16.msra.mxu0 %v10464
          %11652 = vmatprep.subr.bf16.mxu0 %v10473
          %11653 = vmatpush1.bf16.msra.mxu0 %v10472
          %11654 = vmatprep.subr.bf16.mxu0 %v10481
          %11655 = vmatpush1.bf16.msra.mxu0 %v10480
          %11656 = vmatprep.subr.bf16.mxu0 %v10489
          %11657 = vmatpush1.bf16.msra.mxu0 %v10488
          %11658 = vmatprep.subr.bf16.mxu0 %v10497
          %11659 = vmatpush1.bf16.msra.mxu0 %v10496
          %11660 = vmatprep.subr.bf16.mxu0 %v10505
          %11661 = vmatpush1.bf16.msra.mxu0 %v10504
          %11662 = vmatprep.subr.bf16.mxu0 %v10513
          %11663 = vmatpush1.bf16.msra.mxu0 %v10512
          %11664 = vmatprep.subr.bf16.mxu0 %v10521
          %11665 = vmatpush1.bf16.msra.mxu0 %v10520
          %11666 = vmatprep.subr.bf16.mxu0 %v10529
          %11667 = vmatpush1.bf16.msra.mxu0 %v10528
          %11668 = vmatprep.subr.bf16.mxu0 %v10537
          %11669 = vmatpush1.bf16.msra.mxu0 %v10536
          %11670 = vmatprep.subr.bf16.mxu0 %v10545
          %11671 = vmatpush1.bf16.msra.mxu0 %v10544
          %11672 = vmatprep.subr.bf16.mxu0 %v10553
          %11673 = vmatpush1.bf16.msra.mxu0 %v10552
          %11674 = vmatprep.subr.bf16.mxu0 %v10561
          %11675 = vmatpush1.bf16.msra.mxu0 %v10560
          %11676 = vmatprep.subr.bf16.mxu0 %v10569
          %11677 = vmatpush1.bf16.msra.mxu0 %v10568
          %11678 = vmatprep.subr.bf16.mxu0 %v10577
          %11679 = vmatpush1.bf16.msra.mxu0 %v10576
          %11680 = vmatprep.subr.bf16.mxu0 %v10585
          %11681 = vmatpush1.bf16.msra.mxu0 %v10584
          %11682 = vmatprep.mubr.bf16.mxu0 %v8407
          %11683 = vmatmul.mubr.bf16.gmra.mrb[0].mxu0 %v8406
          %v11684 = vpop.f32.mrb[0].mxu0
          %v11685 = vadd.f32 0.0, %v11684
          %v11686 = vpop.f32.mrb[0].mxu0
          %v11687 = vadd.f32 0.0, %v11686
          %v11688 = vpop.f32.mrb[0].mxu0
          %v11689 = vpop.f32.mrb[0].mxu0
          %11690 = vdwg.mxu0
          %11691 = vmatprep.subr.bf16.mxu0 %v10593
          %11692 = vmatpush1.bf16.msra.mxu0 %v10592
          %11693 = vmatprep.subr.bf16.mxu0 %v10601
          %11694 = vmatpush1.bf16.msra.mxu0 %v10600
          %11695 = vmatprep.subr.bf16.mxu0 %v10609
          %11696 = vmatpush1.bf16.msra.mxu0 %v10608
          %11697 = vmatprep.subr.bf16.mxu0 %v10617
          %11698 = vmatpush1.bf16.msra.mxu0 %v10616
          %11699 = vmatprep.subr.bf16.mxu0 %v10625
          %11700 = vmatpush1.bf16.msra.mxu0 %v10624
          %11701 = vmatprep.subr.bf16.mxu0 %v10633
          %11702 = vmatpush1.bf16.msra.mxu0 %v10632
          %11703 = vmatprep.subr.bf16.mxu0 %v10641
          %11704 = vmatpush1.bf16.msra.mxu0 %v10640
          %11705 = vmatprep.subr.bf16.mxu0 %v10649
          %11706 = vmatpush1.bf16.msra.mxu0 %v10648
          %11707 = vmatprep.subr.bf16.mxu0 %v10657
          %11708 = vmatpush1.bf16.msra.mxu0 %v10656
          %11709 = vmatprep.subr.bf16.mxu0 %v10665
          %11710 = vmatpush1.bf16.msra.mxu0 %v10664
          %11711 = vmatprep.subr.bf16.mxu0 %v10673
          %11712 = vmatpush1.bf16.msra.mxu0 %v10672
          %11713 = vmatprep.subr.bf16.mxu0 %v10681
          %11714 = vmatpush1.bf16.msra.mxu0 %v10680
          %11715 = vmatprep.subr.bf16.mxu0 %v10689
          %11716 = vmatpush1.bf16.msra.mxu0 %v10688
          %11717 = vmatprep.subr.bf16.mxu0 %v10697
          %11718 = vmatpush1.bf16.msra.mxu0 %v10696
          %11719 = vmatprep.subr.bf16.mxu0 %v10705
          %11720 = vmatpush1.bf16.msra.mxu0 %v10704
          %11721 = vmatprep.subr.bf16.mxu0 %v10713
          %11722 = vmatpush1.bf16.msra.mxu0 %v10712
          %11723 = vmatprep.mubr.bf16.mxu0 %v8409
          %11724 = vmatmul.mubr.bf16.gmra.mrb[0].mxu0 %v8408
          %v11725 = vpop.f32.mrb[0].mxu0
          %v11726 = vadd.f32 %v11685, %v11725
          %v11727 = vpop.f32.mrb[0].mxu0
          %v11728 = vadd.f32 %v11687, %v11727
          %v11729 = vpop.f32.mrb[0].mxu0
          %v11730 = vpop.f32.mrb[0].mxu0
          %11731 = vdwg.mxu0
          %11732 = vmatprep.subr.bf16.mxu0 %v10721
          %11733 = vmatpush1.bf16.msra.mxu0 %v10720
          %11734 = vmatprep.subr.bf16.mxu0 %v10729
          %11735 = vmatpush1.bf16.msra.mxu0 %v10728
          %11736 = vmatprep.subr.bf16.mxu0 %v10737
          %11737 = vmatpush1.bf16.msra.mxu0 %v10736
          %11738 = vmatprep.subr.bf16.mxu0 %v10745
          %11739 = vmatpush1.bf16.msra.mxu0 %v10744
          %11740 = vmatprep.subr.bf16.mxu0 %v10753
          %11741 = vmatpush1.bf16.msra.mxu0 %v10752
          %11742 = vmatprep.subr.bf16.mxu0 %v10761
          %11743 = vmatpush1.bf16.msra.mxu0 %v10760
          %11744 = vmatprep.subr.bf16.mxu0 %v10769
          %11745 = vmatpush1.bf16.msra.mxu0 %v10768
          %11746 = vmatprep.subr.bf16.mxu0 %v10777
          %11747 = vmatpush1.bf16.msra.mxu0 %v10776
          %11748 = vmatprep.subr.bf16.mxu0 %v10785
          %11749 = vmatpush1.bf16.msra.mxu0 %v10784
          %11750 = vmatprep.subr.bf16.mxu0 %v10793
          %11751 = vmatpush1.bf16.msra.mxu0 %v10792
          %11752 = vmatprep.subr.bf16.mxu0 %v10801
          %11753 = vmatpush1.bf16.msra.mxu0 %v10800
          %11754 = vmatprep.subr.bf16.mxu0 %v10809
          %11755 = vmatpush1.bf16.msra.mxu0 %v10808
          %11756 = vmatprep.subr.bf16.mxu0 %v10817
          %11757 = vmatpush1.bf16.msra.mxu0 %v10816
          %11758 = vmatprep.subr.bf16.mxu0 %v10825
          %11759 = vmatpush1.bf16.msra.mxu0 %v10824
          %11760 = vmatprep.subr.bf16.mxu0 %v10833
          %11761 = vmatpush1.bf16.msra.mxu0 %v10832
          %11762 = vmatprep.subr.bf16.mxu0 %v10841
          %11763 = vmatpush1.bf16.msra.mxu0 %v10840
          %11764 = vmatprep.mubr.bf16.mxu0 %v8411
          %11765 = vmatmul.mubr.bf16.gmra.mrb[0].mxu0 %v8410
          %v11766 = vpop.f32.mrb[0].mxu0
          %v11767 = vadd.f32 %v11726, %v11766
          %v11768 = vpop.f32.mrb[0].mxu0
          %v11769 = vadd.f32 %v11728, %v11768
          %v11770 = vpop.f32.mrb[0].mxu0
          %v11771 = vpop.f32.mrb[0].mxu0
          %11772 = vdwg.mxu0
          %11773 = vmatprep.subr.bf16.mxu0 %v10849
          %11774 = vmatpush1.bf16.msra.mxu0 %v10848
          %11775 = vmatprep.subr.bf16.mxu0 %v10857
          %11776 = vmatpush1.bf16.msra.mxu0 %v10856
          %11777 = vmatprep.subr.bf16.mxu0 %v10865
          %11778 = vmatpush1.bf16.msra.mxu0 %v10864
          %11779 = vmatprep.subr.bf16.mxu0 %v10873
          %11780 = vmatpush1.bf16.msra.mxu0 %v10872
          %11781 = vmatprep.subr.bf16.mxu0 %v10881
          %11782 = vmatpush1.bf16.msra.mxu0 %v10880
          %11783 = vmatprep.subr.bf16.mxu0 %v10889
          %11784 = vmatpush1.bf16.msra.mxu0 %v10888
          %11785 = vmatprep.subr.bf16.mxu0 %v10897
          %11786 = vmatpush1.bf16.msra.mxu0 %v10896
          %11787 = vmatprep.subr.bf16.mxu0 %v10905
          %11788 = vmatpush1.bf16.msra.mxu0 %v10904
          %11789 = vmatprep.subr.bf16.mxu0 %v10913
          %11790 = vmatpush1.bf16.msra.mxu0 %v10912
          %11791 = vmatprep.subr.bf16.mxu0 %v10921
          %11792 = vmatpush1.bf16.msra.mxu0 %v10920
          %11793 = vmatprep.subr.bf16.mxu0 %v10929
          %11794 = vmatpush1.bf16.msra.mxu0 %v10928
          %11795 = vmatprep.subr.bf16.mxu0 %v10937
          %11796 = vmatpush1.bf16.msra.mxu0 %v10936
          %11797 = vmatprep.subr.bf16.mxu0 %v10945
          %11798 = vmatpush1.bf16.msra.mxu0 %v10944
          %11799 = vmatprep.subr.bf16.mxu0 %v10953
          %11800 = vmatpush1.bf16.msra.mxu0 %v10952
          %11801 = vmatprep.subr.bf16.mxu0 %v10961
          %11802 = vmatpush1.bf16.msra.mxu0 %v10960
          %11803 = vmatprep.subr.bf16.mxu0 %v10969
          %11804 = vmatpush1.bf16.msra.mxu0 %v10968
          %11805 = vmatprep.mubr.bf16.mxu0 %v8413
          %11806 = vmatmul.mubr.bf16.gmra.mrb[0].mxu0 %v8412
          %v11807 = vpop.f32.mrb[0].mxu0
          %v11808 = vadd.f32 %v11767, %v11807
          %v11809 = vpop.f32.mrb[0].mxu0
          %v11810 = vadd.f32 %v11769, %v11809
          %v11811 = vpop.f32.mrb[0].mxu0
          %v11812 = vpop.f32.mrb[0].mxu0
          %11813 = vdwg.mxu0
          %11814 = vmatprep.subr.bf16.mxu0 %v10467
          %11815 = vmatpush1.bf16.msra.mxu0 %v10466
          %11816 = vmatprep.subr.bf16.mxu0 %v10475
          %11817 = vmatpush1.bf16.msra.mxu0 %v10474
          %11818 = vmatprep.subr.bf16.mxu0 %v10483
          %11819 = vmatpush1.bf16.msra.mxu0 %v10482
          %11820 = vmatprep.subr.bf16.mxu0 %v10491
          %11821 = vmatpush1.bf16.msra.mxu0 %v10490
          %11822 = vmatprep.subr.bf16.mxu0 %v10499
          %11823 = vmatpush1.bf16.msra.mxu0 %v10498
          %11824 = vmatprep.subr.bf16.mxu0 %v10507
          %11825 = vmatpush1.bf16.msra.mxu0 %v10506
          %11826 = vmatprep.subr.bf16.mxu0 %v10515
          %11827 = vmatpush1.bf16.msra.mxu0 %v10514
          %11828 = vmatprep.subr.bf16.mxu0 %v10523
          %11829 = vmatpush1.bf16.msra.mxu0 %v10522
          %11830 = vmatprep.subr.bf16.mxu0 %v10531
          %11831 = vmatpush1.bf16.msra.mxu0 %v10530
          %11832 = vmatprep.subr.bf16.mxu0 %v10539
          %11833 = vmatpush1.bf16.msra.mxu0 %v10538
          %11834 = vmatprep.subr.bf16.mxu0 %v10547
          %11835 = vmatpush1.bf16.msra.mxu0 %v10546
          %11836 = vmatprep.subr.bf16.mxu0 %v10555
          %11837 = vmatpush1.bf16.msra.mxu0 %v10554
          %11838 = vmatprep.subr.bf16.mxu0 %v10563
          %11839 = vmatpush1.bf16.msra.mxu0 %v10562
          %11840 = vmatprep.subr.bf16.mxu0 %v10571
          %11841 = vmatpush1.bf16.msra.mxu0 %v10570
          %11842 = vmatprep.subr.bf16.mxu0 %v10579
          %11843 = vmatpush1.bf16.msra.mxu0 %v10578
          %11844 = vmatprep.subr.bf16.mxu0 %v10587
          %11845 = vmatpush1.bf16.msra.mxu0 %v10586
          %11846 = vmatprep.mubr.bf16.mxu0 %v8407
          %11847 = vmatmul.mubr.bf16.gmra.mrb[0].mxu0 %v8406
          %v11848 = vpop.f32.mrb[0].mxu0
          %v11849 = vadd.f32 0.0, %v11848
          %v11850 = vpop.f32.mrb[0].mxu0
          %v11851 = vadd.f32 0.0, %v11850
          %v11852 = vpop.f32.mrb[0].mxu0
          %v11853 = vpop.f32.mrb[0].mxu0
          %11854 = vdwg.mxu0
          %11855 = vmatprep.subr.bf16.mxu0 %v10595
          %11856 = vmatpush1.bf16.msra.mxu0 %v10594
          %11857 = vmatprep.subr.bf16.mxu0 %v10603
          %11858 = vmatpush1.bf16.msra.mxu0 %v10602
          %11859 = vmatprep.subr.bf16.mxu0 %v10611
          %11860 = vmatpush1.bf16.msra.mxu0 %v10610
          %11861 = vmatprep.subr.bf16.mxu0 %v10619
          %11862 = vmatpush1.bf16.msra.mxu0 %v10618
          %11863 = vmatprep.subr.bf16.mxu0 %v10627
          %11864 = vmatpush1.bf16.msra.mxu0 %v10626
          %11865 = vmatprep.subr.bf16.mxu0 %v10635
          %11866 = vmatpush1.bf16.msra.mxu0 %v10634
          %11867 = vmatprep.subr.bf16.mxu0 %v10643
          %11868 = vmatpush1.bf16.msra.mxu0 %v10642
          %11869 = vmatprep.subr.bf16.mxu0 %v10651
          %11870 = vmatpush1.bf16.msra.mxu0 %v10650
          %11871 = vmatprep.subr.bf16.mxu0 %v10659
          %11872 = vmatpush1.bf16.msra.mxu0 %v10658
          %11873 = vmatprep.subr.bf16.mxu0 %v10667
          %11874 = vmatpush1.bf16.msra.mxu0 %v10666
          %11875 = vmatprep.subr.bf16.mxu0 %v10675
          %11876 = vmatpush1.bf16.msra.mxu0 %v10674
          %11877 = vmatprep.subr.bf16.mxu0 %v10683
          %11878 = vmatpush1.bf16.msra.mxu0 %v10682
          %11879 = vmatprep.subr.bf16.mxu0 %v10691
          %11880 = vmatpush1.bf16.msra.mxu0 %v10690
          %11881 = vmatprep.subr.bf16.mxu0 %v10699
          %11882 = vmatpush1.bf16.msra.mxu0 %v10698
          %11883 = vmatprep.subr.bf16.mxu0 %v10707
          %11884 = vmatpush1.bf16.msra.mxu0 %v10706
          %11885 = vmatprep.subr.bf16.mxu0 %v10715
          %11886 = vmatpush1.bf16.msra.mxu0 %v10714
          %11887 = vmatprep.mubr.bf16.mxu0 %v8409
          %11888 = vmatmul.mubr.bf16.gmra.mrb[0].mxu0 %v8408
          %v11889 = vpop.f32.mrb[0].mxu0
          %v11890 = vadd.f32 %v11849, %v11889
          %v11891 = vpop.f32.mrb[0].mxu0
          %v11892 = vadd.f32 %v11851, %v11891
          %v11893 = vpop.f32.mrb[0].mxu0
          %v11894 = vpop.f32.mrb[0].mxu0
          %11895 = vdwg.mxu0
          %11896 = vmatprep.subr.bf16.mxu0 %v10723
          %11897 = vmatpush1.bf16.msra.mxu0 %v10722
          %11898 = vmatprep.subr.bf16.mxu0 %v10731
          %11899 = vmatpush1.bf16.msra.mxu0 %v10730
          %11900 = vmatprep.subr.bf16.mxu0 %v10739
          %11901 = vmatpush1.bf16.msra.mxu0 %v10738
          %11902 = vmatprep.subr.bf16.mxu0 %v10747
          %11903 = vmatpush1.bf16.msra.mxu0 %v10746
          %11904 = vmatprep.subr.bf16.mxu0 %v10755
          %11905 = vmatpush1.bf16.msra.mxu0 %v10754
          %11906 = vmatprep.subr.bf16.mxu0 %v10763
          %11907 = vmatpush1.bf16.msra.mxu0 %v10762
          %11908 = vmatprep.subr.bf16.mxu0 %v10771
          %11909 = vmatpush1.bf16.msra.mxu0 %v10770
          %11910 = vmatprep.subr.bf16.mxu0 %v10779
          %11911 = vmatpush1.bf16.msra.mxu0 %v10778
          %11912 = vmatprep.subr.bf16.mxu0 %v10787
          %11913 = vmatpush1.bf16.msra.mxu0 %v10786
          %11914 = vmatprep.subr.bf16.mxu0 %v10795
          %11915 = vmatpush1.bf16.msra.mxu0 %v10794
          %11916 = vmatprep.subr.bf16.mxu0 %v10803
          %11917 = vmatpush1.bf16.msra.mxu0 %v10802
          %11918 = vmatprep.subr.bf16.mxu0 %v10811
          %11919 = vmatpush1.bf16.msra.mxu0 %v10810
          %11920 = vmatprep.subr.bf16.mxu0 %v10819
          %11921 = vmatpush1.bf16.msra.mxu0 %v10818
          %11922 = vmatprep.subr.bf16.mxu0 %v10827
          %11923 = vmatpush1.bf16.msra.mxu0 %v10826
          %11924 = vmatprep.subr.bf16.mxu0 %v10835
          %11925 = vmatpush1.bf16.msra.mxu0 %v10834
          %11926 = vmatprep.subr.bf16.mxu0 %v10843
          %11927 = vmatpush1.bf16.msra.mxu0 %v10842
          %11928 = vmatprep.mubr.bf16.mxu0 %v8411
          %11929 = vmatmul.mubr.bf16.gmra.mrb[0].mxu0 %v8410
          %v11930 = vpop.f32.mrb[0].mxu0
          %v11931 = vadd.f32 %v11890, %v11930
          %v11932 = vpop.f32.mrb[0].mxu0
          %v11933 = vadd.f32 %v11892, %v11932
          %v11934 = vpop.f32.mrb[0].mxu0
          %v11935 = vpop.f32.mrb[0].mxu0
          %11936 = vdwg.mxu0
          %11937 = vmatprep.subr.bf16.mxu0 %v10851
          %11938 = vmatpush1.bf16.msra.mxu0 %v10850
          %11939 = vmatprep.subr.bf16.mxu0 %v10859
          %11940 = vmatpush1.bf16.msra.mxu0 %v10858
          %11941 = vmatprep.subr.bf16.mxu0 %v10867
          %11942 = vmatpush1.bf16.msra.mxu0 %v10866
          %11943 = vmatprep.subr.bf16.mxu0 %v10875
          %11944 = vmatpush1.bf16.msra.mxu0 %v10874
          %11945 = vmatprep.subr.bf16.mxu0 %v10883
          %11946 = vmatpush1.bf16.msra.mxu0 %v10882
          %11947 = vmatprep.subr.bf16.mxu0 %v10891
          %11948 = vmatpush1.bf16.msra.mxu0 %v10890
          %11949 = vmatprep.subr.bf16.mxu0 %v10899
          %11950 = vmatpush1.bf16.msra.mxu0 %v10898
          %11951 = vmatprep.subr.bf16.mxu0 %v10907
          %11952 = vmatpush1.bf16.msra.mxu0 %v10906
          %11953 = vmatprep.subr.bf16.mxu0 %v10915
          %11954 = vmatpush1.bf16.msra.mxu0 %v10914
          %11955 = vmatprep.subr.bf16.mxu0 %v10923
          %11956 = vmatpush1.bf16.msra.mxu0 %v10922
          %11957 = vmatprep.subr.bf16.mxu0 %v10931
          %11958 = vmatpush1.bf16.msra.mxu0 %v10930
          %11959 = vmatprep.subr.bf16.mxu0 %v10939
          %11960 = vmatpush1.bf16.msra.mxu0 %v10938
          %11961 = vmatprep.subr.bf16.mxu0 %v10947
          %11962 = vmatpush1.bf16.msra.mxu0 %v10946
          %11963 = vmatprep.subr.bf16.mxu0 %v10955
          %11964 = vmatpush1.bf16.msra.mxu0 %v10954
          %11965 = vmatprep.subr.bf16.mxu0 %v10963
          %11966 = vmatpush1.bf16.msra.mxu0 %v10962
          %11967 = vmatprep.subr.bf16.mxu0 %v10971
          %11968 = vmatpush1.bf16.msra.mxu0 %v10970
          %11969 = vmatprep.mubr.bf16.mxu0 %v8413
          %11970 = vmatmul.mubr.bf16.gmra.mrb[0].mxu0 %v8412
          %v11971 = vpop.f32.mrb[0].mxu0
          %v11972 = vadd.f32 %v11931, %v11971
          %v11973 = vpop.f32.mrb[0].mxu0
          %v11974 = vadd.f32 %v11933, %v11973
          %v11975 = vpop.f32.mrb[0].mxu0
          %v11976 = vpop.f32.mrb[0].mxu0
          %11977 = vdwg.mxu0
          %11978 = vmatprep.subr.bf16.mxu0 %v10469
          %11979 = vmatpush1.bf16.msra.mxu0 %v10468
          %11980 = vmatprep.subr.bf16.mxu0 %v10477
          %11981 = vmatpush1.bf16.msra.mxu0 %v10476
          %11982 = vmatprep.subr.bf16.mxu0 %v10485
          %11983 = vmatpush1.bf16.msra.mxu0 %v10484
          %11984 = vmatprep.subr.bf16.mxu0 %v10493
          %11985 = vmatpush1.bf16.msra.mxu0 %v10492
          %11986 = vmatprep.subr.bf16.mxu0 %v10501
          %11987 = vmatpush1.bf16.msra.mxu0 %v10500
          %11988 = vmatprep.subr.bf16.mxu0 %v10509
          %11989 = vmatpush1.bf16.msra.mxu0 %v10508
          %11990 = vmatprep.subr.bf16.mxu0 %v10517
          %11991 = vmatpush1.bf16.msra.mxu0 %v10516
          %11992 = vmatprep.subr.bf16.mxu0 %v10525
          %11993 = vmatpush1.bf16.msra.mxu0 %v10524
          %11994 = vmatprep.subr.bf16.mxu0 %v10533
          %11995 = vmatpush1.bf16.msra.mxu0 %v10532
          %11996 = vmatprep.subr.bf16.mxu0 %v10541
          %11997 = vmatpush1.bf16.msra.mxu0 %v10540
          %11998 = vmatprep.subr.bf16.mxu0 %v10549
          %11999 = vmatpush1.bf16.msra.mxu0 %v10548
          %12000 = vmatprep.subr.bf16.mxu0 %v10557
          %12001 = vmatpush1.bf16.msra.mxu0 %v10556
          %12002 = vmatprep.subr.bf16.mxu0 %v10565
          %12003 = vmatpush1.bf16.msra.mxu0 %v10564
          %12004 = vmatprep.subr.bf16.mxu0 %v10573
          %12005 = vmatpush1.bf16.msra.mxu0 %v10572
          %12006 = vmatprep.subr.bf16.mxu0 %v10581
          %12007 = vmatpush1.bf16.msra.mxu0 %v10580
          %12008 = vmatprep.subr.bf16.mxu0 %v10589
          %12009 = vmatpush1.bf16.msra.mxu0 %v10588
          %12010 = vmatprep.mubr.bf16.mxu0 %v8407
          %12011 = vmatmul.mubr.bf16.gmra.mrb[0].mxu0 %v8406
          %v12012 = vpop.f32.mrb[0].mxu0
          %v12013 = vadd.f32 0.0, %v12012
          %v12014 = vpop.f32.mrb[0].mxu0
          %v12015 = vadd.f32 0.0, %v12014
          %v12016 = vpop.f32.mrb[0].mxu0
          %v12017 = vpop.f32.mrb[0].mxu0
          %12018 = vdwg.mxu0
          %12019 = vmatprep.subr.bf16.mxu0 %v10597
          %12020 = vmatpush1.bf16.msra.mxu0 %v10596
          %12021 = vmatprep.subr.bf16.mxu0 %v10605
          %12022 = vmatpush1.bf16.msra.mxu0 %v10604
          %12023 = vmatprep.subr.bf16.mxu0 %v10613
          %12024 = vmatpush1.bf16.msra.mxu0 %v10612
          %12025 = vmatprep.subr.bf16.mxu0 %v10621
          %12026 = vmatpush1.bf16.msra.mxu0 %v10620
          %12027 = vmatprep.subr.bf16.mxu0 %v10629
          %12028 = vmatpush1.bf16.msra.mxu0 %v10628
          %12029 = vmatprep.subr.bf16.mxu0 %v10637
          %12030 = vmatpush1.bf16.msra.mxu0 %v10636
          %12031 = vmatprep.subr.bf16.mxu0 %v10645
          %12032 = vmatpush1.bf16.msra.mxu0 %v10644
          %12033 = vmatprep.subr.bf16.mxu0 %v10653
          %12034 = vmatpush1.bf16.msra.mxu0 %v10652
          %12035 = vmatprep.subr.bf16.mxu0 %v10661
          %12036 = vmatpush1.bf16.msra.mxu0 %v10660
          %12037 = vmatprep.subr.bf16.mxu0 %v10669
          %12038 = vmatpush1.bf16.msra.mxu0 %v10668
          %12039 = vmatprep.subr.bf16.mxu0 %v10677
          %12040 = vmatpush1.bf16.msra.mxu0 %v10676
          %12041 = vmatprep.subr.bf16.mxu0 %v10685
          %12042 = vmatpush1.bf16.msra.mxu0 %v10684
          %12043 = vmatprep.subr.bf16.mxu0 %v10693
          %12044 = vmatpush1.bf16.msra.mxu0 %v10692
          %12045 = vmatprep.subr.bf16.mxu0 %v10701
          %12046 = vmatpush1.bf16.msra.mxu0 %v10700
          %12047 = vmatprep.subr.bf16.mxu0 %v10709
          %12048 = vmatpush1.bf16.msra.mxu0 %v10708
          %12049 = vmatprep.subr.bf16.mxu0 %v10717
          %12050 = vmatpush1.bf16.msra.mxu0 %v10716
          %12051 = vmatprep.mubr.bf16.mxu0 %v8409
          %12052 = vmatmul.mubr.bf16.gmra.mrb[0].mxu0 %v8408
          %v12053 = vpop.f32.mrb[0].mxu0
          %v12054 = vadd.f32 %v12013, %v12053
          %v12055 = vpop.f32.mrb[0].mxu0
          %v12056 = vadd.f32 %v12015, %v12055
          %v12057 = vpop.f32.mrb[0].mxu0
          %v12058 = vpop.f32.mrb[0].mxu0
          %12059 = vdwg.mxu0
          %12060 = vmatprep.subr.bf16.mxu0 %v10725
          %12061 = vmatpush1.bf16.msra.mxu0 %v10724
          %12062 = vmatprep.subr.bf16.mxu0 %v10733
          %12063 = vmatpush1.bf16.msra.mxu0 %v10732
          %12064 = vmatprep.subr.bf16.mxu0 %v10741
          %12065 = vmatpush1.bf16.msra.mxu0 %v10740
          %12066 = vmatprep.subr.bf16.mxu0 %v10749
          %12067 = vmatpush1.bf16.msra.mxu0 %v10748
          %12068 = vmatprep.subr.bf16.mxu0 %v10757
          %12069 = vmatpush1.bf16.msra.mxu0 %v10756
          %12070 = vmatprep.subr.bf16.mxu0 %v10765
          %12071 = vmatpush1.bf16.msra.mxu0 %v10764
          %12072 = vmatprep.subr.bf16.mxu0 %v10773
          %12073 = vmatpush1.bf16.msra.mxu0 %v10772
          %12074 = vmatprep.subr.bf16.mxu0 %v10781
          %12075 = vmatpush1.bf16.msra.mxu0 %v10780
          %12076 = vmatprep.subr.bf16.mxu0 %v10789
          %12077 = vmatpush1.bf16.msra.mxu0 %v10788
          %12078 = vmatprep.subr.bf16.mxu0 %v10797
          %12079 = vmatpush1.bf16.msra.mxu0 %v10796
          %12080 = vmatprep.subr.bf16.mxu0 %v10805
          %12081 = vmatpush1.bf16.msra.mxu0 %v10804
          %12082 = vmatprep.subr.bf16.mxu0 %v10813
          %12083 = vmatpush1.bf16.msra.mxu0 %v10812
          %12084 = vmatprep.subr.bf16.mxu0 %v10821
          %12085 = vmatpush1.bf16.msra.mxu0 %v10820
          %12086 = vmatprep.subr.bf16.mxu0 %v10829
          %12087 = vmatpush1.bf16.msra.mxu0 %v10828
          %12088 = vmatprep.subr.bf16.mxu0 %v10837
          %12089 = vmatpush1.bf16.msra.mxu0 %v10836
          %12090 = vmatprep.subr.bf16.mxu0 %v10845
          %12091 = vmatpush1.bf16.msra.mxu0 %v10844
          %12092 = vmatprep.mubr.bf16.mxu0 %v8411
          %12093 = vmatmul.mubr.bf16.gmra.mrb[0].mxu0 %v8410
          %v12094 = vpop.f32.mrb[0].mxu0
          %v12095 = vadd.f32 %v12054, %v12094
          %v12096 = vpop.f32.mrb[0].mxu0
          %v12097 = vadd.f32 %v12056, %v12096
          %v12098 = vpop.f32.mrb[0].mxu0
          %v12099 = vpop.f32.mrb[0].mxu0
          %12100 = vdwg.mxu0
          %12101 = vmatprep.subr.bf16.mxu0 %v10853
          %12102 = vmatpush1.bf16.msra.mxu0 %v10852
          %12103 = vmatprep.subr.bf16.mxu0 %v10861
          %12104 = vmatpush1.bf16.msra.mxu0 %v10860
          %12105 = vmatprep.subr.bf16.mxu0 %v10869
          %12106 = vmatpush1.bf16.msra.mxu0 %v10868
          %12107 = vmatprep.subr.bf16.mxu0 %v10877
          %12108 = vmatpush1.bf16.msra.mxu0 %v10876
          %12109 = vmatprep.subr.bf16.mxu0 %v10885
          %12110 = vmatpush1.bf16.msra.mxu0 %v10884
          %12111 = vmatprep.subr.bf16.mxu0 %v10893
          %12112 = vmatpush1.bf16.msra.mxu0 %v10892
          %12113 = vmatprep.subr.bf16.mxu0 %v10901
          %12114 = vmatpush1.bf16.msra.mxu0 %v10900
          %12115 = vmatprep.subr.bf16.mxu0 %v10909
          %12116 = vmatpush1.bf16.msra.mxu0 %v10908
          %12117 = vmatprep.subr.bf16.mxu0 %v10917
          %12118 = vmatpush1.bf16.msra.mxu0 %v10916
          %12119 = vmatprep.subr.bf16.mxu0 %v10925
          %12120 = vmatpush1.bf16.msra.mxu0 %v10924
          %12121 = vmatprep.subr.bf16.mxu0 %v10933
          %12122 = vmatpush1.bf16.msra.mxu0 %v10932
          %12123 = vmatprep.subr.bf16.mxu0 %v10941
          %12124 = vmatpush1.bf16.msra.mxu0 %v10940
          %12125 = vmatprep.subr.bf16.mxu0 %v10949
          %12126 = vmatpush1.bf16.msra.mxu0 %v10948
          %12127 = vmatprep.subr.bf16.mxu0 %v10957
          %12128 = vmatpush1.bf16.msra.mxu0 %v10956
          %12129 = vmatprep.subr.bf16.mxu0 %v10965
          %12130 = vmatpush1.bf16.msra.mxu0 %v10964
          %12131 = vmatprep.subr.bf16.mxu0 %v10973
          %12132 = vmatpush1.bf16.msra.mxu0 %v10972
          %12133 = vmatprep.mubr.bf16.mxu0 %v8413
          %12134 = vmatmul.mubr.bf16.gmra.mrb[0].mxu0 %v8412
          %v12135 = vpop.f32.mrb[0].mxu0
          %v12136 = vadd.f32 %v12095, %v12135
          %v12137 = vpop.f32.mrb[0].mxu0
          %v12138 = vadd.f32 %v12097, %v12137
          %v12139 = vpop.f32.mrb[0].mxu0
          %v12140 = vpop.f32.mrb[0].mxu0
          %12141 = vdwg.mxu0
          %v12142 = vmax.f32 %v11644, 0.0
          %v12143 = vmax.f32 %v11646, 0.0
          %v12144 = vmax.f32 %v11808, 0.0
          %v12145 = vmax.f32 %v11810, 0.0
          %v12146 = vmax.f32 %v11972, 0.0
          %v12147 = vmax.f32 %v11974, 0.0
          %v12148 = vmax.f32 %v12136, 0.0
          %v12149 = vmax.f32 %v12138, 0.0
          %v12150 = vsel %vm455, %v12142, 0.0
          %v12151 = vrot.slane %v12150, 4
          %v12152 = vadd.f32 %v12150, %v12151
          %v12153 = vrot.slane %v12152, 2
          %v12154 = vadd.f32 %v12152, %v12153
          %v12155 = vrot.slane %v12154, 1
          %v12156 = vadd.f32 %v12154, %v12155
          %v12157 = vsel %vm455, %v12143, 0.0
          %v12158 = vrot.slane %v12157, 4
          %v12159 = vadd.f32 %v12157, %v12158
          %v12160 = vrot.slane %v12159, 2
          %v12161 = vadd.f32 %v12159, %v12160
          %v12162 = vrot.slane %v12161, 1
          %v12163 = vadd.f32 %v12161, %v12162
          %v12164 = vsel %vm455, %v12144, 0.0
          %v12165 = vrot.slane %v12164, 4
          %v12166 = vadd.f32 %v12164, %v12165
          %v12167 = vrot.slane %v12166, 2
          %v12168 = vadd.f32 %v12166, %v12167
          %v12169 = vrot.slane %v12168, 1
          %v12170 = vadd.f32 %v12168, %v12169
          %v12171 = vsel %vm455, %v12145, 0.0
          %v12172 = vrot.slane %v12171, 4
          %v12173 = vadd.f32 %v12171, %v12172
          %v12174 = vrot.slane %v12173, 2
          %v12175 = vadd.f32 %v12173, %v12174
          %v12176 = vrot.slane %v12175, 1
          %v12177 = vadd.f32 %v12175, %v12176
          %v12178 = vsel %vm455, %v12146, 0.0
          %v12179 = vrot.slane %v12178, 4
          %v12180 = vadd.f32 %v12178, %v12179
          %v12181 = vrot.slane %v12180, 2
          %v12182 = vadd.f32 %v12180, %v12181
          %v12183 = vrot.slane %v12182, 1
          %v12184 = vadd.f32 %v12182, %v12183
          %v12185 = vsel %vm455, %v12147, 0.0
          %v12186 = vrot.slane %v12185, 4
          %v12187 = vadd.f32 %v12185, %v12186
          %v12188 = vrot.slane %v12187, 2
          %v12189 = vadd.f32 %v12187, %v12188
          %v12190 = vrot.slane %v12189, 1
          %v12191 = vadd.f32 %v12189, %v12190
          %v12192 = vsel %vm455, %v12148, 0.0
          %v12193 = vrot.slane %v12192, 4
          %v12194 = vadd.f32 %v12192, %v12193
          %v12195 = vrot.slane %v12194, 2
          %v12196 = vadd.f32 %v12194, %v12195
          %v12197 = vrot.slane %v12196, 1
          %v12198 = vadd.f32 %v12196, %v12197
          %v12199 = vsel %vm455, %v12149, 0.0
          %v12200 = vrot.slane %v12199, 4
          %v12201 = vadd.f32 %v12199, %v12200
          %v12202 = vrot.slane %v12201, 2
          %v12203 = vadd.f32 %v12201, %v12202
          %v12204 = vrot.slane %v12203, 1
          %v12205 = vadd.f32 %v12203, %v12204
          %v12206 = vmul.f32 %v12156, %v568
          %v12207 = vmul.f32 %v12163, %v568
          %v12208 = vmul.f32 %v12170, %v568
          %v12209 = vmul.f32 %v12177, %v568
          %v12210 = vmul.f32 %v12184, %v568
          %v12211 = vmul.f32 %v12191, %v568
          %v12212 = vmul.f32 %v12198, %v568
          %v12213 = vmul.f32 %v12205, %v568
          %v12222 = vcombine.low %v12206, %v12207
          %v12223 = vcombine.low %v12208, %v12209
          %v12224 = vcombine.low %v12210, %v12211
          %v12225 = vcombine.low %v12212, %v12213
          %v12227 = vunpack.c.l.s4 1966171168
          %v12228 = vunpack.c.0.s8 %v12227
          %v12229 = vlaneseq
          %v12230 = vshrl.u32 %v12229, 7
          %v12231 = vsub.s32 %v12228, %v12230
          %v12232 = vrot.slane %v12222, %v12231
          %v12234 = vunpack.c.l.s4 1966171168
          %v12235 = vunpack.c.0.s8 %v12234
          %v12236 = vlaneseq
          %v12237 = vshrl.u32 %v12236, 7
          %v12238 = vsub.s32 %v12235, %v12237
          %v12239 = vrot.slane %v12223, %v12238
          %v12241 = vunpack.c.l.s4 1966171168
          %v12242 = vunpack.c.0.s8 %v12241
          %v12243 = vlaneseq
          %v12244 = vshrl.u32 %v12243, 7
          %v12245 = vsub.s32 %v12242, %v12244
          %v12246 = vrot.slane %v12224, %v12245
          %v12248 = vunpack.c.l.s4 1966171168
          %v12249 = vunpack.c.0.s8 %v12248
          %v12250 = vlaneseq
          %v12251 = vshrl.u32 %v12250, 7
          %v12252 = vsub.s32 %v12249, %v12251
          %v12253 = vrot.slane %v12225, %v12252
          %v12254 = vcombine.low %v12232, %v12239
          %v12255 = vcombine.low %v12246, %v12253
          %v12257 = vunpack.c.l.s4 1966171168
          %v12258 = vunpack.c.0.s8 %v12257
          %v12259 = vlaneseq
          %v12260 = vshrl.u32 %v12259, 7
          %v12261 = vsub.s32 %v12258, %v12260
          %v12262 = vrot.slane %v12254, %v12261
          %v12264 = vunpack.c.l.s4 1966171168
          %v12265 = vunpack.c.0.s8 %v12264
          %v12266 = vlaneseq
          %v12267 = vshrl.u32 %v12266, 7
          %v12268 = vsub.s32 %v12265, %v12267
          %v12269 = vrot.slane %v12255, %v12268
          %v12270 = vcombine.low %v12262, %v12269
          %12272 = vst [vmem:[#allocation15] sm:$0xff] %v12270
          %v12273 = vpack.c.bf16 %v12142, %v12142
          %v12274 = vpack.c.bf16 %v12143, %v12143
          %v12275 = vpack.c.bf16 %v12144, %v12144
          %v12276 = vpack.c.bf16 %v12145, %v12145
          %v12277 = vpack.c.bf16 %v12146, %v12146
          %v12278 = vpack.c.bf16 %v12147, %v12147
          %v12279 = vpack.c.bf16 %v12148, %v12148
          %v12280 = vpack.c.bf16 %v12149, %v12149
          %v12281 = vld [vmem:[#allocation9] sm:$0xf]
          %v12282 = vld [vmem:[#allocation9 + $0x4] sm:$0xf]
          %v12283 = vld [vmem:[#allocation9 + $0x8] sm:$0xf]
          %v12284 = vld [vmem:[#allocation9 + $0xc] sm:$0xf]
          %v12285 = vld [vmem:[#allocation9 + $0x10] sm:$0xf]
          %v12286 = vld [vmem:[#allocation9 + $0x14] sm:$0xf]
          %v12287 = vld [vmem:[#allocation9 + $0x18] sm:$0xf]
          %v12288 = vld [vmem:[#allocation9 + $0x1c] sm:$0xf]
          %v12289 = vld [vmem:[#allocation9 + $0x20] sm:$0xf]
          %v12290 = vld [vmem:[#allocation9 + $0x24] sm:$0xf]
          %v12291 = vld [vmem:[#allocation9 + $0x28] sm:$0xf]
          %v12292 = vld [vmem:[#allocation9 + $0x2c] sm:$0xf]
          %v12293 = vld [vmem:[#allocation9 + $0x30] sm:$0xf]
          %v12294 = vld [vmem:[#allocation9 + $0x34] sm:$0xf]
          %v12295 = vld [vmem:[#allocation9 + $0x38] sm:$0xf]
          %v12296 = vld [vmem:[#allocation9 + $0x3c] sm:$0xf]
          %v12297 = vld [vmem:[#allocation9 + $0x40] sm:$0xf]
          %v12298 = vld [vmem:[#allocation9 + $0x44] sm:$0xf]
          %v12299 = vld [vmem:[#allocation9 + $0x48] sm:$0xf]
          %v12300 = vld [vmem:[#allocation9 + $0x4c] sm:$0xf]
          %v12301 = vld [vmem:[#allocation9 + $0x50] sm:$0xf]
          %v12302 = vld [vmem:[#allocation9 + $0x54] sm:$0xf]
          %v12303 = vld [vmem:[#allocation9 + $0x58] sm:$0xf]
          %v12304 = vld [vmem:[#allocation9 + $0x5c] sm:$0xf]
          %v12305 = vld [vmem:[#allocation9 + $0x60] sm:$0xf]
          %v12306 = vld [vmem:[#allocation9 + $0x64] sm:$0xf]
          %v12307 = vld [vmem:[#allocation9 + $0x68] sm:$0xf]
          %v12308 = vld [vmem:[#allocation9 + $0x6c] sm:$0xf]
          %v12309 = vld [vmem:[#allocation9 + $0x70] sm:$0xf]
          %v12310 = vld [vmem:[#allocation9 + $0x74] sm:$0xf]
          %v12311 = vld [vmem:[#allocation9 + $0x78] sm:$0xf]
          %v12312 = vld [vmem:[#allocation9 + $0x7c] sm:$0xf]
          %v12313 = vld [vmem:[#allocation9 + $0x80] sm:$0xf]
          %v12314 = vld [vmem:[#allocation9 + $0x84] sm:$0xf]
          %v12315 = vld [vmem:[#allocation9 + $0x88] sm:$0xf]
          %v12316 = vld [vmem:[#allocation9 + $0x8c] sm:$0xf]
          %v12317 = vld [vmem:[#allocation9 + $0x90] sm:$0xf]
          %v12318 = vld [vmem:[#allocation9 + $0x94] sm:$0xf]
          %v12319 = vld [vmem:[#allocation9 + $0x98] sm:$0xf]
          %v12320 = vld [vmem:[#allocation9 + $0x9c] sm:$0xf]
          %v12321 = vld [vmem:[#allocation9 + $0xa0] sm:$0xf]
          %v12322 = vld [vmem:[#allocation9 + $0xa4] sm:$0xf]
          %v12323 = vld [vmem:[#allocation9 + $0xa8] sm:$0xf]
          %v12324 = vld [vmem:[#allocation9 + $0xac] sm:$0xf]
          %v12325 = vld [vmem:[#allocation9 + $0xb0] sm:$0xf]
          %v12326 = vld [vmem:[#allocation9 + $0xb4] sm:$0xf]
          %v12327 = vld [vmem:[#allocation9 + $0xb8] sm:$0xf]
          %v12328 = vld [vmem:[#allocation9 + $0xbc] sm:$0xf]
          %v12329 = vld [vmem:[#allocation9 + $0xc0] sm:$0xf]
          %v12330 = vld [vmem:[#allocation9 + $0xc4] sm:$0xf]
          %v12331 = vld [vmem:[#allocation9 + $0xc8] sm:$0xf]
          %v12332 = vld [vmem:[#allocation9 + $0xcc] sm:$0xf]
          %v12333 = vld [vmem:[#allocation9 + $0xd0] sm:$0xf]
          %v12334 = vld [vmem:[#allocation9 + $0xd4] sm:$0xf]
          %v12335 = vld [vmem:[#allocation9 + $0xd8] sm:$0xf]
          %v12336 = vld [vmem:[#allocation9 + $0xdc] sm:$0xf]
          %v12337 = vld [vmem:[#allocation9 + $0xe0] sm:$0xf]
          %v12338 = vld [vmem:[#allocation9 + $0xe4] sm:$0xf]
          %v12339 = vld [vmem:[#allocation9 + $0xe8] sm:$0xf]
          %v12340 = vld [vmem:[#allocation9 + $0xec] sm:$0xf]
          %v12341 = vld [vmem:[#allocation9 + $0xf0] sm:$0xf]
          %v12342 = vld [vmem:[#allocation9 + $0xf4] sm:$0xf]
          %v12343 = vld [vmem:[#allocation9 + $0xf8] sm:$0xf]
          %v12344 = vld [vmem:[#allocation9 + $0xfc] sm:$0xf]
          %v12345 = vld [vmem:[#allocation9 + $0x100] sm:$0xf]
          %v12346 = vld [vmem:[#allocation9 + $0x104] sm:$0xf]
          %v12347 = vld [vmem:[#allocation9 + $0x108] sm:$0xf]
          %v12348 = vld [vmem:[#allocation9 + $0x10c] sm:$0xf]
          %v12349 = vld [vmem:[#allocation9 + $0x110] sm:$0xf]
          %v12350 = vld [vmem:[#allocation9 + $0x114] sm:$0xf]
          %v12351 = vld [vmem:[#allocation9 + $0x118] sm:$0xf]
          %v12352 = vld [vmem:[#allocation9 + $0x11c] sm:$0xf]
          %v12353 = vld [vmem:[#allocation9 + $0x120] sm:$0xf]
          %v12354 = vld [vmem:[#allocation9 + $0x124] sm:$0xf]
          %v12355 = vld [vmem:[#allocation9 + $0x128] sm:$0xf]
          %v12356 = vld [vmem:[#allocation9 + $0x12c] sm:$0xf]
          %v12357 = vld [vmem:[#allocation9 + $0x130] sm:$0xf]
          %v12358 = vld [vmem:[#allocation9 + $0x134] sm:$0xf]
          %v12359 = vld [vmem:[#allocation9 + $0x138] sm:$0xf]
          %v12360 = vld [vmem:[#allocation9 + $0x13c] sm:$0xf]
          %v12361 = vld [vmem:[#allocation9 + $0x140] sm:$0xf]
          %v12362 = vld [vmem:[#allocation9 + $0x144] sm:$0xf]
          %v12363 = vld [vmem:[#allocation9 + $0x148] sm:$0xf]
          %v12364 = vld [vmem:[#allocation9 + $0x14c] sm:$0xf]
          %v12365 = vld [vmem:[#allocation9 + $0x150] sm:$0xf]
          %v12366 = vld [vmem:[#allocation9 + $0x154] sm:$0xf]
          %v12367 = vld [vmem:[#allocation9 + $0x158] sm:$0xf]
          %v12368 = vld [vmem:[#allocation9 + $0x15c] sm:$0xf]
          %v12369 = vld [vmem:[#allocation9 + $0x160] sm:$0xf]
          %v12370 = vld [vmem:[#allocation9 + $0x164] sm:$0xf]
          %v12371 = vld [vmem:[#allocation9 + $0x168] sm:$0xf]
          %v12372 = vld [vmem:[#allocation9 + $0x16c] sm:$0xf]
          %v12373 = vld [vmem:[#allocation9 + $0x170] sm:$0xf]
          %v12374 = vld [vmem:[#allocation9 + $0x174] sm:$0xf]
          %v12375 = vld [vmem:[#allocation9 + $0x178] sm:$0xf]
          %v12376 = vld [vmem:[#allocation9 + $0x17c] sm:$0xf]
          %v12377 = vld [vmem:[#allocation9 + $0x180] sm:$0xf]
          %v12378 = vld [vmem:[#allocation9 + $0x184] sm:$0xf]
          %v12379 = vld [vmem:[#allocation9 + $0x188] sm:$0xf]
          %v12380 = vld [vmem:[#allocation9 + $0x18c] sm:$0xf]
          %v12381 = vld [vmem:[#allocation9 + $0x190] sm:$0xf]
          %v12382 = vld [vmem:[#allocation9 + $0x194] sm:$0xf]
          %v12383 = vld [vmem:[#allocation9 + $0x198] sm:$0xf]
          %v12384 = vld [vmem:[#allocation9 + $0x19c] sm:$0xf]
          %v12385 = vld [vmem:[#allocation9 + $0x1a0] sm:$0xf]
          %v12386 = vld [vmem:[#allocation9 + $0x1a4] sm:$0xf]
          %v12387 = vld [vmem:[#allocation9 + $0x1a8] sm:$0xf]
          %v12388 = vld [vmem:[#allocation9 + $0x1ac] sm:$0xf]
          %v12389 = vld [vmem:[#allocation9 + $0x1b0] sm:$0xf]
          %v12390 = vld [vmem:[#allocation9 + $0x1b4] sm:$0xf]
          %v12391 = vld [vmem:[#allocation9 + $0x1b8] sm:$0xf]
          %v12392 = vld [vmem:[#allocation9 + $0x1bc] sm:$0xf]
          %v12393 = vld [vmem:[#allocation9 + $0x1c0] sm:$0xf]
          %v12394 = vld [vmem:[#allocation9 + $0x1c4] sm:$0xf]
          %v12395 = vld [vmem:[#allocation9 + $0x1c8] sm:$0xf]
          %v12396 = vld [vmem:[#allocation9 + $0x1cc] sm:$0xf]
          %v12397 = vld [vmem:[#allocation9 + $0x1d0] sm:$0xf]
          %v12398 = vld [vmem:[#allocation9 + $0x1d4] sm:$0xf]
          %v12399 = vld [vmem:[#allocation9 + $0x1d8] sm:$0xf]
          %v12400 = vld [vmem:[#allocation9 + $0x1dc] sm:$0xf]
          %v12401 = vld [vmem:[#allocation9 + $0x1e0] sm:$0xf]
          %v12402 = vld [vmem:[#allocation9 + $0x1e4] sm:$0xf]
          %v12403 = vld [vmem:[#allocation9 + $0x1e8] sm:$0xf]
          %v12404 = vld [vmem:[#allocation9 + $0x1ec] sm:$0xf]
          %v12405 = vld [vmem:[#allocation9 + $0x1f0] sm:$0xf]
          %v12406 = vld [vmem:[#allocation9 + $0x1f4] sm:$0xf]
          %v12407 = vld [vmem:[#allocation9 + $0x1f8] sm:$0xf]
          %v12408 = vld [vmem:[#allocation9 + $0x1fc] sm:$0xf]
          %v12537 = vunpack.c.l.b16 %v12281
          %v12538 = vunpack.c.l.b16 %v12282
          %v12539 = vunpack.c.l.b16 %v12283
          %v12540 = vunpack.c.l.b16 %v12284
          %v12541 = vunpack.c.l.b16 %v12285
          %v12542 = vunpack.c.l.b16 %v12286
          %v12543 = vunpack.c.l.b16 %v12287
          %v12544 = vunpack.c.l.b16 %v12288
          %v12545 = vunpack.c.l.b16 %v12289
          %v12546 = vunpack.c.l.b16 %v12290
          %v12547 = vunpack.c.l.b16 %v12291
          %v12548 = vunpack.c.l.b16 %v12292
          %v12549 = vunpack.c.l.b16 %v12293
          %v12550 = vunpack.c.l.b16 %v12294
          %v12551 = vunpack.c.l.b16 %v12295
          %v12552 = vunpack.c.l.b16 %v12296
          %v12553 = vunpack.c.l.b16 %v12297
          %v12554 = vunpack.c.l.b16 %v12298
          %v12555 = vunpack.c.l.b16 %v12299
          %v12556 = vunpack.c.l.b16 %v12300
          %v12557 = vunpack.c.l.b16 %v12301
          %v12558 = vunpack.c.l.b16 %v12302
          %v12559 = vunpack.c.l.b16 %v12303
          %v12560 = vunpack.c.l.b16 %v12304
          %v12561 = vunpack.c.l.b16 %v12305
          %v12562 = vunpack.c.l.b16 %v12306
          %v12563 = vunpack.c.l.b16 %v12307
          %v12564 = vunpack.c.l.b16 %v12308
          %v12565 = vunpack.c.l.b16 %v12309
          %v12566 = vunpack.c.l.b16 %v12310
          %v12567 = vunpack.c.l.b16 %v12311
          %v12568 = vunpack.c.l.b16 %v12312
          %v12569 = vunpack.c.l.b16 %v12313
          %v12570 = vunpack.c.l.b16 %v12314
          %v12571 = vunpack.c.l.b16 %v12315
          %v12572 = vunpack.c.l.b16 %v12316
          %v12573 = vunpack.c.l.b16 %v12317
          %v12574 = vunpack.c.l.b16 %v12318
          %v12575 = vunpack.c.l.b16 %v12319
          %v12576 = vunpack.c.l.b16 %v12320
          %v12577 = vunpack.c.l.b16 %v12321
          %v12578 = vunpack.c.l.b16 %v12322
          %v12579 = vunpack.c.l.b16 %v12323
          %v12580 = vunpack.c.l.b16 %v12324
          %v12581 = vunpack.c.l.b16 %v12325
          %v12582 = vunpack.c.l.b16 %v12326
          %v12583 = vunpack.c.l.b16 %v12327
          %v12584 = vunpack.c.l.b16 %v12328
          %v12585 = vunpack.c.l.b16 %v12329
          %v12586 = vunpack.c.l.b16 %v12330
          %v12587 = vunpack.c.l.b16 %v12331
          %v12588 = vunpack.c.l.b16 %v12332
          %v12589 = vunpack.c.l.b16 %v12333
          %v12590 = vunpack.c.l.b16 %v12334
          %v12591 = vunpack.c.l.b16 %v12335
          %v12592 = vunpack.c.l.b16 %v12336
          %v12593 = vunpack.c.l.b16 %v12337
          %v12594 = vunpack.c.l.b16 %v12338
          %v12595 = vunpack.c.l.b16 %v12339
          %v12596 = vunpack.c.l.b16 %v12340
          %v12597 = vunpack.c.l.b16 %v12341
          %v12598 = vunpack.c.l.b16 %v12342
          %v12599 = vunpack.c.l.b16 %v12343
          %v12600 = vunpack.c.l.b16 %v12344
          %v12601 = vunpack.c.l.b16 %v12345
          %v12602 = vunpack.c.l.b16 %v12346
          %v12603 = vunpack.c.l.b16 %v12347
          %v12604 = vunpack.c.l.b16 %v12348
          %v12605 = vunpack.c.l.b16 %v12349
          %v12606 = vunpack.c.l.b16 %v12350
          %v12607 = vunpack.c.l.b16 %v12351
          %v12608 = vunpack.c.l.b16 %v12352
          %v12609 = vunpack.c.l.b16 %v12353
          %v12610 = vunpack.c.l.b16 %v12354
          %v12611 = vunpack.c.l.b16 %v12355
          %v12612 = vunpack.c.l.b16 %v12356
          %v12613 = vunpack.c.l.b16 %v12357
          %v12614 = vunpack.c.l.b16 %v12358
          %v12615 = vunpack.c.l.b16 %v12359
          %v12616 = vunpack.c.l.b16 %v12360
          %v12617 = vunpack.c.l.b16 %v12361
          %v12618 = vunpack.c.l.b16 %v12362
          %v12619 = vunpack.c.l.b16 %v12363
          %v12620 = vunpack.c.l.b16 %v12364
          %v12621 = vunpack.c.l.b16 %v12365
          %v12622 = vunpack.c.l.b16 %v12366
          %v12623 = vunpack.c.l.b16 %v12367
          %v12624 = vunpack.c.l.b16 %v12368
          %v12625 = vunpack.c.l.b16 %v12369
          %v12626 = vunpack.c.l.b16 %v12370
          %v12627 = vunpack.c.l.b16 %v12371
          %v12628 = vunpack.c.l.b16 %v12372
          %v12629 = vunpack.c.l.b16 %v12373
          %v12630 = vunpack.c.l.b16 %v12374
          %v12631 = vunpack.c.l.b16 %v12375
          %v12632 = vunpack.c.l.b16 %v12376
          %v12633 = vunpack.c.l.b16 %v12377
          %v12634 = vunpack.c.l.b16 %v12378
          %v12635 = vunpack.c.l.b16 %v12379
          %v12636 = vunpack.c.l.b16 %v12380
          %v12637 = vunpack.c.l.b16 %v12381
          %v12638 = vunpack.c.l.b16 %v12382
          %v12639 = vunpack.c.l.b16 %v12383
          %v12640 = vunpack.c.l.b16 %v12384
          %v12641 = vunpack.c.l.b16 %v12385
          %v12642 = vunpack.c.l.b16 %v12386
          %v12643 = vunpack.c.l.b16 %v12387
          %v12644 = vunpack.c.l.b16 %v12388
          %v12645 = vunpack.c.l.b16 %v12389
          %v12646 = vunpack.c.l.b16 %v12390
          %v12647 = vunpack.c.l.b16 %v12391
          %v12648 = vunpack.c.l.b16 %v12392
          %v12649 = vunpack.c.l.b16 %v12393
          %v12650 = vunpack.c.l.b16 %v12394
          %v12651 = vunpack.c.l.b16 %v12395
          %v12652 = vunpack.c.l.b16 %v12396
          %v12653 = vunpack.c.l.b16 %v12397
          %v12654 = vunpack.c.l.b16 %v12398
          %v12655 = vunpack.c.l.b16 %v12399
          %v12656 = vunpack.c.l.b16 %v12400
          %v12657 = vunpack.c.l.b16 %v12401
          %v12658 = vunpack.c.l.b16 %v12402
          %v12659 = vunpack.c.l.b16 %v12403
          %v12660 = vunpack.c.l.b16 %v12404
          %v12661 = vunpack.c.l.b16 %v12405
          %v12662 = vunpack.c.l.b16 %v12406
          %v12663 = vunpack.c.l.b16 %v12407
          %v12664 = vunpack.c.l.b16 %v12408
          %v12665 = vpack.c.b16 %v12538, %v12537
          %v12666 = vpack.c.b16 %v12540, %v12539
          %v12667 = vpack.c.b16 %v12542, %v12541
          %v12668 = vpack.c.b16 %v12544, %v12543
          %v12669 = vpack.c.b16 %v12546, %v12545
          %v12670 = vpack.c.b16 %v12548, %v12547
          %v12671 = vpack.c.b16 %v12550, %v12549
          %v12672 = vpack.c.b16 %v12552, %v12551
          %v12673 = vpack.c.b16 %v12554, %v12553
          %v12674 = vpack.c.b16 %v12556, %v12555
          %v12675 = vpack.c.b16 %v12558, %v12557
          %v12676 = vpack.c.b16 %v12560, %v12559
          %v12677 = vpack.c.b16 %v12562, %v12561
          %v12678 = vpack.c.b16 %v12564, %v12563
          %v12679 = vpack.c.b16 %v12566, %v12565
          %v12680 = vpack.c.b16 %v12568, %v12567
          %v12681 = vpack.c.b16 %v12570, %v12569
          %v12682 = vpack.c.b16 %v12572, %v12571
          %v12683 = vpack.c.b16 %v12574, %v12573
          %v12684 = vpack.c.b16 %v12576, %v12575
          %v12685 = vpack.c.b16 %v12578, %v12577
          %v12686 = vpack.c.b16 %v12580, %v12579
          %v12687 = vpack.c.b16 %v12582, %v12581
          %v12688 = vpack.c.b16 %v12584, %v12583
          %v12689 = vpack.c.b16 %v12586, %v12585
          %v12690 = vpack.c.b16 %v12588, %v12587
          %v12691 = vpack.c.b16 %v12590, %v12589
          %v12692 = vpack.c.b16 %v12592, %v12591
          %v12693 = vpack.c.b16 %v12594, %v12593
          %v12694 = vpack.c.b16 %v12596, %v12595
          %v12695 = vpack.c.b16 %v12598, %v12597
          %v12696 = vpack.c.b16 %v12600, %v12599
          %v12697 = vpack.c.b16 %v12602, %v12601
          %v12698 = vpack.c.b16 %v12604, %v12603
          %v12699 = vpack.c.b16 %v12606, %v12605
          %v12700 = vpack.c.b16 %v12608, %v12607
          %v12701 = vpack.c.b16 %v12610, %v12609
          %v12702 = vpack.c.b16 %v12612, %v12611
          %v12703 = vpack.c.b16 %v12614, %v12613
          %v12704 = vpack.c.b16 %v12616, %v12615
          %v12705 = vpack.c.b16 %v12618, %v12617
          %v12706 = vpack.c.b16 %v12620, %v12619
          %v12707 = vpack.c.b16 %v12622, %v12621
          %v12708 = vpack.c.b16 %v12624, %v12623
          %v12709 = vpack.c.b16 %v12626, %v12625
          %v12710 = vpack.c.b16 %v12628, %v12627
          %v12711 = vpack.c.b16 %v12630, %v12629
          %v12712 = vpack.c.b16 %v12632, %v12631
          %v12713 = vpack.c.b16 %v12634, %v12633
          %v12714 = vpack.c.b16 %v12636, %v12635
          %v12715 = vpack.c.b16 %v12638, %v12637
          %v12716 = vpack.c.b16 %v12640, %v12639
          %v12717 = vpack.c.b16 %v12642, %v12641
          %v12718 = vpack.c.b16 %v12644, %v12643
          %v12719 = vpack.c.b16 %v12646, %v12645
          %v12720 = vpack.c.b16 %v12648, %v12647
          %v12721 = vpack.c.b16 %v12650, %v12649
          %v12722 = vpack.c.b16 %v12652, %v12651
          %v12723 = vpack.c.b16 %v12654, %v12653
          %v12724 = vpack.c.b16 %v12656, %v12655
          %v12725 = vpack.c.b16 %v12658, %v12657
          %v12726 = vpack.c.b16 %v12660, %v12659
          %v12727 = vpack.c.b16 %v12662, %v12661
          %v12728 = vpack.c.b16 %v12664, %v12663
          %12793 = vmatprep.subr.bf16.mxu0 0
          %12794 = vmatpush1.bf16.msra.mxu0 %v12665
          %12795 = vmatprep.subr.bf16.mxu0 0
          %12796 = vmatpush1.bf16.msra.mxu0 %v12666
          %12797 = vmatprep.subr.bf16.mxu0 0
          %12798 = vmatpush1.bf16.msra.mxu0 %v12667
          %12799 = vmatprep.subr.bf16.mxu0 0
          %12800 = vmatpush1.bf16.msra.mxu0 %v12668
          %12801 = vmatprep.subr.bf16.mxu0 0
          %12802 = vmatpush1.bf16.msra.mxu0 %v12669
          %12803 = vmatprep.subr.bf16.mxu0 0
          %12804 = vmatpush1.bf16.msra.mxu0 %v12670
          %12805 = vmatprep.subr.bf16.mxu0 0
          %12806 = vmatpush1.bf16.msra.mxu0 %v12671
          %12807 = vmatprep.subr.bf16.mxu0 0
          %12808 = vmatpush1.bf16.msra.mxu0 %v12672
          %12809 = vmatprep.subr.bf16.mxu0 0
          %12810 = vmatpush1.bf16.msra.mxu0 %v12673
          %12811 = vmatprep.subr.bf16.mxu0 0
          %12812 = vmatpush1.bf16.msra.mxu0 %v12674
          %12813 = vmatprep.subr.bf16.mxu0 0
          %12814 = vmatpush1.bf16.msra.mxu0 %v12675
          %12815 = vmatprep.subr.bf16.mxu0 0
          %12816 = vmatpush1.bf16.msra.mxu0 %v12676
          %12817 = vmatprep.subr.bf16.mxu0 0
          %12818 = vmatpush1.bf16.msra.mxu0 %v12677
          %12819 = vmatprep.subr.bf16.mxu0 0
          %12820 = vmatpush1.bf16.msra.mxu0 %v12678
          %12821 = vmatprep.subr.bf16.mxu0 0
          %12822 = vmatpush1.bf16.msra.mxu0 %v12679
          %12823 = vmatprep.subr.bf16.mxu0 0
          %12824 = vmatpush1.bf16.msra.mxu0 %v12680
          %12825 = vmatprep.mubr.bf16.mxu0 %v12274
          %12826 = vmatmul.mubr.bf16.gmra.mrb[0].mxu0 %v12273
          %v12827 = vpop.f32.mrb[0].mxu0
          %v12828 = vadd.f32 0.0, %v12827
          %v12829 = vpop.f32.mrb[0].mxu0
          %v12830 = vpop.f32.mrb[0].mxu0
          %v12831 = vpop.f32.mrb[0].mxu0
          %12832 = vdwg.mxu0
          %12833 = vmatprep.subr.bf16.mxu0 0
          %12834 = vmatpush1.bf16.msra.mxu0 %v12681
          %12835 = vmatprep.subr.bf16.mxu0 0
          %12836 = vmatpush1.bf16.msra.mxu0 %v12682
          %12837 = vmatprep.subr.bf16.mxu0 0
          %12838 = vmatpush1.bf16.msra.mxu0 %v12683
          %12839 = vmatprep.subr.bf16.mxu0 0
          %12840 = vmatpush1.bf16.msra.mxu0 %v12684
          %12841 = vmatprep.subr.bf16.mxu0 0
          %12842 = vmatpush1.bf16.msra.mxu0 %v12685
          %12843 = vmatprep.subr.bf16.mxu0 0
          %12844 = vmatpush1.bf16.msra.mxu0 %v12686
          %12845 = vmatprep.subr.bf16.mxu0 0
          %12846 = vmatpush1.bf16.msra.mxu0 %v12687
          %12847 = vmatprep.subr.bf16.mxu0 0
          %12848 = vmatpush1.bf16.msra.mxu0 %v12688
          %12849 = vmatprep.subr.bf16.mxu0 0
          %12850 = vmatpush1.bf16.msra.mxu0 %v12689
          %12851 = vmatprep.subr.bf16.mxu0 0
          %12852 = vmatpush1.bf16.msra.mxu0 %v12690
          %12853 = vmatprep.subr.bf16.mxu0 0
          %12854 = vmatpush1.bf16.msra.mxu0 %v12691
          %12855 = vmatprep.subr.bf16.mxu0 0
          %12856 = vmatpush1.bf16.msra.mxu0 %v12692
          %12857 = vmatprep.subr.bf16.mxu0 0
          %12858 = vmatpush1.bf16.msra.mxu0 %v12693
          %12859 = vmatprep.subr.bf16.mxu0 0
          %12860 = vmatpush1.bf16.msra.mxu0 %v12694
          %12861 = vmatprep.subr.bf16.mxu0 0
          %12862 = vmatpush1.bf16.msra.mxu0 %v12695
          %12863 = vmatprep.subr.bf16.mxu0 0
          %12864 = vmatpush1.bf16.msra.mxu0 %v12696
          %12865 = vmatprep.mubr.bf16.mxu0 %v12276
          %12866 = vmatmul.mubr.bf16.gmra.mrb[0].mxu0 %v12275
          %v12867 = vpop.f32.mrb[0].mxu0
          %v12868 = vadd.f32 %v12828, %v12867
          %v12869 = vpop.f32.mrb[0].mxu0
          %v12870 = vpop.f32.mrb[0].mxu0
          %v12871 = vpop.f32.mrb[0].mxu0
          %12872 = vdwg.mxu0
          %12873 = vmatprep.subr.bf16.mxu0 0
          %12874 = vmatpush1.bf16.msra.mxu0 %v12697
          %12875 = vmatprep.subr.bf16.mxu0 0
          %12876 = vmatpush1.bf16.msra.mxu0 %v12698
          %12877 = vmatprep.subr.bf16.mxu0 0
          %12878 = vmatpush1.bf16.msra.mxu0 %v12699
          %12879 = vmatprep.subr.bf16.mxu0 0
          %12880 = vmatpush1.bf16.msra.mxu0 %v12700
          %12881 = vmatprep.subr.bf16.mxu0 0
          %12882 = vmatpush1.bf16.msra.mxu0 %v12701
          %12883 = vmatprep.subr.bf16.mxu0 0
          %12884 = vmatpush1.bf16.msra.mxu0 %v12702
          %12885 = vmatprep.subr.bf16.mxu0 0
          %12886 = vmatpush1.bf16.msra.mxu0 %v12703
          %12887 = vmatprep.subr.bf16.mxu0 0
          %12888 = vmatpush1.bf16.msra.mxu0 %v12704
          %12889 = vmatprep.subr.bf16.mxu0 0
          %12890 = vmatpush1.bf16.msra.mxu0 %v12705
          %12891 = vmatprep.subr.bf16.mxu0 0
          %12892 = vmatpush1.bf16.msra.mxu0 %v12706
          %12893 = vmatprep.subr.bf16.mxu0 0
          %12894 = vmatpush1.bf16.msra.mxu0 %v12707
          %12895 = vmatprep.subr.bf16.mxu0 0
          %12896 = vmatpush1.bf16.msra.mxu0 %v12708
          %12897 = vmatprep.subr.bf16.mxu0 0
          %12898 = vmatpush1.bf16.msra.mxu0 %v12709
          %12899 = vmatprep.subr.bf16.mxu0 0
          %12900 = vmatpush1.bf16.msra.mxu0 %v12710
          %12901 = vmatprep.subr.bf16.mxu0 0
          %12902 = vmatpush1.bf16.msra.mxu0 %v12711
          %12903 = vmatprep.subr.bf16.mxu0 0
          %12904 = vmatpush1.bf16.msra.mxu0 %v12712
          %12905 = vmatprep.mubr.bf16.mxu0 %v12278
          %12906 = vmatmul.mubr.bf16.gmra.mrb[0].mxu0 %v12277
          %v12907 = vpop.f32.mrb[0].mxu0
          %v12908 = vadd.f32 %v12868, %v12907
          %v12909 = vpop.f32.mrb[0].mxu0
          %v12910 = vpop.f32.mrb[0].mxu0
          %v12911 = vpop.f32.mrb[0].mxu0
          %12912 = vdwg.mxu0
          %12913 = vmatprep.subr.bf16.mxu0 0
          %12914 = vmatpush1.bf16.msra.mxu0 %v12713
          %12915 = vmatprep.subr.bf16.mxu0 0
          %12916 = vmatpush1.bf16.msra.mxu0 %v12714
          %12917 = vmatprep.subr.bf16.mxu0 0
          %12918 = vmatpush1.bf16.msra.mxu0 %v12715
          %12919 = vmatprep.subr.bf16.mxu0 0
          %12920 = vmatpush1.bf16.msra.mxu0 %v12716
          %12921 = vmatprep.subr.bf16.mxu0 0
          %12922 = vmatpush1.bf16.msra.mxu0 %v12717
          %12923 = vmatprep.subr.bf16.mxu0 0
          %12924 = vmatpush1.bf16.msra.mxu0 %v12718
          %12925 = vmatprep.subr.bf16.mxu0 0
          %12926 = vmatpush1.bf16.msra.mxu0 %v12719
          %12927 = vmatprep.subr.bf16.mxu0 0
          %12928 = vmatpush1.bf16.msra.mxu0 %v12720
          %12929 = vmatprep.subr.bf16.mxu0 0
          %12930 = vmatpush1.bf16.msra.mxu0 %v12721
          %12931 = vmatprep.subr.bf16.mxu0 0
          %12932 = vmatpush1.bf16.msra.mxu0 %v12722
          %12933 = vmatprep.subr.bf16.mxu0 0
          %12934 = vmatpush1.bf16.msra.mxu0 %v12723
          %12935 = vmatprep.subr.bf16.mxu0 0
          %12936 = vmatpush1.bf16.msra.mxu0 %v12724
          %12937 = vmatprep.subr.bf16.mxu0 0
          %12938 = vmatpush1.bf16.msra.mxu0 %v12725
          %12939 = vmatprep.subr.bf16.mxu0 0
          %12940 = vmatpush1.bf16.msra.mxu0 %v12726
          %12941 = vmatprep.subr.bf16.mxu0 0
          %12942 = vmatpush1.bf16.msra.mxu0 %v12727
          %12943 = vmatprep.subr.bf16.mxu0 0
          %12944 = vmatpush1.bf16.msra.mxu0 %v12728
          %12945 = vmatprep.mubr.bf16.mxu0 %v12280
          %12946 = vmatmul.mubr.bf16.gmra.mrb[0].mxu0 %v12279
          %v12947 = vpop.f32.mrb[0].mxu0
          %v12948 = vadd.f32 %v12908, %v12947
          %v12949 = vpop.f32.mrb[0].mxu0
          %v12950 = vpop.f32.mrb[0].mxu0
          %v12951 = vpop.f32.mrb[0].mxu0
          %12952 = vdwg.mxu0
          %12953 = vst [vmem:[#allocation11] sm:$0x3] %v12948
        $region60: #{net100_forward.1} parent=35 // pred_fallthru
          _
        %s12954 = sand.u32 %s31, 1
        %s12955 = scalar_lea.sflag [#allocation13], %s12954
        %s12956 = sand.u32 %s154, 1
        %s12957 = smul.addr %s12956, 16
        %s12958 = scalar_lea.vmem [#allocation12], %s12957
        // Predicated region
        $region61: #{net100_forward.1} parent=35 // pred_check
          %p12959 = pneg %p138
        $region62: #{net100_forward.1} parent=35 // pred_check_branch
          %12961 = sbr.rel (%p12959) target = $region64
        $region63: #{net100_forward.1} parent=35 // pred_region
          %s12963 = ssub.s32 32, 32
          %12964 = vsyncadd [#allocation5], %s12963
          %s12966 = sshll.u32 [#allocation11], 4
          %s12967 = int_to_ptr.vmem [resolvable:$true] %s12966
          %12969 = dma.vmem_to_hbm [thread:$0]  %s12967, 32, %s4, [#allocation5]
        $region64: #{net100_forward.1} parent=35 // pred_fallthru
          _
        // Predicated region
        $region65: #{net100_forward.1} parent=35 // pred_check
          %p12970 = pneg %p164
        $region66: #{net100_forward.1} parent=35 // pred_check_branch
          %12972 = sbr.rel (%p12970) target = $region68
        $region67: #{net100_forward.1} parent=35 // pred_region
          %s12973 = smul.u32 16, %s31
          %s12975 = ssub.s32 256, 256
          %12976 = vsyncadd %s12955, %s12975
          %s12977 = smul.addr %s12973, 16
          %s12978 = scalar_lea.hbm %s5, %s12977
          %s12980 = sshll.u32 %s12958, 4
          %s12981 = int_to_ptr.vmem [resolvable:$true] %s12980
          %12983 = dma.vmem_to_hbm [thread:$0]  %s12981, 256, %s12978, %s12955
        $region68: #{net100_forward.1} parent=35 // pred_fallthru
          _
        // Predicated region
        $region69: #{net100_forward.1} parent=35 // pred_check
          %p12984 = pneg %p185
        $region70: #{net100_forward.1} parent=35 // pred_check_branch
          %12986 = sbr.rel (%p12984) target = $region72
        $region71: #{net100_forward.1} parent=35 // pred_region
          %s12988 = ssub.s32 128, 128
          %12989 = vsyncadd [#allocation13], %s12988
          %s12991 = sshll.u32 [#allocation14], 4
          %s12992 = int_to_ptr.vmem [resolvable:$true] %s12991
          %12994 = dma.vmem_to_hbm [thread:$0]  %s12992, 128, %s6, [#allocation13]
        $region72: #{net100_forward.1} parent=35 // pred_fallthru
          _
        // Predicated region
        $region73: #{net100_forward.1} parent=35 // pred_check
          %p12995 = pneg %p206
        $region74: #{net100_forward.1} parent=35 // pred_check_branch
          %12997 = sbr.rel (%p12995) target = $region76
        $region75: #{net100_forward.1} parent=35 // pred_region
          %s12999 = ssub.s32 128, 128
          %13000 = vsyncadd [#allocation16], %s12999
          %s13002 = sshll.u32 [#allocation15], 4
          %s13003 = int_to_ptr.vmem [resolvable:$true] %s13002
          %13005 = dma.vmem_to_hbm [thread:$0]  %s13003, 128, %s7, [#allocation16]
        $region76: #{net100_forward.1} parent=35 // pred_fallthru
          _
        // Predicated region
        $region77: #{net100_forward.1} parent=35 // pred_check
          %p13006 = pneg %p138
        $region78: #{net100_forward.1} parent=35 // pred_check_branch
          %13008 = sbr.rel (%p13006) target = $region80
        $region79: #{net100_forward.1} parent=35 // pred_region
          %13009 = dma.done [#allocation5], 32
        $region80: #{net100_forward.1} parent=35 // pred_fallthru
          _
        // Predicated region
        $region81: #{net100_forward.1} parent=35 // pred_check
          %p13010 = pneg %p185
        $region82: #{net100_forward.1} parent=35 // pred_check_branch
          %13012 = sbr.rel (%p13010) target = $region84
        $region83: #{net100_forward.1} parent=35 // pred_region
          %13013 = dma.done [#allocation13], 128
        $region84: #{net100_forward.1} parent=35 // pred_fallthru
          _
        // Predicated region
        $region85: #{net100_forward.1} parent=35 // pred_check
          %p13014 = pneg %p206
        $region86: #{net100_forward.1} parent=35 // pred_check_branch
          %13016 = sbr.rel (%p13014) target = $region88
        $region87: #{net100_forward.1} parent=35 // pred_region
          %13017 = dma.done [#allocation16], 128
        $region88: #{net100_forward.1} parent=35 // pred_fallthru
          _
      $region36: #{net100_forward.1} parent=5 // pred_fallthru
        _
      %p13018 = scmp.le.s32.totalorder 2, %s26
      // Predicated region
      $region89: #{net100_forward.1} parent=5 // pred_check
        %p13019 = pneg %p13018
      $region90: #{net100_forward.1} parent=5 // pred_check_branch
        %13021 = sbr.rel (%p13019) target = $region92
      $region91: #{net100_forward.1} parent=5 // pred_region
        %s13022 = ssub.s32 %s26, 2
        // Predicated region
        $region93: #{net100_forward.1} parent=91 // pred_check
          %p13023 = pneg %p170
        $region94: #{net100_forward.1} parent=91 // pred_check_branch
          %13025 = sbr.rel (%p13023) target = $region96
        $region95: #{net100_forward.1} parent=91 // pred_region
          %s13026 = sand.u32 %s32, 1
          %s13027 = scalar_lea.sflag [#allocation13], %s13026
          %s13028 = sand.u32 %s155, 1
          %s13029 = smul.addr %s13028, 16
          %s13030 = scalar_lea.vmem [#allocation12], %s13029
          %13031 = dma.done %s13027, 256
        $region96: #{net100_forward.1} parent=91 // pred_fallthru
          _
      $region92: #{net100_forward.1} parent=5 // pred_fallthru
        _
    $region6: #{net100_forward.1} parent=1 // loop_footer
      %s30 = sadd.s32 1, %s26
    $region7: #{net100_forward.1} parent=1 // loop_footer_branch
      %25 = sbr.rel target = $region3
    $region8: #{net100_forward.1} parent=1 // loop_exit
      _
    %13032 = vsyncpa [#allocation4], 1
    %s13033 = scalar_lea.sflag [#allocation4], 1
    %13034 = vsyncpa %s13033, 1
    %13035 = vsyncpa [#allocation7], 1
    %s13036 = scalar_lea.sflag [#allocation7], 1
    %13037 = vsyncpa %s13036, 1
    %13038 = vsyncpa [#allocation10], 1
    %13039 = vsyncpa [#allocation5], 1
    %s13040 = scalar_lea.sflag [#allocation5], 1
    %13041 = vsyncpa %s13040, 1
    %13042 = vsyncpa [#allocation13], 1
    %s13043 = scalar_lea.sflag [#allocation13], 1
    %13044 = vsyncpa %s13043, 1
    %13045 = vsyncpa [#allocation16], 1

</llo_original>
